<compile_context>
chip_gen: v5e
topology: v5e:2x2
jax: 0.10.0
libtpu: 0.0.40
codegen_flags: <defaults>
</compile_context>

<pallas_src>
import functools

import jax
import jax.numpy as jnp
from jax.experimental import pallas as pl
from jax.experimental.pallas import tpu as pltpu

NUM_LAYERS = 3   # forward() applies the 3 convs of layer1
CH = 3           # Conv2d(3, 3, 3): Cin == Cout == 3


def _fused_net_kernel(w_ref, b_ref, x_ref, o_ref, *, N, C, H, WP):
    """Fused layer1[0..2]: three sequential 3x3 valid convs in one body.

    w_ref : SMEM f32[3*C*C*9]          three flattened OIHW weights, layer-major
    b_ref : SMEM f32[3*C]              three biases, layer-major
    x_ref : VMEM f32[N, C, H, WP]      input, lane-padded with zeros to width WP
    o_ref : VMEM f32[N, C, H-6, WP-6]  WP-6 is a multiple of 128 -> unmasked stores
    """
    # Per-input-channel slabs (values).  Static slice on a major dim: cheap.
    cur = [x_ref[:, ci, :, :] for ci in range(C)]   # C x (N, H, WP)
    h, w = H, WP

    for layer in range(NUM_LAYERS):
        ho, wo = h - 2, w - 2
        wbase = layer * C * C * 9

        # Hoist all scalar weight loads for this layer out of the FMA nest.
        wts = [
            [w_ref[wbase + co * C * 9 + ci * 9 + k]
             for ci in range(C) for k in range(9)]
            for co in range(C)
        ]

        # One accumulator per output channel, initialised with its bias.
        accs = [
            jnp.full((N, ho, wo), b_ref[layer * C + co], dtype=jnp.float32)
            for co in range(C)
        ]

        # Each shifted patch is materialised exactly once and reused for all C
        # output channels.  Per input channel we keep independent partial sums
        # (one per output channel) and fold them into the accumulators once,
        # keeping the serial add-chain per accumulator short.
        for ci in range(C):
            parts = [None] * C
            for kh in range(3):
                for kw in range(3):
                    patch = cur[ci][:, kh:kh + ho, kw:kw + wo]
                    k = ci * 9 + kh * 3 + kw
                    for co in range(C):
                        term = patch * wts[co][k]
                        parts[co] = term if parts[co] is None else parts[co] + term
            for co in range(C):
                accs[co] = accs[co] + parts[co]

        cur = accs
        h, w = ho, wo

    # Lane-dense epilogue: w == WP - 6 is a multiple of 128, so these are
    # full, unmasked vector stores.
    for co in range(C):
        o_ref[:, co, :, :] = cur[co]


def net_forward(params, x):
    """Forward pass of Net: layer1[0] -> layer1[1] -> layer1[2] (fused)."""
    weights, biases = zip(*params["layer1"])
    N, C, H, W = x.shape
    Ho, Wo = H - 2 * NUM_LAYERS, W - 2 * NUM_LAYERS

    # Lane-pad the input so the FINAL conv output width is a multiple of 128.
    wo_pad = pl.cdiv(Wo, 128) * 128
    WP = wo_pad + 2 * NUM_LAYERS
    x_pad = jnp.pad(x, ((0, 0), (0, 0), (0, 0), (0, WP - W)))

    w_flat = jnp.concatenate([w.reshape(-1) for w in weights])   # f32[3*C*C*9]
    b_flat = jnp.concatenate(list(biases))                       # f32[3*C]

    kernel = functools.partial(_fused_net_kernel, N=N, C=C, H=H, WP=WP)

    out_pad = pl.pallas_call(
        kernel,
        out_shape=jax.ShapeDtypeStruct((N, C, Ho, wo_pad), jnp.float32),
        in_specs=[
            pl.BlockSpec(memory_space=pltpu.MemorySpace.SMEM),   # flat weights
            pl.BlockSpec(memory_space=pltpu.MemorySpace.SMEM),   # flat biases
            pl.BlockSpec(memory_space=pltpu.MemorySpace.VMEM),   # activations
        ],
        out_specs=pl.BlockSpec(memory_space=pltpu.MemorySpace.VMEM),
    )(w_flat, b_flat, x_pad)

    # Slice the valid lanes back out (wrapper-side layout plumbing).
    return out_pad[:, :, :, :Wo]


def init_params(key):
    """Mirror Net.__init__: layer1 and layer2, 3 x Conv2d(3,3,3) each.

    PyTorch default init: U(-1/sqrt(fan_in), 1/sqrt(fan_in)), fan_in = 3*3*3.
    layer2 is created for parameter-count fidelity but unused by forward().
    """
    bound = 1.0 / jnp.sqrt(27.0)
    params = {}
    for name in ("layer1", "layer2"):
        layers = []
        for _ in range(NUM_LAYERS):
            key, kw, kb = jax.random.split(key, 3)
            w = jax.random.uniform(kw, (CH, CH, 3, 3), jnp.float32, -bound, bound)
            b = jax.random.uniform(kb, (CH,), jnp.float32, -bound, bound)
            layers.append((w, b))
        params[name] = layers
    return params


def _reference_forward(params, x):
    for w, b in params["layer1"]:
        x = jax.lax.conv_general_dilated(
            x, w, window_strides=(1, 1), padding="VALID",
            dimension_numbers=("NCHW", "OIHW", "NCHW"),
        ) + b[None, :, None, None]
    return x


if __name__ == "__main__":
    key = jax.random.PRNGKey(0)
    key, kx = jax.random.split(key)
    x = jax.random.normal(kx, (2, CH, 16, 16), jnp.float32)   # NCHW, like PyTorch

    params = init_params(key)

    fwd = jax.jit(net_forward)
    out = jax.block_until_ready(fwd(params, x))

    ref = _reference_forward(params, x)
    assert out.shape == (2, 3, 10, 10), out.shape
    assert jnp.allclose(out, ref, atol=1e-4, rtol=1e-4), "mismatch vs reference conv"

    print("KERNEL_OK")
</pallas_src>

<mosaic_0001>
module attributes {stable_mosaic.version = 11 : i64} {
  func.func @_fused_net_kernel(%arg0: memref<243xf32, #tpu.memory_space<smem>>, %arg1: memref<9xf32, #tpu.memory_space<smem>>, %arg2: memref<2x3x16x134xf32, #tpu.memory_space<vmem>>, %arg3: memref<2x3x10x128xf32, #tpu.memory_space<vmem>>) attributes {dimension_semantics = [], scalar_prefetch = 0 : i64, scratch_operands = 0 : i64, tpu.core_type = #tpu.core_type<tc>} {
    %c0 = arith.constant 0 : index
    %c0_0 = arith.constant 0 : index
    %c0_1 = arith.constant 0 : index
    %c0_2 = arith.constant 0 : index
    %0 = vector.load %arg2[%c0, %c0_0, %c0_1, %c0_2] : memref<2x3x16x134xf32, #tpu.memory_space<vmem>>, vector<2x1x16x134xf32>
    %1 = vector.shape_cast %0 : vector<2x1x16x134xf32> to vector<2x16x134xf32>
    %c0_3 = arith.constant 0 : index
    %c1 = arith.constant 1 : index
    %c0_4 = arith.constant 0 : index
    %c0_5 = arith.constant 0 : index
    %2 = vector.load %arg2[%c0_3, %c1, %c0_4, %c0_5] : memref<2x3x16x134xf32, #tpu.memory_space<vmem>>, vector<2x1x16x134xf32>
    %3 = vector.shape_cast %2 : vector<2x1x16x134xf32> to vector<2x16x134xf32>
    %c0_6 = arith.constant 0 : index
    %c2 = arith.constant 2 : index
    %c0_7 = arith.constant 0 : index
    %c0_8 = arith.constant 0 : index
    %4 = vector.load %arg2[%c0_6, %c2, %c0_7, %c0_8] : memref<2x3x16x134xf32, #tpu.memory_space<vmem>>, vector<2x1x16x134xf32>
    %5 = vector.shape_cast %4 : vector<2x1x16x134xf32> to vector<2x16x134xf32>
    %c0_9 = arith.constant 0 : index
    %6 = memref.load %arg0[%c0_9] : memref<243xf32, #tpu.memory_space<smem>>
    %c1_10 = arith.constant 1 : index
    %7 = memref.load %arg0[%c1_10] : memref<243xf32, #tpu.memory_space<smem>>
    %c2_11 = arith.constant 2 : index
    %8 = memref.load %arg0[%c2_11] : memref<243xf32, #tpu.memory_space<smem>>
    %c3 = arith.constant 3 : index
    %9 = memref.load %arg0[%c3] : memref<243xf32, #tpu.memory_space<smem>>
    %c4 = arith.constant 4 : index
    %10 = memref.load %arg0[%c4] : memref<243xf32, #tpu.memory_space<smem>>
    %c5 = arith.constant 5 : index
    %11 = memref.load %arg0[%c5] : memref<243xf32, #tpu.memory_space<smem>>
    %c6 = arith.constant 6 : index
    %12 = memref.load %arg0[%c6] : memref<243xf32, #tpu.memory_space<smem>>
    %c7 = arith.constant 7 : index
    %13 = memref.load %arg0[%c7] : memref<243xf32, #tpu.memory_space<smem>>
    %c8 = arith.constant 8 : index
    %14 = memref.load %arg0[%c8] : memref<243xf32, #tpu.memory_space<smem>>
    %c9 = arith.constant 9 : index
    %15 = memref.load %arg0[%c9] : memref<243xf32, #tpu.memory_space<smem>>
    %c10 = arith.constant 10 : index
    %16 = memref.load %arg0[%c10] : memref<243xf32, #tpu.memory_space<smem>>
    %c11 = arith.constant 11 : index
    %17 = memref.load %arg0[%c11] : memref<243xf32, #tpu.memory_space<smem>>
    %c12 = arith.constant 12 : index
    %18 = memref.load %arg0[%c12] : memref<243xf32, #tpu.memory_space<smem>>
    %c13 = arith.constant 13 : index
    %19 = memref.load %arg0[%c13] : memref<243xf32, #tpu.memory_space<smem>>
    %c14 = arith.constant 14 : index
    %20 = memref.load %arg0[%c14] : memref<243xf32, #tpu.memory_space<smem>>
    %c15 = arith.constant 15 : index
    %21 = memref.load %arg0[%c15] : memref<243xf32, #tpu.memory_space<smem>>
    %c16 = arith.constant 16 : index
    %22 = memref.load %arg0[%c16] : memref<243xf32, #tpu.memory_space<smem>>
    %c17 = arith.constant 17 : index
    %23 = memref.load %arg0[%c17] : memref<243xf32, #tpu.memory_space<smem>>
    %c18 = arith.constant 18 : index
    %24 = memref.load %arg0[%c18] : memref<243xf32, #tpu.memory_space<smem>>
    %c19 = arith.constant 19 : index
    %25 = memref.load %arg0[%c19] : memref<243xf32, #tpu.memory_space<smem>>
    %c20 = arith.constant 20 : index
    %26 = memref.load %arg0[%c20] : memref<243xf32, #tpu.memory_space<smem>>
    %c21 = arith.constant 21 : index
    %27 = memref.load %arg0[%c21] : memref<243xf32, #tpu.memory_space<smem>>
    %c22 = arith.constant 22 : index
    %28 = memref.load %arg0[%c22] : memref<243xf32, #tpu.memory_space<smem>>
    %c23 = arith.constant 23 : index
    %29 = memref.load %arg0[%c23] : memref<243xf32, #tpu.memory_space<smem>>
    %c24 = arith.constant 24 : index
    %30 = memref.load %arg0[%c24] : memref<243xf32, #tpu.memory_space<smem>>
    %c25 = arith.constant 25 : index
    %31 = memref.load %arg0[%c25] : memref<243xf32, #tpu.memory_space<smem>>
    %c26 = arith.constant 26 : index
    %32 = memref.load %arg0[%c26] : memref<243xf32, #tpu.memory_space<smem>>
    %c27 = arith.constant 27 : index
    %33 = memref.load %arg0[%c27] : memref<243xf32, #tpu.memory_space<smem>>
    %c28 = arith.constant 28 : index
    %34 = memref.load %arg0[%c28] : memref<243xf32, #tpu.memory_space<smem>>
    %c29 = arith.constant 29 : index
    %35 = memref.load %arg0[%c29] : memref<243xf32, #tpu.memory_space<smem>>
    %c30 = arith.constant 30 : index
    %36 = memref.load %arg0[%c30] : memref<243xf32, #tpu.memory_space<smem>>
    %c31 = arith.constant 31 : index
    %37 = memref.load %arg0[%c31] : memref<243xf32, #tpu.memory_space<smem>>
    %c32 = arith.constant 32 : index
    %38 = memref.load %arg0[%c32] : memref<243xf32, #tpu.memory_space<smem>>
    %c33 = arith.constant 33 : index
    %39 = memref.load %arg0[%c33] : memref<243xf32, #tpu.memory_space<smem>>
    %c34 = arith.constant 34 : index
    %40 = memref.load %arg0[%c34] : memref<243xf32, #tpu.memory_space<smem>>
    %c35 = arith.constant 35 : index
    %41 = memref.load %arg0[%c35] : memref<243xf32, #tpu.memory_space<smem>>
    %c36 = arith.constant 36 : index
    %42 = memref.load %arg0[%c36] : memref<243xf32, #tpu.memory_space<smem>>
    %c37 = arith.constant 37 : index
    %43 = memref.load %arg0[%c37] : memref<243xf32, #tpu.memory_space<smem>>
    %c38 = arith.constant 38 : index
    %44 = memref.load %arg0[%c38] : memref<243xf32, #tpu.memory_space<smem>>
    %c39 = arith.constant 39 : index
    %45 = memref.load %arg0[%c39] : memref<243xf32, #tpu.memory_space<smem>>
    %c40 = arith.constant 40 : index
    %46 = memref.load %arg0[%c40] : memref<243xf32, #tpu.memory_space<smem>>
    %c41 = arith.constant 41 : index
    %47 = memref.load %arg0[%c41] : memref<243xf32, #tpu.memory_space<smem>>
    %c42 = arith.constant 42 : index
    %48 = memref.load %arg0[%c42] : memref<243xf32, #tpu.memory_space<smem>>
    %c43 = arith.constant 43 : index
    %49 = memref.load %arg0[%c43] : memref<243xf32, #tpu.memory_space<smem>>
    %c44 = arith.constant 44 : index
    %50 = memref.load %arg0[%c44] : memref<243xf32, #tpu.memory_space<smem>>
    %c45 = arith.constant 45 : index
    %51 = memref.load %arg0[%c45] : memref<243xf32, #tpu.memory_space<smem>>
    %c46 = arith.constant 46 : index
    %52 = memref.load %arg0[%c46] : memref<243xf32, #tpu.memory_space<smem>>
    %c47 = arith.constant 47 : index
    %53 = memref.load %arg0[%c47] : memref<243xf32, #tpu.memory_space<smem>>
    %c48 = arith.constant 48 : index
    %54 = memref.load %arg0[%c48] : memref<243xf32, #tpu.memory_space<smem>>
    %c49 = arith.constant 49 : index
    %55 = memref.load %arg0[%c49] : memref<243xf32, #tpu.memory_space<smem>>
    %c50 = arith.constant 50 : index
    %56 = memref.load %arg0[%c50] : memref<243xf32, #tpu.memory_space<smem>>
    %c51 = arith.constant 51 : index
    %57 = memref.load %arg0[%c51] : memref<243xf32, #tpu.memory_space<smem>>
    %c52 = arith.constant 52 : index
    %58 = memref.load %arg0[%c52] : memref<243xf32, #tpu.memory_space<smem>>
    %c53 = arith.constant 53 : index
    %59 = memref.load %arg0[%c53] : memref<243xf32, #tpu.memory_space<smem>>
    %c54 = arith.constant 54 : index
    %60 = memref.load %arg0[%c54] : memref<243xf32, #tpu.memory_space<smem>>
    %c55 = arith.constant 55 : index
    %61 = memref.load %arg0[%c55] : memref<243xf32, #tpu.memory_space<smem>>
    %c56 = arith.constant 56 : index
    %62 = memref.load %arg0[%c56] : memref<243xf32, #tpu.memory_space<smem>>
    %c57 = arith.constant 57 : index
    %63 = memref.load %arg0[%c57] : memref<243xf32, #tpu.memory_space<smem>>
    %c58 = arith.constant 58 : index
    %64 = memref.load %arg0[%c58] : memref<243xf32, #tpu.memory_space<smem>>
    %c59 = arith.constant 59 : index
    %65 = memref.load %arg0[%c59] : memref<243xf32, #tpu.memory_space<smem>>
    %c60 = arith.constant 60 : index
    %66 = memref.load %arg0[%c60] : memref<243xf32, #tpu.memory_space<smem>>
    %c61 = arith.constant 61 : index
    %67 = memref.load %arg0[%c61] : memref<243xf32, #tpu.memory_space<smem>>
    %c62 = arith.constant 62 : index
    %68 = memref.load %arg0[%c62] : memref<243xf32, #tpu.memory_space<smem>>
    %c63 = arith.constant 63 : index
    %69 = memref.load %arg0[%c63] : memref<243xf32, #tpu.memory_space<smem>>
    %c64 = arith.constant 64 : index
    %70 = memref.load %arg0[%c64] : memref<243xf32, #tpu.memory_space<smem>>
    %c65 = arith.constant 65 : index
    %71 = memref.load %arg0[%c65] : memref<243xf32, #tpu.memory_space<smem>>
    %c66 = arith.constant 66 : index
    %72 = memref.load %arg0[%c66] : memref<243xf32, #tpu.memory_space<smem>>
    %c67 = arith.constant 67 : index
    %73 = memref.load %arg0[%c67] : memref<243xf32, #tpu.memory_space<smem>>
    %c68 = arith.constant 68 : index
    %74 = memref.load %arg0[%c68] : memref<243xf32, #tpu.memory_space<smem>>
    %c69 = arith.constant 69 : index
    %75 = memref.load %arg0[%c69] : memref<243xf32, #tpu.memory_space<smem>>
    %c70 = arith.constant 70 : index
    %76 = memref.load %arg0[%c70] : memref<243xf32, #tpu.memory_space<smem>>
    %c71 = arith.constant 71 : index
    %77 = memref.load %arg0[%c71] : memref<243xf32, #tpu.memory_space<smem>>
    %c72 = arith.constant 72 : index
    %78 = memref.load %arg0[%c72] : memref<243xf32, #tpu.memory_space<smem>>
    %c73 = arith.constant 73 : index
    %79 = memref.load %arg0[%c73] : memref<243xf32, #tpu.memory_space<smem>>
    %c74 = arith.constant 74 : index
    %80 = memref.load %arg0[%c74] : memref<243xf32, #tpu.memory_space<smem>>
    %c75 = arith.constant 75 : index
    %81 = memref.load %arg0[%c75] : memref<243xf32, #tpu.memory_space<smem>>
    %c76 = arith.constant 76 : index
    %82 = memref.load %arg0[%c76] : memref<243xf32, #tpu.memory_space<smem>>
    %c77 = arith.constant 77 : index
    %83 = memref.load %arg0[%c77] : memref<243xf32, #tpu.memory_space<smem>>
    %c78 = arith.constant 78 : index
    %84 = memref.load %arg0[%c78] : memref<243xf32, #tpu.memory_space<smem>>
    %c79 = arith.constant 79 : index
    %85 = memref.load %arg0[%c79] : memref<243xf32, #tpu.memory_space<smem>>
    %c80 = arith.constant 80 : index
    %86 = memref.load %arg0[%c80] : memref<243xf32, #tpu.memory_space<smem>>
    %c0_12 = arith.constant 0 : index
    %87 = memref.load %arg1[%c0_12] : memref<9xf32, #tpu.memory_space<smem>>
    %88 = vector.broadcast %87 : f32 to vector<2x14x132xf32>
    %c1_13 = arith.constant 1 : index
    %89 = memref.load %arg1[%c1_13] : memref<9xf32, #tpu.memory_space<smem>>
    %90 = vector.broadcast %89 : f32 to vector<2x14x132xf32>
    %c2_14 = arith.constant 2 : index
    %91 = memref.load %arg1[%c2_14] : memref<9xf32, #tpu.memory_space<smem>>
    %92 = vector.broadcast %91 : f32 to vector<2x14x132xf32>
    %93 = vector.extract_strided_slice %1 {offsets = [0, 0, 0], sizes = [2, 14, 132], strides = [1, 1, 1]} : vector<2x16x134xf32> to vector<2x14x132xf32>
    %94 = vector.broadcast %6 : f32 to vector<2x14x132xf32>
    %95 = arith.mulf %93, %94 : vector<2x14x132xf32>
    %96 = vector.broadcast %33 : f32 to vector<2x14x132xf32>
    %97 = arith.mulf %93, %96 : vector<2x14x132xf32>
    %98 = vector.broadcast %60 : f32 to vector<2x14x132xf32>
    %99 = arith.mulf %93, %98 : vector<2x14x132xf32>
    %100 = vector.extract_strided_slice %1 {offsets = [0, 0, 1], sizes = [2, 14, 132], strides = [1, 1, 1]} : vector<2x16x134xf32> to vector<2x14x132xf32>
    %101 = vector.broadcast %7 : f32 to vector<2x14x132xf32>
    %102 = arith.mulf %100, %101 : vector<2x14x132xf32>
    %103 = arith.addf %95, %102 : vector<2x14x132xf32>
    %104 = vector.broadcast %34 : f32 to vector<2x14x132xf32>
    %105 = arith.mulf %100, %104 : vector<2x14x132xf32>
    %106 = arith.addf %97, %105 : vector<2x14x132xf32>
    %107 = vector.broadcast %61 : f32 to vector<2x14x132xf32>
    %108 = arith.mulf %100, %107 : vector<2x14x132xf32>
    %109 = arith.addf %99, %108 : vector<2x14x132xf32>
    %110 = vector.extract_strided_slice %1 {offsets = [0, 0, 2], sizes = [2, 14, 132], strides = [1, 1, 1]} : vector<2x16x134xf32> to vector<2x14x132xf32>
    %111 = vector.broadcast %8 : f32 to vector<2x14x132xf32>
    %112 = arith.mulf %110, %111 : vector<2x14x132xf32>
    %113 = arith.addf %103, %112 : vector<2x14x132xf32>
    %114 = vector.broadcast %35 : f32 to vector<2x14x132xf32>
    %115 = arith.mulf %110, %114 : vector<2x14x132xf32>
    %116 = arith.addf %106, %115 : vector<2x14x132xf32>
    %117 = vector.broadcast %62 : f32 to vector<2x14x132xf32>
    %118 = arith.mulf %110, %117 : vector<2x14x132xf32>
    %119 = arith.addf %109, %118 : vector<2x14x132xf32>
    %120 = vector.extract_strided_slice %1 {offsets = [0, 1, 0], sizes = [2, 14, 132], strides = [1, 1, 1]} : vector<2x16x134xf32> to vector<2x14x132xf32>
    %121 = vector.broadcast %9 : f32 to vector<2x14x132xf32>
    %122 = arith.mulf %120, %121 : vector<2x14x132xf32>
    %123 = arith.addf %113, %122 : vector<2x14x132xf32>
    %124 = vector.broadcast %36 : f32 to vector<2x14x132xf32>
    %125 = arith.mulf %120, %124 : vector<2x14x132xf32>
    %126 = arith.addf %116, %125 : vector<2x14x132xf32>
    %127 = vector.broadcast %63 : f32 to vector<2x14x132xf32>
    %128 = arith.mulf %120, %127 : vector<2x14x132xf32>
    %129 = arith.addf %119, %128 : vector<2x14x132xf32>
    %130 = vector.extract_strided_slice %1 {offsets = [0, 1, 1], sizes = [2, 14, 132], strides = [1, 1, 1]} : vector<2x16x134xf32> to vector<2x14x132xf32>
    %131 = vector.broadcast %10 : f32 to vector<2x14x132xf32>
    %132 = arith.mulf %130, %131 : vector<2x14x132xf32>
    %133 = arith.addf %123, %132 : vector<2x14x132xf32>
    %134 = vector.broadcast %37 : f32 to vector<2x14x132xf32>
    %135 = arith.mulf %130, %134 : vector<2x14x132xf32>
    %136 = arith.addf %126, %135 : vector<2x14x132xf32>
    %137 = vector.broadcast %64 : f32 to vector<2x14x132xf32>
    %138 = arith.mulf %130, %137 : vector<2x14x132xf32>
    %139 = arith.addf %129, %138 : vector<2x14x132xf32>
    %140 = vector.extract_strided_slice %1 {offsets = [0, 1, 2], sizes = [2, 14, 132], strides = [1, 1, 1]} : vector<2x16x134xf32> to vector<2x14x132xf32>
    %141 = vector.broadcast %11 : f32 to vector<2x14x132xf32>
    %142 = arith.mulf %140, %141 : vector<2x14x132xf32>
    %143 = arith.addf %133, %142 : vector<2x14x132xf32>
    %144 = vector.broadcast %38 : f32 to vector<2x14x132xf32>
    %145 = arith.mulf %140, %144 : vector<2x14x132xf32>
    %146 = arith.addf %136, %145 : vector<2x14x132xf32>
    %147 = vector.broadcast %65 : f32 to vector<2x14x132xf32>
    %148 = arith.mulf %140, %147 : vector<2x14x132xf32>
    %149 = arith.addf %139, %148 : vector<2x14x132xf32>
    %150 = vector.extract_strided_slice %1 {offsets = [0, 2, 0], sizes = [2, 14, 132], strides = [1, 1, 1]} : vector<2x16x134xf32> to vector<2x14x132xf32>
    %151 = vector.broadcast %12 : f32 to vector<2x14x132xf32>
    %152 = arith.mulf %150, %151 : vector<2x14x132xf32>
    %153 = arith.addf %143, %152 : vector<2x14x132xf32>
    %154 = vector.broadcast %39 : f32 to vector<2x14x132xf32>
    %155 = arith.mulf %150, %154 : vector<2x14x132xf32>
    %156 = arith.addf %146, %155 : vector<2x14x132xf32>
    %157 = vector.broadcast %66 : f32 to vector<2x14x132xf32>
    %158 = arith.mulf %150, %157 : vector<2x14x132xf32>
    %159 = arith.addf %149, %158 : vector<2x14x132xf32>
    %160 = vector.extract_strided_slice %1 {offsets = [0, 2, 1], sizes = [2, 14, 132], strides = [1, 1, 1]} : vector<2x16x134xf32> to vector<2x14x132xf32>
    %161 = vector.broadcast %13 : f32 to vector<2x14x132xf32>
    %162 = arith.mulf %160, %161 : vector<2x14x132xf32>
    %163 = arith.addf %153, %162 : vector<2x14x132xf32>
    %164 = vector.broadcast %40 : f32 to vector<2x14x132xf32>
    %165 = arith.mulf %160, %164 : vector<2x14x132xf32>
    %166 = arith.addf %156, %165 : vector<2x14x132xf32>
    %167 = vector.broadcast %67 : f32 to vector<2x14x132xf32>
    %168 = arith.mulf %160, %167 : vector<2x14x132xf32>
    %169 = arith.addf %159, %168 : vector<2x14x132xf32>
    %170 = vector.extract_strided_slice %1 {offsets = [0, 2, 2], sizes = [2, 14, 132], strides = [1, 1, 1]} : vector<2x16x134xf32> to vector<2x14x132xf32>
    %171 = vector.broadcast %14 : f32 to vector<2x14x132xf32>
    %172 = arith.mulf %170, %171 : vector<2x14x132xf32>
    %173 = arith.addf %163, %172 : vector<2x14x132xf32>
    %174 = vector.broadcast %41 : f32 to vector<2x14x132xf32>
    %175 = arith.mulf %170, %174 : vector<2x14x132xf32>
    %176 = arith.addf %166, %175 : vector<2x14x132xf32>
    %177 = vector.broadcast %68 : f32 to vector<2x14x132xf32>
    %178 = arith.mulf %170, %177 : vector<2x14x132xf32>
    %179 = arith.addf %169, %178 : vector<2x14x132xf32>
    %180 = arith.addf %88, %173 : vector<2x14x132xf32>
    %181 = arith.addf %90, %176 : vector<2x14x132xf32>
    %182 = arith.addf %92, %179 : vector<2x14x132xf32>
    %183 = vector.extract_strided_slice %3 {offsets = [0, 0, 0], sizes = [2, 14, 132], strides = [1, 1, 1]} : vector<2x16x134xf32> to vector<2x14x132xf32>
    %184 = vector.broadcast %15 : f32 to vector<2x14x132xf32>
    %185 = arith.mulf %183, %184 : vector<2x14x132xf32>
    %186 = vector.broadcast %42 : f32 to vector<2x14x132xf32>
    %187 = arith.mulf %183, %186 : vector<2x14x132xf32>
    %188 = vector.broadcast %69 : f32 to vector<2x14x132xf32>
    %189 = arith.mulf %183, %188 : vector<2x14x132xf32>
    %190 = vector.extract_strided_slice %3 {offsets = [0, 0, 1], sizes = [2, 14, 132], strides = [1, 1, 1]} : vector<2x16x134xf32> to vector<2x14x132xf32>
    %191 = vector.broadcast %16 : f32 to vector<2x14x132xf32>
    %192 = arith.mulf %190, %191 : vector<2x14x132xf32>
    %193 = arith.addf %185, %192 : vector<2x14x132xf32>
    %194 = vector.broadcast %43 : f32 to vector<2x14x132xf32>
    %195 = arith.mulf %190, %194 : vector<2x14x132xf32>
    %196 = arith.addf %187, %195 : vector<2x14x132xf32>
    %197 = vector.broadcast %70 : f32 to vector<2x14x132xf32>
    %198 = arith.mulf %190, %197 : vector<2x14x132xf32>
    %199 = arith.addf %189, %198 : vector<2x14x132xf32>
    %200 = vector.extract_strided_slice %3 {offsets = [0, 0, 2], sizes = [2, 14, 132], strides = [1, 1, 1]} : vector<2x16x134xf32> to vector<2x14x132xf32>
    %201 = vector.broadcast %17 : f32 to vector<2x14x132xf32>
    %202 = arith.mulf %200, %201 : vector<2x14x132xf32>
    %203 = arith.addf %193, %202 : vector<2x14x132xf32>
    %204 = vector.broadcast %44 : f32 to vector<2x14x132xf32>
    %205 = arith.mulf %200, %204 : vector<2x14x132xf32>
    %206 = arith.addf %196, %205 : vector<2x14x132xf32>
    %207 = vector.broadcast %71 : f32 to vector<2x14x132xf32>
    %208 = arith.mulf %200, %207 : vector<2x14x132xf32>
    %209 = arith.addf %199, %208 : vector<2x14x132xf32>
    %210 = vector.extract_strided_slice %3 {offsets = [0, 1, 0], sizes = [2, 14, 132], strides = [1, 1, 1]} : vector<2x16x134xf32> to vector<2x14x132xf32>
    %211 = vector.broadcast %18 : f32 to vector<2x14x132xf32>
    %212 = arith.mulf %210, %211 : vector<2x14x132xf32>
    %213 = arith.addf %203, %212 : vector<2x14x132xf32>
    %214 = vector.broadcast %45 : f32 to vector<2x14x132xf32>
    %215 = arith.mulf %210, %214 : vector<2x14x132xf32>
    %216 = arith.addf %206, %215 : vector<2x14x132xf32>
    %217 = vector.broadcast %72 : f32 to vector<2x14x132xf32>
    %218 = arith.mulf %210, %217 : vector<2x14x132xf32>
    %219 = arith.addf %209, %218 : vector<2x14x132xf32>
    %220 = vector.extract_strided_slice %3 {offsets = [0, 1, 1], sizes = [2, 14, 132], strides = [1, 1, 1]} : vector<2x16x134xf32> to vector<2x14x132xf32>
    %221 = vector.broadcast %19 : f32 to vector<2x14x132xf32>
    %222 = arith.mulf %220, %221 : vector<2x14x132xf32>
    %223 = arith.addf %213, %222 : vector<2x14x132xf32>
    %224 = vector.broadcast %46 : f32 to vector<2x14x132xf32>
    %225 = arith.mulf %220, %224 : vector<2x14x132xf32>
    %226 = arith.addf %216, %225 : vector<2x14x132xf32>
    %227 = vector.broadcast %73 : f32 to vector<2x14x132xf32>
    %228 = arith.mulf %220, %227 : vector<2x14x132xf32>
    %229 = arith.addf %219, %228 : vector<2x14x132xf32>
    %230 = vector.extract_strided_slice %3 {offsets = [0, 1, 2], sizes = [2, 14, 132], strides = [1, 1, 1]} : vector<2x16x134xf32> to vector<2x14x132xf32>
    %231 = vector.broadcast %20 : f32 to vector<2x14x132xf32>
    %232 = arith.mulf %230, %231 : vector<2x14x132xf32>
    %233 = arith.addf %223, %232 : vector<2x14x132xf32>
    %234 = vector.broadcast %47 : f32 to vector<2x14x132xf32>
    %235 = arith.mulf %230, %234 : vector<2x14x132xf32>
    %236 = arith.addf %226, %235 : vector<2x14x132xf32>
    %237 = vector.broadcast %74 : f32 to vector<2x14x132xf32>
    %238 = arith.mulf %230, %237 : vector<2x14x132xf32>
    %239 = arith.addf %229, %238 : vector<2x14x132xf32>
    %240 = vector.extract_strided_slice %3 {offsets = [0, 2, 0], sizes = [2, 14, 132], strides = [1, 1, 1]} : vector<2x16x134xf32> to vector<2x14x132xf32>
    %241 = vector.broadcast %21 : f32 to vector<2x14x132xf32>
    %242 = arith.mulf %240, %241 : vector<2x14x132xf32>
    %243 = arith.addf %233, %242 : vector<2x14x132xf32>
    %244 = vector.broadcast %48 : f32 to vector<2x14x132xf32>
    %245 = arith.mulf %240, %244 : vector<2x14x132xf32>
    %246 = arith.addf %236, %245 : vector<2x14x132xf32>
    %247 = vector.broadcast %75 : f32 to vector<2x14x132xf32>
    %248 = arith.mulf %240, %247 : vector<2x14x132xf32>
    %249 = arith.addf %239, %248 : vector<2x14x132xf32>
    %250 = vector.extract_strided_slice %3 {offsets = [0, 2, 1], sizes = [2, 14, 132], strides = [1, 1, 1]} : vector<2x16x134xf32> to vector<2x14x132xf32>
    %251 = vector.broadcast %22 : f32 to vector<2x14x132xf32>
    %252 = arith.mulf %250, %251 : vector<2x14x132xf32>
    %253 = arith.addf %243, %252 : vector<2x14x132xf32>
    %254 = vector.broadcast %49 : f32 to vector<2x14x132xf32>
    %255 = arith.mulf %250, %254 : vector<2x14x132xf32>
    %256 = arith.addf %246, %255 : vector<2x14x132xf32>
    %257 = vector.broadcast %76 : f32 to vector<2x14x132xf32>
    %258 = arith.mulf %250, %257 : vector<2x14x132xf32>
    %259 = arith.addf %249, %258 : vector<2x14x132xf32>
    %260 = vector.extract_strided_slice %3 {offsets = [0, 2, 2], sizes = [2, 14, 132], strides = [1, 1, 1]} : vector<2x16x134xf32> to vector<2x14x132xf32>
    %261 = vector.broadcast %23 : f32 to vector<2x14x132xf32>
    %262 = arith.mulf %260, %261 : vector<2x14x132xf32>
    %263 = arith.addf %253, %262 : vector<2x14x132xf32>
    %264 = vector.broadcast %50 : f32 to vector<2x14x132xf32>
    %265 = arith.mulf %260, %264 : vector<2x14x132xf32>
    %266 = arith.addf %256, %265 : vector<2x14x132xf32>
    %267 = vector.broadcast %77 : f32 to vector<2x14x132xf32>
    %268 = arith.mulf %260, %267 : vector<2x14x132xf32>
    %269 = arith.addf %259, %268 : vector<2x14x132xf32>
    %270 = arith.addf %180, %263 : vector<2x14x132xf32>
    %271 = arith.addf %181, %266 : vector<2x14x132xf32>
    %272 = arith.addf %182, %269 : vector<2x14x132xf32>
    %273 = vector.extract_strided_slice %5 {offsets = [0, 0, 0], sizes = [2, 14, 132], strides = [1, 1, 1]} : vector<2x16x134xf32> to vector<2x14x132xf32>
    %274 = vector.broadcast %24 : f32 to vector<2x14x132xf32>
    %275 = arith.mulf %273, %274 : vector<2x14x132xf32>
    %276 = vector.broadcast %51 : f32 to vector<2x14x132xf32>
    %277 = arith.mulf %273, %276 : vector<2x14x132xf32>
    %278 = vector.broadcast %78 : f32 to vector<2x14x132xf32>
    %279 = arith.mulf %273, %278 : vector<2x14x132xf32>
    %280 = vector.extract_strided_slice %5 {offsets = [0, 0, 1], sizes = [2, 14, 132], strides = [1, 1, 1]} : vector<2x16x134xf32> to vector<2x14x132xf32>
    %281 = vector.broadcast %25 : f32 to vector<2x14x132xf32>
    %282 = arith.mulf %280, %281 : vector<2x14x132xf32>
    %283 = arith.addf %275, %282 : vector<2x14x132xf32>
    %284 = vector.broadcast %52 : f32 to vector<2x14x132xf32>
    %285 = arith.mulf %280, %284 : vector<2x14x132xf32>
    %286 = arith.addf %277, %285 : vector<2x14x132xf32>
    %287 = vector.broadcast %79 : f32 to vector<2x14x132xf32>
    %288 = arith.mulf %280, %287 : vector<2x14x132xf32>
    %289 = arith.addf %279, %288 : vector<2x14x132xf32>
    %290 = vector.extract_strided_slice %5 {offsets = [0, 0, 2], sizes = [2, 14, 132], strides = [1, 1, 1]} : vector<2x16x134xf32> to vector<2x14x132xf32>
    %291 = vector.broadcast %26 : f32 to vector<2x14x132xf32>
    %292 = arith.mulf %290, %291 : vector<2x14x132xf32>
    %293 = arith.addf %283, %292 : vector<2x14x132xf32>
    %294 = vector.broadcast %53 : f32 to vector<2x14x132xf32>
    %295 = arith.mulf %290, %294 : vector<2x14x132xf32>
    %296 = arith.addf %286, %295 : vector<2x14x132xf32>
    %297 = vector.broadcast %80 : f32 to vector<2x14x132xf32>
    %298 = arith.mulf %290, %297 : vector<2x14x132xf32>
    %299 = arith.addf %289, %298 : vector<2x14x132xf32>
    %300 = vector.extract_strided_slice %5 {offsets = [0, 1, 0], sizes = [2, 14, 132], strides = [1, 1, 1]} : vector<2x16x134xf32> to vector<2x14x132xf32>
    %301 = vector.broadcast %27 : f32 to vector<2x14x132xf32>
    %302 = arith.mulf %300, %301 : vector<2x14x132xf32>
    %303 = arith.addf %293, %302 : vector<2x14x132xf32>
    %304 = vector.broadcast %54 : f32 to vector<2x14x132xf32>
    %305 = arith.mulf %300, %304 : vector<2x14x132xf32>
    %306 = arith.addf %296, %305 : vector<2x14x132xf32>
    %307 = vector.broadcast %81 : f32 to vector<2x14x132xf32>
    %308 = arith.mulf %300, %307 : vector<2x14x132xf32>
    %309 = arith.addf %299, %308 : vector<2x14x132xf32>
    %310 = vector.extract_strided_slice %5 {offsets = [0, 1, 1], sizes = [2, 14, 132], strides = [1, 1, 1]} : vector<2x16x134xf32> to vector<2x14x132xf32>
    %311 = vector.broadcast %28 : f32 to vector<2x14x132xf32>
    %312 = arith.mulf %310, %311 : vector<2x14x132xf32>
    %313 = arith.addf %303, %312 : vector<2x14x132xf32>
    %314 = vector.broadcast %55 : f32 to vector<2x14x132xf32>
    %315 = arith.mulf %310, %314 : vector<2x14x132xf32>
    %316 = arith.addf %306, %315 : vector<2x14x132xf32>
    %317 = vector.broadcast %82 : f32 to vector<2x14x132xf32>
    %318 = arith.mulf %310, %317 : vector<2x14x132xf32>
    %319 = arith.addf %309, %318 : vector<2x14x132xf32>
    %320 = vector.extract_strided_slice %5 {offsets = [0, 1, 2], sizes = [2, 14, 132], strides = [1, 1, 1]} : vector<2x16x134xf32> to vector<2x14x132xf32>
    %321 = vector.broadcast %29 : f32 to vector<2x14x132xf32>
    %322 = arith.mulf %320, %321 : vector<2x14x132xf32>
    %323 = arith.addf %313, %322 : vector<2x14x132xf32>
    %324 = vector.broadcast %56 : f32 to vector<2x14x132xf32>
    %325 = arith.mulf %320, %324 : vector<2x14x132xf32>
    %326 = arith.addf %316, %325 : vector<2x14x132xf32>
    %327 = vector.broadcast %83 : f32 to vector<2x14x132xf32>
    %328 = arith.mulf %320, %327 : vector<2x14x132xf32>
    %329 = arith.addf %319, %328 : vector<2x14x132xf32>
    %330 = vector.extract_strided_slice %5 {offsets = [0, 2, 0], sizes = [2, 14, 132], strides = [1, 1, 1]} : vector<2x16x134xf32> to vector<2x14x132xf32>
    %331 = vector.broadcast %30 : f32 to vector<2x14x132xf32>
    %332 = arith.mulf %330, %331 : vector<2x14x132xf32>
    %333 = arith.addf %323, %332 : vector<2x14x132xf32>
    %334 = vector.broadcast %57 : f32 to vector<2x14x132xf32>
    %335 = arith.mulf %330, %334 : vector<2x14x132xf32>
    %336 = arith.addf %326, %335 : vector<2x14x132xf32>
    %337 = vector.broadcast %84 : f32 to vector<2x14x132xf32>
    %338 = arith.mulf %330, %337 : vector<2x14x132xf32>
    %339 = arith.addf %329, %338 : vector<2x14x132xf32>
    %340 = vector.extract_strided_slice %5 {offsets = [0, 2, 1], sizes = [2, 14, 132], strides = [1, 1, 1]} : vector<2x16x134xf32> to vector<2x14x132xf32>
    %341 = vector.broadcast %31 : f32 to vector<2x14x132xf32>
    %342 = arith.mulf %340, %341 : vector<2x14x132xf32>
    %343 = arith.addf %333, %342 : vector<2x14x132xf32>
    %344 = vector.broadcast %58 : f32 to vector<2x14x132xf32>
    %345 = arith.mulf %340, %344 : vector<2x14x132xf32>
    %346 = arith.addf %336, %345 : vector<2x14x132xf32>
    %347 = vector.broadcast %85 : f32 to vector<2x14x132xf32>
    %348 = arith.mulf %340, %347 : vector<2x14x132xf32>
    %349 = arith.addf %339, %348 : vector<2x14x132xf32>
    %350 = vector.extract_strided_slice %5 {offsets = [0, 2, 2], sizes = [2, 14, 132], strides = [1, 1, 1]} : vector<2x16x134xf32> to vector<2x14x132xf32>
    %351 = vector.broadcast %32 : f32 to vector<2x14x132xf32>
    %352 = arith.mulf %350, %351 : vector<2x14x132xf32>
    %353 = arith.addf %343, %352 : vector<2x14x132xf32>
    %354 = vector.broadcast %59 : f32 to vector<2x14x132xf32>
    %355 = arith.mulf %350, %354 : vector<2x14x132xf32>
    %356 = arith.addf %346, %355 : vector<2x14x132xf32>
    %357 = vector.broadcast %86 : f32 to vector<2x14x132xf32>
    %358 = arith.mulf %350, %357 : vector<2x14x132xf32>
    %359 = arith.addf %349, %358 : vector<2x14x132xf32>
    %360 = arith.addf %270, %353 : vector<2x14x132xf32>
    %361 = arith.addf %271, %356 : vector<2x14x132xf32>
    %362 = arith.addf %272, %359 : vector<2x14x132xf32>
    %c81 = arith.constant 81 : index
    %363 = memref.load %arg0[%c81] : memref<243xf32, #tpu.memory_space<smem>>
    %c82 = arith.constant 82 : index
    %364 = memref.load %arg0[%c82] : memref<243xf32, #tpu.memory_space<smem>>
    %c83 = arith.constant 83 : index
    %365 = memref.load %arg0[%c83] : memref<243xf32, #tpu.memory_space<smem>>
    %c84 = arith.constant 84 : index
    %366 = memref.load %arg0[%c84] : memref<243xf32, #tpu.memory_space<smem>>
    %c85 = arith.constant 85 : index
    %367 = memref.load %arg0[%c85] : memref<243xf32, #tpu.memory_space<smem>>
    %c86 = arith.constant 86 : index
    %368 = memref.load %arg0[%c86] : memref<243xf32, #tpu.memory_space<smem>>
    %c87 = arith.constant 87 : index
    %369 = memref.load %arg0[%c87] : memref<243xf32, #tpu.memory_space<smem>>
    %c88 = arith.constant 88 : index
    %370 = memref.load %arg0[%c88] : memref<243xf32, #tpu.memory_space<smem>>
    %c89 = arith.constant 89 : index
    %371 = memref.load %arg0[%c89] : memref<243xf32, #tpu.memory_space<smem>>
    %c90 = arith.constant 90 : index
    %372 = memref.load %arg0[%c90] : memref<243xf32, #tpu.memory_space<smem>>
    %c91 = arith.constant 91 : index
    %373 = memref.load %arg0[%c91] : memref<243xf32, #tpu.memory_space<smem>>
    %c92 = arith.constant 92 : index
    %374 = memref.load %arg0[%c92] : memref<243xf32, #tpu.memory_space<smem>>
    %c93 = arith.constant 93 : index
    %375 = memref.load %arg0[%c93] : memref<243xf32, #tpu.memory_space<smem>>
    %c94 = arith.constant 94 : index
    %376 = memref.load %arg0[%c94] : memref<243xf32, #tpu.memory_space<smem>>
    %c95 = arith.constant 95 : index
    %377 = memref.load %arg0[%c95] : memref<243xf32, #tpu.memory_space<smem>>
    %c96 = arith.constant 96 : index
    %378 = memref.load %arg0[%c96] : memref<243xf32, #tpu.memory_space<smem>>
    %c97 = arith.constant 97 : index
    %379 = memref.load %arg0[%c97] : memref<243xf32, #tpu.memory_space<smem>>
    %c98 = arith.constant 98 : index
    %380 = memref.load %arg0[%c98] : memref<243xf32, #tpu.memory_space<smem>>
    %c99 = arith.constant 99 : index
    %381 = memref.load %arg0[%c99] : memref<243xf32, #tpu.memory_space<smem>>
    %c100 = arith.constant 100 : index
    %382 = memref.load %arg0[%c100] : memref<243xf32, #tpu.memory_space<smem>>
    %c101 = arith.constant 101 : index
    %383 = memref.load %arg0[%c101] : memref<243xf32, #tpu.memory_space<smem>>
    %c102 = arith.constant 102 : index
    %384 = memref.load %arg0[%c102] : memref<243xf32, #tpu.memory_space<smem>>
    %c103 = arith.constant 103 : index
    %385 = memref.load %arg0[%c103] : memref<243xf32, #tpu.memory_space<smem>>
    %c104 = arith.constant 104 : index
    %386 = memref.load %arg0[%c104] : memref<243xf32, #tpu.memory_space<smem>>
    %c105 = arith.constant 105 : index
    %387 = memref.load %arg0[%c105] : memref<243xf32, #tpu.memory_space<smem>>
    %c106 = arith.constant 106 : index
    %388 = memref.load %arg0[%c106] : memref<243xf32, #tpu.memory_space<smem>>
    %c107 = arith.constant 107 : index
    %389 = memref.load %arg0[%c107] : memref<243xf32, #tpu.memory_space<smem>>
    %c108 = arith.constant 108 : index
    %390 = memref.load %arg0[%c108] : memref<243xf32, #tpu.memory_space<smem>>
    %c109 = arith.constant 109 : index
    %391 = memref.load %arg0[%c109] : memref<243xf32, #tpu.memory_space<smem>>
    %c110 = arith.constant 110 : index
    %392 = memref.load %arg0[%c110] : memref<243xf32, #tpu.memory_space<smem>>
    %c111 = arith.constant 111 : index
    %393 = memref.load %arg0[%c111] : memref<243xf32, #tpu.memory_space<smem>>
    %c112 = arith.constant 112 : index
    %394 = memref.load %arg0[%c112] : memref<243xf32, #tpu.memory_space<smem>>
    %c113 = arith.constant 113 : index
    %395 = memref.load %arg0[%c113] : memref<243xf32, #tpu.memory_space<smem>>
    %c114 = arith.constant 114 : index
    %396 = memref.load %arg0[%c114] : memref<243xf32, #tpu.memory_space<smem>>
    %c115 = arith.constant 115 : index
    %397 = memref.load %arg0[%c115] : memref<243xf32, #tpu.memory_space<smem>>
    %c116 = arith.constant 116 : index
    %398 = memref.load %arg0[%c116] : memref<243xf32, #tpu.memory_space<smem>>
    %c117 = arith.constant 117 : index
    %399 = memref.load %arg0[%c117] : memref<243xf32, #tpu.memory_space<smem>>
    %c118 = arith.constant 118 : index
    %400 = memref.load %arg0[%c118] : memref<243xf32, #tpu.memory_space<smem>>
    %c119 = arith.constant 119 : index
    %401 = memref.load %arg0[%c119] : memref<243xf32, #tpu.memory_space<smem>>
    %c120 = arith.constant 120 : index
    %402 = memref.load %arg0[%c120] : memref<243xf32, #tpu.memory_space<smem>>
    %c121 = arith.constant 121 : index
    %403 = memref.load %arg0[%c121] : memref<243xf32, #tpu.memory_space<smem>>
    %c122 = arith.constant 122 : index
    %404 = memref.load %arg0[%c122] : memref<243xf32, #tpu.memory_space<smem>>
    %c123 = arith.constant 123 : index
    %405 = memref.load %arg0[%c123] : memref<243xf32, #tpu.memory_space<smem>>
    %c124 = arith.constant 124 : index
    %406 = memref.load %arg0[%c124] : memref<243xf32, #tpu.memory_space<smem>>
    %c125 = arith.constant 125 : index
    %407 = memref.load %arg0[%c125] : memref<243xf32, #tpu.memory_space<smem>>
    %c126 = arith.constant 126 : index
    %408 = memref.load %arg0[%c126] : memref<243xf32, #tpu.memory_space<smem>>
    %c127 = arith.constant 127 : index
    %409 = memref.load %arg0[%c127] : memref<243xf32, #tpu.memory_space<smem>>
    %c128 = arith.constant 128 : index
    %410 = memref.load %arg0[%c128] : memref<243xf32, #tpu.memory_space<smem>>
    %c129 = arith.constant 129 : index
    %411 = memref.load %arg0[%c129] : memref<243xf32, #tpu.memory_space<smem>>
    %c130 = arith.constant 130 : index
    %412 = memref.load %arg0[%c130] : memref<243xf32, #tpu.memory_space<smem>>
    %c131 = arith.constant 131 : index
    %413 = memref.load %arg0[%c131] : memref<243xf32, #tpu.memory_space<smem>>
    %c132 = arith.constant 132 : index
    %414 = memref.load %arg0[%c132] : memref<243xf32, #tpu.memory_space<smem>>
    %c133 = arith.constant 133 : index
    %415 = memref.load %arg0[%c133] : memref<243xf32, #tpu.memory_space<smem>>
    %c134 = arith.constant 134 : index
    %416 = memref.load %arg0[%c134] : memref<243xf32, #tpu.memory_space<smem>>
    %c135 = arith.constant 135 : index
    %417 = memref.load %arg0[%c135] : memref<243xf32, #tpu.memory_space<smem>>
    %c136 = arith.constant 136 : index
    %418 = memref.load %arg0[%c136] : memref<243xf32, #tpu.memory_space<smem>>
    %c137 = arith.constant 137 : index
    %419 = memref.load %arg0[%c137] : memref<243xf32, #tpu.memory_space<smem>>
    %c138 = arith.constant 138 : index
    %420 = memref.load %arg0[%c138] : memref<243xf32, #tpu.memory_space<smem>>
    %c139 = arith.constant 139 : index
    %421 = memref.load %arg0[%c139] : memref<243xf32, #tpu.memory_space<smem>>
    %c140 = arith.constant 140 : index
    %422 = memref.load %arg0[%c140] : memref<243xf32, #tpu.memory_space<smem>>
    %c141 = arith.constant 141 : index
    %423 = memref.load %arg0[%c141] : memref<243xf32, #tpu.memory_space<smem>>
    %c142 = arith.constant 142 : index
    %424 = memref.load %arg0[%c142] : memref<243xf32, #tpu.memory_space<smem>>
    %c143 = arith.constant 143 : index
    %425 = memref.load %arg0[%c143] : memref<243xf32, #tpu.memory_space<smem>>
    %c144 = arith.constant 144 : index
    %426 = memref.load %arg0[%c144] : memref<243xf32, #tpu.memory_space<smem>>
    %c145 = arith.constant 145 : index
    %427 = memref.load %arg0[%c145] : memref<243xf32, #tpu.memory_space<smem>>
    %c146 = arith.constant 146 : index
    %428 = memref.load %arg0[%c146] : memref<243xf32, #tpu.memory_space<smem>>
    %c147 = arith.constant 147 : index
    %429 = memref.load %arg0[%c147] : memref<243xf32, #tpu.memory_space<smem>>
    %c148 = arith.constant 148 : index
    %430 = memref.load %arg0[%c148] : memref<243xf32, #tpu.memory_space<smem>>
    %c149 = arith.constant 149 : index
    %431 = memref.load %arg0[%c149] : memref<243xf32, #tpu.memory_space<smem>>
    %c150 = arith.constant 150 : index
    %432 = memref.load %arg0[%c150] : memref<243xf32, #tpu.memory_space<smem>>
    %c151 = arith.constant 151 : index
    %433 = memref.load %arg0[%c151] : memref<243xf32, #tpu.memory_space<smem>>
    %c152 = arith.constant 152 : index
    %434 = memref.load %arg0[%c152] : memref<243xf32, #tpu.memory_space<smem>>
    %c153 = arith.constant 153 : index
    %435 = memref.load %arg0[%c153] : memref<243xf32, #tpu.memory_space<smem>>
    %c154 = arith.constant 154 : index
    %436 = memref.load %arg0[%c154] : memref<243xf32, #tpu.memory_space<smem>>
    %c155 = arith.constant 155 : index
    %437 = memref.load %arg0[%c155] : memref<243xf32, #tpu.memory_space<smem>>
    %c156 = arith.constant 156 : index
    %438 = memref.load %arg0[%c156] : memref<243xf32, #tpu.memory_space<smem>>
    %c157 = arith.constant 157 : index
    %439 = memref.load %arg0[%c157] : memref<243xf32, #tpu.memory_space<smem>>
    %c158 = arith.constant 158 : index
    %440 = memref.load %arg0[%c158] : memref<243xf32, #tpu.memory_space<smem>>
    %c159 = arith.constant 159 : index
    %441 = memref.load %arg0[%c159] : memref<243xf32, #tpu.memory_space<smem>>
    %c160 = arith.constant 160 : index
    %442 = memref.load %arg0[%c160] : memref<243xf32, #tpu.memory_space<smem>>
    %c161 = arith.constant 161 : index
    %443 = memref.load %arg0[%c161] : memref<243xf32, #tpu.memory_space<smem>>
    %c3_15 = arith.constant 3 : index
    %444 = memref.load %arg1[%c3_15] : memref<9xf32, #tpu.memory_space<smem>>
    %445 = vector.broadcast %444 : f32 to vector<2x12x130xf32>
    %c4_16 = arith.constant 4 : index
    %446 = memref.load %arg1[%c4_16] : memref<9xf32, #tpu.memory_space<smem>>
    %447 = vector.broadcast %446 : f32 to vector<2x12x130xf32>
    %c5_17 = arith.constant 5 : index
    %448 = memref.load %arg1[%c5_17] : memref<9xf32, #tpu.memory_space<smem>>
    %449 = vector.broadcast %448 : f32 to vector<2x12x130xf32>
    %450 = vector.extract_strided_slice %360 {offsets = [0, 0, 0], sizes = [2, 12, 130], strides = [1, 1, 1]} : vector<2x14x132xf32> to vector<2x12x130xf32>
    %451 = vector.broadcast %363 : f32 to vector<2x12x130xf32>
    %452 = arith.mulf %450, %451 : vector<2x12x130xf32>
    %453 = vector.broadcast %390 : f32 to vector<2x12x130xf32>
    %454 = arith.mulf %450, %453 : vector<2x12x130xf32>
    %455 = vector.broadcast %417 : f32 to vector<2x12x130xf32>
    %456 = arith.mulf %450, %455 : vector<2x12x130xf32>
    %457 = vector.extract_strided_slice %360 {offsets = [0, 0, 1], sizes = [2, 12, 130], strides = [1, 1, 1]} : vector<2x14x132xf32> to vector<2x12x130xf32>
    %458 = vector.broadcast %364 : f32 to vector<2x12x130xf32>
    %459 = arith.mulf %457, %458 : vector<2x12x130xf32>
    %460 = arith.addf %452, %459 : vector<2x12x130xf32>
    %461 = vector.broadcast %391 : f32 to vector<2x12x130xf32>
    %462 = arith.mulf %457, %461 : vector<2x12x130xf32>
    %463 = arith.addf %454, %462 : vector<2x12x130xf32>
    %464 = vector.broadcast %418 : f32 to vector<2x12x130xf32>
    %465 = arith.mulf %457, %464 : vector<2x12x130xf32>
    %466 = arith.addf %456, %465 : vector<2x12x130xf32>
    %467 = vector.extract_strided_slice %360 {offsets = [0, 0, 2], sizes = [2, 12, 130], strides = [1, 1, 1]} : vector<2x14x132xf32> to vector<2x12x130xf32>
    %468 = vector.broadcast %365 : f32 to vector<2x12x130xf32>
    %469 = arith.mulf %467, %468 : vector<2x12x130xf32>
    %470 = arith.addf %460, %469 : vector<2x12x130xf32>
    %471 = vector.broadcast %392 : f32 to vector<2x12x130xf32>
    %472 = arith.mulf %467, %471 : vector<2x12x130xf32>
    %473 = arith.addf %463, %472 : vector<2x12x130xf32>
    %474 = vector.broadcast %419 : f32 to vector<2x12x130xf32>
    %475 = arith.mulf %467, %474 : vector<2x12x130xf32>
    %476 = arith.addf %466, %475 : vector<2x12x130xf32>
    %477 = vector.extract_strided_slice %360 {offsets = [0, 1, 0], sizes = [2, 12, 130], strides = [1, 1, 1]} : vector<2x14x132xf32> to vector<2x12x130xf32>
    %478 = vector.broadcast %366 : f32 to vector<2x12x130xf32>
    %479 = arith.mulf %477, %478 : vector<2x12x130xf32>
    %480 = arith.addf %470, %479 : vector<2x12x130xf32>
    %481 = vector.broadcast %393 : f32 to vector<2x12x130xf32>
    %482 = arith.mulf %477, %481 : vector<2x12x130xf32>
    %483 = arith.addf %473, %482 : vector<2x12x130xf32>
    %484 = vector.broadcast %420 : f32 to vector<2x12x130xf32>
    %485 = arith.mulf %477, %484 : vector<2x12x130xf32>
    %486 = arith.addf %476, %485 : vector<2x12x130xf32>
    %487 = vector.extract_strided_slice %360 {offsets = [0, 1, 1], sizes = [2, 12, 130], strides = [1, 1, 1]} : vector<2x14x132xf32> to vector<2x12x130xf32>
    %488 = vector.broadcast %367 : f32 to vector<2x12x130xf32>
    %489 = arith.mulf %487, %488 : vector<2x12x130xf32>
    %490 = arith.addf %480, %489 : vector<2x12x130xf32>
    %491 = vector.broadcast %394 : f32 to vector<2x12x130xf32>
    %492 = arith.mulf %487, %491 : vector<2x12x130xf32>
    %493 = arith.addf %483, %492 : vector<2x12x130xf32>
    %494 = vector.broadcast %421 : f32 to vector<2x12x130xf32>
    %495 = arith.mulf %487, %494 : vector<2x12x130xf32>
    %496 = arith.addf %486, %495 : vector<2x12x130xf32>
    %497 = vector.extract_strided_slice %360 {offsets = [0, 1, 2], sizes = [2, 12, 130], strides = [1, 1, 1]} : vector<2x14x132xf32> to vector<2x12x130xf32>
    %498 = vector.broadcast %368 : f32 to vector<2x12x130xf32>
    %499 = arith.mulf %497, %498 : vector<2x12x130xf32>
    %500 = arith.addf %490, %499 : vector<2x12x130xf32>
    %501 = vector.broadcast %395 : f32 to vector<2x12x130xf32>
    %502 = arith.mulf %497, %501 : vector<2x12x130xf32>
    %503 = arith.addf %493, %502 : vector<2x12x130xf32>
    %504 = vector.broadcast %422 : f32 to vector<2x12x130xf32>
    %505 = arith.mulf %497, %504 : vector<2x12x130xf32>
    %506 = arith.addf %496, %505 : vector<2x12x130xf32>
    %507 = vector.extract_strided_slice %360 {offsets = [0, 2, 0], sizes = [2, 12, 130], strides = [1, 1, 1]} : vector<2x14x132xf32> to vector<2x12x130xf32>
    %508 = vector.broadcast %369 : f32 to vector<2x12x130xf32>
    %509 = arith.mulf %507, %508 : vector<2x12x130xf32>
    %510 = arith.addf %500, %509 : vector<2x12x130xf32>
    %511 = vector.broadcast %396 : f32 to vector<2x12x130xf32>
    %512 = arith.mulf %507, %511 : vector<2x12x130xf32>
    %513 = arith.addf %503, %512 : vector<2x12x130xf32>
    %514 = vector.broadcast %423 : f32 to vector<2x12x130xf32>
    %515 = arith.mulf %507, %514 : vector<2x12x130xf32>
    %516 = arith.addf %506, %515 : vector<2x12x130xf32>
    %517 = vector.extract_strided_slice %360 {offsets = [0, 2, 1], sizes = [2, 12, 130], strides = [1, 1, 1]} : vector<2x14x132xf32> to vector<2x12x130xf32>
    %518 = vector.broadcast %370 : f32 to vector<2x12x130xf32>
    %519 = arith.mulf %517, %518 : vector<2x12x130xf32>
    %520 = arith.addf %510, %519 : vector<2x12x130xf32>
    %521 = vector.broadcast %397 : f32 to vector<2x12x130xf32>
    %522 = arith.mulf %517, %521 : vector<2x12x130xf32>
    %523 = arith.addf %513, %522 : vector<2x12x130xf32>
    %524 = vector.broadcast %424 : f32 to vector<2x12x130xf32>
    %525 = arith.mulf %517, %524 : vector<2x12x130xf32>
    %526 = arith.addf %516, %525 : vector<2x12x130xf32>
    %527 = vector.extract_strided_slice %360 {offsets = [0, 2, 2], sizes = [2, 12, 130], strides = [1, 1, 1]} : vector<2x14x132xf32> to vector<2x12x130xf32>
    %528 = vector.broadcast %371 : f32 to vector<2x12x130xf32>
    %529 = arith.mulf %527, %528 : vector<2x12x130xf32>
    %530 = arith.addf %520, %529 : vector<2x12x130xf32>
    %531 = vector.broadcast %398 : f32 to vector<2x12x130xf32>
    %532 = arith.mulf %527, %531 : vector<2x12x130xf32>
    %533 = arith.addf %523, %532 : vector<2x12x130xf32>
    %534 = vector.broadcast %425 : f32 to vector<2x12x130xf32>
    %535 = arith.mulf %527, %534 : vector<2x12x130xf32>
    %536 = arith.addf %526, %535 : vector<2x12x130xf32>
    %537 = arith.addf %445, %530 : vector<2x12x130xf32>
    %538 = arith.addf %447, %533 : vector<2x12x130xf32>
    %539 = arith.addf %449, %536 : vector<2x12x130xf32>
    %540 = vector.extract_strided_slice %361 {offsets = [0, 0, 0], sizes = [2, 12, 130], strides = [1, 1, 1]} : vector<2x14x132xf32> to vector<2x12x130xf32>
    %541 = vector.broadcast %372 : f32 to vector<2x12x130xf32>
    %542 = arith.mulf %540, %541 : vector<2x12x130xf32>
    %543 = vector.broadcast %399 : f32 to vector<2x12x130xf32>
    %544 = arith.mulf %540, %543 : vector<2x12x130xf32>
    %545 = vector.broadcast %426 : f32 to vector<2x12x130xf32>
    %546 = arith.mulf %540, %545 : vector<2x12x130xf32>
    %547 = vector.extract_strided_slice %361 {offsets = [0, 0, 1], sizes = [2, 12, 130], strides = [1, 1, 1]} : vector<2x14x132xf32> to vector<2x12x130xf32>
    %548 = vector.broadcast %373 : f32 to vector<2x12x130xf32>
    %549 = arith.mulf %547, %548 : vector<2x12x130xf32>
    %550 = arith.addf %542, %549 : vector<2x12x130xf32>
    %551 = vector.broadcast %400 : f32 to vector<2x12x130xf32>
    %552 = arith.mulf %547, %551 : vector<2x12x130xf32>
    %553 = arith.addf %544, %552 : vector<2x12x130xf32>
    %554 = vector.broadcast %427 : f32 to vector<2x12x130xf32>
    %555 = arith.mulf %547, %554 : vector<2x12x130xf32>
    %556 = arith.addf %546, %555 : vector<2x12x130xf32>
    %557 = vector.extract_strided_slice %361 {offsets = [0, 0, 2], sizes = [2, 12, 130], strides = [1, 1, 1]} : vector<2x14x132xf32> to vector<2x12x130xf32>
    %558 = vector.broadcast %374 : f32 to vector<2x12x130xf32>
    %559 = arith.mulf %557, %558 : vector<2x12x130xf32>
    %560 = arith.addf %550, %559 : vector<2x12x130xf32>
    %561 = vector.broadcast %401 : f32 to vector<2x12x130xf32>
    %562 = arith.mulf %557, %561 : vector<2x12x130xf32>
    %563 = arith.addf %553, %562 : vector<2x12x130xf32>
    %564 = vector.broadcast %428 : f32 to vector<2x12x130xf32>
    %565 = arith.mulf %557, %564 : vector<2x12x130xf32>
    %566 = arith.addf %556, %565 : vector<2x12x130xf32>
    %567 = vector.extract_strided_slice %361 {offsets = [0, 1, 0], sizes = [2, 12, 130], strides = [1, 1, 1]} : vector<2x14x132xf32> to vector<2x12x130xf32>
    %568 = vector.broadcast %375 : f32 to vector<2x12x130xf32>
    %569 = arith.mulf %567, %568 : vector<2x12x130xf32>
    %570 = arith.addf %560, %569 : vector<2x12x130xf32>
    %571 = vector.broadcast %402 : f32 to vector<2x12x130xf32>
    %572 = arith.mulf %567, %571 : vector<2x12x130xf32>
    %573 = arith.addf %563, %572 : vector<2x12x130xf32>
    %574 = vector.broadcast %429 : f32 to vector<2x12x130xf32>
    %575 = arith.mulf %567, %574 : vector<2x12x130xf32>
    %576 = arith.addf %566, %575 : vector<2x12x130xf32>
    %577 = vector.extract_strided_slice %361 {offsets = [0, 1, 1], sizes = [2, 12, 130], strides = [1, 1, 1]} : vector<2x14x132xf32> to vector<2x12x130xf32>
    %578 = vector.broadcast %376 : f32 to vector<2x12x130xf32>
    %579 = arith.mulf %577, %578 : vector<2x12x130xf32>
    %580 = arith.addf %570, %579 : vector<2x12x130xf32>
    %581 = vector.broadcast %403 : f32 to vector<2x12x130xf32>
    %582 = arith.mulf %577, %581 : vector<2x12x130xf32>
    %583 = arith.addf %573, %582 : vector<2x12x130xf32>
    %584 = vector.broadcast %430 : f32 to vector<2x12x130xf32>
    %585 = arith.mulf %577, %584 : vector<2x12x130xf32>
    %586 = arith.addf %576, %585 : vector<2x12x130xf32>
    %587 = vector.extract_strided_slice %361 {offsets = [0, 1, 2], sizes = [2, 12, 130], strides = [1, 1, 1]} : vector<2x14x132xf32> to vector<2x12x130xf32>
    %588 = vector.broadcast %377 : f32 to vector<2x12x130xf32>
    %589 = arith.mulf %587, %588 : vector<2x12x130xf32>
    %590 = arith.addf %580, %589 : vector<2x12x130xf32>
    %591 = vector.broadcast %404 : f32 to vector<2x12x130xf32>
    %592 = arith.mulf %587, %591 : vector<2x12x130xf32>
    %593 = arith.addf %583, %592 : vector<2x12x130xf32>
    %594 = vector.broadcast %431 : f32 to vector<2x12x130xf32>
    %595 = arith.mulf %587, %594 : vector<2x12x130xf32>
    %596 = arith.addf %586, %595 : vector<2x12x130xf32>
    %597 = vector.extract_strided_slice %361 {offsets = [0, 2, 0], sizes = [2, 12, 130], strides = [1, 1, 1]} : vector<2x14x132xf32> to vector<2x12x130xf32>
    %598 = vector.broadcast %378 : f32 to vector<2x12x130xf32>
    %599 = arith.mulf %597, %598 : vector<2x12x130xf32>
    %600 = arith.addf %590, %599 : vector<2x12x130xf32>
    %601 = vector.broadcast %405 : f32 to vector<2x12x130xf32>
    %602 = arith.mulf %597, %601 : vector<2x12x130xf32>
    %603 = arith.addf %593, %602 : vector<2x12x130xf32>
    %604 = vector.broadcast %432 : f32 to vector<2x12x130xf32>
    %605 = arith.mulf %597, %604 : vector<2x12x130xf32>
    %606 = arith.addf %596, %605 : vector<2x12x130xf32>
    %607 = vector.extract_strided_slice %361 {offsets = [0, 2, 1], sizes = [2, 12, 130], strides = [1, 1, 1]} : vector<2x14x132xf32> to vector<2x12x130xf32>
    %608 = vector.broadcast %379 : f32 to vector<2x12x130xf32>
    %609 = arith.mulf %607, %608 : vector<2x12x130xf32>
    %610 = arith.addf %600, %609 : vector<2x12x130xf32>
    %611 = vector.broadcast %406 : f32 to vector<2x12x130xf32>
    %612 = arith.mulf %607, %611 : vector<2x12x130xf32>
    %613 = arith.addf %603, %612 : vector<2x12x130xf32>
    %614 = vector.broadcast %433 : f32 to vector<2x12x130xf32>
    %615 = arith.mulf %607, %614 : vector<2x12x130xf32>
    %616 = arith.addf %606, %615 : vector<2x12x130xf32>
    %617 = vector.extract_strided_slice %361 {offsets = [0, 2, 2], sizes = [2, 12, 130], strides = [1, 1, 1]} : vector<2x14x132xf32> to vector<2x12x130xf32>
    %618 = vector.broadcast %380 : f32 to vector<2x12x130xf32>
    %619 = arith.mulf %617, %618 : vector<2x12x130xf32>
    %620 = arith.addf %610, %619 : vector<2x12x130xf32>
    %621 = vector.broadcast %407 : f32 to vector<2x12x130xf32>
    %622 = arith.mulf %617, %621 : vector<2x12x130xf32>
    %623 = arith.addf %613, %622 : vector<2x12x130xf32>
    %624 = vector.broadcast %434 : f32 to vector<2x12x130xf32>
    %625 = arith.mulf %617, %624 : vector<2x12x130xf32>
    %626 = arith.addf %616, %625 : vector<2x12x130xf32>
    %627 = arith.addf %537, %620 : vector<2x12x130xf32>
    %628 = arith.addf %538, %623 : vector<2x12x130xf32>
    %629 = arith.addf %539, %626 : vector<2x12x130xf32>
    %630 = vector.extract_strided_slice %362 {offsets = [0, 0, 0], sizes = [2, 12, 130], strides = [1, 1, 1]} : vector<2x14x132xf32> to vector<2x12x130xf32>
    %631 = vector.broadcast %381 : f32 to vector<2x12x130xf32>
    %632 = arith.mulf %630, %631 : vector<2x12x130xf32>
    %633 = vector.broadcast %408 : f32 to vector<2x12x130xf32>
    %634 = arith.mulf %630, %633 : vector<2x12x130xf32>
    %635 = vector.broadcast %435 : f32 to vector<2x12x130xf32>
    %636 = arith.mulf %630, %635 : vector<2x12x130xf32>
    %637 = vector.extract_strided_slice %362 {offsets = [0, 0, 1], sizes = [2, 12, 130], strides = [1, 1, 1]} : vector<2x14x132xf32> to vector<2x12x130xf32>
    %638 = vector.broadcast %382 : f32 to vector<2x12x130xf32>
    %639 = arith.mulf %637, %638 : vector<2x12x130xf32>
    %640 = arith.addf %632, %639 : vector<2x12x130xf32>
    %641 = vector.broadcast %409 : f32 to vector<2x12x130xf32>
    %642 = arith.mulf %637, %641 : vector<2x12x130xf32>
    %643 = arith.addf %634, %642 : vector<2x12x130xf32>
    %644 = vector.broadcast %436 : f32 to vector<2x12x130xf32>
    %645 = arith.mulf %637, %644 : vector<2x12x130xf32>
    %646 = arith.addf %636, %645 : vector<2x12x130xf32>
    %647 = vector.extract_strided_slice %362 {offsets = [0, 0, 2], sizes = [2, 12, 130], strides = [1, 1, 1]} : vector<2x14x132xf32> to vector<2x12x130xf32>
    %648 = vector.broadcast %383 : f32 to vector<2x12x130xf32>
    %649 = arith.mulf %647, %648 : vector<2x12x130xf32>
    %650 = arith.addf %640, %649 : vector<2x12x130xf32>
    %651 = vector.broadcast %410 : f32 to vector<2x12x130xf32>
    %652 = arith.mulf %647, %651 : vector<2x12x130xf32>
    %653 = arith.addf %643, %652 : vector<2x12x130xf32>
    %654 = vector.broadcast %437 : f32 to vector<2x12x130xf32>
    %655 = arith.mulf %647, %654 : vector<2x12x130xf32>
    %656 = arith.addf %646, %655 : vector<2x12x130xf32>
    %657 = vector.extract_strided_slice %362 {offsets = [0, 1, 0], sizes = [2, 12, 130], strides = [1, 1, 1]} : vector<2x14x132xf32> to vector<2x12x130xf32>
    %658 = vector.broadcast %384 : f32 to vector<2x12x130xf32>
    %659 = arith.mulf %657, %658 : vector<2x12x130xf32>
    %660 = arith.addf %650, %659 : vector<2x12x130xf32>
    %661 = vector.broadcast %411 : f32 to vector<2x12x130xf32>
    %662 = arith.mulf %657, %661 : vector<2x12x130xf32>
    %663 = arith.addf %653, %662 : vector<2x12x130xf32>
    %664 = vector.broadcast %438 : f32 to vector<2x12x130xf32>
    %665 = arith.mulf %657, %664 : vector<2x12x130xf32>
    %666 = arith.addf %656, %665 : vector<2x12x130xf32>
    %667 = vector.extract_strided_slice %362 {offsets = [0, 1, 1], sizes = [2, 12, 130], strides = [1, 1, 1]} : vector<2x14x132xf32> to vector<2x12x130xf32>
    %668 = vector.broadcast %385 : f32 to vector<2x12x130xf32>
    %669 = arith.mulf %667, %668 : vector<2x12x130xf32>
    %670 = arith.addf %660, %669 : vector<2x12x130xf32>
    %671 = vector.broadcast %412 : f32 to vector<2x12x130xf32>
    %672 = arith.mulf %667, %671 : vector<2x12x130xf32>
    %673 = arith.addf %663, %672 : vector<2x12x130xf32>
    %674 = vector.broadcast %439 : f32 to vector<2x12x130xf32>
    %675 = arith.mulf %667, %674 : vector<2x12x130xf32>
    %676 = arith.addf %666, %675 : vector<2x12x130xf32>
    %677 = vector.extract_strided_slice %362 {offsets = [0, 1, 2], sizes = [2, 12, 130], strides = [1, 1, 1]} : vector<2x14x132xf32> to vector<2x12x130xf32>
    %678 = vector.broadcast %386 : f32 to vector<2x12x130xf32>
    %679 = arith.mulf %677, %678 : vector<2x12x130xf32>
    %680 = arith.addf %670, %679 : vector<2x12x130xf32>
    %681 = vector.broadcast %413 : f32 to vector<2x12x130xf32>
    %682 = arith.mulf %677, %681 : vector<2x12x130xf32>
    %683 = arith.addf %673, %682 : vector<2x12x130xf32>
    %684 = vector.broadcast %440 : f32 to vector<2x12x130xf32>
    %685 = arith.mulf %677, %684 : vector<2x12x130xf32>
    %686 = arith.addf %676, %685 : vector<2x12x130xf32>
    %687 = vector.extract_strided_slice %362 {offsets = [0, 2, 0], sizes = [2, 12, 130], strides = [1, 1, 1]} : vector<2x14x132xf32> to vector<2x12x130xf32>
    %688 = vector.broadcast %387 : f32 to vector<2x12x130xf32>
    %689 = arith.mulf %687, %688 : vector<2x12x130xf32>
    %690 = arith.addf %680, %689 : vector<2x12x130xf32>
    %691 = vector.broadcast %414 : f32 to vector<2x12x130xf32>
    %692 = arith.mulf %687, %691 : vector<2x12x130xf32>
    %693 = arith.addf %683, %692 : vector<2x12x130xf32>
    %694 = vector.broadcast %441 : f32 to vector<2x12x130xf32>
    %695 = arith.mulf %687, %694 : vector<2x12x130xf32>
    %696 = arith.addf %686, %695 : vector<2x12x130xf32>
    %697 = vector.extract_strided_slice %362 {offsets = [0, 2, 1], sizes = [2, 12, 130], strides = [1, 1, 1]} : vector<2x14x132xf32> to vector<2x12x130xf32>
    %698 = vector.broadcast %388 : f32 to vector<2x12x130xf32>
    %699 = arith.mulf %697, %698 : vector<2x12x130xf32>
    %700 = arith.addf %690, %699 : vector<2x12x130xf32>
    %701 = vector.broadcast %415 : f32 to vector<2x12x130xf32>
    %702 = arith.mulf %697, %701 : vector<2x12x130xf32>
    %703 = arith.addf %693, %702 : vector<2x12x130xf32>
    %704 = vector.broadcast %442 : f32 to vector<2x12x130xf32>
    %705 = arith.mulf %697, %704 : vector<2x12x130xf32>
    %706 = arith.addf %696, %705 : vector<2x12x130xf32>
    %707 = vector.extract_strided_slice %362 {offsets = [0, 2, 2], sizes = [2, 12, 130], strides = [1, 1, 1]} : vector<2x14x132xf32> to vector<2x12x130xf32>
    %708 = vector.broadcast %389 : f32 to vector<2x12x130xf32>
    %709 = arith.mulf %707, %708 : vector<2x12x130xf32>
    %710 = arith.addf %700, %709 : vector<2x12x130xf32>
    %711 = vector.broadcast %416 : f32 to vector<2x12x130xf32>
    %712 = arith.mulf %707, %711 : vector<2x12x130xf32>
    %713 = arith.addf %703, %712 : vector<2x12x130xf32>
    %714 = vector.broadcast %443 : f32 to vector<2x12x130xf32>
    %715 = arith.mulf %707, %714 : vector<2x12x130xf32>
    %716 = arith.addf %706, %715 : vector<2x12x130xf32>
    %717 = arith.addf %627, %710 : vector<2x12x130xf32>
    %718 = arith.addf %628, %713 : vector<2x12x130xf32>
    %719 = arith.addf %629, %716 : vector<2x12x130xf32>
    %c162 = arith.constant 162 : index
    %720 = memref.load %arg0[%c162] : memref<243xf32, #tpu.memory_space<smem>>
    %c163 = arith.constant 163 : index
    %721 = memref.load %arg0[%c163] : memref<243xf32, #tpu.memory_space<smem>>
    %c164 = arith.constant 164 : index
    %722 = memref.load %arg0[%c164] : memref<243xf32, #tpu.memory_space<smem>>
    %c165 = arith.constant 165 : index
    %723 = memref.load %arg0[%c165] : memref<243xf32, #tpu.memory_space<smem>>
    %c166 = arith.constant 166 : index
    %724 = memref.load %arg0[%c166] : memref<243xf32, #tpu.memory_space<smem>>
    %c167 = arith.constant 167 : index
    %725 = memref.load %arg0[%c167] : memref<243xf32, #tpu.memory_space<smem>>
    %c168 = arith.constant 168 : index
    %726 = memref.load %arg0[%c168] : memref<243xf32, #tpu.memory_space<smem>>
    %c169 = arith.constant 169 : index
    %727 = memref.load %arg0[%c169] : memref<243xf32, #tpu.memory_space<smem>>
    %c170 = arith.constant 170 : index
    %728 = memref.load %arg0[%c170] : memref<243xf32, #tpu.memory_space<smem>>
    %c171 = arith.constant 171 : index
    %729 = memref.load %arg0[%c171] : memref<243xf32, #tpu.memory_space<smem>>
    %c172 = arith.constant 172 : index
    %730 = memref.load %arg0[%c172] : memref<243xf32, #tpu.memory_space<smem>>
    %c173 = arith.constant 173 : index
    %731 = memref.load %arg0[%c173] : memref<243xf32, #tpu.memory_space<smem>>
    %c174 = arith.constant 174 : index
    %732 = memref.load %arg0[%c174] : memref<243xf32, #tpu.memory_space<smem>>
    %c175 = arith.constant 175 : index
    %733 = memref.load %arg0[%c175] : memref<243xf32, #tpu.memory_space<smem>>
    %c176 = arith.constant 176 : index
    %734 = memref.load %arg0[%c176] : memref<243xf32, #tpu.memory_space<smem>>
    %c177 = arith.constant 177 : index
    %735 = memref.load %arg0[%c177] : memref<243xf32, #tpu.memory_space<smem>>
    %c178 = arith.constant 178 : index
    %736 = memref.load %arg0[%c178] : memref<243xf32, #tpu.memory_space<smem>>
    %c179 = arith.constant 179 : index
    %737 = memref.load %arg0[%c179] : memref<243xf32, #tpu.memory_space<smem>>
    %c180 = arith.constant 180 : index
    %738 = memref.load %arg0[%c180] : memref<243xf32, #tpu.memory_space<smem>>
    %c181 = arith.constant 181 : index
    %739 = memref.load %arg0[%c181] : memref<243xf32, #tpu.memory_space<smem>>
    %c182 = arith.constant 182 : index
    %740 = memref.load %arg0[%c182] : memref<243xf32, #tpu.memory_space<smem>>
    %c183 = arith.constant 183 : index
    %741 = memref.load %arg0[%c183] : memref<243xf32, #tpu.memory_space<smem>>
    %c184 = arith.constant 184 : index
    %742 = memref.load %arg0[%c184] : memref<243xf32, #tpu.memory_space<smem>>
    %c185 = arith.constant 185 : index
    %743 = memref.load %arg0[%c185] : memref<243xf32, #tpu.memory_space<smem>>
    %c186 = arith.constant 186 : index
    %744 = memref.load %arg0[%c186] : memref<243xf32, #tpu.memory_space<smem>>
    %c187 = arith.constant 187 : index
    %745 = memref.load %arg0[%c187] : memref<243xf32, #tpu.memory_space<smem>>
    %c188 = arith.constant 188 : index
    %746 = memref.load %arg0[%c188] : memref<243xf32, #tpu.memory_space<smem>>
    %c189 = arith.constant 189 : index
    %747 = memref.load %arg0[%c189] : memref<243xf32, #tpu.memory_space<smem>>
    %c190 = arith.constant 190 : index
    %748 = memref.load %arg0[%c190] : memref<243xf32, #tpu.memory_space<smem>>
    %c191 = arith.constant 191 : index
    %749 = memref.load %arg0[%c191] : memref<243xf32, #tpu.memory_space<smem>>
    %c192 = arith.constant 192 : index
    %750 = memref.load %arg0[%c192] : memref<243xf32, #tpu.memory_space<smem>>
    %c193 = arith.constant 193 : index
    %751 = memref.load %arg0[%c193] : memref<243xf32, #tpu.memory_space<smem>>
    %c194 = arith.constant 194 : index
    %752 = memref.load %arg0[%c194] : memref<243xf32, #tpu.memory_space<smem>>
    %c195 = arith.constant 195 : index
    %753 = memref.load %arg0[%c195] : memref<243xf32, #tpu.memory_space<smem>>
    %c196 = arith.constant 196 : index
    %754 = memref.load %arg0[%c196] : memref<243xf32, #tpu.memory_space<smem>>
    %c197 = arith.constant 197 : index
    %755 = memref.load %arg0[%c197] : memref<243xf32, #tpu.memory_space<smem>>
    %c198 = arith.constant 198 : index
    %756 = memref.load %arg0[%c198] : memref<243xf32, #tpu.memory_space<smem>>
    %c199 = arith.constant 199 : index
    %757 = memref.load %arg0[%c199] : memref<243xf32, #tpu.memory_space<smem>>
    %c200 = arith.constant 200 : index
    %758 = memref.load %arg0[%c200] : memref<243xf32, #tpu.memory_space<smem>>
    %c201 = arith.constant 201 : index
    %759 = memref.load %arg0[%c201] : memref<243xf32, #tpu.memory_space<smem>>
    %c202 = arith.constant 202 : index
    %760 = memref.load %arg0[%c202] : memref<243xf32, #tpu.memory_space<smem>>
    %c203 = arith.constant 203 : index
    %761 = memref.load %arg0[%c203] : memref<243xf32, #tpu.memory_space<smem>>
    %c204 = arith.constant 204 : index
    %762 = memref.load %arg0[%c204] : memref<243xf32, #tpu.memory_space<smem>>
    %c205 = arith.constant 205 : index
    %763 = memref.load %arg0[%c205] : memref<243xf32, #tpu.memory_space<smem>>
    %c206 = arith.constant 206 : index
    %764 = memref.load %arg0[%c206] : memref<243xf32, #tpu.memory_space<smem>>
    %c207 = arith.constant 207 : index
    %765 = memref.load %arg0[%c207] : memref<243xf32, #tpu.memory_space<smem>>
    %c208 = arith.constant 208 : index
    %766 = memref.load %arg0[%c208] : memref<243xf32, #tpu.memory_space<smem>>
    %c209 = arith.constant 209 : index
    %767 = memref.load %arg0[%c209] : memref<243xf32, #tpu.memory_space<smem>>
    %c210 = arith.constant 210 : index
    %768 = memref.load %arg0[%c210] : memref<243xf32, #tpu.memory_space<smem>>
    %c211 = arith.constant 211 : index
    %769 = memref.load %arg0[%c211] : memref<243xf32, #tpu.memory_space<smem>>
    %c212 = arith.constant 212 : index
    %770 = memref.load %arg0[%c212] : memref<243xf32, #tpu.memory_space<smem>>
    %c213 = arith.constant 213 : index
    %771 = memref.load %arg0[%c213] : memref<243xf32, #tpu.memory_space<smem>>
    %c214 = arith.constant 214 : index
    %772 = memref.load %arg0[%c214] : memref<243xf32, #tpu.memory_space<smem>>
    %c215 = arith.constant 215 : index
    %773 = memref.load %arg0[%c215] : memref<243xf32, #tpu.memory_space<smem>>
    %c216 = arith.constant 216 : index
    %774 = memref.load %arg0[%c216] : memref<243xf32, #tpu.memory_space<smem>>
    %c217 = arith.constant 217 : index
    %775 = memref.load %arg0[%c217] : memref<243xf32, #tpu.memory_space<smem>>
    %c218 = arith.constant 218 : index
    %776 = memref.load %arg0[%c218] : memref<243xf32, #tpu.memory_space<smem>>
    %c219 = arith.constant 219 : index
    %777 = memref.load %arg0[%c219] : memref<243xf32, #tpu.memory_space<smem>>
    %c220 = arith.constant 220 : index
    %778 = memref.load %arg0[%c220] : memref<243xf32, #tpu.memory_space<smem>>
    %c221 = arith.constant 221 : index
    %779 = memref.load %arg0[%c221] : memref<243xf32, #tpu.memory_space<smem>>
    %c222 = arith.constant 222 : index
    %780 = memref.load %arg0[%c222] : memref<243xf32, #tpu.memory_space<smem>>
    %c223 = arith.constant 223 : index
    %781 = memref.load %arg0[%c223] : memref<243xf32, #tpu.memory_space<smem>>
    %c224 = arith.constant 224 : index
    %782 = memref.load %arg0[%c224] : memref<243xf32, #tpu.memory_space<smem>>
    %c225 = arith.constant 225 : index
    %783 = memref.load %arg0[%c225] : memref<243xf32, #tpu.memory_space<smem>>
    %c226 = arith.constant 226 : index
    %784 = memref.load %arg0[%c226] : memref<243xf32, #tpu.memory_space<smem>>
    %c227 = arith.constant 227 : index
    %785 = memref.load %arg0[%c227] : memref<243xf32, #tpu.memory_space<smem>>
    %c228 = arith.constant 228 : index
    %786 = memref.load %arg0[%c228] : memref<243xf32, #tpu.memory_space<smem>>
    %c229 = arith.constant 229 : index
    %787 = memref.load %arg0[%c229] : memref<243xf32, #tpu.memory_space<smem>>
    %c230 = arith.constant 230 : index
    %788 = memref.load %arg0[%c230] : memref<243xf32, #tpu.memory_space<smem>>
    %c231 = arith.constant 231 : index
    %789 = memref.load %arg0[%c231] : memref<243xf32, #tpu.memory_space<smem>>
    %c232 = arith.constant 232 : index
    %790 = memref.load %arg0[%c232] : memref<243xf32, #tpu.memory_space<smem>>
    %c233 = arith.constant 233 : index
    %791 = memref.load %arg0[%c233] : memref<243xf32, #tpu.memory_space<smem>>
    %c234 = arith.constant 234 : index
    %792 = memref.load %arg0[%c234] : memref<243xf32, #tpu.memory_space<smem>>
    %c235 = arith.constant 235 : index
    %793 = memref.load %arg0[%c235] : memref<243xf32, #tpu.memory_space<smem>>
    %c236 = arith.constant 236 : index
    %794 = memref.load %arg0[%c236] : memref<243xf32, #tpu.memory_space<smem>>
    %c237 = arith.constant 237 : index
    %795 = memref.load %arg0[%c237] : memref<243xf32, #tpu.memory_space<smem>>
    %c238 = arith.constant 238 : index
    %796 = memref.load %arg0[%c238] : memref<243xf32, #tpu.memory_space<smem>>
    %c239 = arith.constant 239 : index
    %797 = memref.load %arg0[%c239] : memref<243xf32, #tpu.memory_space<smem>>
    %c240 = arith.constant 240 : index
    %798 = memref.load %arg0[%c240] : memref<243xf32, #tpu.memory_space<smem>>
    %c241 = arith.constant 241 : index
    %799 = memref.load %arg0[%c241] : memref<243xf32, #tpu.memory_space<smem>>
    %c242 = arith.constant 242 : index
    %800 = memref.load %arg0[%c242] : memref<243xf32, #tpu.memory_space<smem>>
    %c6_18 = arith.constant 6 : index
    %801 = memref.load %arg1[%c6_18] : memref<9xf32, #tpu.memory_space<smem>>
    %802 = vector.broadcast %801 : f32 to vector<2x10x128xf32>
    %c7_19 = arith.constant 7 : index
    %803 = memref.load %arg1[%c7_19] : memref<9xf32, #tpu.memory_space<smem>>
    %804 = vector.broadcast %803 : f32 to vector<2x10x128xf32>
    %c8_20 = arith.constant 8 : index
    %805 = memref.load %arg1[%c8_20] : memref<9xf32, #tpu.memory_space<smem>>
    %806 = vector.broadcast %805 : f32 to vector<2x10x128xf32>
    %807 = vector.extract_strided_slice %717 {offsets = [0, 0, 0], sizes = [2, 10, 128], strides = [1, 1, 1]} : vector<2x12x130xf32> to vector<2x10x128xf32>
    %808 = vector.broadcast %720 : f32 to vector<2x10x128xf32>
    %809 = arith.mulf %807, %808 : vector<2x10x128xf32>
    %810 = vector.broadcast %747 : f32 to vector<2x10x128xf32>
    %811 = arith.mulf %807, %810 : vector<2x10x128xf32>
    %812 = vector.broadcast %774 : f32 to vector<2x10x128xf32>
    %813 = arith.mulf %807, %812 : vector<2x10x128xf32>
    %814 = vector.extract_strided_slice %717 {offsets = [0, 0, 1], sizes = [2, 10, 128], strides = [1, 1, 1]} : vector<2x12x130xf32> to vector<2x10x128xf32>
    %815 = vector.broadcast %721 : f32 to vector<2x10x128xf32>
    %816 = arith.mulf %814, %815 : vector<2x10x128xf32>
    %817 = arith.addf %809, %816 : vector<2x10x128xf32>
    %818 = vector.broadcast %748 : f32 to vector<2x10x128xf32>
    %819 = arith.mulf %814, %818 : vector<2x10x128xf32>
    %820 = arith.addf %811, %819 : vector<2x10x128xf32>
    %821 = vector.broadcast %775 : f32 to vector<2x10x128xf32>
    %822 = arith.mulf %814, %821 : vector<2x10x128xf32>
    %823 = arith.addf %813, %822 : vector<2x10x128xf32>
    %824 = vector.extract_strided_slice %717 {offsets = [0, 0, 2], sizes = [2, 10, 128], strides = [1, 1, 1]} : vector<2x12x130xf32> to vector<2x10x128xf32>
    %825 = vector.broadcast %722 : f32 to vector<2x10x128xf32>
    %826 = arith.mulf %824, %825 : vector<2x10x128xf32>
    %827 = arith.addf %817, %826 : vector<2x10x128xf32>
    %828 = vector.broadcast %749 : f32 to vector<2x10x128xf32>
    %829 = arith.mulf %824, %828 : vector<2x10x128xf32>
    %830 = arith.addf %820, %829 : vector<2x10x128xf32>
    %831 = vector.broadcast %776 : f32 to vector<2x10x128xf32>
    %832 = arith.mulf %824, %831 : vector<2x10x128xf32>
    %833 = arith.addf %823, %832 : vector<2x10x128xf32>
    %834 = vector.extract_strided_slice %717 {offsets = [0, 1, 0], sizes = [2, 10, 128], strides = [1, 1, 1]} : vector<2x12x130xf32> to vector<2x10x128xf32>
    %835 = vector.broadcast %723 : f32 to vector<2x10x128xf32>
    %836 = arith.mulf %834, %835 : vector<2x10x128xf32>
    %837 = arith.addf %827, %836 : vector<2x10x128xf32>
    %838 = vector.broadcast %750 : f32 to vector<2x10x128xf32>
    %839 = arith.mulf %834, %838 : vector<2x10x128xf32>
    %840 = arith.addf %830, %839 : vector<2x10x128xf32>
    %841 = vector.broadcast %777 : f32 to vector<2x10x128xf32>
    %842 = arith.mulf %834, %841 : vector<2x10x128xf32>
    %843 = arith.addf %833, %842 : vector<2x10x128xf32>
    %844 = vector.extract_strided_slice %717 {offsets = [0, 1, 1], sizes = [2, 10, 128], strides = [1, 1, 1]} : vector<2x12x130xf32> to vector<2x10x128xf32>
    %845 = vector.broadcast %724 : f32 to vector<2x10x128xf32>
    %846 = arith.mulf %844, %845 : vector<2x10x128xf32>
    %847 = arith.addf %837, %846 : vector<2x10x128xf32>
    %848 = vector.broadcast %751 : f32 to vector<2x10x128xf32>
    %849 = arith.mulf %844, %848 : vector<2x10x128xf32>
    %850 = arith.addf %840, %849 : vector<2x10x128xf32>
    %851 = vector.broadcast %778 : f32 to vector<2x10x128xf32>
    %852 = arith.mulf %844, %851 : vector<2x10x128xf32>
    %853 = arith.addf %843, %852 : vector<2x10x128xf32>
    %854 = vector.extract_strided_slice %717 {offsets = [0, 1, 2], sizes = [2, 10, 128], strides = [1, 1, 1]} : vector<2x12x130xf32> to vector<2x10x128xf32>
    %855 = vector.broadcast %725 : f32 to vector<2x10x128xf32>
    %856 = arith.mulf %854, %855 : vector<2x10x128xf32>
    %857 = arith.addf %847, %856 : vector<2x10x128xf32>
    %858 = vector.broadcast %752 : f32 to vector<2x10x128xf32>
    %859 = arith.mulf %854, %858 : vector<2x10x128xf32>
    %860 = arith.addf %850, %859 : vector<2x10x128xf32>
    %861 = vector.broadcast %779 : f32 to vector<2x10x128xf32>
    %862 = arith.mulf %854, %861 : vector<2x10x128xf32>
    %863 = arith.addf %853, %862 : vector<2x10x128xf32>
    %864 = vector.extract_strided_slice %717 {offsets = [0, 2, 0], sizes = [2, 10, 128], strides = [1, 1, 1]} : vector<2x12x130xf32> to vector<2x10x128xf32>
    %865 = vector.broadcast %726 : f32 to vector<2x10x128xf32>
    %866 = arith.mulf %864, %865 : vector<2x10x128xf32>
    %867 = arith.addf %857, %866 : vector<2x10x128xf32>
    %868 = vector.broadcast %753 : f32 to vector<2x10x128xf32>
    %869 = arith.mulf %864, %868 : vector<2x10x128xf32>
    %870 = arith.addf %860, %869 : vector<2x10x128xf32>
    %871 = vector.broadcast %780 : f32 to vector<2x10x128xf32>
    %872 = arith.mulf %864, %871 : vector<2x10x128xf32>
    %873 = arith.addf %863, %872 : vector<2x10x128xf32>
    %874 = vector.extract_strided_slice %717 {offsets = [0, 2, 1], sizes = [2, 10, 128], strides = [1, 1, 1]} : vector<2x12x130xf32> to vector<2x10x128xf32>
    %875 = vector.broadcast %727 : f32 to vector<2x10x128xf32>
    %876 = arith.mulf %874, %875 : vector<2x10x128xf32>
    %877 = arith.addf %867, %876 : vector<2x10x128xf32>
    %878 = vector.broadcast %754 : f32 to vector<2x10x128xf32>
    %879 = arith.mulf %874, %878 : vector<2x10x128xf32>
    %880 = arith.addf %870, %879 : vector<2x10x128xf32>
    %881 = vector.broadcast %781 : f32 to vector<2x10x128xf32>
    %882 = arith.mulf %874, %881 : vector<2x10x128xf32>
    %883 = arith.addf %873, %882 : vector<2x10x128xf32>
    %884 = vector.extract_strided_slice %717 {offsets = [0, 2, 2], sizes = [2, 10, 128], strides = [1, 1, 1]} : vector<2x12x130xf32> to vector<2x10x128xf32>
    %885 = vector.broadcast %728 : f32 to vector<2x10x128xf32>
    %886 = arith.mulf %884, %885 : vector<2x10x128xf32>
    %887 = arith.addf %877, %886 : vector<2x10x128xf32>
    %888 = vector.broadcast %755 : f32 to vector<2x10x128xf32>
    %889 = arith.mulf %884, %888 : vector<2x10x128xf32>
    %890 = arith.addf %880, %889 : vector<2x10x128xf32>
    %891 = vector.broadcast %782 : f32 to vector<2x10x128xf32>
    %892 = arith.mulf %884, %891 : vector<2x10x128xf32>
    %893 = arith.addf %883, %892 : vector<2x10x128xf32>
    %894 = arith.addf %802, %887 : vector<2x10x128xf32>
    %895 = arith.addf %804, %890 : vector<2x10x128xf32>
    %896 = arith.addf %806, %893 : vector<2x10x128xf32>
    %897 = vector.extract_strided_slice %718 {offsets = [0, 0, 0], sizes = [2, 10, 128], strides = [1, 1, 1]} : vector<2x12x130xf32> to vector<2x10x128xf32>
    %898 = vector.broadcast %729 : f32 to vector<2x10x128xf32>
    %899 = arith.mulf %897, %898 : vector<2x10x128xf32>
    %900 = vector.broadcast %756 : f32 to vector<2x10x128xf32>
    %901 = arith.mulf %897, %900 : vector<2x10x128xf32>
    %902 = vector.broadcast %783 : f32 to vector<2x10x128xf32>
    %903 = arith.mulf %897, %902 : vector<2x10x128xf32>
    %904 = vector.extract_strided_slice %718 {offsets = [0, 0, 1], sizes = [2, 10, 128], strides = [1, 1, 1]} : vector<2x12x130xf32> to vector<2x10x128xf32>
    %905 = vector.broadcast %730 : f32 to vector<2x10x128xf32>
    %906 = arith.mulf %904, %905 : vector<2x10x128xf32>
    %907 = arith.addf %899, %906 : vector<2x10x128xf32>
    %908 = vector.broadcast %757 : f32 to vector<2x10x128xf32>
    %909 = arith.mulf %904, %908 : vector<2x10x128xf32>
    %910 = arith.addf %901, %909 : vector<2x10x128xf32>
    %911 = vector.broadcast %784 : f32 to vector<2x10x128xf32>
    %912 = arith.mulf %904, %911 : vector<2x10x128xf32>
    %913 = arith.addf %903, %912 : vector<2x10x128xf32>
    %914 = vector.extract_strided_slice %718 {offsets = [0, 0, 2], sizes = [2, 10, 128], strides = [1, 1, 1]} : vector<2x12x130xf32> to vector<2x10x128xf32>
    %915 = vector.broadcast %731 : f32 to vector<2x10x128xf32>
    %916 = arith.mulf %914, %915 : vector<2x10x128xf32>
    %917 = arith.addf %907, %916 : vector<2x10x128xf32>
    %918 = vector.broadcast %758 : f32 to vector<2x10x128xf32>
    %919 = arith.mulf %914, %918 : vector<2x10x128xf32>
    %920 = arith.addf %910, %919 : vector<2x10x128xf32>
    %921 = vector.broadcast %785 : f32 to vector<2x10x128xf32>
    %922 = arith.mulf %914, %921 : vector<2x10x128xf32>
    %923 = arith.addf %913, %922 : vector<2x10x128xf32>
    %924 = vector.extract_strided_slice %718 {offsets = [0, 1, 0], sizes = [2, 10, 128], strides = [1, 1, 1]} : vector<2x12x130xf32> to vector<2x10x128xf32>
    %925 = vector.broadcast %732 : f32 to vector<2x10x128xf32>
    %926 = arith.mulf %924, %925 : vector<2x10x128xf32>
    %927 = arith.addf %917, %926 : vector<2x10x128xf32>
    %928 = vector.broadcast %759 : f32 to vector<2x10x128xf32>
    %929 = arith.mulf %924, %928 : vector<2x10x128xf32>
    %930 = arith.addf %920, %929 : vector<2x10x128xf32>
    %931 = vector.broadcast %786 : f32 to vector<2x10x128xf32>
    %932 = arith.mulf %924, %931 : vector<2x10x128xf32>
    %933 = arith.addf %923, %932 : vector<2x10x128xf32>
    %934 = vector.extract_strided_slice %718 {offsets = [0, 1, 1], sizes = [2, 10, 128], strides = [1, 1, 1]} : vector<2x12x130xf32> to vector<2x10x128xf32>
    %935 = vector.broadcast %733 : f32 to vector<2x10x128xf32>
    %936 = arith.mulf %934, %935 : vector<2x10x128xf32>
    %937 = arith.addf %927, %936 : vector<2x10x128xf32>
    %938 = vector.broadcast %760 : f32 to vector<2x10x128xf32>
    %939 = arith.mulf %934, %938 : vector<2x10x128xf32>
    %940 = arith.addf %930, %939 : vector<2x10x128xf32>
    %941 = vector.broadcast %787 : f32 to vector<2x10x128xf32>
    %942 = arith.mulf %934, %941 : vector<2x10x128xf32>
    %943 = arith.addf %933, %942 : vector<2x10x128xf32>
    %944 = vector.extract_strided_slice %718 {offsets = [0, 1, 2], sizes = [2, 10, 128], strides = [1, 1, 1]} : vector<2x12x130xf32> to vector<2x10x128xf32>
    %945 = vector.broadcast %734 : f32 to vector<2x10x128xf32>
    %946 = arith.mulf %944, %945 : vector<2x10x128xf32>
    %947 = arith.addf %937, %946 : vector<2x10x128xf32>
    %948 = vector.broadcast %761 : f32 to vector<2x10x128xf32>
    %949 = arith.mulf %944, %948 : vector<2x10x128xf32>
    %950 = arith.addf %940, %949 : vector<2x10x128xf32>
    %951 = vector.broadcast %788 : f32 to vector<2x10x128xf32>
    %952 = arith.mulf %944, %951 : vector<2x10x128xf32>
    %953 = arith.addf %943, %952 : vector<2x10x128xf32>
    %954 = vector.extract_strided_slice %718 {offsets = [0, 2, 0], sizes = [2, 10, 128], strides = [1, 1, 1]} : vector<2x12x130xf32> to vector<2x10x128xf32>
    %955 = vector.broadcast %735 : f32 to vector<2x10x128xf32>
    %956 = arith.mulf %954, %955 : vector<2x10x128xf32>
    %957 = arith.addf %947, %956 : vector<2x10x128xf32>
    %958 = vector.broadcast %762 : f32 to vector<2x10x128xf32>
    %959 = arith.mulf %954, %958 : vector<2x10x128xf32>
    %960 = arith.addf %950, %959 : vector<2x10x128xf32>
    %961 = vector.broadcast %789 : f32 to vector<2x10x128xf32>
    %962 = arith.mulf %954, %961 : vector<2x10x128xf32>
    %963 = arith.addf %953, %962 : vector<2x10x128xf32>
    %964 = vector.extract_strided_slice %718 {offsets = [0, 2, 1], sizes = [2, 10, 128], strides = [1, 1, 1]} : vector<2x12x130xf32> to vector<2x10x128xf32>
    %965 = vector.broadcast %736 : f32 to vector<2x10x128xf32>
    %966 = arith.mulf %964, %965 : vector<2x10x128xf32>
    %967 = arith.addf %957, %966 : vector<2x10x128xf32>
    %968 = vector.broadcast %763 : f32 to vector<2x10x128xf32>
    %969 = arith.mulf %964, %968 : vector<2x10x128xf32>
    %970 = arith.addf %960, %969 : vector<2x10x128xf32>
    %971 = vector.broadcast %790 : f32 to vector<2x10x128xf32>
    %972 = arith.mulf %964, %971 : vector<2x10x128xf32>
    %973 = arith.addf %963, %972 : vector<2x10x128xf32>
    %974 = vector.extract_strided_slice %718 {offsets = [0, 2, 2], sizes = [2, 10, 128], strides = [1, 1, 1]} : vector<2x12x130xf32> to vector<2x10x128xf32>
    %975 = vector.broadcast %737 : f32 to vector<2x10x128xf32>
    %976 = arith.mulf %974, %975 : vector<2x10x128xf32>
    %977 = arith.addf %967, %976 : vector<2x10x128xf32>
    %978 = vector.broadcast %764 : f32 to vector<2x10x128xf32>
    %979 = arith.mulf %974, %978 : vector<2x10x128xf32>
    %980 = arith.addf %970, %979 : vector<2x10x128xf32>
    %981 = vector.broadcast %791 : f32 to vector<2x10x128xf32>
    %982 = arith.mulf %974, %981 : vector<2x10x128xf32>
    %983 = arith.addf %973, %982 : vector<2x10x128xf32>
    %984 = arith.addf %894, %977 : vector<2x10x128xf32>
    %985 = arith.addf %895, %980 : vector<2x10x128xf32>
    %986 = arith.addf %896, %983 : vector<2x10x128xf32>
    %987 = vector.extract_strided_slice %719 {offsets = [0, 0, 0], sizes = [2, 10, 128], strides = [1, 1, 1]} : vector<2x12x130xf32> to vector<2x10x128xf32>
    %988 = vector.broadcast %738 : f32 to vector<2x10x128xf32>
    %989 = arith.mulf %987, %988 : vector<2x10x128xf32>
    %990 = vector.broadcast %765 : f32 to vector<2x10x128xf32>
    %991 = arith.mulf %987, %990 : vector<2x10x128xf32>
    %992 = vector.broadcast %792 : f32 to vector<2x10x128xf32>
    %993 = arith.mulf %987, %992 : vector<2x10x128xf32>
    %994 = vector.extract_strided_slice %719 {offsets = [0, 0, 1], sizes = [2, 10, 128], strides = [1, 1, 1]} : vector<2x12x130xf32> to vector<2x10x128xf32>
    %995 = vector.broadcast %739 : f32 to vector<2x10x128xf32>
    %996 = arith.mulf %994, %995 : vector<2x10x128xf32>
    %997 = arith.addf %989, %996 : vector<2x10x128xf32>
    %998 = vector.broadcast %766 : f32 to vector<2x10x128xf32>
    %999 = arith.mulf %994, %998 : vector<2x10x128xf32>
    %1000 = arith.addf %991, %999 : vector<2x10x128xf32>
    %1001 = vector.broadcast %793 : f32 to vector<2x10x128xf32>
    %1002 = arith.mulf %994, %1001 : vector<2x10x128xf32>
    %1003 = arith.addf %993, %1002 : vector<2x10x128xf32>
    %1004 = vector.extract_strided_slice %719 {offsets = [0, 0, 2], sizes = [2, 10, 128], strides = [1, 1, 1]} : vector<2x12x130xf32> to vector<2x10x128xf32>
    %1005 = vector.broadcast %740 : f32 to vector<2x10x128xf32>
    %1006 = arith.mulf %1004, %1005 : vector<2x10x128xf32>
    %1007 = arith.addf %997, %1006 : vector<2x10x128xf32>
    %1008 = vector.broadcast %767 : f32 to vector<2x10x128xf32>
    %1009 = arith.mulf %1004, %1008 : vector<2x10x128xf32>
    %1010 = arith.addf %1000, %1009 : vector<2x10x128xf32>
    %1011 = vector.broadcast %794 : f32 to vector<2x10x128xf32>
    %1012 = arith.mulf %1004, %1011 : vector<2x10x128xf32>
    %1013 = arith.addf %1003, %1012 : vector<2x10x128xf32>
    %1014 = vector.extract_strided_slice %719 {offsets = [0, 1, 0], sizes = [2, 10, 128], strides = [1, 1, 1]} : vector<2x12x130xf32> to vector<2x10x128xf32>
    %1015 = vector.broadcast %741 : f32 to vector<2x10x128xf32>
    %1016 = arith.mulf %1014, %1015 : vector<2x10x128xf32>
    %1017 = arith.addf %1007, %1016 : vector<2x10x128xf32>
    %1018 = vector.broadcast %768 : f32 to vector<2x10x128xf32>
    %1019 = arith.mulf %1014, %1018 : vector<2x10x128xf32>
    %1020 = arith.addf %1010, %1019 : vector<2x10x128xf32>
    %1021 = vector.broadcast %795 : f32 to vector<2x10x128xf32>
    %1022 = arith.mulf %1014, %1021 : vector<2x10x128xf32>
    %1023 = arith.addf %1013, %1022 : vector<2x10x128xf32>
    %1024 = vector.extract_strided_slice %719 {offsets = [0, 1, 1], sizes = [2, 10, 128], strides = [1, 1, 1]} : vector<2x12x130xf32> to vector<2x10x128xf32>
    %1025 = vector.broadcast %742 : f32 to vector<2x10x128xf32>
    %1026 = arith.mulf %1024, %1025 : vector<2x10x128xf32>
    %1027 = arith.addf %1017, %1026 : vector<2x10x128xf32>
    %1028 = vector.broadcast %769 : f32 to vector<2x10x128xf32>
    %1029 = arith.mulf %1024, %1028 : vector<2x10x128xf32>
    %1030 = arith.addf %1020, %1029 : vector<2x10x128xf32>
    %1031 = vector.broadcast %796 : f32 to vector<2x10x128xf32>
    %1032 = arith.mulf %1024, %1031 : vector<2x10x128xf32>
    %1033 = arith.addf %1023, %1032 : vector<2x10x128xf32>
    %1034 = vector.extract_strided_slice %719 {offsets = [0, 1, 2], sizes = [2, 10, 128], strides = [1, 1, 1]} : vector<2x12x130xf32> to vector<2x10x128xf32>
    %1035 = vector.broadcast %743 : f32 to vector<2x10x128xf32>
    %1036 = arith.mulf %1034, %1035 : vector<2x10x128xf32>
    %1037 = arith.addf %1027, %1036 : vector<2x10x128xf32>
    %1038 = vector.broadcast %770 : f32 to vector<2x10x128xf32>
    %1039 = arith.mulf %1034, %1038 : vector<2x10x128xf32>
    %1040 = arith.addf %1030, %1039 : vector<2x10x128xf32>
    %1041 = vector.broadcast %797 : f32 to vector<2x10x128xf32>
    %1042 = arith.mulf %1034, %1041 : vector<2x10x128xf32>
    %1043 = arith.addf %1033, %1042 : vector<2x10x128xf32>
    %1044 = vector.extract_strided_slice %719 {offsets = [0, 2, 0], sizes = [2, 10, 128], strides = [1, 1, 1]} : vector<2x12x130xf32> to vector<2x10x128xf32>
    %1045 = vector.broadcast %744 : f32 to vector<2x10x128xf32>
    %1046 = arith.mulf %1044, %1045 : vector<2x10x128xf32>
    %1047 = arith.addf %1037, %1046 : vector<2x10x128xf32>
    %1048 = vector.broadcast %771 : f32 to vector<2x10x128xf32>
    %1049 = arith.mulf %1044, %1048 : vector<2x10x128xf32>
    %1050 = arith.addf %1040, %1049 : vector<2x10x128xf32>
    %1051 = vector.broadcast %798 : f32 to vector<2x10x128xf32>
    %1052 = arith.mulf %1044, %1051 : vector<2x10x128xf32>
    %1053 = arith.addf %1043, %1052 : vector<2x10x128xf32>
    %1054 = vector.extract_strided_slice %719 {offsets = [0, 2, 1], sizes = [2, 10, 128], strides = [1, 1, 1]} : vector<2x12x130xf32> to vector<2x10x128xf32>
    %1055 = vector.broadcast %745 : f32 to vector<2x10x128xf32>
    %1056 = arith.mulf %1054, %1055 : vector<2x10x128xf32>
    %1057 = arith.addf %1047, %1056 : vector<2x10x128xf32>
    %1058 = vector.broadcast %772 : f32 to vector<2x10x128xf32>
    %1059 = arith.mulf %1054, %1058 : vector<2x10x128xf32>
    %1060 = arith.addf %1050, %1059 : vector<2x10x128xf32>
    %1061 = vector.broadcast %799 : f32 to vector<2x10x128xf32>
    %1062 = arith.mulf %1054, %1061 : vector<2x10x128xf32>
    %1063 = arith.addf %1053, %1062 : vector<2x10x128xf32>
    %1064 = vector.extract_strided_slice %719 {offsets = [0, 2, 2], sizes = [2, 10, 128], strides = [1, 1, 1]} : vector<2x12x130xf32> to vector<2x10x128xf32>
    %1065 = vector.broadcast %746 : f32 to vector<2x10x128xf32>
    %1066 = arith.mulf %1064, %1065 : vector<2x10x128xf32>
    %1067 = arith.addf %1057, %1066 : vector<2x10x128xf32>
    %1068 = vector.broadcast %773 : f32 to vector<2x10x128xf32>
    %1069 = arith.mulf %1064, %1068 : vector<2x10x128xf32>
    %1070 = arith.addf %1060, %1069 : vector<2x10x128xf32>
    %1071 = vector.broadcast %800 : f32 to vector<2x10x128xf32>
    %1072 = arith.mulf %1064, %1071 : vector<2x10x128xf32>
    %1073 = arith.addf %1063, %1072 : vector<2x10x128xf32>
    %1074 = arith.addf %984, %1067 : vector<2x10x128xf32>
    %1075 = arith.addf %985, %1070 : vector<2x10x128xf32>
    %1076 = arith.addf %986, %1073 : vector<2x10x128xf32>
    %c0_21 = arith.constant 0 : index
    %c0_22 = arith.constant 0 : index
    %c0_23 = arith.constant 0 : index
    %c0_24 = arith.constant 0 : index
    %1077 = vector.load %arg3[%c0_21, %c0_22, %c0_23, %c0_24] : memref<2x3x10x128xf32, #tpu.memory_space<vmem>>, vector<2x1x10x128xf32>
    %1078 = vector.shape_cast %1077 : vector<2x1x10x128xf32> to vector<2x10x128xf32>
    %1079 = vector.shape_cast %1074 : vector<2x10x128xf32> to vector<2x1x10x128xf32>
    tpu.vector_store %arg3[%c0_21, %c0_22, %c0_23, %c0_24], %1079 {strides = array<i32>} : memref<2x3x10x128xf32, #tpu.memory_space<vmem>>, vector<2x1x10x128xf32>,
    %c0_25 = arith.constant 0 : index
    %c1_26 = arith.constant 1 : index
    %c0_27 = arith.constant 0 : index
    %c0_28 = arith.constant 0 : index
    %1080 = vector.load %arg3[%c0_25, %c1_26, %c0_27, %c0_28] : memref<2x3x10x128xf32, #tpu.memory_space<vmem>>, vector<2x1x10x128xf32>
    %1081 = vector.shape_cast %1080 : vector<2x1x10x128xf32> to vector<2x10x128xf32>
    %1082 = vector.shape_cast %1075 : vector<2x10x128xf32> to vector<2x1x10x128xf32>
    tpu.vector_store %arg3[%c0_25, %c1_26, %c0_27, %c0_28], %1082 {strides = array<i32>} : memref<2x3x10x128xf32, #tpu.memory_space<vmem>>, vector<2x1x10x128xf32>,
    %c0_29 = arith.constant 0 : index
    %c2_30 = arith.constant 2 : index
    %c0_31 = arith.constant 0 : index
    %c0_32 = arith.constant 0 : index
    %1083 = vector.load %arg3[%c0_29, %c2_30, %c0_31, %c0_32] : memref<2x3x10x128xf32, #tpu.memory_space<vmem>>, vector<2x1x10x128xf32>
    %1084 = vector.shape_cast %1083 : vector<2x1x10x128xf32> to vector<2x10x128xf32>
    %1085 = vector.shape_cast %1076 : vector<2x10x128xf32> to vector<2x1x10x128xf32>
    tpu.vector_store %arg3[%c0_29, %c2_30, %c0_31, %c0_32], %1085 {strides = array<i32>} : memref<2x3x10x128xf32, #tpu.memory_space<vmem>>, vector<2x1x10x128xf32>,
    return
  }
}

</mosaic_0001>

<llo_original>
// kernel: net_forward.1
$region0: #{net_forward.1}
  #allocation0 [shape = 'u32[]', space=smem, size = 0x4, offset = 0x4, fixed_abs, tag = 'smem constant byte address 0x4 - core index']
  #allocation1 [shape = 'u32[72,128]{1,0:T(1,128)}', space=vmem, size = 0x9000, scoped, tag = 'internal scratch']
  %s0 = inlined_call_operand.vmem [shape: f32[243], index: 0, kind: input, shape index: {}]
  %s1 = inlined_call_operand.vmem [shape: f32[9], index: 1, kind: input, shape index: {}]
  %s2 = inlined_call_operand.vmem [shape: f32[2,3,16,134], index: 2, kind: input, shape index: {}]
  %s3 = inlined_call_operand.vmem [shape: f32[2,3,10,128], index: 3, kind: output, shape index: {}]
  %s4 = sld [smem:[#allocation0]]
  $region30: #{net_forward.1} parent=0
    _
  %s6 = ssub.s32 1, %s4
  %s7 = scalar_select 0, %s6, %s4
  $region1: #{net_forward.1} parent=0
    #allocation2 [shape = 'u8[1024]{0}', space=smem, size = 0x400, scoped, tag = 'input window, operand 0, single buffered']
    #allocation3 [shape = 's32[1]{0}', space=sflag, size = 0x4, scoped, tag = 'scoped memory for net_forward.1']
    #allocation4 [shape = 'u8[512]{0}', space=smem, size = 0x200, scoped, tag = 'input window, operand 1, single buffered']
    #allocation5 [shape = 's32[1]{0}', space=sflag, size = 0x4, scoped, tag = 'scoped memory for net_forward.1']
    %8 = vsyncpa [#allocation3], 0
    %9 = vsyncpa [#allocation5], 0
    // Predicated region
    $region2: #{net_forward.1} parent=1 // pred_check
      _
    $region3: #{net_forward.1} parent=1 // pred_check_branch
      %11 = sbr.rel (0) target = $region5
    $region4: #{net_forward.1} parent=1 // pred_region
      %13 = vsyncadd [#allocation3], 0
      %s15 = sshll.u32 %s0, 4
      %s16 = int_to_ptr.vmem [resolvable:$true] %s15
      %18 = dma.vmem_to_smem %s16, 32, [#allocation2], [#allocation3]
    $region5: #{net_forward.1} parent=1 // pred_fallthru
      _
    // Predicated region
    $region6: #{net_forward.1} parent=1 // pred_check
      _
    $region7: #{net_forward.1} parent=1 // pred_check_branch
      %20 = sbr.rel (0) target = $region9
    $region8: #{net_forward.1} parent=1 // pred_region
      %22 = vsyncadd [#allocation5], 0
      %s24 = sshll.u32 %s1, 4
      %s25 = int_to_ptr.vmem [resolvable:$true] %s24
      %27 = dma.vmem_to_smem %s25, 16, [#allocation4], [#allocation5]
    $region9: #{net_forward.1} parent=1 // pred_fallthru
      _
    // Predicated region
    $region10: #{net_forward.1} parent=1 // pred_check
      _
    $region11: #{net_forward.1} parent=1 // pred_check_branch
      %29 = sbr.rel (0) target = $region13
    $region12: #{net_forward.1} parent=1 // pred_region
      _
    $region13: #{net_forward.1} parent=1 // pred_fallthru
      _
    // Predicated region
    $region14: #{net_forward.1} parent=1 // pred_check
      _
    $region15: #{net_forward.1} parent=1 // pred_check_branch
      %31 = sbr.rel (0) target = $region17
    $region16: #{net_forward.1} parent=1 // pred_region
      %33 = dma.done [#allocation3], 32
    $region17: #{net_forward.1} parent=1 // pred_fallthru
      _
    // Predicated region
    $region18: #{net_forward.1} parent=1 // pred_check
      _
    $region19: #{net_forward.1} parent=1 // pred_check_branch
      %35 = sbr.rel (0) target = $region21
    $region20: #{net_forward.1} parent=1 // pred_region
      %37 = dma.done [#allocation5], 16
    $region21: #{net_forward.1} parent=1 // pred_fallthru
      _
    %38 = sfence
    %v39 = vld [vmem:[%s2] sm:$0xff]
    %v40 = vld [vmem:[%s2 + $0x8] sm:$0xff]
    %v41 = vld [vmem:[%s2 + $0x10] sm:$0xff]
    %v42 = vld [vmem:[%s2 + $0x18] sm:$0xff]
    %v43 = vld [vmem:[%s2 + $0x60] sm:$0xff]
    %v44 = vld [vmem:[%s2 + $0x68] sm:$0xff]
    %v45 = vld [vmem:[%s2 + $0x70] sm:$0xff]
    %v46 = vld [vmem:[%s2 + $0x78] sm:$0xff]
    %s47 = scalar_lea.vmem %s2, 32
    %v48 = vld [vmem:[%s47] sm:$0xff]
    %v49 = vld [vmem:[%s47 + $0x8] sm:$0xff]
    %v50 = vld [vmem:[%s47 + $0x10] sm:$0xff]
    %v51 = vld [vmem:[%s47 + $0x18] sm:$0xff]
    %v52 = vld [vmem:[%s47 + $0x60] sm:$0xff]
    %v53 = vld [vmem:[%s47 + $0x68] sm:$0xff]
    %v54 = vld [vmem:[%s47 + $0x70] sm:$0xff]
    %v55 = vld [vmem:[%s47 + $0x78] sm:$0xff]
    %s56 = scalar_lea.vmem %s2, 64
    %v57 = vld [vmem:[%s56] sm:$0xff]
    %v58 = vld [vmem:[%s56 + $0x8] sm:$0xff]
    %v59 = vld [vmem:[%s56 + $0x10] sm:$0xff]
    %v60 = vld [vmem:[%s56 + $0x18] sm:$0xff]
    %v61 = vld [vmem:[%s56 + $0x60] sm:$0xff]
    %v62 = vld [vmem:[%s56 + $0x68] sm:$0xff]
    %v63 = vld [vmem:[%s56 + $0x70] sm:$0xff]
    %v64 = vld [vmem:[%s56 + $0x78] sm:$0xff]
    %s65 = sld [smem:[#allocation2]]
    %s66 = sld [smem:[#allocation2 + $0x1]]
    %s67 = sld [smem:[#allocation2 + $0x2]]
    %s68 = sld [smem:[#allocation2 + $0x3]]
    %s69 = sld [smem:[#allocation2 + $0x4]]
    %s70 = sld [smem:[#allocation2 + $0x5]]
    %s71 = sld [smem:[#allocation2 + $0x6]]
    %s72 = sld [smem:[#allocation2 + $0x7]]
    %s73 = sld [smem:[#allocation2 + $0x8]]
    %s74 = sld [smem:[#allocation2 + $0x9]]
    %s75 = sld [smem:[#allocation2 + $0xa]]
    %s76 = sld [smem:[#allocation2 + $0xb]]
    %s77 = sld [smem:[#allocation2 + $0xc]]
    %s78 = sld [smem:[#allocation2 + $0xd]]
    %s79 = sld [smem:[#allocation2 + $0xe]]
    %s80 = sld [smem:[#allocation2 + $0xf]]
    %s81 = sld [smem:[#allocation2 + $0x10]]
    %s82 = sld [smem:[#allocation2 + $0x11]]
    %s83 = sld [smem:[#allocation2 + $0x12]]
    %s84 = sld [smem:[#allocation2 + $0x13]]
    %s85 = sld [smem:[#allocation2 + $0x14]]
    %s86 = sld [smem:[#allocation2 + $0x15]]
    %s87 = sld [smem:[#allocation2 + $0x16]]
    %s88 = sld [smem:[#allocation2 + $0x17]]
    %s89 = sld [smem:[#allocation2 + $0x18]]
    %s90 = sld [smem:[#allocation2 + $0x19]]
    %s91 = sld [smem:[#allocation2 + $0x1a]]
    %s92 = sld [smem:[#allocation2 + $0x1b]]
    %s93 = sld [smem:[#allocation2 + $0x1c]]
    %s94 = sld [smem:[#allocation2 + $0x1d]]
    %s95 = sld [smem:[#allocation2 + $0x1e]]
    %s96 = sld [smem:[#allocation2 + $0x1f]]
    %s97 = sld [smem:[#allocation2 + $0x20]]
    %s98 = sld [smem:[#allocation2 + $0x21]]
    %s99 = sld [smem:[#allocation2 + $0x22]]
    %s100 = sld [smem:[#allocation2 + $0x23]]
    %s101 = sld [smem:[#allocation2 + $0x24]]
    %s102 = sld [smem:[#allocation2 + $0x25]]
    %s103 = sld [smem:[#allocation2 + $0x26]]
    %s104 = sld [smem:[#allocation2 + $0x27]]
    %s105 = sld [smem:[#allocation2 + $0x28]]
    %s106 = sld [smem:[#allocation2 + $0x29]]
    %s107 = sld [smem:[#allocation2 + $0x2a]]
    %s108 = sld [smem:[#allocation2 + $0x2b]]
    %s109 = sld [smem:[#allocation2 + $0x2c]]
    %s110 = sld [smem:[#allocation2 + $0x2d]]
    %s111 = sld [smem:[#allocation2 + $0x2e]]
    %s112 = sld [smem:[#allocation2 + $0x2f]]
    %s113 = sld [smem:[#allocation2 + $0x30]]
    %s114 = sld [smem:[#allocation2 + $0x31]]
    %s115 = sld [smem:[#allocation2 + $0x32]]
    %s116 = sld [smem:[#allocation2 + $0x33]]
    %s117 = sld [smem:[#allocation2 + $0x34]]
    %s118 = sld [smem:[#allocation2 + $0x35]]
    %s119 = sld [smem:[#allocation2 + $0x36]]
    %s120 = sld [smem:[#allocation2 + $0x37]]
    %s121 = sld [smem:[#allocation2 + $0x38]]
    %s122 = sld [smem:[#allocation2 + $0x39]]
    %s123 = sld [smem:[#allocation2 + $0x3a]]
    %s124 = sld [smem:[#allocation2 + $0x3b]]
    %s125 = sld [smem:[#allocation2 + $0x3c]]
    %s126 = sld [smem:[#allocation2 + $0x3d]]
    %s127 = sld [smem:[#allocation2 + $0x3e]]
    %s128 = sld [smem:[#allocation2 + $0x3f]]
    %s129 = sld [smem:[#allocation2 + $0x40]]
    %s130 = sld [smem:[#allocation2 + $0x41]]
    %s131 = sld [smem:[#allocation2 + $0x42]]
    %s132 = sld [smem:[#allocation2 + $0x43]]
    %s133 = sld [smem:[#allocation2 + $0x44]]
    %s134 = sld [smem:[#allocation2 + $0x45]]
    %s135 = sld [smem:[#allocation2 + $0x46]]
    %s136 = sld [smem:[#allocation2 + $0x47]]
    %s137 = sld [smem:[#allocation2 + $0x48]]
    %s138 = sld [smem:[#allocation2 + $0x49]]
    %s139 = sld [smem:[#allocation2 + $0x4a]]
    %s140 = sld [smem:[#allocation2 + $0x4b]]
    %s141 = sld [smem:[#allocation2 + $0x4c]]
    %s142 = sld [smem:[#allocation2 + $0x4d]]
    %s143 = sld [smem:[#allocation2 + $0x4e]]
    %s144 = sld [smem:[#allocation2 + $0x4f]]
    %s145 = sld [smem:[#allocation2 + $0x50]]
    %s146 = sld [smem:[#allocation4]]
    %v147 = vstv %s146
    %s148 = sld [smem:[#allocation4 + $0x1]]
    %v149 = vstv %s148
    %s150 = sld [smem:[#allocation4 + $0x2]]
    %v151 = vstv %s150
    %v152 = vstv %s65
    %v153 = vmul.f32 %v39, %v152
    %v154 = vmul.f32 %v40, %v152
    %v155 = vmul.f32 %v41, %v152
    %v156 = vmul.f32 %v42, %v152
    %v157 = vmul.f32 %v43, %v152
    %v158 = vmul.f32 %v44, %v152
    %v159 = vmul.f32 %v45, %v152
    %v160 = vmul.f32 %v46, %v152
    %v161 = vstv %s92
    %v162 = vmul.f32 %v39, %v161
    %v163 = vmul.f32 %v40, %v161
    %v164 = vmul.f32 %v41, %v161
    %v165 = vmul.f32 %v42, %v161
    %v166 = vmul.f32 %v43, %v161
    %v167 = vmul.f32 %v44, %v161
    %v168 = vmul.f32 %v45, %v161
    %v169 = vmul.f32 %v46, %v161
    %v170 = vstv %s119
    %v171 = vmul.f32 %v39, %v170
    %v172 = vmul.f32 %v40, %v170
    %v173 = vmul.f32 %v41, %v170
    %v174 = vmul.f32 %v42, %v170
    %v175 = vmul.f32 %v43, %v170
    %v176 = vmul.f32 %v44, %v170
    %v177 = vmul.f32 %v45, %v170
    %v178 = vmul.f32 %v46, %v170
    %v179 = vstv %s66
    %v180 = vmul.f32 %v39, %v179
    %v181 = vmul.f32 %v40, %v179
    %v182 = vmul.f32 %v41, %v179
    %v183 = vmul.f32 %v42, %v179
    %v184 = vmul.f32 %v43, %v179
    %v185 = vmul.f32 %v44, %v179
    %v186 = vmul.f32 %v45, %v179
    %v187 = vmul.f32 %v46, %v179
    %196 = vrot.lane.b32.xlu0 %v180, 127
    %v197 = vpop.permute.xlu0 %196
    %198 = vrot.lane.b32.xlu0 %v181, 127
    %v199 = vpop.permute.xlu0 %198
    %200 = vrot.lane.b32.xlu0 %v182, 127
    %v201 = vpop.permute.xlu0 %200
    %202 = vrot.lane.b32.xlu0 %v183, 127
    %v203 = vpop.permute.xlu0 %202
    %204 = vrot.lane.b32.xlu0 %v184, 127
    %v205 = vpop.permute.xlu0 %204
    %206 = vrot.lane.b32.xlu0 %v185, 127
    %v207 = vpop.permute.xlu0 %206
    %208 = vrot.lane.b32.xlu0 %v186, 127
    %v209 = vpop.permute.xlu0 %208
    %210 = vrot.lane.b32.xlu0 %v187, 127
    %v211 = vpop.permute.xlu0 %210
    %vm212 = vcmask 1039360
    %v213 = vsel %vm212, %v197, %v199
    %v214 = vsel %vm212, %v201, %v203
    %v215 = vsel %vm212, %v205, %v207
    %v216 = vsel %vm212, %v209, %v211
    %v225 = vadd.f32 %v153, %v213
    %v226 = vadd.f32 %v154, %v199
    %v227 = vadd.f32 %v155, %v214
    %v228 = vadd.f32 %v156, %v203
    %v229 = vadd.f32 %v157, %v215
    %v230 = vadd.f32 %v158, %v207
    %v231 = vadd.f32 %v159, %v216
    %v232 = vadd.f32 %v160, %v211
    %v233 = vstv %s93
    %v234 = vmul.f32 %v39, %v233
    %v235 = vmul.f32 %v40, %v233
    %v236 = vmul.f32 %v41, %v233
    %v237 = vmul.f32 %v42, %v233
    %v238 = vmul.f32 %v43, %v233
    %v239 = vmul.f32 %v44, %v233
    %v240 = vmul.f32 %v45, %v233
    %v241 = vmul.f32 %v46, %v233
    %250 = vrot.lane.b32.xlu0 %v234, 127
    %v251 = vpop.permute.xlu0 %250
    %252 = vrot.lane.b32.xlu0 %v235, 127
    %v253 = vpop.permute.xlu0 %252
    %254 = vrot.lane.b32.xlu0 %v236, 127
    %v255 = vpop.permute.xlu0 %254
    %256 = vrot.lane.b32.xlu0 %v237, 127
    %v257 = vpop.permute.xlu0 %256
    %258 = vrot.lane.b32.xlu0 %v238, 127
    %v259 = vpop.permute.xlu0 %258
    %260 = vrot.lane.b32.xlu0 %v239, 127
    %v261 = vpop.permute.xlu0 %260
    %262 = vrot.lane.b32.xlu0 %v240, 127
    %v263 = vpop.permute.xlu0 %262
    %264 = vrot.lane.b32.xlu0 %v241, 127
    %v265 = vpop.permute.xlu0 %264
    %v266 = vsel %vm212, %v251, %v253
    %v267 = vsel %vm212, %v255, %v257
    %v268 = vsel %vm212, %v259, %v261
    %v269 = vsel %vm212, %v263, %v265
    %v278 = vadd.f32 %v162, %v266
    %v279 = vadd.f32 %v163, %v253
    %v280 = vadd.f32 %v164, %v267
    %v281 = vadd.f32 %v165, %v257
    %v282 = vadd.f32 %v166, %v268
    %v283 = vadd.f32 %v167, %v261
    %v284 = vadd.f32 %v168, %v269
    %v285 = vadd.f32 %v169, %v265
    %v286 = vstv %s120
    %v287 = vmul.f32 %v39, %v286
    %v288 = vmul.f32 %v40, %v286
    %v289 = vmul.f32 %v41, %v286
    %v290 = vmul.f32 %v42, %v286
    %v291 = vmul.f32 %v43, %v286
    %v292 = vmul.f32 %v44, %v286
    %v293 = vmul.f32 %v45, %v286
    %v294 = vmul.f32 %v46, %v286
    %303 = vrot.lane.b32.xlu0 %v287, 127
    %v304 = vpop.permute.xlu0 %303
    %305 = vrot.lane.b32.xlu0 %v288, 127
    %v306 = vpop.permute.xlu0 %305
    %307 = vrot.lane.b32.xlu0 %v289, 127
    %v308 = vpop.permute.xlu0 %307
    %309 = vrot.lane.b32.xlu0 %v290, 127
    %v310 = vpop.permute.xlu0 %309
    %311 = vrot.lane.b32.xlu0 %v291, 127
    %v312 = vpop.permute.xlu0 %311
    %313 = vrot.lane.b32.xlu0 %v292, 127
    %v314 = vpop.permute.xlu0 %313
    %315 = vrot.lane.b32.xlu0 %v293, 127
    %v316 = vpop.permute.xlu0 %315
    %317 = vrot.lane.b32.xlu0 %v294, 127
    %v318 = vpop.permute.xlu0 %317
    %v319 = vsel %vm212, %v304, %v306
    %v320 = vsel %vm212, %v308, %v310
    %v321 = vsel %vm212, %v312, %v314
    %v322 = vsel %vm212, %v316, %v318
    %v331 = vadd.f32 %v171, %v319
    %v332 = vadd.f32 %v172, %v306
    %v333 = vadd.f32 %v173, %v320
    %v334 = vadd.f32 %v174, %v310
    %v335 = vadd.f32 %v175, %v321
    %v336 = vadd.f32 %v176, %v314
    %v337 = vadd.f32 %v177, %v322
    %v338 = vadd.f32 %v178, %v318
    %v339 = vstv %s67
    %v340 = vmul.f32 %v39, %v339
    %v341 = vmul.f32 %v40, %v339
    %v342 = vmul.f32 %v41, %v339
    %v343 = vmul.f32 %v42, %v339
    %v344 = vmul.f32 %v43, %v339
    %v345 = vmul.f32 %v44, %v339
    %v346 = vmul.f32 %v45, %v339
    %v347 = vmul.f32 %v46, %v339
    %356 = vrot.lane.b32.xlu0 %v340, 126
    %v357 = vpop.permute.xlu0 %356
    %358 = vrot.lane.b32.xlu0 %v341, 126
    %v359 = vpop.permute.xlu0 %358
    %360 = vrot.lane.b32.xlu0 %v342, 126
    %v361 = vpop.permute.xlu0 %360
    %362 = vrot.lane.b32.xlu0 %v343, 126
    %v363 = vpop.permute.xlu0 %362
    %364 = vrot.lane.b32.xlu0 %v344, 126
    %v365 = vpop.permute.xlu0 %364
    %366 = vrot.lane.b32.xlu0 %v345, 126
    %v367 = vpop.permute.xlu0 %366
    %368 = vrot.lane.b32.xlu0 %v346, 126
    %v369 = vpop.permute.xlu0 %368
    %370 = vrot.lane.b32.xlu0 %v347, 126
    %v371 = vpop.permute.xlu0 %370
    %vm372 = vcmask 1031168
    %v373 = vsel %vm372, %v357, %v359
    %v374 = vsel %vm372, %v361, %v363
    %v375 = vsel %vm372, %v365, %v367
    %v376 = vsel %vm372, %v369, %v371
    %v385 = vadd.f32 %v225, %v373
    %v386 = vadd.f32 %v226, %v359
    %v387 = vadd.f32 %v227, %v374
    %v388 = vadd.f32 %v228, %v363
    %v389 = vadd.f32 %v229, %v375
    %v390 = vadd.f32 %v230, %v367
    %v391 = vadd.f32 %v231, %v376
    %v392 = vadd.f32 %v232, %v371
    %v393 = vstv %s94
    %v394 = vmul.f32 %v39, %v393
    %v395 = vmul.f32 %v40, %v393
    %v396 = vmul.f32 %v41, %v393
    %v397 = vmul.f32 %v42, %v393
    %v398 = vmul.f32 %v43, %v393
    %v399 = vmul.f32 %v44, %v393
    %v400 = vmul.f32 %v45, %v393
    %v401 = vmul.f32 %v46, %v393
    %410 = vrot.lane.b32.xlu0 %v394, 126
    %v411 = vpop.permute.xlu0 %410
    %412 = vrot.lane.b32.xlu0 %v395, 126
    %v413 = vpop.permute.xlu0 %412
    %414 = vrot.lane.b32.xlu0 %v396, 126
    %v415 = vpop.permute.xlu0 %414
    %416 = vrot.lane.b32.xlu0 %v397, 126
    %v417 = vpop.permute.xlu0 %416
    %418 = vrot.lane.b32.xlu0 %v398, 126
    %v419 = vpop.permute.xlu0 %418
    %420 = vrot.lane.b32.xlu0 %v399, 126
    %v421 = vpop.permute.xlu0 %420
    %422 = vrot.lane.b32.xlu0 %v400, 126
    %v423 = vpop.permute.xlu0 %422
    %424 = vrot.lane.b32.xlu0 %v401, 126
    %v425 = vpop.permute.xlu0 %424
    %v426 = vsel %vm372, %v411, %v413
    %v427 = vsel %vm372, %v415, %v417
    %v428 = vsel %vm372, %v419, %v421
    %v429 = vsel %vm372, %v423, %v425
    %v438 = vadd.f32 %v278, %v426
    %v439 = vadd.f32 %v279, %v413
    %v440 = vadd.f32 %v280, %v427
    %v441 = vadd.f32 %v281, %v417
    %v442 = vadd.f32 %v282, %v428
    %v443 = vadd.f32 %v283, %v421
    %v444 = vadd.f32 %v284, %v429
    %v445 = vadd.f32 %v285, %v425
    %v446 = vstv %s121
    %v447 = vmul.f32 %v39, %v446
    %v448 = vmul.f32 %v40, %v446
    %v449 = vmul.f32 %v41, %v446
    %v450 = vmul.f32 %v42, %v446
    %v451 = vmul.f32 %v43, %v446
    %v452 = vmul.f32 %v44, %v446
    %v453 = vmul.f32 %v45, %v446
    %v454 = vmul.f32 %v46, %v446
    %463 = vrot.lane.b32.xlu0 %v447, 126
    %v464 = vpop.permute.xlu0 %463
    %465 = vrot.lane.b32.xlu0 %v448, 126
    %v466 = vpop.permute.xlu0 %465
    %467 = vrot.lane.b32.xlu0 %v449, 126
    %v468 = vpop.permute.xlu0 %467
    %469 = vrot.lane.b32.xlu0 %v450, 126
    %v470 = vpop.permute.xlu0 %469
    %471 = vrot.lane.b32.xlu0 %v451, 126
    %v472 = vpop.permute.xlu0 %471
    %473 = vrot.lane.b32.xlu0 %v452, 126
    %v474 = vpop.permute.xlu0 %473
    %475 = vrot.lane.b32.xlu0 %v453, 126
    %v476 = vpop.permute.xlu0 %475
    %477 = vrot.lane.b32.xlu0 %v454, 126
    %v478 = vpop.permute.xlu0 %477
    %v479 = vsel %vm372, %v464, %v466
    %v480 = vsel %vm372, %v468, %v470
    %v481 = vsel %vm372, %v472, %v474
    %v482 = vsel %vm372, %v476, %v478
    %v491 = vadd.f32 %v331, %v479
    %v492 = vadd.f32 %v332, %v466
    %v493 = vadd.f32 %v333, %v480
    %v494 = vadd.f32 %v334, %v470
    %v495 = vadd.f32 %v335, %v481
    %v496 = vadd.f32 %v336, %v474
    %v497 = vadd.f32 %v337, %v482
    %v498 = vadd.f32 %v338, %v478
    %v499 = vstv %s68
    %v500 = vmul.f32 %v39, %v499
    %v501 = vmul.f32 %v40, %v499
    %v502 = vmul.f32 %v41, %v499
    %v503 = vmul.f32 %v42, %v499
    %v504 = vmul.f32 %v43, %v499
    %v505 = vmul.f32 %v44, %v499
    %v506 = vmul.f32 %v45, %v499
    %v507 = vmul.f32 %v46, %v499
    %vm516 = vcmask 1046528
    %v517 = vrot.slane %v500, 1
    %v518 = vrot.slane %v502, 1
    %v519 = vsel %vm516, %v517, %v518
    %v520 = vrot.slane %v501, 1
    %v521 = vrot.slane %v503, 1
    %v522 = vsel %vm516, %v520, %v521
    %v523 = vrot.slane %v504, 1
    %v524 = vrot.slane %v506, 1
    %v525 = vsel %vm516, %v523, %v524
    %v526 = vrot.slane %v505, 1
    %v527 = vrot.slane %v507, 1
    %v528 = vsel %vm516, %v526, %v527
    %v537 = vadd.f32 %v385, %v519
    %v538 = vadd.f32 %v386, %v522
    %v539 = vadd.f32 %v387, %v518
    %v540 = vadd.f32 %v388, %v521
    %v541 = vadd.f32 %v389, %v525
    %v542 = vadd.f32 %v390, %v528
    %v543 = vadd.f32 %v391, %v524
    %v544 = vadd.f32 %v392, %v527
    %v545 = vstv %s95
    %v546 = vmul.f32 %v39, %v545
    %v547 = vmul.f32 %v40, %v545
    %v548 = vmul.f32 %v41, %v545
    %v549 = vmul.f32 %v42, %v545
    %v550 = vmul.f32 %v43, %v545
    %v551 = vmul.f32 %v44, %v545
    %v552 = vmul.f32 %v45, %v545
    %v553 = vmul.f32 %v46, %v545
    %v562 = vrot.slane %v546, 1
    %v563 = vrot.slane %v548, 1
    %v564 = vsel %vm516, %v562, %v563
    %v565 = vrot.slane %v547, 1
    %v566 = vrot.slane %v549, 1
    %v567 = vsel %vm516, %v565, %v566
    %v568 = vrot.slane %v550, 1
    %v569 = vrot.slane %v552, 1
    %v570 = vsel %vm516, %v568, %v569
    %v571 = vrot.slane %v551, 1
    %v572 = vrot.slane %v553, 1
    %v573 = vsel %vm516, %v571, %v572
    %v582 = vadd.f32 %v438, %v564
    %v583 = vadd.f32 %v439, %v567
    %v584 = vadd.f32 %v440, %v563
    %v585 = vadd.f32 %v441, %v566
    %v586 = vadd.f32 %v442, %v570
    %v587 = vadd.f32 %v443, %v573
    %v588 = vadd.f32 %v444, %v569
    %v589 = vadd.f32 %v445, %v572
    %v590 = vstv %s122
    %v591 = vmul.f32 %v39, %v590
    %v592 = vmul.f32 %v40, %v590
    %v593 = vmul.f32 %v41, %v590
    %v594 = vmul.f32 %v42, %v590
    %v595 = vmul.f32 %v43, %v590
    %v596 = vmul.f32 %v44, %v590
    %v597 = vmul.f32 %v45, %v590
    %v598 = vmul.f32 %v46, %v590
    %v607 = vrot.slane %v591, 1
    %v608 = vrot.slane %v593, 1
    %v609 = vsel %vm516, %v607, %v608
    %v610 = vrot.slane %v592, 1
    %v611 = vrot.slane %v594, 1
    %v612 = vsel %vm516, %v610, %v611
    %v613 = vrot.slane %v595, 1
    %v614 = vrot.slane %v597, 1
    %v615 = vsel %vm516, %v613, %v614
    %v616 = vrot.slane %v596, 1
    %v617 = vrot.slane %v598, 1
    %v618 = vsel %vm516, %v616, %v617
    %v627 = vadd.f32 %v491, %v609
    %v628 = vadd.f32 %v492, %v612
    %v629 = vadd.f32 %v493, %v608
    %v630 = vadd.f32 %v494, %v611
    %v631 = vadd.f32 %v495, %v615
    %v632 = vadd.f32 %v496, %v618
    %v633 = vadd.f32 %v497, %v614
    %v634 = vadd.f32 %v498, %v617
    %v635 = vstv %s69
    %v636 = vmul.f32 %v39, %v635
    %v637 = vmul.f32 %v40, %v635
    %v638 = vmul.f32 %v41, %v635
    %v639 = vmul.f32 %v42, %v635
    %v640 = vmul.f32 %v43, %v635
    %v641 = vmul.f32 %v44, %v635
    %v642 = vmul.f32 %v45, %v635
    %v643 = vmul.f32 %v46, %v635
    %v652 = vrot.slane %v636, 1
    %v653 = vrot.slane %v638, 1
    %v654 = vsel %vm516, %v652, %v653
    %v655 = vrot.slane %v637, 1
    %v656 = vrot.slane %v639, 1
    %v657 = vsel %vm516, %v655, %v656
    %v658 = vrot.slane %v640, 1
    %v659 = vrot.slane %v642, 1
    %v660 = vsel %vm516, %v658, %v659
    %v661 = vrot.slane %v641, 1
    %v662 = vrot.slane %v643, 1
    %v663 = vsel %vm516, %v661, %v662
    %664 = vrot.lane.b32.xlu0 %v654, 127
    %v665 = vpop.permute.xlu0 %664
    %666 = vrot.lane.b32.xlu0 %v657, 127
    %v667 = vpop.permute.xlu0 %666
    %668 = vrot.lane.b32.xlu0 %v653, 127
    %v669 = vpop.permute.xlu0 %668
    %670 = vrot.lane.b32.xlu0 %v656, 127
    %v671 = vpop.permute.xlu0 %670
    %672 = vrot.lane.b32.xlu0 %v660, 127
    %v673 = vpop.permute.xlu0 %672
    %674 = vrot.lane.b32.xlu0 %v663, 127
    %v675 = vpop.permute.xlu0 %674
    %676 = vrot.lane.b32.xlu0 %v659, 127
    %v677 = vpop.permute.xlu0 %676
    %678 = vrot.lane.b32.xlu0 %v662, 127
    %v679 = vpop.permute.xlu0 %678
    %v680 = vsel %vm212, %v665, %v667
    %v681 = vsel %vm212, %v669, %v671
    %v682 = vsel %vm212, %v673, %v675
    %v683 = vsel %vm212, %v677, %v679
    %v692 = vadd.f32 %v537, %v680
    %v693 = vadd.f32 %v538, %v667
    %v694 = vadd.f32 %v539, %v681
    %v695 = vadd.f32 %v540, %v671
    %v696 = vadd.f32 %v541, %v682
    %v697 = vadd.f32 %v542, %v675
    %v698 = vadd.f32 %v543, %v683
    %v699 = vadd.f32 %v544, %v679
    %v700 = vstv %s96
    %v701 = vmul.f32 %v39, %v700
    %v702 = vmul.f32 %v40, %v700
    %v703 = vmul.f32 %v41, %v700
    %v704 = vmul.f32 %v42, %v700
    %v705 = vmul.f32 %v43, %v700
    %v706 = vmul.f32 %v44, %v700
    %v707 = vmul.f32 %v45, %v700
    %v708 = vmul.f32 %v46, %v700
    %v717 = vrot.slane %v701, 1
    %v718 = vrot.slane %v703, 1
    %v719 = vsel %vm516, %v717, %v718
    %v720 = vrot.slane %v702, 1
    %v721 = vrot.slane %v704, 1
    %v722 = vsel %vm516, %v720, %v721
    %v723 = vrot.slane %v705, 1
    %v724 = vrot.slane %v707, 1
    %v725 = vsel %vm516, %v723, %v724
    %v726 = vrot.slane %v706, 1
    %v727 = vrot.slane %v708, 1
    %v728 = vsel %vm516, %v726, %v727
    %729 = vrot.lane.b32.xlu0 %v719, 127
    %v730 = vpop.permute.xlu0 %729
    %731 = vrot.lane.b32.xlu0 %v722, 127
    %v732 = vpop.permute.xlu0 %731
    %733 = vrot.lane.b32.xlu0 %v718, 127
    %v734 = vpop.permute.xlu0 %733
    %735 = vrot.lane.b32.xlu0 %v721, 127
    %v736 = vpop.permute.xlu0 %735
    %737 = vrot.lane.b32.xlu0 %v725, 127
    %v738 = vpop.permute.xlu0 %737
    %739 = vrot.lane.b32.xlu0 %v728, 127
    %v740 = vpop.permute.xlu0 %739
    %741 = vrot.lane.b32.xlu0 %v724, 127
    %v742 = vpop.permute.xlu0 %741
    %743 = vrot.lane.b32.xlu0 %v727, 127
    %v744 = vpop.permute.xlu0 %743
    %v745 = vsel %vm212, %v730, %v732
    %v746 = vsel %vm212, %v734, %v736
    %v747 = vsel %vm212, %v738, %v740
    %v748 = vsel %vm212, %v742, %v744
    %v757 = vadd.f32 %v582, %v745
    %v758 = vadd.f32 %v583, %v732
    %v759 = vadd.f32 %v584, %v746
    %v760 = vadd.f32 %v585, %v736
    %v761 = vadd.f32 %v586, %v747
    %v762 = vadd.f32 %v587, %v740
    %v763 = vadd.f32 %v588, %v748
    %v764 = vadd.f32 %v589, %v744
    %v765 = vstv %s123
    %v766 = vmul.f32 %v39, %v765
    %v767 = vmul.f32 %v40, %v765
    %v768 = vmul.f32 %v41, %v765
    %v769 = vmul.f32 %v42, %v765
    %v770 = vmul.f32 %v43, %v765
    %v771 = vmul.f32 %v44, %v765
    %v772 = vmul.f32 %v45, %v765
    %v773 = vmul.f32 %v46, %v765
    %v782 = vrot.slane %v766, 1
    %v783 = vrot.slane %v768, 1
    %v784 = vsel %vm516, %v782, %v783
    %v785 = vrot.slane %v767, 1
    %v786 = vrot.slane %v769, 1
    %v787 = vsel %vm516, %v785, %v786
    %v788 = vrot.slane %v770, 1
    %v789 = vrot.slane %v772, 1
    %v790 = vsel %vm516, %v788, %v789
    %v791 = vrot.slane %v771, 1
    %v792 = vrot.slane %v773, 1
    %v793 = vsel %vm516, %v791, %v792
    %794 = vrot.lane.b32.xlu0 %v784, 127
    %v795 = vpop.permute.xlu0 %794
    %796 = vrot.lane.b32.xlu0 %v787, 127
    %v797 = vpop.permute.xlu0 %796
    %798 = vrot.lane.b32.xlu0 %v783, 127
    %v799 = vpop.permute.xlu0 %798
    %800 = vrot.lane.b32.xlu0 %v786, 127
    %v801 = vpop.permute.xlu0 %800
    %802 = vrot.lane.b32.xlu0 %v790, 127
    %v803 = vpop.permute.xlu0 %802
    %804 = vrot.lane.b32.xlu0 %v793, 127
    %v805 = vpop.permute.xlu0 %804
    %806 = vrot.lane.b32.xlu0 %v789, 127
    %v807 = vpop.permute.xlu0 %806
    %808 = vrot.lane.b32.xlu0 %v792, 127
    %v809 = vpop.permute.xlu0 %808
    %v810 = vsel %vm212, %v795, %v797
    %v811 = vsel %vm212, %v799, %v801
    %v812 = vsel %vm212, %v803, %v805
    %v813 = vsel %vm212, %v807, %v809
    %v822 = vadd.f32 %v627, %v810
    %v823 = vadd.f32 %v628, %v797
    %v824 = vadd.f32 %v629, %v811
    %v825 = vadd.f32 %v630, %v801
    %v826 = vadd.f32 %v631, %v812
    %v827 = vadd.f32 %v632, %v805
    %v828 = vadd.f32 %v633, %v813
    %v829 = vadd.f32 %v634, %v809
    %v830 = vstv %s70
    %v831 = vmul.f32 %v39, %v830
    %v832 = vmul.f32 %v40, %v830
    %v833 = vmul.f32 %v41, %v830
    %v834 = vmul.f32 %v42, %v830
    %v835 = vmul.f32 %v43, %v830
    %v836 = vmul.f32 %v44, %v830
    %v837 = vmul.f32 %v45, %v830
    %v838 = vmul.f32 %v46, %v830
    %v847 = vrot.slane %v831, 1
    %v848 = vrot.slane %v833, 1
    %v849 = vsel %vm516, %v847, %v848
    %v850 = vrot.slane %v832, 1
    %v851 = vrot.slane %v834, 1
    %v852 = vsel %vm516, %v850, %v851
    %v853 = vrot.slane %v835, 1
    %v854 = vrot.slane %v837, 1
    %v855 = vsel %vm516, %v853, %v854
    %v856 = vrot.slane %v836, 1
    %v857 = vrot.slane %v838, 1
    %v858 = vsel %vm516, %v856, %v857
    %859 = vrot.lane.b32.xlu0 %v849, 126
    %v860 = vpop.permute.xlu0 %859
    %861 = vrot.lane.b32.xlu0 %v852, 126
    %v862 = vpop.permute.xlu0 %861
    %863 = vrot.lane.b32.xlu0 %v848, 126
    %v864 = vpop.permute.xlu0 %863
    %865 = vrot.lane.b32.xlu0 %v851, 126
    %v866 = vpop.permute.xlu0 %865
    %867 = vrot.lane.b32.xlu0 %v855, 126
    %v868 = vpop.permute.xlu0 %867
    %869 = vrot.lane.b32.xlu0 %v858, 126
    %v870 = vpop.permute.xlu0 %869
    %871 = vrot.lane.b32.xlu0 %v854, 126
    %v872 = vpop.permute.xlu0 %871
    %873 = vrot.lane.b32.xlu0 %v857, 126
    %v874 = vpop.permute.xlu0 %873
    %v875 = vsel %vm372, %v860, %v862
    %v876 = vsel %vm372, %v864, %v866
    %v877 = vsel %vm372, %v868, %v870
    %v878 = vsel %vm372, %v872, %v874
    %v887 = vadd.f32 %v692, %v875
    %v888 = vadd.f32 %v693, %v862
    %v889 = vadd.f32 %v694, %v876
    %v890 = vadd.f32 %v695, %v866
    %v891 = vadd.f32 %v696, %v877
    %v892 = vadd.f32 %v697, %v870
    %v893 = vadd.f32 %v698, %v878
    %v894 = vadd.f32 %v699, %v874
    %v895 = vstv %s97
    %v896 = vmul.f32 %v39, %v895
    %v897 = vmul.f32 %v40, %v895
    %v898 = vmul.f32 %v41, %v895
    %v899 = vmul.f32 %v42, %v895
    %v900 = vmul.f32 %v43, %v895
    %v901 = vmul.f32 %v44, %v895
    %v902 = vmul.f32 %v45, %v895
    %v903 = vmul.f32 %v46, %v895
    %v912 = vrot.slane %v896, 1
    %v913 = vrot.slane %v898, 1
    %v914 = vsel %vm516, %v912, %v913
    %v915 = vrot.slane %v897, 1
    %v916 = vrot.slane %v899, 1
    %v917 = vsel %vm516, %v915, %v916
    %v918 = vrot.slane %v900, 1
    %v919 = vrot.slane %v902, 1
    %v920 = vsel %vm516, %v918, %v919
    %v921 = vrot.slane %v901, 1
    %v922 = vrot.slane %v903, 1
    %v923 = vsel %vm516, %v921, %v922
    %924 = vrot.lane.b32.xlu0 %v914, 126
    %v925 = vpop.permute.xlu0 %924
    %926 = vrot.lane.b32.xlu0 %v917, 126
    %v927 = vpop.permute.xlu0 %926
    %928 = vrot.lane.b32.xlu0 %v913, 126
    %v929 = vpop.permute.xlu0 %928
    %930 = vrot.lane.b32.xlu0 %v916, 126
    %v931 = vpop.permute.xlu0 %930
    %932 = vrot.lane.b32.xlu0 %v920, 126
    %v933 = vpop.permute.xlu0 %932
    %934 = vrot.lane.b32.xlu0 %v923, 126
    %v935 = vpop.permute.xlu0 %934
    %936 = vrot.lane.b32.xlu0 %v919, 126
    %v937 = vpop.permute.xlu0 %936
    %938 = vrot.lane.b32.xlu0 %v922, 126
    %v939 = vpop.permute.xlu0 %938
    %v940 = vsel %vm372, %v925, %v927
    %v941 = vsel %vm372, %v929, %v931
    %v942 = vsel %vm372, %v933, %v935
    %v943 = vsel %vm372, %v937, %v939
    %v952 = vadd.f32 %v757, %v940
    %v953 = vadd.f32 %v758, %v927
    %v954 = vadd.f32 %v759, %v941
    %v955 = vadd.f32 %v760, %v931
    %v956 = vadd.f32 %v761, %v942
    %v957 = vadd.f32 %v762, %v935
    %v958 = vadd.f32 %v763, %v943
    %v959 = vadd.f32 %v764, %v939
    %v960 = vstv %s124
    %v961 = vmul.f32 %v39, %v960
    %v962 = vmul.f32 %v40, %v960
    %v963 = vmul.f32 %v41, %v960
    %v964 = vmul.f32 %v42, %v960
    %v965 = vmul.f32 %v43, %v960
    %v966 = vmul.f32 %v44, %v960
    %v967 = vmul.f32 %v45, %v960
    %v968 = vmul.f32 %v46, %v960
    %v977 = vrot.slane %v961, 1
    %v978 = vrot.slane %v963, 1
    %v979 = vsel %vm516, %v977, %v978
    %v980 = vrot.slane %v962, 1
    %v981 = vrot.slane %v964, 1
    %v982 = vsel %vm516, %v980, %v981
    %v983 = vrot.slane %v965, 1
    %v984 = vrot.slane %v967, 1
    %v985 = vsel %vm516, %v983, %v984
    %v986 = vrot.slane %v966, 1
    %v987 = vrot.slane %v968, 1
    %v988 = vsel %vm516, %v986, %v987
    %989 = vrot.lane.b32.xlu0 %v979, 126
    %v990 = vpop.permute.xlu0 %989
    %991 = vrot.lane.b32.xlu0 %v982, 126
    %v992 = vpop.permute.xlu0 %991
    %993 = vrot.lane.b32.xlu0 %v978, 126
    %v994 = vpop.permute.xlu0 %993
    %995 = vrot.lane.b32.xlu0 %v981, 126
    %v996 = vpop.permute.xlu0 %995
    %997 = vrot.lane.b32.xlu0 %v985, 126
    %v998 = vpop.permute.xlu0 %997
    %999 = vrot.lane.b32.xlu0 %v988, 126
    %v1000 = vpop.permute.xlu0 %999
    %1001 = vrot.lane.b32.xlu0 %v984, 126
    %v1002 = vpop.permute.xlu0 %1001
    %1003 = vrot.lane.b32.xlu0 %v987, 126
    %v1004 = vpop.permute.xlu0 %1003
    %v1005 = vsel %vm372, %v990, %v992
    %v1006 = vsel %vm372, %v994, %v996
    %v1007 = vsel %vm372, %v998, %v1000
    %v1008 = vsel %vm372, %v1002, %v1004
    %v1017 = vadd.f32 %v822, %v1005
    %v1018 = vadd.f32 %v823, %v992
    %v1019 = vadd.f32 %v824, %v1006
    %v1020 = vadd.f32 %v825, %v996
    %v1021 = vadd.f32 %v826, %v1007
    %v1022 = vadd.f32 %v827, %v1000
    %v1023 = vadd.f32 %v828, %v1008
    %v1024 = vadd.f32 %v829, %v1004
    %v1025 = vstv %s71
    %v1026 = vmul.f32 %v39, %v1025
    %v1027 = vmul.f32 %v40, %v1025
    %v1028 = vmul.f32 %v41, %v1025
    %v1029 = vmul.f32 %v42, %v1025
    %v1030 = vmul.f32 %v43, %v1025
    %v1031 = vmul.f32 %v44, %v1025
    %v1032 = vmul.f32 %v45, %v1025
    %v1033 = vmul.f32 %v46, %v1025
    %vm1042 = vcmask 1045504
    %v1043 = vrot.slane %v1026, 2
    %v1044 = vrot.slane %v1028, 2
    %v1045 = vsel %vm1042, %v1043, %v1044
    %v1046 = vrot.slane %v1027, 2
    %v1047 = vrot.slane %v1029, 2
    %v1048 = vsel %vm1042, %v1046, %v1047
    %v1049 = vrot.slane %v1030, 2
    %v1050 = vrot.slane %v1032, 2
    %v1051 = vsel %vm1042, %v1049, %v1050
    %v1052 = vrot.slane %v1031, 2
    %v1053 = vrot.slane %v1033, 2
    %v1054 = vsel %vm1042, %v1052, %v1053
    %v1063 = vadd.f32 %v887, %v1045
    %v1064 = vadd.f32 %v888, %v1048
    %v1065 = vadd.f32 %v889, %v1044
    %v1066 = vadd.f32 %v890, %v1047
    %v1067 = vadd.f32 %v891, %v1051
    %v1068 = vadd.f32 %v892, %v1054
    %v1069 = vadd.f32 %v893, %v1050
    %v1070 = vadd.f32 %v894, %v1053
    %v1071 = vstv %s98
    %v1072 = vmul.f32 %v39, %v1071
    %v1073 = vmul.f32 %v40, %v1071
    %v1074 = vmul.f32 %v41, %v1071
    %v1075 = vmul.f32 %v42, %v1071
    %v1076 = vmul.f32 %v43, %v1071
    %v1077 = vmul.f32 %v44, %v1071
    %v1078 = vmul.f32 %v45, %v1071
    %v1079 = vmul.f32 %v46, %v1071
    %v1088 = vrot.slane %v1072, 2
    %v1089 = vrot.slane %v1074, 2
    %v1090 = vsel %vm1042, %v1088, %v1089
    %v1091 = vrot.slane %v1073, 2
    %v1092 = vrot.slane %v1075, 2
    %v1093 = vsel %vm1042, %v1091, %v1092
    %v1094 = vrot.slane %v1076, 2
    %v1095 = vrot.slane %v1078, 2
    %v1096 = vsel %vm1042, %v1094, %v1095
    %v1097 = vrot.slane %v1077, 2
    %v1098 = vrot.slane %v1079, 2
    %v1099 = vsel %vm1042, %v1097, %v1098
    %v1108 = vadd.f32 %v952, %v1090
    %v1109 = vadd.f32 %v953, %v1093
    %v1110 = vadd.f32 %v954, %v1089
    %v1111 = vadd.f32 %v955, %v1092
    %v1112 = vadd.f32 %v956, %v1096
    %v1113 = vadd.f32 %v957, %v1099
    %v1114 = vadd.f32 %v958, %v1095
    %v1115 = vadd.f32 %v959, %v1098
    %v1116 = vstv %s125
    %v1117 = vmul.f32 %v39, %v1116
    %v1118 = vmul.f32 %v40, %v1116
    %v1119 = vmul.f32 %v41, %v1116
    %v1120 = vmul.f32 %v42, %v1116
    %v1121 = vmul.f32 %v43, %v1116
    %v1122 = vmul.f32 %v44, %v1116
    %v1123 = vmul.f32 %v45, %v1116
    %v1124 = vmul.f32 %v46, %v1116
    %v1133 = vrot.slane %v1117, 2
    %v1134 = vrot.slane %v1119, 2
    %v1135 = vsel %vm1042, %v1133, %v1134
    %v1136 = vrot.slane %v1118, 2
    %v1137 = vrot.slane %v1120, 2
    %v1138 = vsel %vm1042, %v1136, %v1137
    %v1139 = vrot.slane %v1121, 2
    %v1140 = vrot.slane %v1123, 2
    %v1141 = vsel %vm1042, %v1139, %v1140
    %v1142 = vrot.slane %v1122, 2
    %v1143 = vrot.slane %v1124, 2
    %v1144 = vsel %vm1042, %v1142, %v1143
    %v1153 = vadd.f32 %v1017, %v1135
    %v1154 = vadd.f32 %v1018, %v1138
    %v1155 = vadd.f32 %v1019, %v1134
    %v1156 = vadd.f32 %v1020, %v1137
    %v1157 = vadd.f32 %v1021, %v1141
    %v1158 = vadd.f32 %v1022, %v1144
    %v1159 = vadd.f32 %v1023, %v1140
    %v1160 = vadd.f32 %v1024, %v1143
    %v1161 = vstv %s72
    %v1162 = vmul.f32 %v39, %v1161
    %v1163 = vmul.f32 %v40, %v1161
    %v1164 = vmul.f32 %v41, %v1161
    %v1165 = vmul.f32 %v42, %v1161
    %v1166 = vmul.f32 %v43, %v1161
    %v1167 = vmul.f32 %v44, %v1161
    %v1168 = vmul.f32 %v45, %v1161
    %v1169 = vmul.f32 %v46, %v1161
    %v1178 = vrot.slane %v1162, 2
    %v1179 = vrot.slane %v1164, 2
    %v1180 = vsel %vm1042, %v1178, %v1179
    %v1181 = vrot.slane %v1163, 2
    %v1182 = vrot.slane %v1165, 2
    %v1183 = vsel %vm1042, %v1181, %v1182
    %v1184 = vrot.slane %v1166, 2
    %v1185 = vrot.slane %v1168, 2
    %v1186 = vsel %vm1042, %v1184, %v1185
    %v1187 = vrot.slane %v1167, 2
    %v1188 = vrot.slane %v1169, 2
    %v1189 = vsel %vm1042, %v1187, %v1188
    %1190 = vrot.lane.b32.xlu0 %v1180, 127
    %v1191 = vpop.permute.xlu0 %1190
    %1192 = vrot.lane.b32.xlu0 %v1183, 127
    %v1193 = vpop.permute.xlu0 %1192
    %1194 = vrot.lane.b32.xlu0 %v1179, 127
    %v1195 = vpop.permute.xlu0 %1194
    %1196 = vrot.lane.b32.xlu0 %v1182, 127
    %v1197 = vpop.permute.xlu0 %1196
    %1198 = vrot.lane.b32.xlu0 %v1186, 127
    %v1199 = vpop.permute.xlu0 %1198
    %1200 = vrot.lane.b32.xlu0 %v1189, 127
    %v1201 = vpop.permute.xlu0 %1200
    %1202 = vrot.lane.b32.xlu0 %v1185, 127
    %v1203 = vpop.permute.xlu0 %1202
    %1204 = vrot.lane.b32.xlu0 %v1188, 127
    %v1205 = vpop.permute.xlu0 %1204
    %v1206 = vsel %vm212, %v1191, %v1193
    %v1207 = vsel %vm212, %v1195, %v1197
    %v1208 = vsel %vm212, %v1199, %v1201
    %v1209 = vsel %vm212, %v1203, %v1205
    %v1218 = vadd.f32 %v1063, %v1206
    %v1219 = vadd.f32 %v1064, %v1193
    %v1220 = vadd.f32 %v1065, %v1207
    %v1221 = vadd.f32 %v1066, %v1197
    %v1222 = vadd.f32 %v1067, %v1208
    %v1223 = vadd.f32 %v1068, %v1201
    %v1224 = vadd.f32 %v1069, %v1209
    %v1225 = vadd.f32 %v1070, %v1205
    %v1226 = vstv %s99
    %v1227 = vmul.f32 %v39, %v1226
    %v1228 = vmul.f32 %v40, %v1226
    %v1229 = vmul.f32 %v41, %v1226
    %v1230 = vmul.f32 %v42, %v1226
    %v1231 = vmul.f32 %v43, %v1226
    %v1232 = vmul.f32 %v44, %v1226
    %v1233 = vmul.f32 %v45, %v1226
    %v1234 = vmul.f32 %v46, %v1226
    %v1243 = vrot.slane %v1227, 2
    %v1244 = vrot.slane %v1229, 2
    %v1245 = vsel %vm1042, %v1243, %v1244
    %v1246 = vrot.slane %v1228, 2
    %v1247 = vrot.slane %v1230, 2
    %v1248 = vsel %vm1042, %v1246, %v1247
    %v1249 = vrot.slane %v1231, 2
    %v1250 = vrot.slane %v1233, 2
    %v1251 = vsel %vm1042, %v1249, %v1250
    %v1252 = vrot.slane %v1232, 2
    %v1253 = vrot.slane %v1234, 2
    %v1254 = vsel %vm1042, %v1252, %v1253
    %1255 = vrot.lane.b32.xlu0 %v1245, 127
    %v1256 = vpop.permute.xlu0 %1255
    %1257 = vrot.lane.b32.xlu0 %v1248, 127
    %v1258 = vpop.permute.xlu0 %1257
    %1259 = vrot.lane.b32.xlu0 %v1244, 127
    %v1260 = vpop.permute.xlu0 %1259
    %1261 = vrot.lane.b32.xlu0 %v1247, 127
    %v1262 = vpop.permute.xlu0 %1261
    %1263 = vrot.lane.b32.xlu0 %v1251, 127
    %v1264 = vpop.permute.xlu0 %1263
    %1265 = vrot.lane.b32.xlu0 %v1254, 127
    %v1266 = vpop.permute.xlu0 %1265
    %1267 = vrot.lane.b32.xlu0 %v1250, 127
    %v1268 = vpop.permute.xlu0 %1267
    %1269 = vrot.lane.b32.xlu0 %v1253, 127
    %v1270 = vpop.permute.xlu0 %1269
    %v1271 = vsel %vm212, %v1256, %v1258
    %v1272 = vsel %vm212, %v1260, %v1262
    %v1273 = vsel %vm212, %v1264, %v1266
    %v1274 = vsel %vm212, %v1268, %v1270
    %v1283 = vadd.f32 %v1108, %v1271
    %v1284 = vadd.f32 %v1109, %v1258
    %v1285 = vadd.f32 %v1110, %v1272
    %v1286 = vadd.f32 %v1111, %v1262
    %v1287 = vadd.f32 %v1112, %v1273
    %v1288 = vadd.f32 %v1113, %v1266
    %v1289 = vadd.f32 %v1114, %v1274
    %v1290 = vadd.f32 %v1115, %v1270
    %v1291 = vstv %s126
    %v1292 = vmul.f32 %v39, %v1291
    %v1293 = vmul.f32 %v40, %v1291
    %v1294 = vmul.f32 %v41, %v1291
    %v1295 = vmul.f32 %v42, %v1291
    %v1296 = vmul.f32 %v43, %v1291
    %v1297 = vmul.f32 %v44, %v1291
    %v1298 = vmul.f32 %v45, %v1291
    %v1299 = vmul.f32 %v46, %v1291
    %v1308 = vrot.slane %v1292, 2
    %v1309 = vrot.slane %v1294, 2
    %v1310 = vsel %vm1042, %v1308, %v1309
    %v1311 = vrot.slane %v1293, 2
    %v1312 = vrot.slane %v1295, 2
    %v1313 = vsel %vm1042, %v1311, %v1312
    %v1314 = vrot.slane %v1296, 2
    %v1315 = vrot.slane %v1298, 2
    %v1316 = vsel %vm1042, %v1314, %v1315
    %v1317 = vrot.slane %v1297, 2
    %v1318 = vrot.slane %v1299, 2
    %v1319 = vsel %vm1042, %v1317, %v1318
    %1320 = vrot.lane.b32.xlu0 %v1310, 127
    %v1321 = vpop.permute.xlu0 %1320
    %1322 = vrot.lane.b32.xlu0 %v1313, 127
    %v1323 = vpop.permute.xlu0 %1322
    %1324 = vrot.lane.b32.xlu0 %v1309, 127
    %v1325 = vpop.permute.xlu0 %1324
    %1326 = vrot.lane.b32.xlu0 %v1312, 127
    %v1327 = vpop.permute.xlu0 %1326
    %1328 = vrot.lane.b32.xlu0 %v1316, 127
    %v1329 = vpop.permute.xlu0 %1328
    %1330 = vrot.lane.b32.xlu0 %v1319, 127
    %v1331 = vpop.permute.xlu0 %1330
    %1332 = vrot.lane.b32.xlu0 %v1315, 127
    %v1333 = vpop.permute.xlu0 %1332
    %1334 = vrot.lane.b32.xlu0 %v1318, 127
    %v1335 = vpop.permute.xlu0 %1334
    %v1336 = vsel %vm212, %v1321, %v1323
    %v1337 = vsel %vm212, %v1325, %v1327
    %v1338 = vsel %vm212, %v1329, %v1331
    %v1339 = vsel %vm212, %v1333, %v1335
    %v1348 = vadd.f32 %v1153, %v1336
    %v1349 = vadd.f32 %v1154, %v1323
    %v1350 = vadd.f32 %v1155, %v1337
    %v1351 = vadd.f32 %v1156, %v1327
    %v1352 = vadd.f32 %v1157, %v1338
    %v1353 = vadd.f32 %v1158, %v1331
    %v1354 = vadd.f32 %v1159, %v1339
    %v1355 = vadd.f32 %v1160, %v1335
    %v1356 = vstv %s73
    %v1357 = vmul.f32 %v39, %v1356
    %v1358 = vmul.f32 %v40, %v1356
    %v1359 = vmul.f32 %v41, %v1356
    %v1360 = vmul.f32 %v42, %v1356
    %v1361 = vmul.f32 %v43, %v1356
    %v1362 = vmul.f32 %v44, %v1356
    %v1363 = vmul.f32 %v45, %v1356
    %v1364 = vmul.f32 %v46, %v1356
    %v1373 = vrot.slane %v1357, 2
    %v1374 = vrot.slane %v1359, 2
    %v1375 = vsel %vm1042, %v1373, %v1374
    %v1376 = vrot.slane %v1358, 2
    %v1377 = vrot.slane %v1360, 2
    %v1378 = vsel %vm1042, %v1376, %v1377
    %v1379 = vrot.slane %v1361, 2
    %v1380 = vrot.slane %v1363, 2
    %v1381 = vsel %vm1042, %v1379, %v1380
    %v1382 = vrot.slane %v1362, 2
    %v1383 = vrot.slane %v1364, 2
    %v1384 = vsel %vm1042, %v1382, %v1383
    %1385 = vrot.lane.b32.xlu0 %v1375, 126
    %v1386 = vpop.permute.xlu0 %1385
    %1387 = vrot.lane.b32.xlu0 %v1378, 126
    %v1388 = vpop.permute.xlu0 %1387
    %1389 = vrot.lane.b32.xlu0 %v1374, 126
    %v1390 = vpop.permute.xlu0 %1389
    %1391 = vrot.lane.b32.xlu0 %v1377, 126
    %v1392 = vpop.permute.xlu0 %1391
    %1393 = vrot.lane.b32.xlu0 %v1381, 126
    %v1394 = vpop.permute.xlu0 %1393
    %1395 = vrot.lane.b32.xlu0 %v1384, 126
    %v1396 = vpop.permute.xlu0 %1395
    %1397 = vrot.lane.b32.xlu0 %v1380, 126
    %v1398 = vpop.permute.xlu0 %1397
    %1399 = vrot.lane.b32.xlu0 %v1383, 126
    %v1400 = vpop.permute.xlu0 %1399
    %v1401 = vsel %vm372, %v1386, %v1388
    %v1402 = vsel %vm372, %v1390, %v1392
    %v1403 = vsel %vm372, %v1394, %v1396
    %v1404 = vsel %vm372, %v1398, %v1400
    %v1413 = vadd.f32 %v1218, %v1401
    %v1414 = vadd.f32 %v1219, %v1388
    %v1415 = vadd.f32 %v1220, %v1402
    %v1416 = vadd.f32 %v1221, %v1392
    %v1417 = vadd.f32 %v1222, %v1403
    %v1418 = vadd.f32 %v1223, %v1396
    %v1419 = vadd.f32 %v1224, %v1404
    %v1420 = vadd.f32 %v1225, %v1400
    %v1421 = vstv %s100
    %v1422 = vmul.f32 %v39, %v1421
    %v1423 = vmul.f32 %v40, %v1421
    %v1424 = vmul.f32 %v41, %v1421
    %v1425 = vmul.f32 %v42, %v1421
    %v1426 = vmul.f32 %v43, %v1421
    %v1427 = vmul.f32 %v44, %v1421
    %v1428 = vmul.f32 %v45, %v1421
    %v1429 = vmul.f32 %v46, %v1421
    %v1438 = vrot.slane %v1422, 2
    %v1439 = vrot.slane %v1424, 2
    %v1440 = vsel %vm1042, %v1438, %v1439
    %v1441 = vrot.slane %v1423, 2
    %v1442 = vrot.slane %v1425, 2
    %v1443 = vsel %vm1042, %v1441, %v1442
    %v1444 = vrot.slane %v1426, 2
    %v1445 = vrot.slane %v1428, 2
    %v1446 = vsel %vm1042, %v1444, %v1445
    %v1447 = vrot.slane %v1427, 2
    %v1448 = vrot.slane %v1429, 2
    %v1449 = vsel %vm1042, %v1447, %v1448
    %1450 = vrot.lane.b32.xlu0 %v1440, 126
    %v1451 = vpop.permute.xlu0 %1450
    %1452 = vrot.lane.b32.xlu0 %v1443, 126
    %v1453 = vpop.permute.xlu0 %1452
    %1454 = vrot.lane.b32.xlu0 %v1439, 126
    %v1455 = vpop.permute.xlu0 %1454
    %1456 = vrot.lane.b32.xlu0 %v1442, 126
    %v1457 = vpop.permute.xlu0 %1456
    %1458 = vrot.lane.b32.xlu0 %v1446, 126
    %v1459 = vpop.permute.xlu0 %1458
    %1460 = vrot.lane.b32.xlu0 %v1449, 126
    %v1461 = vpop.permute.xlu0 %1460
    %1462 = vrot.lane.b32.xlu0 %v1445, 126
    %v1463 = vpop.permute.xlu0 %1462
    %1464 = vrot.lane.b32.xlu0 %v1448, 126
    %v1465 = vpop.permute.xlu0 %1464
    %v1466 = vsel %vm372, %v1451, %v1453
    %v1467 = vsel %vm372, %v1455, %v1457
    %v1468 = vsel %vm372, %v1459, %v1461
    %v1469 = vsel %vm372, %v1463, %v1465
    %v1478 = vadd.f32 %v1283, %v1466
    %v1479 = vadd.f32 %v1284, %v1453
    %v1480 = vadd.f32 %v1285, %v1467
    %v1481 = vadd.f32 %v1286, %v1457
    %v1482 = vadd.f32 %v1287, %v1468
    %v1483 = vadd.f32 %v1288, %v1461
    %v1484 = vadd.f32 %v1289, %v1469
    %v1485 = vadd.f32 %v1290, %v1465
    %v1486 = vstv %s127
    %v1487 = vmul.f32 %v39, %v1486
    %v1488 = vmul.f32 %v40, %v1486
    %v1489 = vmul.f32 %v41, %v1486
    %v1490 = vmul.f32 %v42, %v1486
    %v1491 = vmul.f32 %v43, %v1486
    %v1492 = vmul.f32 %v44, %v1486
    %v1493 = vmul.f32 %v45, %v1486
    %v1494 = vmul.f32 %v46, %v1486
    %v1503 = vrot.slane %v1487, 2
    %v1504 = vrot.slane %v1489, 2
    %v1505 = vsel %vm1042, %v1503, %v1504
    %v1506 = vrot.slane %v1488, 2
    %v1507 = vrot.slane %v1490, 2
    %v1508 = vsel %vm1042, %v1506, %v1507
    %v1509 = vrot.slane %v1491, 2
    %v1510 = vrot.slane %v1493, 2
    %v1511 = vsel %vm1042, %v1509, %v1510
    %v1512 = vrot.slane %v1492, 2
    %v1513 = vrot.slane %v1494, 2
    %v1514 = vsel %vm1042, %v1512, %v1513
    %1515 = vrot.lane.b32.xlu0 %v1505, 126
    %v1516 = vpop.permute.xlu0 %1515
    %1517 = vrot.lane.b32.xlu0 %v1508, 126
    %v1518 = vpop.permute.xlu0 %1517
    %1519 = vrot.lane.b32.xlu0 %v1504, 126
    %v1520 = vpop.permute.xlu0 %1519
    %1521 = vrot.lane.b32.xlu0 %v1507, 126
    %v1522 = vpop.permute.xlu0 %1521
    %1523 = vrot.lane.b32.xlu0 %v1511, 126
    %v1524 = vpop.permute.xlu0 %1523
    %1525 = vrot.lane.b32.xlu0 %v1514, 126
    %v1526 = vpop.permute.xlu0 %1525
    %1527 = vrot.lane.b32.xlu0 %v1510, 126
    %v1528 = vpop.permute.xlu0 %1527
    %1529 = vrot.lane.b32.xlu0 %v1513, 126
    %v1530 = vpop.permute.xlu0 %1529
    %v1531 = vsel %vm372, %v1516, %v1518
    %v1532 = vsel %vm372, %v1520, %v1522
    %v1533 = vsel %vm372, %v1524, %v1526
    %v1534 = vsel %vm372, %v1528, %v1530
    %v1543 = vadd.f32 %v1348, %v1531
    %v1544 = vadd.f32 %v1349, %v1518
    %v1545 = vadd.f32 %v1350, %v1532
    %v1546 = vadd.f32 %v1351, %v1522
    %v1547 = vadd.f32 %v1352, %v1533
    %v1548 = vadd.f32 %v1353, %v1526
    %v1549 = vadd.f32 %v1354, %v1534
    %v1550 = vadd.f32 %v1355, %v1530
    %v1551 = vadd.f32 %v147, %v1413
    %v1552 = vadd.f32 %v147, %v1414
    %v1553 = vadd.f32 %v147, %v1415
    %v1554 = vadd.f32 %v147, %v1416
    %v1555 = vadd.f32 %v147, %v1417
    %v1556 = vadd.f32 %v147, %v1418
    %v1557 = vadd.f32 %v147, %v1419
    %v1558 = vadd.f32 %v147, %v1420
    %v1559 = vadd.f32 %v149, %v1478
    %v1560 = vadd.f32 %v149, %v1479
    %v1561 = vadd.f32 %v149, %v1480
    %v1562 = vadd.f32 %v149, %v1481
    %v1563 = vadd.f32 %v149, %v1482
    %v1564 = vadd.f32 %v149, %v1483
    %v1565 = vadd.f32 %v149, %v1484
    %v1566 = vadd.f32 %v149, %v1485
    %v1567 = vadd.f32 %v151, %v1543
    %v1568 = vadd.f32 %v151, %v1544
    %v1569 = vadd.f32 %v151, %v1545
    %v1570 = vadd.f32 %v151, %v1546
    %v1571 = vadd.f32 %v151, %v1547
    %v1572 = vadd.f32 %v151, %v1548
    %v1573 = vadd.f32 %v151, %v1549
    %v1574 = vadd.f32 %v151, %v1550
    %v1575 = vstv %s74
    %v1576 = vmul.f32 %v48, %v1575
    %v1577 = vmul.f32 %v49, %v1575
    %v1578 = vmul.f32 %v50, %v1575
    %v1579 = vmul.f32 %v51, %v1575
    %v1580 = vmul.f32 %v52, %v1575
    %v1581 = vmul.f32 %v53, %v1575
    %v1582 = vmul.f32 %v54, %v1575
    %v1583 = vmul.f32 %v55, %v1575
    %v1584 = vstv %s101
    %v1585 = vmul.f32 %v48, %v1584
    %v1586 = vmul.f32 %v49, %v1584
    %v1587 = vmul.f32 %v50, %v1584
    %v1588 = vmul.f32 %v51, %v1584
    %v1589 = vmul.f32 %v52, %v1584
    %v1590 = vmul.f32 %v53, %v1584
    %v1591 = vmul.f32 %v54, %v1584
    %v1592 = vmul.f32 %v55, %v1584
    %v1593 = vstv %s128
    %v1594 = vmul.f32 %v48, %v1593
    %v1595 = vmul.f32 %v49, %v1593
    %v1596 = vmul.f32 %v50, %v1593
    %v1597 = vmul.f32 %v51, %v1593
    %v1598 = vmul.f32 %v52, %v1593
    %v1599 = vmul.f32 %v53, %v1593
    %v1600 = vmul.f32 %v54, %v1593
    %v1601 = vmul.f32 %v55, %v1593
    %v1602 = vstv %s75
    %v1603 = vmul.f32 %v48, %v1602
    %v1604 = vmul.f32 %v49, %v1602
    %v1605 = vmul.f32 %v50, %v1602
    %v1606 = vmul.f32 %v51, %v1602
    %v1607 = vmul.f32 %v52, %v1602
    %v1608 = vmul.f32 %v53, %v1602
    %v1609 = vmul.f32 %v54, %v1602
    %v1610 = vmul.f32 %v55, %v1602
    %1619 = vrot.lane.b32.xlu0 %v1603, 127
    %v1620 = vpop.permute.xlu0 %1619
    %1621 = vrot.lane.b32.xlu0 %v1604, 127
    %v1622 = vpop.permute.xlu0 %1621
    %1623 = vrot.lane.b32.xlu0 %v1605, 127
    %v1624 = vpop.permute.xlu0 %1623
    %1625 = vrot.lane.b32.xlu0 %v1606, 127
    %v1626 = vpop.permute.xlu0 %1625
    %1627 = vrot.lane.b32.xlu0 %v1607, 127
    %v1628 = vpop.permute.xlu0 %1627
    %1629 = vrot.lane.b32.xlu0 %v1608, 127
    %v1630 = vpop.permute.xlu0 %1629
    %1631 = vrot.lane.b32.xlu0 %v1609, 127
    %v1632 = vpop.permute.xlu0 %1631
    %1633 = vrot.lane.b32.xlu0 %v1610, 127
    %v1634 = vpop.permute.xlu0 %1633
    %v1635 = vsel %vm212, %v1620, %v1622
    %v1636 = vsel %vm212, %v1624, %v1626
    %v1637 = vsel %vm212, %v1628, %v1630
    %v1638 = vsel %vm212, %v1632, %v1634
    %v1647 = vadd.f32 %v1576, %v1635
    %v1648 = vadd.f32 %v1577, %v1622
    %v1649 = vadd.f32 %v1578, %v1636
    %v1650 = vadd.f32 %v1579, %v1626
    %v1651 = vadd.f32 %v1580, %v1637
    %v1652 = vadd.f32 %v1581, %v1630
    %v1653 = vadd.f32 %v1582, %v1638
    %v1654 = vadd.f32 %v1583, %v1634
    %v1655 = vstv %s102
    %v1656 = vmul.f32 %v48, %v1655
    %v1657 = vmul.f32 %v49, %v1655
    %v1658 = vmul.f32 %v50, %v1655
    %v1659 = vmul.f32 %v51, %v1655
    %v1660 = vmul.f32 %v52, %v1655
    %v1661 = vmul.f32 %v53, %v1655
    %v1662 = vmul.f32 %v54, %v1655
    %v1663 = vmul.f32 %v55, %v1655
    %1672 = vrot.lane.b32.xlu0 %v1656, 127
    %v1673 = vpop.permute.xlu0 %1672
    %1674 = vrot.lane.b32.xlu0 %v1657, 127
    %v1675 = vpop.permute.xlu0 %1674
    %1676 = vrot.lane.b32.xlu0 %v1658, 127
    %v1677 = vpop.permute.xlu0 %1676
    %1678 = vrot.lane.b32.xlu0 %v1659, 127
    %v1679 = vpop.permute.xlu0 %1678
    %1680 = vrot.lane.b32.xlu0 %v1660, 127
    %v1681 = vpop.permute.xlu0 %1680
    %1682 = vrot.lane.b32.xlu0 %v1661, 127
    %v1683 = vpop.permute.xlu0 %1682
    %1684 = vrot.lane.b32.xlu0 %v1662, 127
    %v1685 = vpop.permute.xlu0 %1684
    %1686 = vrot.lane.b32.xlu0 %v1663, 127
    %v1687 = vpop.permute.xlu0 %1686
    %v1688 = vsel %vm212, %v1673, %v1675
    %v1689 = vsel %vm212, %v1677, %v1679
    %v1690 = vsel %vm212, %v1681, %v1683
    %v1691 = vsel %vm212, %v1685, %v1687
    %v1700 = vadd.f32 %v1585, %v1688
    %v1701 = vadd.f32 %v1586, %v1675
    %v1702 = vadd.f32 %v1587, %v1689
    %v1703 = vadd.f32 %v1588, %v1679
    %v1704 = vadd.f32 %v1589, %v1690
    %v1705 = vadd.f32 %v1590, %v1683
    %v1706 = vadd.f32 %v1591, %v1691
    %v1707 = vadd.f32 %v1592, %v1687
    %v1708 = vstv %s129
    %v1709 = vmul.f32 %v48, %v1708
    %v1710 = vmul.f32 %v49, %v1708
    %v1711 = vmul.f32 %v50, %v1708
    %v1712 = vmul.f32 %v51, %v1708
    %v1713 = vmul.f32 %v52, %v1708
    %v1714 = vmul.f32 %v53, %v1708
    %v1715 = vmul.f32 %v54, %v1708
    %v1716 = vmul.f32 %v55, %v1708
    %1725 = vrot.lane.b32.xlu0 %v1709, 127
    %v1726 = vpop.permute.xlu0 %1725
    %1727 = vrot.lane.b32.xlu0 %v1710, 127
    %v1728 = vpop.permute.xlu0 %1727
    %1729 = vrot.lane.b32.xlu0 %v1711, 127
    %v1730 = vpop.permute.xlu0 %1729
    %1731 = vrot.lane.b32.xlu0 %v1712, 127
    %v1732 = vpop.permute.xlu0 %1731
    %1733 = vrot.lane.b32.xlu0 %v1713, 127
    %v1734 = vpop.permute.xlu0 %1733
    %1735 = vrot.lane.b32.xlu0 %v1714, 127
    %v1736 = vpop.permute.xlu0 %1735
    %1737 = vrot.lane.b32.xlu0 %v1715, 127
    %v1738 = vpop.permute.xlu0 %1737
    %1739 = vrot.lane.b32.xlu0 %v1716, 127
    %v1740 = vpop.permute.xlu0 %1739
    %v1741 = vsel %vm212, %v1726, %v1728
    %v1742 = vsel %vm212, %v1730, %v1732
    %v1743 = vsel %vm212, %v1734, %v1736
    %v1744 = vsel %vm212, %v1738, %v1740
    %v1753 = vadd.f32 %v1594, %v1741
    %v1754 = vadd.f32 %v1595, %v1728
    %v1755 = vadd.f32 %v1596, %v1742
    %v1756 = vadd.f32 %v1597, %v1732
    %v1757 = vadd.f32 %v1598, %v1743
    %v1758 = vadd.f32 %v1599, %v1736
    %v1759 = vadd.f32 %v1600, %v1744
    %v1760 = vadd.f32 %v1601, %v1740
    %v1761 = vstv %s76
    %v1762 = vmul.f32 %v48, %v1761
    %v1763 = vmul.f32 %v49, %v1761
    %v1764 = vmul.f32 %v50, %v1761
    %v1765 = vmul.f32 %v51, %v1761
    %v1766 = vmul.f32 %v52, %v1761
    %v1767 = vmul.f32 %v53, %v1761
    %v1768 = vmul.f32 %v54, %v1761
    %v1769 = vmul.f32 %v55, %v1761
    %1778 = vrot.lane.b32.xlu0 %v1762, 126
    %v1779 = vpop.permute.xlu0 %1778
    %1780 = vrot.lane.b32.xlu0 %v1763, 126
    %v1781 = vpop.permute.xlu0 %1780
    %1782 = vrot.lane.b32.xlu0 %v1764, 126
    %v1783 = vpop.permute.xlu0 %1782
    %1784 = vrot.lane.b32.xlu0 %v1765, 126
    %v1785 = vpop.permute.xlu0 %1784
    %1786 = vrot.lane.b32.xlu0 %v1766, 126
    %v1787 = vpop.permute.xlu0 %1786
    %1788 = vrot.lane.b32.xlu0 %v1767, 126
    %v1789 = vpop.permute.xlu0 %1788
    %1790 = vrot.lane.b32.xlu0 %v1768, 126
    %v1791 = vpop.permute.xlu0 %1790
    %1792 = vrot.lane.b32.xlu0 %v1769, 126
    %v1793 = vpop.permute.xlu0 %1792
    %v1794 = vsel %vm372, %v1779, %v1781
    %v1795 = vsel %vm372, %v1783, %v1785
    %v1796 = vsel %vm372, %v1787, %v1789
    %v1797 = vsel %vm372, %v1791, %v1793
    %v1806 = vadd.f32 %v1647, %v1794
    %v1807 = vadd.f32 %v1648, %v1781
    %v1808 = vadd.f32 %v1649, %v1795
    %v1809 = vadd.f32 %v1650, %v1785
    %v1810 = vadd.f32 %v1651, %v1796
    %v1811 = vadd.f32 %v1652, %v1789
    %v1812 = vadd.f32 %v1653, %v1797
    %v1813 = vadd.f32 %v1654, %v1793
    %v1814 = vstv %s103
    %v1815 = vmul.f32 %v48, %v1814
    %v1816 = vmul.f32 %v49, %v1814
    %v1817 = vmul.f32 %v50, %v1814
    %v1818 = vmul.f32 %v51, %v1814
    %v1819 = vmul.f32 %v52, %v1814
    %v1820 = vmul.f32 %v53, %v1814
    %v1821 = vmul.f32 %v54, %v1814
    %v1822 = vmul.f32 %v55, %v1814
    %1831 = vrot.lane.b32.xlu0 %v1815, 126
    %v1832 = vpop.permute.xlu0 %1831
    %1833 = vrot.lane.b32.xlu0 %v1816, 126
    %v1834 = vpop.permute.xlu0 %1833
    %1835 = vrot.lane.b32.xlu0 %v1817, 126
    %v1836 = vpop.permute.xlu0 %1835
    %1837 = vrot.lane.b32.xlu0 %v1818, 126
    %v1838 = vpop.permute.xlu0 %1837
    %1839 = vrot.lane.b32.xlu0 %v1819, 126
    %v1840 = vpop.permute.xlu0 %1839
    %1841 = vrot.lane.b32.xlu0 %v1820, 126
    %v1842 = vpop.permute.xlu0 %1841
    %1843 = vrot.lane.b32.xlu0 %v1821, 126
    %v1844 = vpop.permute.xlu0 %1843
    %1845 = vrot.lane.b32.xlu0 %v1822, 126
    %v1846 = vpop.permute.xlu0 %1845
    %v1847 = vsel %vm372, %v1832, %v1834
    %v1848 = vsel %vm372, %v1836, %v1838
    %v1849 = vsel %vm372, %v1840, %v1842
    %v1850 = vsel %vm372, %v1844, %v1846
    %v1859 = vadd.f32 %v1700, %v1847
    %v1860 = vadd.f32 %v1701, %v1834
    %v1861 = vadd.f32 %v1702, %v1848
    %v1862 = vadd.f32 %v1703, %v1838
    %v1863 = vadd.f32 %v1704, %v1849
    %v1864 = vadd.f32 %v1705, %v1842
    %v1865 = vadd.f32 %v1706, %v1850
    %v1866 = vadd.f32 %v1707, %v1846
    %v1867 = vstv %s130
    %v1868 = vmul.f32 %v48, %v1867
    %v1869 = vmul.f32 %v49, %v1867
    %v1870 = vmul.f32 %v50, %v1867
    %v1871 = vmul.f32 %v51, %v1867
    %v1872 = vmul.f32 %v52, %v1867
    %v1873 = vmul.f32 %v53, %v1867
    %v1874 = vmul.f32 %v54, %v1867
    %v1875 = vmul.f32 %v55, %v1867
    %1884 = vrot.lane.b32.xlu0 %v1868, 126
    %v1885 = vpop.permute.xlu0 %1884
    %1886 = vrot.lane.b32.xlu0 %v1869, 126
    %v1887 = vpop.permute.xlu0 %1886
    %1888 = vrot.lane.b32.xlu0 %v1870, 126
    %v1889 = vpop.permute.xlu0 %1888
    %1890 = vrot.lane.b32.xlu0 %v1871, 126
    %v1891 = vpop.permute.xlu0 %1890
    %1892 = vrot.lane.b32.xlu0 %v1872, 126
    %v1893 = vpop.permute.xlu0 %1892
    %1894 = vrot.lane.b32.xlu0 %v1873, 126
    %v1895 = vpop.permute.xlu0 %1894
    %1896 = vrot.lane.b32.xlu0 %v1874, 126
    %v1897 = vpop.permute.xlu0 %1896
    %1898 = vrot.lane.b32.xlu0 %v1875, 126
    %v1899 = vpop.permute.xlu0 %1898
    %v1900 = vsel %vm372, %v1885, %v1887
    %v1901 = vsel %vm372, %v1889, %v1891
    %v1902 = vsel %vm372, %v1893, %v1895
    %v1903 = vsel %vm372, %v1897, %v1899
    %v1912 = vadd.f32 %v1753, %v1900
    %v1913 = vadd.f32 %v1754, %v1887
    %v1914 = vadd.f32 %v1755, %v1901
    %v1915 = vadd.f32 %v1756, %v1891
    %v1916 = vadd.f32 %v1757, %v1902
    %v1917 = vadd.f32 %v1758, %v1895
    %v1918 = vadd.f32 %v1759, %v1903
    %v1919 = vadd.f32 %v1760, %v1899
    %v1920 = vstv %s77
    %v1921 = vmul.f32 %v48, %v1920
    %v1922 = vmul.f32 %v49, %v1920
    %v1923 = vmul.f32 %v50, %v1920
    %v1924 = vmul.f32 %v51, %v1920
    %v1925 = vmul.f32 %v52, %v1920
    %v1926 = vmul.f32 %v53, %v1920
    %v1927 = vmul.f32 %v54, %v1920
    %v1928 = vmul.f32 %v55, %v1920
    %v1937 = vrot.slane %v1921, 1
    %v1938 = vrot.slane %v1923, 1
    %v1939 = vsel %vm516, %v1937, %v1938
    %v1940 = vrot.slane %v1922, 1
    %v1941 = vrot.slane %v1924, 1
    %v1942 = vsel %vm516, %v1940, %v1941
    %v1943 = vrot.slane %v1925, 1
    %v1944 = vrot.slane %v1927, 1
    %v1945 = vsel %vm516, %v1943, %v1944
    %v1946 = vrot.slane %v1926, 1
    %v1947 = vrot.slane %v1928, 1
    %v1948 = vsel %vm516, %v1946, %v1947
    %v1957 = vadd.f32 %v1806, %v1939
    %v1958 = vadd.f32 %v1807, %v1942
    %v1959 = vadd.f32 %v1808, %v1938
    %v1960 = vadd.f32 %v1809, %v1941
    %v1961 = vadd.f32 %v1810, %v1945
    %v1962 = vadd.f32 %v1811, %v1948
    %v1963 = vadd.f32 %v1812, %v1944
    %v1964 = vadd.f32 %v1813, %v1947
    %v1965 = vstv %s104
    %v1966 = vmul.f32 %v48, %v1965
    %v1967 = vmul.f32 %v49, %v1965
    %v1968 = vmul.f32 %v50, %v1965
    %v1969 = vmul.f32 %v51, %v1965
    %v1970 = vmul.f32 %v52, %v1965
    %v1971 = vmul.f32 %v53, %v1965
    %v1972 = vmul.f32 %v54, %v1965
    %v1973 = vmul.f32 %v55, %v1965
    %v1982 = vrot.slane %v1966, 1
    %v1983 = vrot.slane %v1968, 1
    %v1984 = vsel %vm516, %v1982, %v1983
    %v1985 = vrot.slane %v1967, 1
    %v1986 = vrot.slane %v1969, 1
    %v1987 = vsel %vm516, %v1985, %v1986
    %v1988 = vrot.slane %v1970, 1
    %v1989 = vrot.slane %v1972, 1
    %v1990 = vsel %vm516, %v1988, %v1989
    %v1991 = vrot.slane %v1971, 1
    %v1992 = vrot.slane %v1973, 1
    %v1993 = vsel %vm516, %v1991, %v1992
    %v2002 = vadd.f32 %v1859, %v1984
    %v2003 = vadd.f32 %v1860, %v1987
    %v2004 = vadd.f32 %v1861, %v1983
    %v2005 = vadd.f32 %v1862, %v1986
    %v2006 = vadd.f32 %v1863, %v1990
    %v2007 = vadd.f32 %v1864, %v1993
    %v2008 = vadd.f32 %v1865, %v1989
    %v2009 = vadd.f32 %v1866, %v1992
    %v2010 = vstv %s131
    %v2011 = vmul.f32 %v48, %v2010
    %v2012 = vmul.f32 %v49, %v2010
    %v2013 = vmul.f32 %v50, %v2010
    %v2014 = vmul.f32 %v51, %v2010
    %v2015 = vmul.f32 %v52, %v2010
    %v2016 = vmul.f32 %v53, %v2010
    %v2017 = vmul.f32 %v54, %v2010
    %v2018 = vmul.f32 %v55, %v2010
    %v2027 = vrot.slane %v2011, 1
    %v2028 = vrot.slane %v2013, 1
    %v2029 = vsel %vm516, %v2027, %v2028
    %v2030 = vrot.slane %v2012, 1
    %v2031 = vrot.slane %v2014, 1
    %v2032 = vsel %vm516, %v2030, %v2031
    %v2033 = vrot.slane %v2015, 1
    %v2034 = vrot.slane %v2017, 1
    %v2035 = vsel %vm516, %v2033, %v2034
    %v2036 = vrot.slane %v2016, 1
    %v2037 = vrot.slane %v2018, 1
    %v2038 = vsel %vm516, %v2036, %v2037
    %v2047 = vadd.f32 %v1912, %v2029
    %v2048 = vadd.f32 %v1913, %v2032
    %v2049 = vadd.f32 %v1914, %v2028
    %v2050 = vadd.f32 %v1915, %v2031
    %v2051 = vadd.f32 %v1916, %v2035
    %v2052 = vadd.f32 %v1917, %v2038
    %v2053 = vadd.f32 %v1918, %v2034
    %v2054 = vadd.f32 %v1919, %v2037
    %v2055 = vstv %s78
    %v2056 = vmul.f32 %v48, %v2055
    %v2057 = vmul.f32 %v49, %v2055
    %v2058 = vmul.f32 %v50, %v2055
    %v2059 = vmul.f32 %v51, %v2055
    %v2060 = vmul.f32 %v52, %v2055
    %v2061 = vmul.f32 %v53, %v2055
    %v2062 = vmul.f32 %v54, %v2055
    %v2063 = vmul.f32 %v55, %v2055
    %v2072 = vrot.slane %v2056, 1
    %v2073 = vrot.slane %v2058, 1
    %v2074 = vsel %vm516, %v2072, %v2073
    %v2075 = vrot.slane %v2057, 1
    %v2076 = vrot.slane %v2059, 1
    %v2077 = vsel %vm516, %v2075, %v2076
    %v2078 = vrot.slane %v2060, 1
    %v2079 = vrot.slane %v2062, 1
    %v2080 = vsel %vm516, %v2078, %v2079
    %v2081 = vrot.slane %v2061, 1
    %v2082 = vrot.slane %v2063, 1
    %v2083 = vsel %vm516, %v2081, %v2082
    %2084 = vrot.lane.b32.xlu0 %v2074, 127
    %v2085 = vpop.permute.xlu0 %2084
    %2086 = vrot.lane.b32.xlu0 %v2077, 127
    %v2087 = vpop.permute.xlu0 %2086
    %2088 = vrot.lane.b32.xlu0 %v2073, 127
    %v2089 = vpop.permute.xlu0 %2088
    %2090 = vrot.lane.b32.xlu0 %v2076, 127
    %v2091 = vpop.permute.xlu0 %2090
    %2092 = vrot.lane.b32.xlu0 %v2080, 127
    %v2093 = vpop.permute.xlu0 %2092
    %2094 = vrot.lane.b32.xlu0 %v2083, 127
    %v2095 = vpop.permute.xlu0 %2094
    %2096 = vrot.lane.b32.xlu0 %v2079, 127
    %v2097 = vpop.permute.xlu0 %2096
    %2098 = vrot.lane.b32.xlu0 %v2082, 127
    %v2099 = vpop.permute.xlu0 %2098
    %v2100 = vsel %vm212, %v2085, %v2087
    %v2101 = vsel %vm212, %v2089, %v2091
    %v2102 = vsel %vm212, %v2093, %v2095
    %v2103 = vsel %vm212, %v2097, %v2099
    %v2112 = vadd.f32 %v1957, %v2100
    %v2113 = vadd.f32 %v1958, %v2087
    %v2114 = vadd.f32 %v1959, %v2101
    %v2115 = vadd.f32 %v1960, %v2091
    %v2116 = vadd.f32 %v1961, %v2102
    %v2117 = vadd.f32 %v1962, %v2095
    %v2118 = vadd.f32 %v1963, %v2103
    %v2119 = vadd.f32 %v1964, %v2099
    %v2120 = vstv %s105
    %v2121 = vmul.f32 %v48, %v2120
    %v2122 = vmul.f32 %v49, %v2120
    %v2123 = vmul.f32 %v50, %v2120
    %v2124 = vmul.f32 %v51, %v2120
    %v2125 = vmul.f32 %v52, %v2120
    %v2126 = vmul.f32 %v53, %v2120
    %v2127 = vmul.f32 %v54, %v2120
    %v2128 = vmul.f32 %v55, %v2120
    %v2137 = vrot.slane %v2121, 1
    %v2138 = vrot.slane %v2123, 1
    %v2139 = vsel %vm516, %v2137, %v2138
    %v2140 = vrot.slane %v2122, 1
    %v2141 = vrot.slane %v2124, 1
    %v2142 = vsel %vm516, %v2140, %v2141
    %v2143 = vrot.slane %v2125, 1
    %v2144 = vrot.slane %v2127, 1
    %v2145 = vsel %vm516, %v2143, %v2144
    %v2146 = vrot.slane %v2126, 1
    %v2147 = vrot.slane %v2128, 1
    %v2148 = vsel %vm516, %v2146, %v2147
    %2149 = vrot.lane.b32.xlu0 %v2139, 127
    %v2150 = vpop.permute.xlu0 %2149
    %2151 = vrot.lane.b32.xlu0 %v2142, 127
    %v2152 = vpop.permute.xlu0 %2151
    %2153 = vrot.lane.b32.xlu0 %v2138, 127
    %v2154 = vpop.permute.xlu0 %2153
    %2155 = vrot.lane.b32.xlu0 %v2141, 127
    %v2156 = vpop.permute.xlu0 %2155
    %2157 = vrot.lane.b32.xlu0 %v2145, 127
    %v2158 = vpop.permute.xlu0 %2157
    %2159 = vrot.lane.b32.xlu0 %v2148, 127
    %v2160 = vpop.permute.xlu0 %2159
    %2161 = vrot.lane.b32.xlu0 %v2144, 127
    %v2162 = vpop.permute.xlu0 %2161
    %2163 = vrot.lane.b32.xlu0 %v2147, 127
    %v2164 = vpop.permute.xlu0 %2163
    %v2165 = vsel %vm212, %v2150, %v2152
    %v2166 = vsel %vm212, %v2154, %v2156
    %v2167 = vsel %vm212, %v2158, %v2160
    %v2168 = vsel %vm212, %v2162, %v2164
    %v2177 = vadd.f32 %v2002, %v2165
    %v2178 = vadd.f32 %v2003, %v2152
    %v2179 = vadd.f32 %v2004, %v2166
    %v2180 = vadd.f32 %v2005, %v2156
    %v2181 = vadd.f32 %v2006, %v2167
    %v2182 = vadd.f32 %v2007, %v2160
    %v2183 = vadd.f32 %v2008, %v2168
    %v2184 = vadd.f32 %v2009, %v2164
    %v2185 = vstv %s132
    %v2186 = vmul.f32 %v48, %v2185
    %v2187 = vmul.f32 %v49, %v2185
    %v2188 = vmul.f32 %v50, %v2185
    %v2189 = vmul.f32 %v51, %v2185
    %v2190 = vmul.f32 %v52, %v2185
    %v2191 = vmul.f32 %v53, %v2185
    %v2192 = vmul.f32 %v54, %v2185
    %v2193 = vmul.f32 %v55, %v2185
    %v2202 = vrot.slane %v2186, 1
    %v2203 = vrot.slane %v2188, 1
    %v2204 = vsel %vm516, %v2202, %v2203
    %v2205 = vrot.slane %v2187, 1
    %v2206 = vrot.slane %v2189, 1
    %v2207 = vsel %vm516, %v2205, %v2206
    %v2208 = vrot.slane %v2190, 1
    %v2209 = vrot.slane %v2192, 1
    %v2210 = vsel %vm516, %v2208, %v2209
    %v2211 = vrot.slane %v2191, 1
    %v2212 = vrot.slane %v2193, 1
    %v2213 = vsel %vm516, %v2211, %v2212
    %2214 = vrot.lane.b32.xlu0 %v2204, 127
    %v2215 = vpop.permute.xlu0 %2214
    %2216 = vrot.lane.b32.xlu0 %v2207, 127
    %v2217 = vpop.permute.xlu0 %2216
    %2218 = vrot.lane.b32.xlu0 %v2203, 127
    %v2219 = vpop.permute.xlu0 %2218
    %2220 = vrot.lane.b32.xlu0 %v2206, 127
    %v2221 = vpop.permute.xlu0 %2220
    %2222 = vrot.lane.b32.xlu0 %v2210, 127
    %v2223 = vpop.permute.xlu0 %2222
    %2224 = vrot.lane.b32.xlu0 %v2213, 127
    %v2225 = vpop.permute.xlu0 %2224
    %2226 = vrot.lane.b32.xlu0 %v2209, 127
    %v2227 = vpop.permute.xlu0 %2226
    %2228 = vrot.lane.b32.xlu0 %v2212, 127
    %v2229 = vpop.permute.xlu0 %2228
    %v2230 = vsel %vm212, %v2215, %v2217
    %v2231 = vsel %vm212, %v2219, %v2221
    %v2232 = vsel %vm212, %v2223, %v2225
    %v2233 = vsel %vm212, %v2227, %v2229
    %v2242 = vadd.f32 %v2047, %v2230
    %v2243 = vadd.f32 %v2048, %v2217
    %v2244 = vadd.f32 %v2049, %v2231
    %v2245 = vadd.f32 %v2050, %v2221
    %v2246 = vadd.f32 %v2051, %v2232
    %v2247 = vadd.f32 %v2052, %v2225
    %v2248 = vadd.f32 %v2053, %v2233
    %v2249 = vadd.f32 %v2054, %v2229
    %v2250 = vstv %s79
    %v2251 = vmul.f32 %v48, %v2250
    %v2252 = vmul.f32 %v49, %v2250
    %v2253 = vmul.f32 %v50, %v2250
    %v2254 = vmul.f32 %v51, %v2250
    %v2255 = vmul.f32 %v52, %v2250
    %v2256 = vmul.f32 %v53, %v2250
    %v2257 = vmul.f32 %v54, %v2250
    %v2258 = vmul.f32 %v55, %v2250
    %v2267 = vrot.slane %v2251, 1
    %v2268 = vrot.slane %v2253, 1
    %v2269 = vsel %vm516, %v2267, %v2268
    %v2270 = vrot.slane %v2252, 1
    %v2271 = vrot.slane %v2254, 1
    %v2272 = vsel %vm516, %v2270, %v2271
    %v2273 = vrot.slane %v2255, 1
    %v2274 = vrot.slane %v2257, 1
    %v2275 = vsel %vm516, %v2273, %v2274
    %v2276 = vrot.slane %v2256, 1
    %v2277 = vrot.slane %v2258, 1
    %v2278 = vsel %vm516, %v2276, %v2277
    %2279 = vrot.lane.b32.xlu0 %v2269, 126
    %v2280 = vpop.permute.xlu0 %2279
    %2281 = vrot.lane.b32.xlu0 %v2272, 126
    %v2282 = vpop.permute.xlu0 %2281
    %2283 = vrot.lane.b32.xlu0 %v2268, 126
    %v2284 = vpop.permute.xlu0 %2283
    %2285 = vrot.lane.b32.xlu0 %v2271, 126
    %v2286 = vpop.permute.xlu0 %2285
    %2287 = vrot.lane.b32.xlu0 %v2275, 126
    %v2288 = vpop.permute.xlu0 %2287
    %2289 = vrot.lane.b32.xlu0 %v2278, 126
    %v2290 = vpop.permute.xlu0 %2289
    %2291 = vrot.lane.b32.xlu0 %v2274, 126
    %v2292 = vpop.permute.xlu0 %2291
    %2293 = vrot.lane.b32.xlu0 %v2277, 126
    %v2294 = vpop.permute.xlu0 %2293
    %v2295 = vsel %vm372, %v2280, %v2282
    %v2296 = vsel %vm372, %v2284, %v2286
    %v2297 = vsel %vm372, %v2288, %v2290
    %v2298 = vsel %vm372, %v2292, %v2294
    %v2307 = vadd.f32 %v2112, %v2295
    %v2308 = vadd.f32 %v2113, %v2282
    %v2309 = vadd.f32 %v2114, %v2296
    %v2310 = vadd.f32 %v2115, %v2286
    %v2311 = vadd.f32 %v2116, %v2297
    %v2312 = vadd.f32 %v2117, %v2290
    %v2313 = vadd.f32 %v2118, %v2298
    %v2314 = vadd.f32 %v2119, %v2294
    %v2315 = vstv %s106
    %v2316 = vmul.f32 %v48, %v2315
    %v2317 = vmul.f32 %v49, %v2315
    %v2318 = vmul.f32 %v50, %v2315
    %v2319 = vmul.f32 %v51, %v2315
    %v2320 = vmul.f32 %v52, %v2315
    %v2321 = vmul.f32 %v53, %v2315
    %v2322 = vmul.f32 %v54, %v2315
    %v2323 = vmul.f32 %v55, %v2315
    %v2332 = vrot.slane %v2316, 1
    %v2333 = vrot.slane %v2318, 1
    %v2334 = vsel %vm516, %v2332, %v2333
    %v2335 = vrot.slane %v2317, 1
    %v2336 = vrot.slane %v2319, 1
    %v2337 = vsel %vm516, %v2335, %v2336
    %v2338 = vrot.slane %v2320, 1
    %v2339 = vrot.slane %v2322, 1
    %v2340 = vsel %vm516, %v2338, %v2339
    %v2341 = vrot.slane %v2321, 1
    %v2342 = vrot.slane %v2323, 1
    %v2343 = vsel %vm516, %v2341, %v2342
    %2344 = vrot.lane.b32.xlu0 %v2334, 126
    %v2345 = vpop.permute.xlu0 %2344
    %2346 = vrot.lane.b32.xlu0 %v2337, 126
    %v2347 = vpop.permute.xlu0 %2346
    %2348 = vrot.lane.b32.xlu0 %v2333, 126
    %v2349 = vpop.permute.xlu0 %2348
    %2350 = vrot.lane.b32.xlu0 %v2336, 126
    %v2351 = vpop.permute.xlu0 %2350
    %2352 = vrot.lane.b32.xlu0 %v2340, 126
    %v2353 = vpop.permute.xlu0 %2352
    %2354 = vrot.lane.b32.xlu0 %v2343, 126
    %v2355 = vpop.permute.xlu0 %2354
    %2356 = vrot.lane.b32.xlu0 %v2339, 126
    %v2357 = vpop.permute.xlu0 %2356
    %2358 = vrot.lane.b32.xlu0 %v2342, 126
    %v2359 = vpop.permute.xlu0 %2358
    %v2360 = vsel %vm372, %v2345, %v2347
    %v2361 = vsel %vm372, %v2349, %v2351
    %v2362 = vsel %vm372, %v2353, %v2355
    %v2363 = vsel %vm372, %v2357, %v2359
    %v2372 = vadd.f32 %v2177, %v2360
    %v2373 = vadd.f32 %v2178, %v2347
    %v2374 = vadd.f32 %v2179, %v2361
    %v2375 = vadd.f32 %v2180, %v2351
    %v2376 = vadd.f32 %v2181, %v2362
    %v2377 = vadd.f32 %v2182, %v2355
    %v2378 = vadd.f32 %v2183, %v2363
    %v2379 = vadd.f32 %v2184, %v2359
    %v2380 = vstv %s133
    %v2381 = vmul.f32 %v48, %v2380
    %v2382 = vmul.f32 %v49, %v2380
    %v2383 = vmul.f32 %v50, %v2380
    %v2384 = vmul.f32 %v51, %v2380
    %v2385 = vmul.f32 %v52, %v2380
    %v2386 = vmul.f32 %v53, %v2380
    %v2387 = vmul.f32 %v54, %v2380
    %v2388 = vmul.f32 %v55, %v2380
    %v2397 = vrot.slane %v2381, 1
    %v2398 = vrot.slane %v2383, 1
    %v2399 = vsel %vm516, %v2397, %v2398
    %v2400 = vrot.slane %v2382, 1
    %v2401 = vrot.slane %v2384, 1
    %v2402 = vsel %vm516, %v2400, %v2401
    %v2403 = vrot.slane %v2385, 1
    %v2404 = vrot.slane %v2387, 1
    %v2405 = vsel %vm516, %v2403, %v2404
    %v2406 = vrot.slane %v2386, 1
    %v2407 = vrot.slane %v2388, 1
    %v2408 = vsel %vm516, %v2406, %v2407
    %2409 = vrot.lane.b32.xlu0 %v2399, 126
    %v2410 = vpop.permute.xlu0 %2409
    %2411 = vrot.lane.b32.xlu0 %v2402, 126
    %v2412 = vpop.permute.xlu0 %2411
    %2413 = vrot.lane.b32.xlu0 %v2398, 126
    %v2414 = vpop.permute.xlu0 %2413
    %2415 = vrot.lane.b32.xlu0 %v2401, 126
    %v2416 = vpop.permute.xlu0 %2415
    %2417 = vrot.lane.b32.xlu0 %v2405, 126
    %v2418 = vpop.permute.xlu0 %2417
    %2419 = vrot.lane.b32.xlu0 %v2408, 126
    %v2420 = vpop.permute.xlu0 %2419
    %2421 = vrot.lane.b32.xlu0 %v2404, 126
    %v2422 = vpop.permute.xlu0 %2421
    %2423 = vrot.lane.b32.xlu0 %v2407, 126
    %v2424 = vpop.permute.xlu0 %2423
    %v2425 = vsel %vm372, %v2410, %v2412
    %v2426 = vsel %vm372, %v2414, %v2416
    %v2427 = vsel %vm372, %v2418, %v2420
    %v2428 = vsel %vm372, %v2422, %v2424
    %v2437 = vadd.f32 %v2242, %v2425
    %v2438 = vadd.f32 %v2243, %v2412
    %v2439 = vadd.f32 %v2244, %v2426
    %v2440 = vadd.f32 %v2245, %v2416
    %v2441 = vadd.f32 %v2246, %v2427
    %v2442 = vadd.f32 %v2247, %v2420
    %v2443 = vadd.f32 %v2248, %v2428
    %v2444 = vadd.f32 %v2249, %v2424
    %v2445 = vstv %s80
    %v2446 = vmul.f32 %v48, %v2445
    %v2447 = vmul.f32 %v49, %v2445
    %v2448 = vmul.f32 %v50, %v2445
    %v2449 = vmul.f32 %v51, %v2445
    %v2450 = vmul.f32 %v52, %v2445
    %v2451 = vmul.f32 %v53, %v2445
    %v2452 = vmul.f32 %v54, %v2445
    %v2453 = vmul.f32 %v55, %v2445
    %v2462 = vrot.slane %v2446, 2
    %v2463 = vrot.slane %v2448, 2
    %v2464 = vsel %vm1042, %v2462, %v2463
    %v2465 = vrot.slane %v2447, 2
    %v2466 = vrot.slane %v2449, 2
    %v2467 = vsel %vm1042, %v2465, %v2466
    %v2468 = vrot.slane %v2450, 2
    %v2469 = vrot.slane %v2452, 2
    %v2470 = vsel %vm1042, %v2468, %v2469
    %v2471 = vrot.slane %v2451, 2
    %v2472 = vrot.slane %v2453, 2
    %v2473 = vsel %vm1042, %v2471, %v2472
    %v2482 = vadd.f32 %v2307, %v2464
    %v2483 = vadd.f32 %v2308, %v2467
    %v2484 = vadd.f32 %v2309, %v2463
    %v2485 = vadd.f32 %v2310, %v2466
    %v2486 = vadd.f32 %v2311, %v2470
    %v2487 = vadd.f32 %v2312, %v2473
    %v2488 = vadd.f32 %v2313, %v2469
    %v2489 = vadd.f32 %v2314, %v2472
    %v2490 = vstv %s107
    %v2491 = vmul.f32 %v48, %v2490
    %v2492 = vmul.f32 %v49, %v2490
    %v2493 = vmul.f32 %v50, %v2490
    %v2494 = vmul.f32 %v51, %v2490
    %v2495 = vmul.f32 %v52, %v2490
    %v2496 = vmul.f32 %v53, %v2490
    %v2497 = vmul.f32 %v54, %v2490
    %v2498 = vmul.f32 %v55, %v2490
    %v2507 = vrot.slane %v2491, 2
    %v2508 = vrot.slane %v2493, 2
    %v2509 = vsel %vm1042, %v2507, %v2508
    %v2510 = vrot.slane %v2492, 2
    %v2511 = vrot.slane %v2494, 2
    %v2512 = vsel %vm1042, %v2510, %v2511
    %v2513 = vrot.slane %v2495, 2
    %v2514 = vrot.slane %v2497, 2
    %v2515 = vsel %vm1042, %v2513, %v2514
    %v2516 = vrot.slane %v2496, 2
    %v2517 = vrot.slane %v2498, 2
    %v2518 = vsel %vm1042, %v2516, %v2517
    %v2527 = vadd.f32 %v2372, %v2509
    %v2528 = vadd.f32 %v2373, %v2512
    %v2529 = vadd.f32 %v2374, %v2508
    %v2530 = vadd.f32 %v2375, %v2511
    %v2531 = vadd.f32 %v2376, %v2515
    %v2532 = vadd.f32 %v2377, %v2518
    %v2533 = vadd.f32 %v2378, %v2514
    %v2534 = vadd.f32 %v2379, %v2517
    %v2535 = vstv %s134
    %v2536 = vmul.f32 %v48, %v2535
    %v2537 = vmul.f32 %v49, %v2535
    %v2538 = vmul.f32 %v50, %v2535
    %v2539 = vmul.f32 %v51, %v2535
    %v2540 = vmul.f32 %v52, %v2535
    %v2541 = vmul.f32 %v53, %v2535
    %v2542 = vmul.f32 %v54, %v2535
    %v2543 = vmul.f32 %v55, %v2535
    %v2552 = vrot.slane %v2536, 2
    %v2553 = vrot.slane %v2538, 2
    %v2554 = vsel %vm1042, %v2552, %v2553
    %v2555 = vrot.slane %v2537, 2
    %v2556 = vrot.slane %v2539, 2
    %v2557 = vsel %vm1042, %v2555, %v2556
    %v2558 = vrot.slane %v2540, 2
    %v2559 = vrot.slane %v2542, 2
    %v2560 = vsel %vm1042, %v2558, %v2559
    %v2561 = vrot.slane %v2541, 2
    %v2562 = vrot.slane %v2543, 2
    %v2563 = vsel %vm1042, %v2561, %v2562
    %v2572 = vadd.f32 %v2437, %v2554
    %v2573 = vadd.f32 %v2438, %v2557
    %v2574 = vadd.f32 %v2439, %v2553
    %v2575 = vadd.f32 %v2440, %v2556
    %v2576 = vadd.f32 %v2441, %v2560
    %v2577 = vadd.f32 %v2442, %v2563
    %v2578 = vadd.f32 %v2443, %v2559
    %v2579 = vadd.f32 %v2444, %v2562
    %v2580 = vstv %s81
    %v2581 = vmul.f32 %v48, %v2580
    %v2582 = vmul.f32 %v49, %v2580
    %v2583 = vmul.f32 %v50, %v2580
    %v2584 = vmul.f32 %v51, %v2580
    %v2585 = vmul.f32 %v52, %v2580
    %v2586 = vmul.f32 %v53, %v2580
    %v2587 = vmul.f32 %v54, %v2580
    %v2588 = vmul.f32 %v55, %v2580
    %v2597 = vrot.slane %v2581, 2
    %v2598 = vrot.slane %v2583, 2
    %v2599 = vsel %vm1042, %v2597, %v2598
    %v2600 = vrot.slane %v2582, 2
    %v2601 = vrot.slane %v2584, 2
    %v2602 = vsel %vm1042, %v2600, %v2601
    %v2603 = vrot.slane %v2585, 2
    %v2604 = vrot.slane %v2587, 2
    %v2605 = vsel %vm1042, %v2603, %v2604
    %v2606 = vrot.slane %v2586, 2
    %v2607 = vrot.slane %v2588, 2
    %v2608 = vsel %vm1042, %v2606, %v2607
    %2609 = vrot.lane.b32.xlu0 %v2599, 127
    %v2610 = vpop.permute.xlu0 %2609
    %2611 = vrot.lane.b32.xlu0 %v2602, 127
    %v2612 = vpop.permute.xlu0 %2611
    %2613 = vrot.lane.b32.xlu0 %v2598, 127
    %v2614 = vpop.permute.xlu0 %2613
    %2615 = vrot.lane.b32.xlu0 %v2601, 127
    %v2616 = vpop.permute.xlu0 %2615
    %2617 = vrot.lane.b32.xlu0 %v2605, 127
    %v2618 = vpop.permute.xlu0 %2617
    %2619 = vrot.lane.b32.xlu0 %v2608, 127
    %v2620 = vpop.permute.xlu0 %2619
    %2621 = vrot.lane.b32.xlu0 %v2604, 127
    %v2622 = vpop.permute.xlu0 %2621
    %2623 = vrot.lane.b32.xlu0 %v2607, 127
    %v2624 = vpop.permute.xlu0 %2623
    %v2625 = vsel %vm212, %v2610, %v2612
    %v2626 = vsel %vm212, %v2614, %v2616
    %v2627 = vsel %vm212, %v2618, %v2620
    %v2628 = vsel %vm212, %v2622, %v2624
    %v2637 = vadd.f32 %v2482, %v2625
    %v2638 = vadd.f32 %v2483, %v2612
    %v2639 = vadd.f32 %v2484, %v2626
    %v2640 = vadd.f32 %v2485, %v2616
    %v2641 = vadd.f32 %v2486, %v2627
    %v2642 = vadd.f32 %v2487, %v2620
    %v2643 = vadd.f32 %v2488, %v2628
    %v2644 = vadd.f32 %v2489, %v2624
    %v2645 = vstv %s108
    %v2646 = vmul.f32 %v48, %v2645
    %v2647 = vmul.f32 %v49, %v2645
    %v2648 = vmul.f32 %v50, %v2645
    %v2649 = vmul.f32 %v51, %v2645
    %v2650 = vmul.f32 %v52, %v2645
    %v2651 = vmul.f32 %v53, %v2645
    %v2652 = vmul.f32 %v54, %v2645
    %v2653 = vmul.f32 %v55, %v2645
    %v2662 = vrot.slane %v2646, 2
    %v2663 = vrot.slane %v2648, 2
    %v2664 = vsel %vm1042, %v2662, %v2663
    %v2665 = vrot.slane %v2647, 2
    %v2666 = vrot.slane %v2649, 2
    %v2667 = vsel %vm1042, %v2665, %v2666
    %v2668 = vrot.slane %v2650, 2
    %v2669 = vrot.slane %v2652, 2
    %v2670 = vsel %vm1042, %v2668, %v2669
    %v2671 = vrot.slane %v2651, 2
    %v2672 = vrot.slane %v2653, 2
    %v2673 = vsel %vm1042, %v2671, %v2672
    %2674 = vrot.lane.b32.xlu0 %v2664, 127
    %v2675 = vpop.permute.xlu0 %2674
    %2676 = vrot.lane.b32.xlu0 %v2667, 127
    %v2677 = vpop.permute.xlu0 %2676
    %2678 = vrot.lane.b32.xlu0 %v2663, 127
    %v2679 = vpop.permute.xlu0 %2678
    %2680 = vrot.lane.b32.xlu0 %v2666, 127
    %v2681 = vpop.permute.xlu0 %2680
    %2682 = vrot.lane.b32.xlu0 %v2670, 127
    %v2683 = vpop.permute.xlu0 %2682
    %2684 = vrot.lane.b32.xlu0 %v2673, 127
    %v2685 = vpop.permute.xlu0 %2684
    %2686 = vrot.lane.b32.xlu0 %v2669, 127
    %v2687 = vpop.permute.xlu0 %2686
    %2688 = vrot.lane.b32.xlu0 %v2672, 127
    %v2689 = vpop.permute.xlu0 %2688
    %v2690 = vsel %vm212, %v2675, %v2677
    %v2691 = vsel %vm212, %v2679, %v2681
    %v2692 = vsel %vm212, %v2683, %v2685
    %v2693 = vsel %vm212, %v2687, %v2689
    %v2702 = vadd.f32 %v2527, %v2690
    %v2703 = vadd.f32 %v2528, %v2677
    %v2704 = vadd.f32 %v2529, %v2691
    %v2705 = vadd.f32 %v2530, %v2681
    %v2706 = vadd.f32 %v2531, %v2692
    %v2707 = vadd.f32 %v2532, %v2685
    %v2708 = vadd.f32 %v2533, %v2693
    %v2709 = vadd.f32 %v2534, %v2689
    %v2710 = vstv %s135
    %v2711 = vmul.f32 %v48, %v2710
    %v2712 = vmul.f32 %v49, %v2710
    %v2713 = vmul.f32 %v50, %v2710
    %v2714 = vmul.f32 %v51, %v2710
    %v2715 = vmul.f32 %v52, %v2710
    %v2716 = vmul.f32 %v53, %v2710
    %v2717 = vmul.f32 %v54, %v2710
    %v2718 = vmul.f32 %v55, %v2710
    %v2727 = vrot.slane %v2711, 2
    %v2728 = vrot.slane %v2713, 2
    %v2729 = vsel %vm1042, %v2727, %v2728
    %v2730 = vrot.slane %v2712, 2
    %v2731 = vrot.slane %v2714, 2
    %v2732 = vsel %vm1042, %v2730, %v2731
    %v2733 = vrot.slane %v2715, 2
    %v2734 = vrot.slane %v2717, 2
    %v2735 = vsel %vm1042, %v2733, %v2734
    %v2736 = vrot.slane %v2716, 2
    %v2737 = vrot.slane %v2718, 2
    %v2738 = vsel %vm1042, %v2736, %v2737
    %2739 = vrot.lane.b32.xlu0 %v2729, 127
    %v2740 = vpop.permute.xlu0 %2739
    %2741 = vrot.lane.b32.xlu0 %v2732, 127
    %v2742 = vpop.permute.xlu0 %2741
    %2743 = vrot.lane.b32.xlu0 %v2728, 127
    %v2744 = vpop.permute.xlu0 %2743
    %2745 = vrot.lane.b32.xlu0 %v2731, 127
    %v2746 = vpop.permute.xlu0 %2745
    %2747 = vrot.lane.b32.xlu0 %v2735, 127
    %v2748 = vpop.permute.xlu0 %2747
    %2749 = vrot.lane.b32.xlu0 %v2738, 127
    %v2750 = vpop.permute.xlu0 %2749
    %2751 = vrot.lane.b32.xlu0 %v2734, 127
    %v2752 = vpop.permute.xlu0 %2751
    %2753 = vrot.lane.b32.xlu0 %v2737, 127
    %v2754 = vpop.permute.xlu0 %2753
    %v2755 = vsel %vm212, %v2740, %v2742
    %v2756 = vsel %vm212, %v2744, %v2746
    %v2757 = vsel %vm212, %v2748, %v2750
    %v2758 = vsel %vm212, %v2752, %v2754
    %v2767 = vadd.f32 %v2572, %v2755
    %v2768 = vadd.f32 %v2573, %v2742
    %v2769 = vadd.f32 %v2574, %v2756
    %v2770 = vadd.f32 %v2575, %v2746
    %v2771 = vadd.f32 %v2576, %v2757
    %v2772 = vadd.f32 %v2577, %v2750
    %v2773 = vadd.f32 %v2578, %v2758
    %v2774 = vadd.f32 %v2579, %v2754
    %v2775 = vstv %s82
    %v2776 = vmul.f32 %v48, %v2775
    %v2777 = vmul.f32 %v49, %v2775
    %v2778 = vmul.f32 %v50, %v2775
    %v2779 = vmul.f32 %v51, %v2775
    %v2780 = vmul.f32 %v52, %v2775
    %v2781 = vmul.f32 %v53, %v2775
    %v2782 = vmul.f32 %v54, %v2775
    %v2783 = vmul.f32 %v55, %v2775
    %v2792 = vrot.slane %v2776, 2
    %v2793 = vrot.slane %v2778, 2
    %v2794 = vsel %vm1042, %v2792, %v2793
    %v2795 = vrot.slane %v2777, 2
    %v2796 = vrot.slane %v2779, 2
    %v2797 = vsel %vm1042, %v2795, %v2796
    %v2798 = vrot.slane %v2780, 2
    %v2799 = vrot.slane %v2782, 2
    %v2800 = vsel %vm1042, %v2798, %v2799
    %v2801 = vrot.slane %v2781, 2
    %v2802 = vrot.slane %v2783, 2
    %v2803 = vsel %vm1042, %v2801, %v2802
    %2804 = vrot.lane.b32.xlu0 %v2794, 126
    %v2805 = vpop.permute.xlu0 %2804
    %2806 = vrot.lane.b32.xlu0 %v2797, 126
    %v2807 = vpop.permute.xlu0 %2806
    %2808 = vrot.lane.b32.xlu0 %v2793, 126
    %v2809 = vpop.permute.xlu0 %2808
    %2810 = vrot.lane.b32.xlu0 %v2796, 126
    %v2811 = vpop.permute.xlu0 %2810
    %2812 = vrot.lane.b32.xlu0 %v2800, 126
    %v2813 = vpop.permute.xlu0 %2812
    %2814 = vrot.lane.b32.xlu0 %v2803, 126
    %v2815 = vpop.permute.xlu0 %2814
    %2816 = vrot.lane.b32.xlu0 %v2799, 126
    %v2817 = vpop.permute.xlu0 %2816
    %2818 = vrot.lane.b32.xlu0 %v2802, 126
    %v2819 = vpop.permute.xlu0 %2818
    %v2820 = vsel %vm372, %v2805, %v2807
    %v2821 = vsel %vm372, %v2809, %v2811
    %v2822 = vsel %vm372, %v2813, %v2815
    %v2823 = vsel %vm372, %v2817, %v2819
    %v2832 = vadd.f32 %v2637, %v2820
    %v2833 = vadd.f32 %v2638, %v2807
    %v2834 = vadd.f32 %v2639, %v2821
    %v2835 = vadd.f32 %v2640, %v2811
    %v2836 = vadd.f32 %v2641, %v2822
    %v2837 = vadd.f32 %v2642, %v2815
    %v2838 = vadd.f32 %v2643, %v2823
    %v2839 = vadd.f32 %v2644, %v2819
    %v2840 = vstv %s109
    %v2841 = vmul.f32 %v48, %v2840
    %v2842 = vmul.f32 %v49, %v2840
    %v2843 = vmul.f32 %v50, %v2840
    %v2844 = vmul.f32 %v51, %v2840
    %v2845 = vmul.f32 %v52, %v2840
    %v2846 = vmul.f32 %v53, %v2840
    %v2847 = vmul.f32 %v54, %v2840
    %v2848 = vmul.f32 %v55, %v2840
    %v2857 = vrot.slane %v2841, 2
    %v2858 = vrot.slane %v2843, 2
    %v2859 = vsel %vm1042, %v2857, %v2858
    %v2860 = vrot.slane %v2842, 2
    %v2861 = vrot.slane %v2844, 2
    %v2862 = vsel %vm1042, %v2860, %v2861
    %v2863 = vrot.slane %v2845, 2
    %v2864 = vrot.slane %v2847, 2
    %v2865 = vsel %vm1042, %v2863, %v2864
    %v2866 = vrot.slane %v2846, 2
    %v2867 = vrot.slane %v2848, 2
    %v2868 = vsel %vm1042, %v2866, %v2867
    %2869 = vrot.lane.b32.xlu0 %v2859, 126
    %v2870 = vpop.permute.xlu0 %2869
    %2871 = vrot.lane.b32.xlu0 %v2862, 126
    %v2872 = vpop.permute.xlu0 %2871
    %2873 = vrot.lane.b32.xlu0 %v2858, 126
    %v2874 = vpop.permute.xlu0 %2873
    %2875 = vrot.lane.b32.xlu0 %v2861, 126
    %v2876 = vpop.permute.xlu0 %2875
    %2877 = vrot.lane.b32.xlu0 %v2865, 126
    %v2878 = vpop.permute.xlu0 %2877
    %2879 = vrot.lane.b32.xlu0 %v2868, 126
    %v2880 = vpop.permute.xlu0 %2879
    %2881 = vrot.lane.b32.xlu0 %v2864, 126
    %v2882 = vpop.permute.xlu0 %2881
    %2883 = vrot.lane.b32.xlu0 %v2867, 126
    %v2884 = vpop.permute.xlu0 %2883
    %v2885 = vsel %vm372, %v2870, %v2872
    %v2886 = vsel %vm372, %v2874, %v2876
    %v2887 = vsel %vm372, %v2878, %v2880
    %v2888 = vsel %vm372, %v2882, %v2884
    %v2897 = vadd.f32 %v2702, %v2885
    %v2898 = vadd.f32 %v2703, %v2872
    %v2899 = vadd.f32 %v2704, %v2886
    %v2900 = vadd.f32 %v2705, %v2876
    %v2901 = vadd.f32 %v2706, %v2887
    %v2902 = vadd.f32 %v2707, %v2880
    %v2903 = vadd.f32 %v2708, %v2888
    %v2904 = vadd.f32 %v2709, %v2884
    %v2905 = vstv %s136
    %v2906 = vmul.f32 %v48, %v2905
    %v2907 = vmul.f32 %v49, %v2905
    %v2908 = vmul.f32 %v50, %v2905
    %v2909 = vmul.f32 %v51, %v2905
    %v2910 = vmul.f32 %v52, %v2905
    %v2911 = vmul.f32 %v53, %v2905
    %v2912 = vmul.f32 %v54, %v2905
    %v2913 = vmul.f32 %v55, %v2905
    %v2922 = vrot.slane %v2906, 2
    %v2923 = vrot.slane %v2908, 2
    %v2924 = vsel %vm1042, %v2922, %v2923
    %v2925 = vrot.slane %v2907, 2
    %v2926 = vrot.slane %v2909, 2
    %v2927 = vsel %vm1042, %v2925, %v2926
    %v2928 = vrot.slane %v2910, 2
    %v2929 = vrot.slane %v2912, 2
    %v2930 = vsel %vm1042, %v2928, %v2929
    %v2931 = vrot.slane %v2911, 2
    %v2932 = vrot.slane %v2913, 2
    %v2933 = vsel %vm1042, %v2931, %v2932
    %2934 = vrot.lane.b32.xlu0 %v2924, 126
    %v2935 = vpop.permute.xlu0 %2934
    %2936 = vrot.lane.b32.xlu0 %v2927, 126
    %v2937 = vpop.permute.xlu0 %2936
    %2938 = vrot.lane.b32.xlu0 %v2923, 126
    %v2939 = vpop.permute.xlu0 %2938
    %2940 = vrot.lane.b32.xlu0 %v2926, 126
    %v2941 = vpop.permute.xlu0 %2940
    %2942 = vrot.lane.b32.xlu0 %v2930, 126
    %v2943 = vpop.permute.xlu0 %2942
    %2944 = vrot.lane.b32.xlu0 %v2933, 126
    %v2945 = vpop.permute.xlu0 %2944
    %2946 = vrot.lane.b32.xlu0 %v2929, 126
    %v2947 = vpop.permute.xlu0 %2946
    %2948 = vrot.lane.b32.xlu0 %v2932, 126
    %v2949 = vpop.permute.xlu0 %2948
    %v2950 = vsel %vm372, %v2935, %v2937
    %v2951 = vsel %vm372, %v2939, %v2941
    %v2952 = vsel %vm372, %v2943, %v2945
    %v2953 = vsel %vm372, %v2947, %v2949
    %v2962 = vadd.f32 %v2767, %v2950
    %v2963 = vadd.f32 %v2768, %v2937
    %v2964 = vadd.f32 %v2769, %v2951
    %v2965 = vadd.f32 %v2770, %v2941
    %v2966 = vadd.f32 %v2771, %v2952
    %v2967 = vadd.f32 %v2772, %v2945
    %v2968 = vadd.f32 %v2773, %v2953
    %v2969 = vadd.f32 %v2774, %v2949
    %v2970 = vadd.f32 %v1551, %v2832
    %v2971 = vadd.f32 %v1552, %v2833
    %v2972 = vadd.f32 %v1553, %v2834
    %v2973 = vadd.f32 %v1554, %v2835
    %v2974 = vadd.f32 %v1555, %v2836
    %v2975 = vadd.f32 %v1556, %v2837
    %v2976 = vadd.f32 %v1557, %v2838
    %v2977 = vadd.f32 %v1558, %v2839
    %v2978 = vadd.f32 %v1559, %v2897
    %v2979 = vadd.f32 %v1560, %v2898
    %v2980 = vadd.f32 %v1561, %v2899
    %v2981 = vadd.f32 %v1562, %v2900
    %v2982 = vadd.f32 %v1563, %v2901
    %v2983 = vadd.f32 %v1564, %v2902
    %v2984 = vadd.f32 %v1565, %v2903
    %v2985 = vadd.f32 %v1566, %v2904
    %v2986 = vadd.f32 %v1567, %v2962
    %v2987 = vadd.f32 %v1568, %v2963
    %v2988 = vadd.f32 %v1569, %v2964
    %v2989 = vadd.f32 %v1570, %v2965
    %v2990 = vadd.f32 %v1571, %v2966
    %v2991 = vadd.f32 %v1572, %v2967
    %v2992 = vadd.f32 %v1573, %v2968
    %v2993 = vadd.f32 %v1574, %v2969
    %v2994 = vstv %s83
    %v2995 = vmul.f32 %v57, %v2994
    %v2996 = vmul.f32 %v58, %v2994
    %v2997 = vmul.f32 %v59, %v2994
    %v2998 = vmul.f32 %v60, %v2994
    %v2999 = vmul.f32 %v61, %v2994
    %v3000 = vmul.f32 %v62, %v2994
    %v3001 = vmul.f32 %v63, %v2994
    %v3002 = vmul.f32 %v64, %v2994
    %v3003 = vstv %s110
    %v3004 = vmul.f32 %v57, %v3003
    %v3005 = vmul.f32 %v58, %v3003
    %v3006 = vmul.f32 %v59, %v3003
    %v3007 = vmul.f32 %v60, %v3003
    %v3008 = vmul.f32 %v61, %v3003
    %v3009 = vmul.f32 %v62, %v3003
    %v3010 = vmul.f32 %v63, %v3003
    %v3011 = vmul.f32 %v64, %v3003
    %v3012 = vstv %s137
    %v3013 = vmul.f32 %v57, %v3012
    %v3014 = vmul.f32 %v58, %v3012
    %v3015 = vmul.f32 %v59, %v3012
    %v3016 = vmul.f32 %v60, %v3012
    %v3017 = vmul.f32 %v61, %v3012
    %v3018 = vmul.f32 %v62, %v3012
    %v3019 = vmul.f32 %v63, %v3012
    %v3020 = vmul.f32 %v64, %v3012
    %v3021 = vstv %s84
    %v3022 = vmul.f32 %v57, %v3021
    %v3023 = vmul.f32 %v58, %v3021
    %v3024 = vmul.f32 %v59, %v3021
    %v3025 = vmul.f32 %v60, %v3021
    %v3026 = vmul.f32 %v61, %v3021
    %v3027 = vmul.f32 %v62, %v3021
    %v3028 = vmul.f32 %v63, %v3021
    %v3029 = vmul.f32 %v64, %v3021
    %3038 = vrot.lane.b32.xlu0 %v3022, 127
    %v3039 = vpop.permute.xlu0 %3038
    %3040 = vrot.lane.b32.xlu0 %v3023, 127
    %v3041 = vpop.permute.xlu0 %3040
    %3042 = vrot.lane.b32.xlu0 %v3024, 127
    %v3043 = vpop.permute.xlu0 %3042
    %3044 = vrot.lane.b32.xlu0 %v3025, 127
    %v3045 = vpop.permute.xlu0 %3044
    %3046 = vrot.lane.b32.xlu0 %v3026, 127
    %v3047 = vpop.permute.xlu0 %3046
    %3048 = vrot.lane.b32.xlu0 %v3027, 127
    %v3049 = vpop.permute.xlu0 %3048
    %3050 = vrot.lane.b32.xlu0 %v3028, 127
    %v3051 = vpop.permute.xlu0 %3050
    %3052 = vrot.lane.b32.xlu0 %v3029, 127
    %v3053 = vpop.permute.xlu0 %3052
    %v3054 = vsel %vm212, %v3039, %v3041
    %v3055 = vsel %vm212, %v3043, %v3045
    %v3056 = vsel %vm212, %v3047, %v3049
    %v3057 = vsel %vm212, %v3051, %v3053
    %v3066 = vadd.f32 %v2995, %v3054
    %v3067 = vadd.f32 %v2996, %v3041
    %v3068 = vadd.f32 %v2997, %v3055
    %v3069 = vadd.f32 %v2998, %v3045
    %v3070 = vadd.f32 %v2999, %v3056
    %v3071 = vadd.f32 %v3000, %v3049
    %v3072 = vadd.f32 %v3001, %v3057
    %v3073 = vadd.f32 %v3002, %v3053
    %v3074 = vstv %s111
    %v3075 = vmul.f32 %v57, %v3074
    %v3076 = vmul.f32 %v58, %v3074
    %v3077 = vmul.f32 %v59, %v3074
    %v3078 = vmul.f32 %v60, %v3074
    %v3079 = vmul.f32 %v61, %v3074
    %v3080 = vmul.f32 %v62, %v3074
    %v3081 = vmul.f32 %v63, %v3074
    %v3082 = vmul.f32 %v64, %v3074
    %3091 = vrot.lane.b32.xlu0 %v3075, 127
    %v3092 = vpop.permute.xlu0 %3091
    %3093 = vrot.lane.b32.xlu0 %v3076, 127
    %v3094 = vpop.permute.xlu0 %3093
    %3095 = vrot.lane.b32.xlu0 %v3077, 127
    %v3096 = vpop.permute.xlu0 %3095
    %3097 = vrot.lane.b32.xlu0 %v3078, 127
    %v3098 = vpop.permute.xlu0 %3097
    %3099 = vrot.lane.b32.xlu0 %v3079, 127
    %v3100 = vpop.permute.xlu0 %3099
    %3101 = vrot.lane.b32.xlu0 %v3080, 127
    %v3102 = vpop.permute.xlu0 %3101
    %3103 = vrot.lane.b32.xlu0 %v3081, 127
    %v3104 = vpop.permute.xlu0 %3103
    %3105 = vrot.lane.b32.xlu0 %v3082, 127
    %v3106 = vpop.permute.xlu0 %3105
    %v3107 = vsel %vm212, %v3092, %v3094
    %v3108 = vsel %vm212, %v3096, %v3098
    %v3109 = vsel %vm212, %v3100, %v3102
    %v3110 = vsel %vm212, %v3104, %v3106
    %v3119 = vadd.f32 %v3004, %v3107
    %v3120 = vadd.f32 %v3005, %v3094
    %v3121 = vadd.f32 %v3006, %v3108
    %v3122 = vadd.f32 %v3007, %v3098
    %v3123 = vadd.f32 %v3008, %v3109
    %v3124 = vadd.f32 %v3009, %v3102
    %v3125 = vadd.f32 %v3010, %v3110
    %v3126 = vadd.f32 %v3011, %v3106
    %v3127 = vstv %s138
    %v3128 = vmul.f32 %v57, %v3127
    %v3129 = vmul.f32 %v58, %v3127
    %v3130 = vmul.f32 %v59, %v3127
    %v3131 = vmul.f32 %v60, %v3127
    %v3132 = vmul.f32 %v61, %v3127
    %v3133 = vmul.f32 %v62, %v3127
    %v3134 = vmul.f32 %v63, %v3127
    %v3135 = vmul.f32 %v64, %v3127
    %3144 = vrot.lane.b32.xlu0 %v3128, 127
    %v3145 = vpop.permute.xlu0 %3144
    %3146 = vrot.lane.b32.xlu0 %v3129, 127
    %v3147 = vpop.permute.xlu0 %3146
    %3148 = vrot.lane.b32.xlu0 %v3130, 127
    %v3149 = vpop.permute.xlu0 %3148
    %3150 = vrot.lane.b32.xlu0 %v3131, 127
    %v3151 = vpop.permute.xlu0 %3150
    %3152 = vrot.lane.b32.xlu0 %v3132, 127
    %v3153 = vpop.permute.xlu0 %3152
    %3154 = vrot.lane.b32.xlu0 %v3133, 127
    %v3155 = vpop.permute.xlu0 %3154
    %3156 = vrot.lane.b32.xlu0 %v3134, 127
    %v3157 = vpop.permute.xlu0 %3156
    %3158 = vrot.lane.b32.xlu0 %v3135, 127
    %v3159 = vpop.permute.xlu0 %3158
    %v3160 = vsel %vm212, %v3145, %v3147
    %v3161 = vsel %vm212, %v3149, %v3151
    %v3162 = vsel %vm212, %v3153, %v3155
    %v3163 = vsel %vm212, %v3157, %v3159
    %v3172 = vadd.f32 %v3013, %v3160
    %v3173 = vadd.f32 %v3014, %v3147
    %v3174 = vadd.f32 %v3015, %v3161
    %v3175 = vadd.f32 %v3016, %v3151
    %v3176 = vadd.f32 %v3017, %v3162
    %v3177 = vadd.f32 %v3018, %v3155
    %v3178 = vadd.f32 %v3019, %v3163
    %v3179 = vadd.f32 %v3020, %v3159
    %v3180 = vstv %s85
    %v3181 = vmul.f32 %v57, %v3180
    %v3182 = vmul.f32 %v58, %v3180
    %v3183 = vmul.f32 %v59, %v3180
    %v3184 = vmul.f32 %v60, %v3180
    %v3185 = vmul.f32 %v61, %v3180
    %v3186 = vmul.f32 %v62, %v3180
    %v3187 = vmul.f32 %v63, %v3180
    %v3188 = vmul.f32 %v64, %v3180
    %3197 = vrot.lane.b32.xlu0 %v3181, 126
    %v3198 = vpop.permute.xlu0 %3197
    %3199 = vrot.lane.b32.xlu0 %v3182, 126
    %v3200 = vpop.permute.xlu0 %3199
    %3201 = vrot.lane.b32.xlu0 %v3183, 126
    %v3202 = vpop.permute.xlu0 %3201
    %3203 = vrot.lane.b32.xlu0 %v3184, 126
    %v3204 = vpop.permute.xlu0 %3203
    %3205 = vrot.lane.b32.xlu0 %v3185, 126
    %v3206 = vpop.permute.xlu0 %3205
    %3207 = vrot.lane.b32.xlu0 %v3186, 126
    %v3208 = vpop.permute.xlu0 %3207
    %3209 = vrot.lane.b32.xlu0 %v3187, 126
    %v3210 = vpop.permute.xlu0 %3209
    %3211 = vrot.lane.b32.xlu0 %v3188, 126
    %v3212 = vpop.permute.xlu0 %3211
    %v3213 = vsel %vm372, %v3198, %v3200
    %v3214 = vsel %vm372, %v3202, %v3204
    %v3215 = vsel %vm372, %v3206, %v3208
    %v3216 = vsel %vm372, %v3210, %v3212
    %v3225 = vadd.f32 %v3066, %v3213
    %v3226 = vadd.f32 %v3067, %v3200
    %v3227 = vadd.f32 %v3068, %v3214
    %v3228 = vadd.f32 %v3069, %v3204
    %v3229 = vadd.f32 %v3070, %v3215
    %v3230 = vadd.f32 %v3071, %v3208
    %v3231 = vadd.f32 %v3072, %v3216
    %v3232 = vadd.f32 %v3073, %v3212
    %v3233 = vstv %s112
    %v3234 = vmul.f32 %v57, %v3233
    %v3235 = vmul.f32 %v58, %v3233
    %v3236 = vmul.f32 %v59, %v3233
    %v3237 = vmul.f32 %v60, %v3233
    %v3238 = vmul.f32 %v61, %v3233
    %v3239 = vmul.f32 %v62, %v3233
    %v3240 = vmul.f32 %v63, %v3233
    %v3241 = vmul.f32 %v64, %v3233
    %3250 = vrot.lane.b32.xlu0 %v3234, 126
    %v3251 = vpop.permute.xlu0 %3250
    %3252 = vrot.lane.b32.xlu0 %v3235, 126
    %v3253 = vpop.permute.xlu0 %3252
    %3254 = vrot.lane.b32.xlu0 %v3236, 126
    %v3255 = vpop.permute.xlu0 %3254
    %3256 = vrot.lane.b32.xlu0 %v3237, 126
    %v3257 = vpop.permute.xlu0 %3256
    %3258 = vrot.lane.b32.xlu0 %v3238, 126
    %v3259 = vpop.permute.xlu0 %3258
    %3260 = vrot.lane.b32.xlu0 %v3239, 126
    %v3261 = vpop.permute.xlu0 %3260
    %3262 = vrot.lane.b32.xlu0 %v3240, 126
    %v3263 = vpop.permute.xlu0 %3262
    %3264 = vrot.lane.b32.xlu0 %v3241, 126
    %v3265 = vpop.permute.xlu0 %3264
    %v3266 = vsel %vm372, %v3251, %v3253
    %v3267 = vsel %vm372, %v3255, %v3257
    %v3268 = vsel %vm372, %v3259, %v3261
    %v3269 = vsel %vm372, %v3263, %v3265
    %v3278 = vadd.f32 %v3119, %v3266
    %v3279 = vadd.f32 %v3120, %v3253
    %v3280 = vadd.f32 %v3121, %v3267
    %v3281 = vadd.f32 %v3122, %v3257
    %v3282 = vadd.f32 %v3123, %v3268
    %v3283 = vadd.f32 %v3124, %v3261
    %v3284 = vadd.f32 %v3125, %v3269
    %v3285 = vadd.f32 %v3126, %v3265
    %v3286 = vstv %s139
    %v3287 = vmul.f32 %v57, %v3286
    %v3288 = vmul.f32 %v58, %v3286
    %v3289 = vmul.f32 %v59, %v3286
    %v3290 = vmul.f32 %v60, %v3286
    %v3291 = vmul.f32 %v61, %v3286
    %v3292 = vmul.f32 %v62, %v3286
    %v3293 = vmul.f32 %v63, %v3286
    %v3294 = vmul.f32 %v64, %v3286
    %3303 = vrot.lane.b32.xlu0 %v3287, 126
    %v3304 = vpop.permute.xlu0 %3303
    %3305 = vrot.lane.b32.xlu0 %v3288, 126
    %v3306 = vpop.permute.xlu0 %3305
    %3307 = vrot.lane.b32.xlu0 %v3289, 126
    %v3308 = vpop.permute.xlu0 %3307
    %3309 = vrot.lane.b32.xlu0 %v3290, 126
    %v3310 = vpop.permute.xlu0 %3309
    %3311 = vrot.lane.b32.xlu0 %v3291, 126
    %v3312 = vpop.permute.xlu0 %3311
    %3313 = vrot.lane.b32.xlu0 %v3292, 126
    %v3314 = vpop.permute.xlu0 %3313
    %3315 = vrot.lane.b32.xlu0 %v3293, 126
    %v3316 = vpop.permute.xlu0 %3315
    %3317 = vrot.lane.b32.xlu0 %v3294, 126
    %v3318 = vpop.permute.xlu0 %3317
    %v3319 = vsel %vm372, %v3304, %v3306
    %v3320 = vsel %vm372, %v3308, %v3310
    %v3321 = vsel %vm372, %v3312, %v3314
    %v3322 = vsel %vm372, %v3316, %v3318
    %v3331 = vadd.f32 %v3172, %v3319
    %v3332 = vadd.f32 %v3173, %v3306
    %v3333 = vadd.f32 %v3174, %v3320
    %v3334 = vadd.f32 %v3175, %v3310
    %v3335 = vadd.f32 %v3176, %v3321
    %v3336 = vadd.f32 %v3177, %v3314
    %v3337 = vadd.f32 %v3178, %v3322
    %v3338 = vadd.f32 %v3179, %v3318
    %v3339 = vstv %s86
    %v3340 = vmul.f32 %v57, %v3339
    %v3341 = vmul.f32 %v58, %v3339
    %v3342 = vmul.f32 %v59, %v3339
    %v3343 = vmul.f32 %v60, %v3339
    %v3344 = vmul.f32 %v61, %v3339
    %v3345 = vmul.f32 %v62, %v3339
    %v3346 = vmul.f32 %v63, %v3339
    %v3347 = vmul.f32 %v64, %v3339
    %v3356 = vrot.slane %v3340, 1
    %v3357 = vrot.slane %v3342, 1
    %v3358 = vsel %vm516, %v3356, %v3357
    %v3359 = vrot.slane %v3341, 1
    %v3360 = vrot.slane %v3343, 1
    %v3361 = vsel %vm516, %v3359, %v3360
    %v3362 = vrot.slane %v3344, 1
    %v3363 = vrot.slane %v3346, 1
    %v3364 = vsel %vm516, %v3362, %v3363
    %v3365 = vrot.slane %v3345, 1
    %v3366 = vrot.slane %v3347, 1
    %v3367 = vsel %vm516, %v3365, %v3366
    %v3376 = vadd.f32 %v3225, %v3358
    %v3377 = vadd.f32 %v3226, %v3361
    %v3378 = vadd.f32 %v3227, %v3357
    %v3379 = vadd.f32 %v3228, %v3360
    %v3380 = vadd.f32 %v3229, %v3364
    %v3381 = vadd.f32 %v3230, %v3367
    %v3382 = vadd.f32 %v3231, %v3363
    %v3383 = vadd.f32 %v3232, %v3366
    %v3384 = vstv %s113
    %v3385 = vmul.f32 %v57, %v3384
    %v3386 = vmul.f32 %v58, %v3384
    %v3387 = vmul.f32 %v59, %v3384
    %v3388 = vmul.f32 %v60, %v3384
    %v3389 = vmul.f32 %v61, %v3384
    %v3390 = vmul.f32 %v62, %v3384
    %v3391 = vmul.f32 %v63, %v3384
    %v3392 = vmul.f32 %v64, %v3384
    %v3401 = vrot.slane %v3385, 1
    %v3402 = vrot.slane %v3387, 1
    %v3403 = vsel %vm516, %v3401, %v3402
    %v3404 = vrot.slane %v3386, 1
    %v3405 = vrot.slane %v3388, 1
    %v3406 = vsel %vm516, %v3404, %v3405
    %v3407 = vrot.slane %v3389, 1
    %v3408 = vrot.slane %v3391, 1
    %v3409 = vsel %vm516, %v3407, %v3408
    %v3410 = vrot.slane %v3390, 1
    %v3411 = vrot.slane %v3392, 1
    %v3412 = vsel %vm516, %v3410, %v3411
    %v3421 = vadd.f32 %v3278, %v3403
    %v3422 = vadd.f32 %v3279, %v3406
    %v3423 = vadd.f32 %v3280, %v3402
    %v3424 = vadd.f32 %v3281, %v3405
    %v3425 = vadd.f32 %v3282, %v3409
    %v3426 = vadd.f32 %v3283, %v3412
    %v3427 = vadd.f32 %v3284, %v3408
    %v3428 = vadd.f32 %v3285, %v3411
    %v3429 = vstv %s140
    %v3430 = vmul.f32 %v57, %v3429
    %v3431 = vmul.f32 %v58, %v3429
    %v3432 = vmul.f32 %v59, %v3429
    %v3433 = vmul.f32 %v60, %v3429
    %v3434 = vmul.f32 %v61, %v3429
    %v3435 = vmul.f32 %v62, %v3429
    %v3436 = vmul.f32 %v63, %v3429
    %v3437 = vmul.f32 %v64, %v3429
    %v3446 = vrot.slane %v3430, 1
    %v3447 = vrot.slane %v3432, 1
    %v3448 = vsel %vm516, %v3446, %v3447
    %v3449 = vrot.slane %v3431, 1
    %v3450 = vrot.slane %v3433, 1
    %v3451 = vsel %vm516, %v3449, %v3450
    %v3452 = vrot.slane %v3434, 1
    %v3453 = vrot.slane %v3436, 1
    %v3454 = vsel %vm516, %v3452, %v3453
    %v3455 = vrot.slane %v3435, 1
    %v3456 = vrot.slane %v3437, 1
    %v3457 = vsel %vm516, %v3455, %v3456
    %v3466 = vadd.f32 %v3331, %v3448
    %v3467 = vadd.f32 %v3332, %v3451
    %v3468 = vadd.f32 %v3333, %v3447
    %v3469 = vadd.f32 %v3334, %v3450
    %v3470 = vadd.f32 %v3335, %v3454
    %v3471 = vadd.f32 %v3336, %v3457
    %v3472 = vadd.f32 %v3337, %v3453
    %v3473 = vadd.f32 %v3338, %v3456
    %v3474 = vstv %s87
    %v3475 = vmul.f32 %v57, %v3474
    %v3476 = vmul.f32 %v58, %v3474
    %v3477 = vmul.f32 %v59, %v3474
    %v3478 = vmul.f32 %v60, %v3474
    %v3479 = vmul.f32 %v61, %v3474
    %v3480 = vmul.f32 %v62, %v3474
    %v3481 = vmul.f32 %v63, %v3474
    %v3482 = vmul.f32 %v64, %v3474
    %v3491 = vrot.slane %v3475, 1
    %v3492 = vrot.slane %v3477, 1
    %v3493 = vsel %vm516, %v3491, %v3492
    %v3494 = vrot.slane %v3476, 1
    %v3495 = vrot.slane %v3478, 1
    %v3496 = vsel %vm516, %v3494, %v3495
    %v3497 = vrot.slane %v3479, 1
    %v3498 = vrot.slane %v3481, 1
    %v3499 = vsel %vm516, %v3497, %v3498
    %v3500 = vrot.slane %v3480, 1
    %v3501 = vrot.slane %v3482, 1
    %v3502 = vsel %vm516, %v3500, %v3501
    %3503 = vrot.lane.b32.xlu0 %v3493, 127
    %v3504 = vpop.permute.xlu0 %3503
    %3505 = vrot.lane.b32.xlu0 %v3496, 127
    %v3506 = vpop.permute.xlu0 %3505
    %3507 = vrot.lane.b32.xlu0 %v3492, 127
    %v3508 = vpop.permute.xlu0 %3507
    %3509 = vrot.lane.b32.xlu0 %v3495, 127
    %v3510 = vpop.permute.xlu0 %3509
    %3511 = vrot.lane.b32.xlu0 %v3499, 127
    %v3512 = vpop.permute.xlu0 %3511
    %3513 = vrot.lane.b32.xlu0 %v3502, 127
    %v3514 = vpop.permute.xlu0 %3513
    %3515 = vrot.lane.b32.xlu0 %v3498, 127
    %v3516 = vpop.permute.xlu0 %3515
    %3517 = vrot.lane.b32.xlu0 %v3501, 127
    %v3518 = vpop.permute.xlu0 %3517
    %v3519 = vsel %vm212, %v3504, %v3506
    %v3520 = vsel %vm212, %v3508, %v3510
    %v3521 = vsel %vm212, %v3512, %v3514
    %v3522 = vsel %vm212, %v3516, %v3518
    %v3531 = vadd.f32 %v3376, %v3519
    %v3532 = vadd.f32 %v3377, %v3506
    %v3533 = vadd.f32 %v3378, %v3520
    %v3534 = vadd.f32 %v3379, %v3510
    %v3535 = vadd.f32 %v3380, %v3521
    %v3536 = vadd.f32 %v3381, %v3514
    %v3537 = vadd.f32 %v3382, %v3522
    %v3538 = vadd.f32 %v3383, %v3518
    %v3539 = vstv %s114
    %v3540 = vmul.f32 %v57, %v3539
    %v3541 = vmul.f32 %v58, %v3539
    %v3542 = vmul.f32 %v59, %v3539
    %v3543 = vmul.f32 %v60, %v3539
    %v3544 = vmul.f32 %v61, %v3539
    %v3545 = vmul.f32 %v62, %v3539
    %v3546 = vmul.f32 %v63, %v3539
    %v3547 = vmul.f32 %v64, %v3539
    %v3556 = vrot.slane %v3540, 1
    %v3557 = vrot.slane %v3542, 1
    %v3558 = vsel %vm516, %v3556, %v3557
    %v3559 = vrot.slane %v3541, 1
    %v3560 = vrot.slane %v3543, 1
    %v3561 = vsel %vm516, %v3559, %v3560
    %v3562 = vrot.slane %v3544, 1
    %v3563 = vrot.slane %v3546, 1
    %v3564 = vsel %vm516, %v3562, %v3563
    %v3565 = vrot.slane %v3545, 1
    %v3566 = vrot.slane %v3547, 1
    %v3567 = vsel %vm516, %v3565, %v3566
    %3568 = vrot.lane.b32.xlu0 %v3558, 127
    %v3569 = vpop.permute.xlu0 %3568
    %3570 = vrot.lane.b32.xlu0 %v3561, 127
    %v3571 = vpop.permute.xlu0 %3570
    %3572 = vrot.lane.b32.xlu0 %v3557, 127
    %v3573 = vpop.permute.xlu0 %3572
    %3574 = vrot.lane.b32.xlu0 %v3560, 127
    %v3575 = vpop.permute.xlu0 %3574
    %3576 = vrot.lane.b32.xlu0 %v3564, 127
    %v3577 = vpop.permute.xlu0 %3576
    %3578 = vrot.lane.b32.xlu0 %v3567, 127
    %v3579 = vpop.permute.xlu0 %3578
    %3580 = vrot.lane.b32.xlu0 %v3563, 127
    %v3581 = vpop.permute.xlu0 %3580
    %3582 = vrot.lane.b32.xlu0 %v3566, 127
    %v3583 = vpop.permute.xlu0 %3582
    %v3584 = vsel %vm212, %v3569, %v3571
    %v3585 = vsel %vm212, %v3573, %v3575
    %v3586 = vsel %vm212, %v3577, %v3579
    %v3587 = vsel %vm212, %v3581, %v3583
    %v3596 = vadd.f32 %v3421, %v3584
    %v3597 = vadd.f32 %v3422, %v3571
    %v3598 = vadd.f32 %v3423, %v3585
    %v3599 = vadd.f32 %v3424, %v3575
    %v3600 = vadd.f32 %v3425, %v3586
    %v3601 = vadd.f32 %v3426, %v3579
    %v3602 = vadd.f32 %v3427, %v3587
    %v3603 = vadd.f32 %v3428, %v3583
    %v3604 = vstv %s141
    %v3605 = vmul.f32 %v57, %v3604
    %v3606 = vmul.f32 %v58, %v3604
    %v3607 = vmul.f32 %v59, %v3604
    %v3608 = vmul.f32 %v60, %v3604
    %v3609 = vmul.f32 %v61, %v3604
    %v3610 = vmul.f32 %v62, %v3604
    %v3611 = vmul.f32 %v63, %v3604
    %v3612 = vmul.f32 %v64, %v3604
    %v3621 = vrot.slane %v3605, 1
    %v3622 = vrot.slane %v3607, 1
    %v3623 = vsel %vm516, %v3621, %v3622
    %v3624 = vrot.slane %v3606, 1
    %v3625 = vrot.slane %v3608, 1
    %v3626 = vsel %vm516, %v3624, %v3625
    %v3627 = vrot.slane %v3609, 1
    %v3628 = vrot.slane %v3611, 1
    %v3629 = vsel %vm516, %v3627, %v3628
    %v3630 = vrot.slane %v3610, 1
    %v3631 = vrot.slane %v3612, 1
    %v3632 = vsel %vm516, %v3630, %v3631
    %3633 = vrot.lane.b32.xlu0 %v3623, 127
    %v3634 = vpop.permute.xlu0 %3633
    %3635 = vrot.lane.b32.xlu0 %v3626, 127
    %v3636 = vpop.permute.xlu0 %3635
    %3637 = vrot.lane.b32.xlu0 %v3622, 127
    %v3638 = vpop.permute.xlu0 %3637
    %3639 = vrot.lane.b32.xlu0 %v3625, 127
    %v3640 = vpop.permute.xlu0 %3639
    %3641 = vrot.lane.b32.xlu0 %v3629, 127
    %v3642 = vpop.permute.xlu0 %3641
    %3643 = vrot.lane.b32.xlu0 %v3632, 127
    %v3644 = vpop.permute.xlu0 %3643
    %3645 = vrot.lane.b32.xlu0 %v3628, 127
    %v3646 = vpop.permute.xlu0 %3645
    %3647 = vrot.lane.b32.xlu0 %v3631, 127
    %v3648 = vpop.permute.xlu0 %3647
    %v3649 = vsel %vm212, %v3634, %v3636
    %v3650 = vsel %vm212, %v3638, %v3640
    %v3651 = vsel %vm212, %v3642, %v3644
    %v3652 = vsel %vm212, %v3646, %v3648
    %v3661 = vadd.f32 %v3466, %v3649
    %v3662 = vadd.f32 %v3467, %v3636
    %v3663 = vadd.f32 %v3468, %v3650
    %v3664 = vadd.f32 %v3469, %v3640
    %v3665 = vadd.f32 %v3470, %v3651
    %v3666 = vadd.f32 %v3471, %v3644
    %v3667 = vadd.f32 %v3472, %v3652
    %v3668 = vadd.f32 %v3473, %v3648
    %v3669 = vstv %s88
    %v3670 = vmul.f32 %v57, %v3669
    %v3671 = vmul.f32 %v58, %v3669
    %v3672 = vmul.f32 %v59, %v3669
    %v3673 = vmul.f32 %v60, %v3669
    %v3674 = vmul.f32 %v61, %v3669
    %v3675 = vmul.f32 %v62, %v3669
    %v3676 = vmul.f32 %v63, %v3669
    %v3677 = vmul.f32 %v64, %v3669
    %v3686 = vrot.slane %v3670, 1
    %v3687 = vrot.slane %v3672, 1
    %v3688 = vsel %vm516, %v3686, %v3687
    %v3689 = vrot.slane %v3671, 1
    %v3690 = vrot.slane %v3673, 1
    %v3691 = vsel %vm516, %v3689, %v3690
    %v3692 = vrot.slane %v3674, 1
    %v3693 = vrot.slane %v3676, 1
    %v3694 = vsel %vm516, %v3692, %v3693
    %v3695 = vrot.slane %v3675, 1
    %v3696 = vrot.slane %v3677, 1
    %v3697 = vsel %vm516, %v3695, %v3696
    %3698 = vrot.lane.b32.xlu0 %v3688, 126
    %v3699 = vpop.permute.xlu0 %3698
    %3700 = vrot.lane.b32.xlu0 %v3691, 126
    %v3701 = vpop.permute.xlu0 %3700
    %3702 = vrot.lane.b32.xlu0 %v3687, 126
    %v3703 = vpop.permute.xlu0 %3702
    %3704 = vrot.lane.b32.xlu0 %v3690, 126
    %v3705 = vpop.permute.xlu0 %3704
    %3706 = vrot.lane.b32.xlu0 %v3694, 126
    %v3707 = vpop.permute.xlu0 %3706
    %3708 = vrot.lane.b32.xlu0 %v3697, 126
    %v3709 = vpop.permute.xlu0 %3708
    %3710 = vrot.lane.b32.xlu0 %v3693, 126
    %v3711 = vpop.permute.xlu0 %3710
    %3712 = vrot.lane.b32.xlu0 %v3696, 126
    %v3713 = vpop.permute.xlu0 %3712
    %v3714 = vsel %vm372, %v3699, %v3701
    %v3715 = vsel %vm372, %v3703, %v3705
    %v3716 = vsel %vm372, %v3707, %v3709
    %v3717 = vsel %vm372, %v3711, %v3713
    %v3726 = vadd.f32 %v3531, %v3714
    %v3727 = vadd.f32 %v3532, %v3701
    %v3728 = vadd.f32 %v3533, %v3715
    %v3729 = vadd.f32 %v3534, %v3705
    %v3730 = vadd.f32 %v3535, %v3716
    %v3731 = vadd.f32 %v3536, %v3709
    %v3732 = vadd.f32 %v3537, %v3717
    %v3733 = vadd.f32 %v3538, %v3713
    %v3734 = vstv %s115
    %v3735 = vmul.f32 %v57, %v3734
    %v3736 = vmul.f32 %v58, %v3734
    %v3737 = vmul.f32 %v59, %v3734
    %v3738 = vmul.f32 %v60, %v3734
    %v3739 = vmul.f32 %v61, %v3734
    %v3740 = vmul.f32 %v62, %v3734
    %v3741 = vmul.f32 %v63, %v3734
    %v3742 = vmul.f32 %v64, %v3734
    %v3751 = vrot.slane %v3735, 1
    %v3752 = vrot.slane %v3737, 1
    %v3753 = vsel %vm516, %v3751, %v3752
    %v3754 = vrot.slane %v3736, 1
    %v3755 = vrot.slane %v3738, 1
    %v3756 = vsel %vm516, %v3754, %v3755
    %v3757 = vrot.slane %v3739, 1
    %v3758 = vrot.slane %v3741, 1
    %v3759 = vsel %vm516, %v3757, %v3758
    %v3760 = vrot.slane %v3740, 1
    %v3761 = vrot.slane %v3742, 1
    %v3762 = vsel %vm516, %v3760, %v3761
    %3763 = vrot.lane.b32.xlu0 %v3753, 126
    %v3764 = vpop.permute.xlu0 %3763
    %3765 = vrot.lane.b32.xlu0 %v3756, 126
    %v3766 = vpop.permute.xlu0 %3765
    %3767 = vrot.lane.b32.xlu0 %v3752, 126
    %v3768 = vpop.permute.xlu0 %3767
    %3769 = vrot.lane.b32.xlu0 %v3755, 126
    %v3770 = vpop.permute.xlu0 %3769
    %3771 = vrot.lane.b32.xlu0 %v3759, 126
    %v3772 = vpop.permute.xlu0 %3771
    %3773 = vrot.lane.b32.xlu0 %v3762, 126
    %v3774 = vpop.permute.xlu0 %3773
    %3775 = vrot.lane.b32.xlu0 %v3758, 126
    %v3776 = vpop.permute.xlu0 %3775
    %3777 = vrot.lane.b32.xlu0 %v3761, 126
    %v3778 = vpop.permute.xlu0 %3777
    %v3779 = vsel %vm372, %v3764, %v3766
    %v3780 = vsel %vm372, %v3768, %v3770
    %v3781 = vsel %vm372, %v3772, %v3774
    %v3782 = vsel %vm372, %v3776, %v3778
    %v3791 = vadd.f32 %v3596, %v3779
    %v3792 = vadd.f32 %v3597, %v3766
    %v3793 = vadd.f32 %v3598, %v3780
    %v3794 = vadd.f32 %v3599, %v3770
    %v3795 = vadd.f32 %v3600, %v3781
    %v3796 = vadd.f32 %v3601, %v3774
    %v3797 = vadd.f32 %v3602, %v3782
    %v3798 = vadd.f32 %v3603, %v3778
    %v3799 = vstv %s142
    %v3800 = vmul.f32 %v57, %v3799
    %v3801 = vmul.f32 %v58, %v3799
    %v3802 = vmul.f32 %v59, %v3799
    %v3803 = vmul.f32 %v60, %v3799
    %v3804 = vmul.f32 %v61, %v3799
    %v3805 = vmul.f32 %v62, %v3799
    %v3806 = vmul.f32 %v63, %v3799
    %v3807 = vmul.f32 %v64, %v3799
    %v3816 = vrot.slane %v3800, 1
    %v3817 = vrot.slane %v3802, 1
    %v3818 = vsel %vm516, %v3816, %v3817
    %v3819 = vrot.slane %v3801, 1
    %v3820 = vrot.slane %v3803, 1
    %v3821 = vsel %vm516, %v3819, %v3820
    %v3822 = vrot.slane %v3804, 1
    %v3823 = vrot.slane %v3806, 1
    %v3824 = vsel %vm516, %v3822, %v3823
    %v3825 = vrot.slane %v3805, 1
    %v3826 = vrot.slane %v3807, 1
    %v3827 = vsel %vm516, %v3825, %v3826
    %3828 = vrot.lane.b32.xlu0 %v3818, 126
    %v3829 = vpop.permute.xlu0 %3828
    %3830 = vrot.lane.b32.xlu0 %v3821, 126
    %v3831 = vpop.permute.xlu0 %3830
    %3832 = vrot.lane.b32.xlu0 %v3817, 126
    %v3833 = vpop.permute.xlu0 %3832
    %3834 = vrot.lane.b32.xlu0 %v3820, 126
    %v3835 = vpop.permute.xlu0 %3834
    %3836 = vrot.lane.b32.xlu0 %v3824, 126
    %v3837 = vpop.permute.xlu0 %3836
    %3838 = vrot.lane.b32.xlu0 %v3827, 126
    %v3839 = vpop.permute.xlu0 %3838
    %3840 = vrot.lane.b32.xlu0 %v3823, 126
    %v3841 = vpop.permute.xlu0 %3840
    %3842 = vrot.lane.b32.xlu0 %v3826, 126
    %v3843 = vpop.permute.xlu0 %3842
    %v3844 = vsel %vm372, %v3829, %v3831
    %v3845 = vsel %vm372, %v3833, %v3835
    %v3846 = vsel %vm372, %v3837, %v3839
    %v3847 = vsel %vm372, %v3841, %v3843
    %v3856 = vadd.f32 %v3661, %v3844
    %v3857 = vadd.f32 %v3662, %v3831
    %v3858 = vadd.f32 %v3663, %v3845
    %v3859 = vadd.f32 %v3664, %v3835
    %v3860 = vadd.f32 %v3665, %v3846
    %v3861 = vadd.f32 %v3666, %v3839
    %v3862 = vadd.f32 %v3667, %v3847
    %v3863 = vadd.f32 %v3668, %v3843
    %v3864 = vstv %s89
    %v3865 = vmul.f32 %v57, %v3864
    %v3866 = vmul.f32 %v58, %v3864
    %v3867 = vmul.f32 %v59, %v3864
    %v3868 = vmul.f32 %v60, %v3864
    %v3869 = vmul.f32 %v61, %v3864
    %v3870 = vmul.f32 %v62, %v3864
    %v3871 = vmul.f32 %v63, %v3864
    %v3872 = vmul.f32 %v64, %v3864
    %v3881 = vrot.slane %v3865, 2
    %v3882 = vrot.slane %v3867, 2
    %v3883 = vsel %vm1042, %v3881, %v3882
    %v3884 = vrot.slane %v3866, 2
    %v3885 = vrot.slane %v3868, 2
    %v3886 = vsel %vm1042, %v3884, %v3885
    %v3887 = vrot.slane %v3869, 2
    %v3888 = vrot.slane %v3871, 2
    %v3889 = vsel %vm1042, %v3887, %v3888
    %v3890 = vrot.slane %v3870, 2
    %v3891 = vrot.slane %v3872, 2
    %v3892 = vsel %vm1042, %v3890, %v3891
    %v3901 = vadd.f32 %v3726, %v3883
    %v3902 = vadd.f32 %v3727, %v3886
    %v3903 = vadd.f32 %v3728, %v3882
    %v3904 = vadd.f32 %v3729, %v3885
    %v3905 = vadd.f32 %v3730, %v3889
    %v3906 = vadd.f32 %v3731, %v3892
    %v3907 = vadd.f32 %v3732, %v3888
    %v3908 = vadd.f32 %v3733, %v3891
    %v3909 = vstv %s116
    %v3910 = vmul.f32 %v57, %v3909
    %v3911 = vmul.f32 %v58, %v3909
    %v3912 = vmul.f32 %v59, %v3909
    %v3913 = vmul.f32 %v60, %v3909
    %v3914 = vmul.f32 %v61, %v3909
    %v3915 = vmul.f32 %v62, %v3909
    %v3916 = vmul.f32 %v63, %v3909
    %v3917 = vmul.f32 %v64, %v3909
    %v3926 = vrot.slane %v3910, 2
    %v3927 = vrot.slane %v3912, 2
    %v3928 = vsel %vm1042, %v3926, %v3927
    %v3929 = vrot.slane %v3911, 2
    %v3930 = vrot.slane %v3913, 2
    %v3931 = vsel %vm1042, %v3929, %v3930
    %v3932 = vrot.slane %v3914, 2
    %v3933 = vrot.slane %v3916, 2
    %v3934 = vsel %vm1042, %v3932, %v3933
    %v3935 = vrot.slane %v3915, 2
    %v3936 = vrot.slane %v3917, 2
    %v3937 = vsel %vm1042, %v3935, %v3936
    %v3946 = vadd.f32 %v3791, %v3928
    %v3947 = vadd.f32 %v3792, %v3931
    %v3948 = vadd.f32 %v3793, %v3927
    %v3949 = vadd.f32 %v3794, %v3930
    %v3950 = vadd.f32 %v3795, %v3934
    %v3951 = vadd.f32 %v3796, %v3937
    %v3952 = vadd.f32 %v3797, %v3933
    %v3953 = vadd.f32 %v3798, %v3936
    %v3954 = vstv %s143
    %v3955 = vmul.f32 %v57, %v3954
    %v3956 = vmul.f32 %v58, %v3954
    %v3957 = vmul.f32 %v59, %v3954
    %v3958 = vmul.f32 %v60, %v3954
    %v3959 = vmul.f32 %v61, %v3954
    %v3960 = vmul.f32 %v62, %v3954
    %v3961 = vmul.f32 %v63, %v3954
    %v3962 = vmul.f32 %v64, %v3954
    %v3971 = vrot.slane %v3955, 2
    %v3972 = vrot.slane %v3957, 2
    %v3973 = vsel %vm1042, %v3971, %v3972
    %v3974 = vrot.slane %v3956, 2
    %v3975 = vrot.slane %v3958, 2
    %v3976 = vsel %vm1042, %v3974, %v3975
    %v3977 = vrot.slane %v3959, 2
    %v3978 = vrot.slane %v3961, 2
    %v3979 = vsel %vm1042, %v3977, %v3978
    %v3980 = vrot.slane %v3960, 2
    %v3981 = vrot.slane %v3962, 2
    %v3982 = vsel %vm1042, %v3980, %v3981
    %v3991 = vadd.f32 %v3856, %v3973
    %v3992 = vadd.f32 %v3857, %v3976
    %v3993 = vadd.f32 %v3858, %v3972
    %v3994 = vadd.f32 %v3859, %v3975
    %v3995 = vadd.f32 %v3860, %v3979
    %v3996 = vadd.f32 %v3861, %v3982
    %v3997 = vadd.f32 %v3862, %v3978
    %v3998 = vadd.f32 %v3863, %v3981
    %v3999 = vstv %s90
    %v4000 = vmul.f32 %v57, %v3999
    %v4001 = vmul.f32 %v58, %v3999
    %v4002 = vmul.f32 %v59, %v3999
    %v4003 = vmul.f32 %v60, %v3999
    %v4004 = vmul.f32 %v61, %v3999
    %v4005 = vmul.f32 %v62, %v3999
    %v4006 = vmul.f32 %v63, %v3999
    %v4007 = vmul.f32 %v64, %v3999
    %v4016 = vrot.slane %v4000, 2
    %v4017 = vrot.slane %v4002, 2
    %v4018 = vsel %vm1042, %v4016, %v4017
    %v4019 = vrot.slane %v4001, 2
    %v4020 = vrot.slane %v4003, 2
    %v4021 = vsel %vm1042, %v4019, %v4020
    %v4022 = vrot.slane %v4004, 2
    %v4023 = vrot.slane %v4006, 2
    %v4024 = vsel %vm1042, %v4022, %v4023
    %v4025 = vrot.slane %v4005, 2
    %v4026 = vrot.slane %v4007, 2
    %v4027 = vsel %vm1042, %v4025, %v4026
    %4028 = vrot.lane.b32.xlu0 %v4018, 127
    %v4029 = vpop.permute.xlu0 %4028
    %4030 = vrot.lane.b32.xlu0 %v4021, 127
    %v4031 = vpop.permute.xlu0 %4030
    %4032 = vrot.lane.b32.xlu0 %v4017, 127
    %v4033 = vpop.permute.xlu0 %4032
    %4034 = vrot.lane.b32.xlu0 %v4020, 127
    %v4035 = vpop.permute.xlu0 %4034
    %4036 = vrot.lane.b32.xlu0 %v4024, 127
    %v4037 = vpop.permute.xlu0 %4036
    %4038 = vrot.lane.b32.xlu0 %v4027, 127
    %v4039 = vpop.permute.xlu0 %4038
    %4040 = vrot.lane.b32.xlu0 %v4023, 127
    %v4041 = vpop.permute.xlu0 %4040
    %4042 = vrot.lane.b32.xlu0 %v4026, 127
    %v4043 = vpop.permute.xlu0 %4042
    %v4044 = vsel %vm212, %v4029, %v4031
    %v4045 = vsel %vm212, %v4033, %v4035
    %v4046 = vsel %vm212, %v4037, %v4039
    %v4047 = vsel %vm212, %v4041, %v4043
    %v4056 = vadd.f32 %v3901, %v4044
    %v4057 = vadd.f32 %v3902, %v4031
    %v4058 = vadd.f32 %v3903, %v4045
    %v4059 = vadd.f32 %v3904, %v4035
    %v4060 = vadd.f32 %v3905, %v4046
    %v4061 = vadd.f32 %v3906, %v4039
    %v4062 = vadd.f32 %v3907, %v4047
    %v4063 = vadd.f32 %v3908, %v4043
    %v4064 = vstv %s117
    %v4065 = vmul.f32 %v57, %v4064
    %v4066 = vmul.f32 %v58, %v4064
    %v4067 = vmul.f32 %v59, %v4064
    %v4068 = vmul.f32 %v60, %v4064
    %v4069 = vmul.f32 %v61, %v4064
    %v4070 = vmul.f32 %v62, %v4064
    %v4071 = vmul.f32 %v63, %v4064
    %v4072 = vmul.f32 %v64, %v4064
    %v4081 = vrot.slane %v4065, 2
    %v4082 = vrot.slane %v4067, 2
    %v4083 = vsel %vm1042, %v4081, %v4082
    %v4084 = vrot.slane %v4066, 2
    %v4085 = vrot.slane %v4068, 2
    %v4086 = vsel %vm1042, %v4084, %v4085
    %v4087 = vrot.slane %v4069, 2
    %v4088 = vrot.slane %v4071, 2
    %v4089 = vsel %vm1042, %v4087, %v4088
    %v4090 = vrot.slane %v4070, 2
    %v4091 = vrot.slane %v4072, 2
    %v4092 = vsel %vm1042, %v4090, %v4091
    %4093 = vrot.lane.b32.xlu0 %v4083, 127
    %v4094 = vpop.permute.xlu0 %4093
    %4095 = vrot.lane.b32.xlu0 %v4086, 127
    %v4096 = vpop.permute.xlu0 %4095
    %4097 = vrot.lane.b32.xlu0 %v4082, 127
    %v4098 = vpop.permute.xlu0 %4097
    %4099 = vrot.lane.b32.xlu0 %v4085, 127
    %v4100 = vpop.permute.xlu0 %4099
    %4101 = vrot.lane.b32.xlu0 %v4089, 127
    %v4102 = vpop.permute.xlu0 %4101
    %4103 = vrot.lane.b32.xlu0 %v4092, 127
    %v4104 = vpop.permute.xlu0 %4103
    %4105 = vrot.lane.b32.xlu0 %v4088, 127
    %v4106 = vpop.permute.xlu0 %4105
    %4107 = vrot.lane.b32.xlu0 %v4091, 127
    %v4108 = vpop.permute.xlu0 %4107
    %v4109 = vsel %vm212, %v4094, %v4096
    %v4110 = vsel %vm212, %v4098, %v4100
    %v4111 = vsel %vm212, %v4102, %v4104
    %v4112 = vsel %vm212, %v4106, %v4108
    %v4121 = vadd.f32 %v3946, %v4109
    %v4122 = vadd.f32 %v3947, %v4096
    %v4123 = vadd.f32 %v3948, %v4110
    %v4124 = vadd.f32 %v3949, %v4100
    %v4125 = vadd.f32 %v3950, %v4111
    %v4126 = vadd.f32 %v3951, %v4104
    %v4127 = vadd.f32 %v3952, %v4112
    %v4128 = vadd.f32 %v3953, %v4108
    %v4129 = vstv %s144
    %v4130 = vmul.f32 %v57, %v4129
    %v4131 = vmul.f32 %v58, %v4129
    %v4132 = vmul.f32 %v59, %v4129
    %v4133 = vmul.f32 %v60, %v4129
    %v4134 = vmul.f32 %v61, %v4129
    %v4135 = vmul.f32 %v62, %v4129
    %v4136 = vmul.f32 %v63, %v4129
    %v4137 = vmul.f32 %v64, %v4129
    %v4146 = vrot.slane %v4130, 2
    %v4147 = vrot.slane %v4132, 2
    %v4148 = vsel %vm1042, %v4146, %v4147
    %v4149 = vrot.slane %v4131, 2
    %v4150 = vrot.slane %v4133, 2
    %v4151 = vsel %vm1042, %v4149, %v4150
    %v4152 = vrot.slane %v4134, 2
    %v4153 = vrot.slane %v4136, 2
    %v4154 = vsel %vm1042, %v4152, %v4153
    %v4155 = vrot.slane %v4135, 2
    %v4156 = vrot.slane %v4137, 2
    %v4157 = vsel %vm1042, %v4155, %v4156
    %4158 = vrot.lane.b32.xlu0 %v4148, 127
    %v4159 = vpop.permute.xlu0 %4158
    %4160 = vrot.lane.b32.xlu0 %v4151, 127
    %v4161 = vpop.permute.xlu0 %4160
    %4162 = vrot.lane.b32.xlu0 %v4147, 127
    %v4163 = vpop.permute.xlu0 %4162
    %4164 = vrot.lane.b32.xlu0 %v4150, 127
    %v4165 = vpop.permute.xlu0 %4164
    %4166 = vrot.lane.b32.xlu0 %v4154, 127
    %v4167 = vpop.permute.xlu0 %4166
    %4168 = vrot.lane.b32.xlu0 %v4157, 127
    %v4169 = vpop.permute.xlu0 %4168
    %4170 = vrot.lane.b32.xlu0 %v4153, 127
    %v4171 = vpop.permute.xlu0 %4170
    %4172 = vrot.lane.b32.xlu0 %v4156, 127
    %v4173 = vpop.permute.xlu0 %4172
    %v4174 = vsel %vm212, %v4159, %v4161
    %v4175 = vsel %vm212, %v4163, %v4165
    %v4176 = vsel %vm212, %v4167, %v4169
    %v4177 = vsel %vm212, %v4171, %v4173
    %v4186 = vadd.f32 %v3991, %v4174
    %v4187 = vadd.f32 %v3992, %v4161
    %v4188 = vadd.f32 %v3993, %v4175
    %v4189 = vadd.f32 %v3994, %v4165
    %v4190 = vadd.f32 %v3995, %v4176
    %v4191 = vadd.f32 %v3996, %v4169
    %v4192 = vadd.f32 %v3997, %v4177
    %v4193 = vadd.f32 %v3998, %v4173
    %v4194 = vstv %s91
    %v4195 = vmul.f32 %v57, %v4194
    %v4196 = vmul.f32 %v58, %v4194
    %v4197 = vmul.f32 %v59, %v4194
    %v4198 = vmul.f32 %v60, %v4194
    %v4199 = vmul.f32 %v61, %v4194
    %v4200 = vmul.f32 %v62, %v4194
    %v4201 = vmul.f32 %v63, %v4194
    %v4202 = vmul.f32 %v64, %v4194
    %v4211 = vrot.slane %v4195, 2
    %v4212 = vrot.slane %v4197, 2
    %v4213 = vsel %vm1042, %v4211, %v4212
    %v4214 = vrot.slane %v4196, 2
    %v4215 = vrot.slane %v4198, 2
    %v4216 = vsel %vm1042, %v4214, %v4215
    %v4217 = vrot.slane %v4199, 2
    %v4218 = vrot.slane %v4201, 2
    %v4219 = vsel %vm1042, %v4217, %v4218
    %v4220 = vrot.slane %v4200, 2
    %v4221 = vrot.slane %v4202, 2
    %v4222 = vsel %vm1042, %v4220, %v4221
    %4223 = vrot.lane.b32.xlu0 %v4213, 126
    %v4224 = vpop.permute.xlu0 %4223
    %4225 = vrot.lane.b32.xlu0 %v4216, 126
    %v4226 = vpop.permute.xlu0 %4225
    %4227 = vrot.lane.b32.xlu0 %v4212, 126
    %v4228 = vpop.permute.xlu0 %4227
    %4229 = vrot.lane.b32.xlu0 %v4215, 126
    %v4230 = vpop.permute.xlu0 %4229
    %4231 = vrot.lane.b32.xlu0 %v4219, 126
    %v4232 = vpop.permute.xlu0 %4231
    %4233 = vrot.lane.b32.xlu0 %v4222, 126
    %v4234 = vpop.permute.xlu0 %4233
    %4235 = vrot.lane.b32.xlu0 %v4218, 126
    %v4236 = vpop.permute.xlu0 %4235
    %4237 = vrot.lane.b32.xlu0 %v4221, 126
    %v4238 = vpop.permute.xlu0 %4237
    %v4239 = vsel %vm372, %v4224, %v4226
    %v4240 = vsel %vm372, %v4228, %v4230
    %v4241 = vsel %vm372, %v4232, %v4234
    %v4242 = vsel %vm372, %v4236, %v4238
    %v4251 = vadd.f32 %v4056, %v4239
    %v4252 = vadd.f32 %v4057, %v4226
    %v4253 = vadd.f32 %v4058, %v4240
    %v4254 = vadd.f32 %v4059, %v4230
    %v4255 = vadd.f32 %v4060, %v4241
    %v4256 = vadd.f32 %v4061, %v4234
    %v4257 = vadd.f32 %v4062, %v4242
    %v4258 = vadd.f32 %v4063, %v4238
    %v4259 = vstv %s118
    %v4260 = vmul.f32 %v57, %v4259
    %v4261 = vmul.f32 %v58, %v4259
    %v4262 = vmul.f32 %v59, %v4259
    %v4263 = vmul.f32 %v60, %v4259
    %v4264 = vmul.f32 %v61, %v4259
    %v4265 = vmul.f32 %v62, %v4259
    %v4266 = vmul.f32 %v63, %v4259
    %v4267 = vmul.f32 %v64, %v4259
    %v4276 = vrot.slane %v4260, 2
    %v4277 = vrot.slane %v4262, 2
    %v4278 = vsel %vm1042, %v4276, %v4277
    %v4279 = vrot.slane %v4261, 2
    %v4280 = vrot.slane %v4263, 2
    %v4281 = vsel %vm1042, %v4279, %v4280
    %v4282 = vrot.slane %v4264, 2
    %v4283 = vrot.slane %v4266, 2
    %v4284 = vsel %vm1042, %v4282, %v4283
    %v4285 = vrot.slane %v4265, 2
    %v4286 = vrot.slane %v4267, 2
    %v4287 = vsel %vm1042, %v4285, %v4286
    %4288 = vrot.lane.b32.xlu0 %v4278, 126
    %v4289 = vpop.permute.xlu0 %4288
    %4290 = vrot.lane.b32.xlu0 %v4281, 126
    %v4291 = vpop.permute.xlu0 %4290
    %4292 = vrot.lane.b32.xlu0 %v4277, 126
    %v4293 = vpop.permute.xlu0 %4292
    %4294 = vrot.lane.b32.xlu0 %v4280, 126
    %v4295 = vpop.permute.xlu0 %4294
    %4296 = vrot.lane.b32.xlu0 %v4284, 126
    %v4297 = vpop.permute.xlu0 %4296
    %4298 = vrot.lane.b32.xlu0 %v4287, 126
    %v4299 = vpop.permute.xlu0 %4298
    %4300 = vrot.lane.b32.xlu0 %v4283, 126
    %v4301 = vpop.permute.xlu0 %4300
    %4302 = vrot.lane.b32.xlu0 %v4286, 126
    %v4303 = vpop.permute.xlu0 %4302
    %v4304 = vsel %vm372, %v4289, %v4291
    %v4305 = vsel %vm372, %v4293, %v4295
    %v4306 = vsel %vm372, %v4297, %v4299
    %v4307 = vsel %vm372, %v4301, %v4303
    %v4316 = vadd.f32 %v4121, %v4304
    %v4317 = vadd.f32 %v4122, %v4291
    %v4318 = vadd.f32 %v4123, %v4305
    %v4319 = vadd.f32 %v4124, %v4295
    %v4320 = vadd.f32 %v4125, %v4306
    %v4321 = vadd.f32 %v4126, %v4299
    %v4322 = vadd.f32 %v4127, %v4307
    %v4323 = vadd.f32 %v4128, %v4303
    %v4324 = vstv %s145
    %v4325 = vmul.f32 %v57, %v4324
    %v4326 = vmul.f32 %v58, %v4324
    %v4327 = vmul.f32 %v59, %v4324
    %v4328 = vmul.f32 %v60, %v4324
    %v4329 = vmul.f32 %v61, %v4324
    %v4330 = vmul.f32 %v62, %v4324
    %v4331 = vmul.f32 %v63, %v4324
    %v4332 = vmul.f32 %v64, %v4324
    %v4341 = vrot.slane %v4325, 2
    %v4342 = vrot.slane %v4327, 2
    %v4343 = vsel %vm1042, %v4341, %v4342
    %v4344 = vrot.slane %v4326, 2
    %v4345 = vrot.slane %v4328, 2
    %v4346 = vsel %vm1042, %v4344, %v4345
    %v4347 = vrot.slane %v4329, 2
    %v4348 = vrot.slane %v4331, 2
    %v4349 = vsel %vm1042, %v4347, %v4348
    %v4350 = vrot.slane %v4330, 2
    %v4351 = vrot.slane %v4332, 2
    %v4352 = vsel %vm1042, %v4350, %v4351
    %4353 = vrot.lane.b32.xlu0 %v4343, 126
    %v4354 = vpop.permute.xlu0 %4353
    %4355 = vrot.lane.b32.xlu0 %v4346, 126
    %v4356 = vpop.permute.xlu0 %4355
    %4357 = vrot.lane.b32.xlu0 %v4342, 126
    %v4358 = vpop.permute.xlu0 %4357
    %4359 = vrot.lane.b32.xlu0 %v4345, 126
    %v4360 = vpop.permute.xlu0 %4359
    %4361 = vrot.lane.b32.xlu0 %v4349, 126
    %v4362 = vpop.permute.xlu0 %4361
    %4363 = vrot.lane.b32.xlu0 %v4352, 126
    %v4364 = vpop.permute.xlu0 %4363
    %4365 = vrot.lane.b32.xlu0 %v4348, 126
    %v4366 = vpop.permute.xlu0 %4365
    %4367 = vrot.lane.b32.xlu0 %v4351, 126
    %v4368 = vpop.permute.xlu0 %4367
    %v4369 = vsel %vm372, %v4354, %v4356
    %v4370 = vsel %vm372, %v4358, %v4360
    %v4371 = vsel %vm372, %v4362, %v4364
    %v4372 = vsel %vm372, %v4366, %v4368
    %v4381 = vadd.f32 %v4186, %v4369
    %v4382 = vadd.f32 %v4187, %v4356
    %v4383 = vadd.f32 %v4188, %v4370
    %v4384 = vadd.f32 %v4189, %v4360
    %v4385 = vadd.f32 %v4190, %v4371
    %v4386 = vadd.f32 %v4191, %v4364
    %v4387 = vadd.f32 %v4192, %v4372
    %v4388 = vadd.f32 %v4193, %v4368
    %v4389 = vadd.f32 %v2970, %v4251
    %v4390 = vadd.f32 %v2971, %v4252
    %v4391 = vadd.f32 %v2972, %v4253
    %v4392 = vadd.f32 %v2973, %v4254
    %v4393 = vadd.f32 %v2974, %v4255
    %v4394 = vadd.f32 %v2975, %v4256
    %v4395 = vadd.f32 %v2976, %v4257
    %v4396 = vadd.f32 %v2977, %v4258
    %v4397 = vadd.f32 %v2978, %v4316
    %v4398 = vadd.f32 %v2979, %v4317
    %v4399 = vadd.f32 %v2980, %v4318
    %v4400 = vadd.f32 %v2981, %v4319
    %v4401 = vadd.f32 %v2982, %v4320
    %v4402 = vadd.f32 %v2983, %v4321
    %v4403 = vadd.f32 %v2984, %v4322
    %v4404 = vadd.f32 %v2985, %v4323
    %v4405 = vadd.f32 %v2986, %v4381
    %v4406 = vadd.f32 %v2987, %v4382
    %v4407 = vadd.f32 %v2988, %v4383
    %v4408 = vadd.f32 %v2989, %v4384
    %v4409 = vadd.f32 %v2990, %v4385
    %v4410 = vadd.f32 %v2991, %v4386
    %v4411 = vadd.f32 %v2992, %v4387
    %v4412 = vadd.f32 %v2993, %v4388
    %s4413 = sld [smem:[#allocation2 + $0x51]]
    %s4414 = sld [smem:[#allocation2 + $0x52]]
    %s4415 = sld [smem:[#allocation2 + $0x53]]
    %s4416 = sld [smem:[#allocation2 + $0x54]]
    %s4417 = sld [smem:[#allocation2 + $0x55]]
    %s4418 = sld [smem:[#allocation2 + $0x56]]
    %s4419 = sld [smem:[#allocation2 + $0x57]]
    %s4420 = sld [smem:[#allocation2 + $0x58]]
    %s4421 = sld [smem:[#allocation2 + $0x59]]
    %s4422 = sld [smem:[#allocation2 + $0x5a]]
    %s4423 = sld [smem:[#allocation2 + $0x5b]]
    %s4424 = sld [smem:[#allocation2 + $0x5c]]
    %s4425 = sld [smem:[#allocation2 + $0x5d]]
    %s4426 = sld [smem:[#allocation2 + $0x5e]]
    %s4427 = sld [smem:[#allocation2 + $0x5f]]
    %s4428 = sld [smem:[#allocation2 + $0x60]]
    %s4429 = sld [smem:[#allocation2 + $0x61]]
    %s4430 = sld [smem:[#allocation2 + $0x62]]
    %s4431 = sld [smem:[#allocation2 + $0x63]]
    %s4432 = sld [smem:[#allocation2 + $0x64]]
    %s4433 = sld [smem:[#allocation2 + $0x65]]
    %s4434 = sld [smem:[#allocation2 + $0x66]]
    %s4435 = sld [smem:[#allocation2 + $0x67]]
    %s4436 = sld [smem:[#allocation2 + $0x68]]
    %s4437 = sld [smem:[#allocation2 + $0x69]]
    %s4438 = sld [smem:[#allocation2 + $0x6a]]
    %s4439 = sld [smem:[#allocation2 + $0x6b]]
    %s4440 = sld [smem:[#allocation2 + $0x6c]]
    %s4441 = sld [smem:[#allocation2 + $0x6d]]
    %s4442 = sld [smem:[#allocation2 + $0x6e]]
    %s4443 = sld [smem:[#allocation2 + $0x6f]]
    %s4444 = sld [smem:[#allocation2 + $0x70]]
    %s4445 = sld [smem:[#allocation2 + $0x71]]
    %s4446 = sld [smem:[#allocation2 + $0x72]]
    %s4447 = sld [smem:[#allocation2 + $0x73]]
    %s4448 = sld [smem:[#allocation2 + $0x74]]
    %s4449 = sld [smem:[#allocation2 + $0x75]]
    %s4450 = sld [smem:[#allocation2 + $0x76]]
    %s4451 = sld [smem:[#allocation2 + $0x77]]
    %s4452 = sld [smem:[#allocation2 + $0x78]]
    %s4453 = sld [smem:[#allocation2 + $0x79]]
    %s4454 = sld [smem:[#allocation2 + $0x7a]]
    %s4455 = sld [smem:[#allocation2 + $0x7b]]
    %s4456 = sld [smem:[#allocation2 + $0x7c]]
    %s4457 = sld [smem:[#allocation2 + $0x7d]]
    %s4458 = sld [smem:[#allocation2 + $0x7e]]
    %s4459 = sld [smem:[#allocation2 + $0x7f]]
    %s4460 = sld [smem:[#allocation2 + $0x80]]
    %s4461 = sld [smem:[#allocation2 + $0x81]]
    %s4462 = sld [smem:[#allocation2 + $0x82]]
    %s4463 = sld [smem:[#allocation2 + $0x83]]
    %s4464 = sld [smem:[#allocation2 + $0x84]]
    %s4465 = sld [smem:[#allocation2 + $0x85]]
    %s4466 = sld [smem:[#allocation2 + $0x86]]
    %s4467 = sld [smem:[#allocation2 + $0x87]]
    %s4468 = sld [smem:[#allocation2 + $0x88]]
    %s4469 = sld [smem:[#allocation2 + $0x89]]
    %s4470 = sld [smem:[#allocation2 + $0x8a]]
    %s4471 = sld [smem:[#allocation2 + $0x8b]]
    %s4472 = sld [smem:[#allocation2 + $0x8c]]
    %s4473 = sld [smem:[#allocation2 + $0x8d]]
    %s4474 = sld [smem:[#allocation2 + $0x8e]]
    %s4475 = sld [smem:[#allocation2 + $0x8f]]
    %s4476 = sld [smem:[#allocation2 + $0x90]]
    %s4477 = sld [smem:[#allocation2 + $0x91]]
    %s4478 = sld [smem:[#allocation2 + $0x92]]
    %s4479 = sld [smem:[#allocation2 + $0x93]]
    %s4480 = sld [smem:[#allocation2 + $0x94]]
    %s4481 = sld [smem:[#allocation2 + $0x95]]
    %s4482 = sld [smem:[#allocation2 + $0x96]]
    %s4483 = sld [smem:[#allocation2 + $0x97]]
    %s4484 = sld [smem:[#allocation2 + $0x98]]
    %s4485 = sld [smem:[#allocation2 + $0x99]]
    %s4486 = sld [smem:[#allocation2 + $0x9a]]
    %s4487 = sld [smem:[#allocation2 + $0x9b]]
    %s4488 = sld [smem:[#allocation2 + $0x9c]]
    %s4489 = sld [smem:[#allocation2 + $0x9d]]
    %s4490 = sld [smem:[#allocation2 + $0x9e]]
    %s4491 = sld [smem:[#allocation2 + $0x9f]]
    %s4492 = sld [smem:[#allocation2 + $0xa0]]
    %s4493 = sld [smem:[#allocation2 + $0xa1]]
    %s4494 = sld [smem:[#allocation4 + $0x3]]
    %v4495 = vstv %s4494
    %s4496 = sld [smem:[#allocation4 + $0x4]]
    %v4497 = vstv %s4496
    %s4498 = sld [smem:[#allocation4 + $0x5]]
    %v4499 = vstv %s4498
    %v4500 = vstv %s4413
    %v4501 = vmul.f32 %v4389, %v4500
    %v4502 = vmul.f32 %v4390, %v4500
    %v4503 = vmul.f32 %v4391, %v4500
    %v4504 = vmul.f32 %v4392, %v4500
    %v4505 = vmul.f32 %v4393, %v4500
    %v4506 = vmul.f32 %v4394, %v4500
    %v4507 = vmul.f32 %v4395, %v4500
    %v4508 = vmul.f32 %v4396, %v4500
    %v4509 = vstv %s4440
    %v4510 = vmul.f32 %v4389, %v4509
    %v4511 = vmul.f32 %v4390, %v4509
    %v4512 = vmul.f32 %v4391, %v4509
    %v4513 = vmul.f32 %v4392, %v4509
    %v4514 = vmul.f32 %v4393, %v4509
    %v4515 = vmul.f32 %v4394, %v4509
    %v4516 = vmul.f32 %v4395, %v4509
    %v4517 = vmul.f32 %v4396, %v4509
    %v4518 = vstv %s4467
    %v4519 = vmul.f32 %v4389, %v4518
    %v4520 = vmul.f32 %v4390, %v4518
    %v4521 = vmul.f32 %v4391, %v4518
    %v4522 = vmul.f32 %v4392, %v4518
    %v4523 = vmul.f32 %v4393, %v4518
    %v4524 = vmul.f32 %v4394, %v4518
    %v4525 = vmul.f32 %v4395, %v4518
    %v4526 = vmul.f32 %v4396, %v4518
    %v4527 = vstv %s4414
    %v4528 = vmul.f32 %v4389, %v4527
    %v4529 = vmul.f32 %v4390, %v4527
    %v4530 = vmul.f32 %v4391, %v4527
    %v4531 = vmul.f32 %v4392, %v4527
    %v4532 = vmul.f32 %v4393, %v4527
    %v4533 = vmul.f32 %v4394, %v4527
    %v4534 = vmul.f32 %v4395, %v4527
    %v4535 = vmul.f32 %v4396, %v4527
    %4544 = vrot.lane.b32.xlu0 %v4528, 127
    %v4545 = vpop.permute.xlu0 %4544
    %4546 = vrot.lane.b32.xlu0 %v4529, 127
    %v4547 = vpop.permute.xlu0 %4546
    %4548 = vrot.lane.b32.xlu0 %v4530, 127
    %v4549 = vpop.permute.xlu0 %4548
    %4550 = vrot.lane.b32.xlu0 %v4531, 127
    %v4551 = vpop.permute.xlu0 %4550
    %4552 = vrot.lane.b32.xlu0 %v4532, 127
    %v4553 = vpop.permute.xlu0 %4552
    %4554 = vrot.lane.b32.xlu0 %v4533, 127
    %v4555 = vpop.permute.xlu0 %4554
    %4556 = vrot.lane.b32.xlu0 %v4534, 127
    %v4557 = vpop.permute.xlu0 %4556
    %4558 = vrot.lane.b32.xlu0 %v4535, 127
    %v4559 = vpop.permute.xlu0 %4558
    %v4560 = vsel %vm212, %v4545, %v4547
    %v4561 = vsel %vm212, %v4549, %v4551
    %v4562 = vsel %vm212, %v4553, %v4555
    %v4563 = vsel %vm212, %v4557, %v4559
    %v4572 = vadd.f32 %v4501, %v4560
    %v4573 = vadd.f32 %v4502, %v4547
    %v4574 = vadd.f32 %v4503, %v4561
    %v4575 = vadd.f32 %v4504, %v4551
    %v4576 = vadd.f32 %v4505, %v4562
    %v4577 = vadd.f32 %v4506, %v4555
    %v4578 = vadd.f32 %v4507, %v4563
    %v4579 = vadd.f32 %v4508, %v4559
    %v4580 = vstv %s4441
    %v4581 = vmul.f32 %v4389, %v4580
    %v4582 = vmul.f32 %v4390, %v4580
    %v4583 = vmul.f32 %v4391, %v4580
    %v4584 = vmul.f32 %v4392, %v4580
    %v4585 = vmul.f32 %v4393, %v4580
    %v4586 = vmul.f32 %v4394, %v4580
    %v4587 = vmul.f32 %v4395, %v4580
    %v4588 = vmul.f32 %v4396, %v4580
    %4597 = vrot.lane.b32.xlu0 %v4581, 127
    %v4598 = vpop.permute.xlu0 %4597
    %4599 = vrot.lane.b32.xlu0 %v4582, 127
    %v4600 = vpop.permute.xlu0 %4599
    %4601 = vrot.lane.b32.xlu0 %v4583, 127
    %v4602 = vpop.permute.xlu0 %4601
    %4603 = vrot.lane.b32.xlu0 %v4584, 127
    %v4604 = vpop.permute.xlu0 %4603
    %4605 = vrot.lane.b32.xlu0 %v4585, 127
    %v4606 = vpop.permute.xlu0 %4605
    %4607 = vrot.lane.b32.xlu0 %v4586, 127
    %v4608 = vpop.permute.xlu0 %4607
    %4609 = vrot.lane.b32.xlu0 %v4587, 127
    %v4610 = vpop.permute.xlu0 %4609
    %4611 = vrot.lane.b32.xlu0 %v4588, 127
    %v4612 = vpop.permute.xlu0 %4611
    %v4613 = vsel %vm212, %v4598, %v4600
    %v4614 = vsel %vm212, %v4602, %v4604
    %v4615 = vsel %vm212, %v4606, %v4608
    %v4616 = vsel %vm212, %v4610, %v4612
    %v4625 = vadd.f32 %v4510, %v4613
    %v4626 = vadd.f32 %v4511, %v4600
    %v4627 = vadd.f32 %v4512, %v4614
    %v4628 = vadd.f32 %v4513, %v4604
    %v4629 = vadd.f32 %v4514, %v4615
    %v4630 = vadd.f32 %v4515, %v4608
    %v4631 = vadd.f32 %v4516, %v4616
    %v4632 = vadd.f32 %v4517, %v4612
    %v4633 = vstv %s4468
    %v4634 = vmul.f32 %v4389, %v4633
    %v4635 = vmul.f32 %v4390, %v4633
    %v4636 = vmul.f32 %v4391, %v4633
    %v4637 = vmul.f32 %v4392, %v4633
    %v4638 = vmul.f32 %v4393, %v4633
    %v4639 = vmul.f32 %v4394, %v4633
    %v4640 = vmul.f32 %v4395, %v4633
    %v4641 = vmul.f32 %v4396, %v4633
    %4650 = vrot.lane.b32.xlu0 %v4634, 127
    %v4651 = vpop.permute.xlu0 %4650
    %4652 = vrot.lane.b32.xlu0 %v4635, 127
    %v4653 = vpop.permute.xlu0 %4652
    %4654 = vrot.lane.b32.xlu0 %v4636, 127
    %v4655 = vpop.permute.xlu0 %4654
    %4656 = vrot.lane.b32.xlu0 %v4637, 127
    %v4657 = vpop.permute.xlu0 %4656
    %4658 = vrot.lane.b32.xlu0 %v4638, 127
    %v4659 = vpop.permute.xlu0 %4658
    %4660 = vrot.lane.b32.xlu0 %v4639, 127
    %v4661 = vpop.permute.xlu0 %4660
    %4662 = vrot.lane.b32.xlu0 %v4640, 127
    %v4663 = vpop.permute.xlu0 %4662
    %4664 = vrot.lane.b32.xlu0 %v4641, 127
    %v4665 = vpop.permute.xlu0 %4664
    %v4666 = vsel %vm212, %v4651, %v4653
    %v4667 = vsel %vm212, %v4655, %v4657
    %v4668 = vsel %vm212, %v4659, %v4661
    %v4669 = vsel %vm212, %v4663, %v4665
    %v4678 = vadd.f32 %v4519, %v4666
    %v4679 = vadd.f32 %v4520, %v4653
    %v4680 = vadd.f32 %v4521, %v4667
    %v4681 = vadd.f32 %v4522, %v4657
    %v4682 = vadd.f32 %v4523, %v4668
    %v4683 = vadd.f32 %v4524, %v4661
    %v4684 = vadd.f32 %v4525, %v4669
    %v4685 = vadd.f32 %v4526, %v4665
    %v4686 = vstv %s4415
    %v4687 = vmul.f32 %v4389, %v4686
    %v4688 = vmul.f32 %v4390, %v4686
    %v4689 = vmul.f32 %v4391, %v4686
    %v4690 = vmul.f32 %v4392, %v4686
    %v4691 = vmul.f32 %v4393, %v4686
    %v4692 = vmul.f32 %v4394, %v4686
    %v4693 = vmul.f32 %v4395, %v4686
    %v4694 = vmul.f32 %v4396, %v4686
    %4703 = vrot.lane.b32.xlu0 %v4687, 126
    %v4704 = vpop.permute.xlu0 %4703
    %4705 = vrot.lane.b32.xlu0 %v4688, 126
    %v4706 = vpop.permute.xlu0 %4705
    %4707 = vrot.lane.b32.xlu0 %v4689, 126
    %v4708 = vpop.permute.xlu0 %4707
    %4709 = vrot.lane.b32.xlu0 %v4690, 126
    %v4710 = vpop.permute.xlu0 %4709
    %4711 = vrot.lane.b32.xlu0 %v4691, 126
    %v4712 = vpop.permute.xlu0 %4711
    %4713 = vrot.lane.b32.xlu0 %v4692, 126
    %v4714 = vpop.permute.xlu0 %4713
    %4715 = vrot.lane.b32.xlu0 %v4693, 126
    %v4716 = vpop.permute.xlu0 %4715
    %4717 = vrot.lane.b32.xlu0 %v4694, 126
    %v4718 = vpop.permute.xlu0 %4717
    %v4719 = vsel %vm372, %v4704, %v4706
    %v4720 = vsel %vm372, %v4708, %v4710
    %v4721 = vsel %vm372, %v4712, %v4714
    %v4722 = vsel %vm372, %v4716, %v4718
    %v4731 = vadd.f32 %v4572, %v4719
    %v4732 = vadd.f32 %v4573, %v4706
    %v4733 = vadd.f32 %v4574, %v4720
    %v4734 = vadd.f32 %v4575, %v4710
    %v4735 = vadd.f32 %v4576, %v4721
    %v4736 = vadd.f32 %v4577, %v4714
    %v4737 = vadd.f32 %v4578, %v4722
    %v4738 = vadd.f32 %v4579, %v4718
    %v4739 = vstv %s4442
    %v4740 = vmul.f32 %v4389, %v4739
    %v4741 = vmul.f32 %v4390, %v4739
    %v4742 = vmul.f32 %v4391, %v4739
    %v4743 = vmul.f32 %v4392, %v4739
    %v4744 = vmul.f32 %v4393, %v4739
    %v4745 = vmul.f32 %v4394, %v4739
    %v4746 = vmul.f32 %v4395, %v4739
    %v4747 = vmul.f32 %v4396, %v4739
    %4756 = vrot.lane.b32.xlu0 %v4740, 126
    %v4757 = vpop.permute.xlu0 %4756
    %4758 = vrot.lane.b32.xlu0 %v4741, 126
    %v4759 = vpop.permute.xlu0 %4758
    %4760 = vrot.lane.b32.xlu0 %v4742, 126
    %v4761 = vpop.permute.xlu0 %4760
    %4762 = vrot.lane.b32.xlu0 %v4743, 126
    %v4763 = vpop.permute.xlu0 %4762
    %4764 = vrot.lane.b32.xlu0 %v4744, 126
    %v4765 = vpop.permute.xlu0 %4764
    %4766 = vrot.lane.b32.xlu0 %v4745, 126
    %v4767 = vpop.permute.xlu0 %4766
    %4768 = vrot.lane.b32.xlu0 %v4746, 126
    %v4769 = vpop.permute.xlu0 %4768
    %4770 = vrot.lane.b32.xlu0 %v4747, 126
    %v4771 = vpop.permute.xlu0 %4770
    %v4772 = vsel %vm372, %v4757, %v4759
    %v4773 = vsel %vm372, %v4761, %v4763
    %v4774 = vsel %vm372, %v4765, %v4767
    %v4775 = vsel %vm372, %v4769, %v4771
    %v4784 = vadd.f32 %v4625, %v4772
    %v4785 = vadd.f32 %v4626, %v4759
    %v4786 = vadd.f32 %v4627, %v4773
    %v4787 = vadd.f32 %v4628, %v4763
    %v4788 = vadd.f32 %v4629, %v4774
    %v4789 = vadd.f32 %v4630, %v4767
    %v4790 = vadd.f32 %v4631, %v4775
    %v4791 = vadd.f32 %v4632, %v4771
    %v4792 = vstv %s4469
    %v4793 = vmul.f32 %v4389, %v4792
    %v4794 = vmul.f32 %v4390, %v4792
    %v4795 = vmul.f32 %v4391, %v4792
    %v4796 = vmul.f32 %v4392, %v4792
    %v4797 = vmul.f32 %v4393, %v4792
    %v4798 = vmul.f32 %v4394, %v4792
    %v4799 = vmul.f32 %v4395, %v4792
    %v4800 = vmul.f32 %v4396, %v4792
    %4809 = vrot.lane.b32.xlu0 %v4793, 126
    %v4810 = vpop.permute.xlu0 %4809
    %4811 = vrot.lane.b32.xlu0 %v4794, 126
    %v4812 = vpop.permute.xlu0 %4811
    %4813 = vrot.lane.b32.xlu0 %v4795, 126
    %v4814 = vpop.permute.xlu0 %4813
    %4815 = vrot.lane.b32.xlu0 %v4796, 126
    %v4816 = vpop.permute.xlu0 %4815
    %4817 = vrot.lane.b32.xlu0 %v4797, 126
    %v4818 = vpop.permute.xlu0 %4817
    %4819 = vrot.lane.b32.xlu0 %v4798, 126
    %v4820 = vpop.permute.xlu0 %4819
    %4821 = vrot.lane.b32.xlu0 %v4799, 126
    %v4822 = vpop.permute.xlu0 %4821
    %4823 = vrot.lane.b32.xlu0 %v4800, 126
    %v4824 = vpop.permute.xlu0 %4823
    %v4825 = vsel %vm372, %v4810, %v4812
    %v4826 = vsel %vm372, %v4814, %v4816
    %v4827 = vsel %vm372, %v4818, %v4820
    %v4828 = vsel %vm372, %v4822, %v4824
    %v4837 = vadd.f32 %v4678, %v4825
    %v4838 = vadd.f32 %v4679, %v4812
    %v4839 = vadd.f32 %v4680, %v4826
    %v4840 = vadd.f32 %v4681, %v4816
    %v4841 = vadd.f32 %v4682, %v4827
    %v4842 = vadd.f32 %v4683, %v4820
    %v4843 = vadd.f32 %v4684, %v4828
    %v4844 = vadd.f32 %v4685, %v4824
    %v4845 = vstv %s4416
    %v4846 = vmul.f32 %v4389, %v4845
    %v4847 = vmul.f32 %v4390, %v4845
    %v4848 = vmul.f32 %v4391, %v4845
    %v4849 = vmul.f32 %v4392, %v4845
    %v4850 = vmul.f32 %v4393, %v4845
    %v4851 = vmul.f32 %v4394, %v4845
    %v4852 = vmul.f32 %v4395, %v4845
    %v4853 = vmul.f32 %v4396, %v4845
    %v4862 = vrot.slane %v4846, 1
    %v4863 = vrot.slane %v4848, 1
    %v4864 = vsel %vm516, %v4862, %v4863
    %v4865 = vrot.slane %v4847, 1
    %v4866 = vrot.slane %v4849, 1
    %v4867 = vsel %vm516, %v4865, %v4866
    %v4868 = vrot.slane %v4850, 1
    %v4869 = vrot.slane %v4852, 1
    %v4870 = vsel %vm516, %v4868, %v4869
    %v4871 = vrot.slane %v4851, 1
    %v4872 = vrot.slane %v4853, 1
    %v4873 = vsel %vm516, %v4871, %v4872
    %v4882 = vadd.f32 %v4731, %v4864
    %v4883 = vadd.f32 %v4732, %v4867
    %v4884 = vadd.f32 %v4733, %v4863
    %v4885 = vadd.f32 %v4734, %v4866
    %v4886 = vadd.f32 %v4735, %v4870
    %v4887 = vadd.f32 %v4736, %v4873
    %v4888 = vadd.f32 %v4737, %v4869
    %v4889 = vadd.f32 %v4738, %v4872
    %v4890 = vstv %s4443
    %v4891 = vmul.f32 %v4389, %v4890
    %v4892 = vmul.f32 %v4390, %v4890
    %v4893 = vmul.f32 %v4391, %v4890
    %v4894 = vmul.f32 %v4392, %v4890
    %v4895 = vmul.f32 %v4393, %v4890
    %v4896 = vmul.f32 %v4394, %v4890
    %v4897 = vmul.f32 %v4395, %v4890
    %v4898 = vmul.f32 %v4396, %v4890
    %v4907 = vrot.slane %v4891, 1
    %v4908 = vrot.slane %v4893, 1
    %v4909 = vsel %vm516, %v4907, %v4908
    %v4910 = vrot.slane %v4892, 1
    %v4911 = vrot.slane %v4894, 1
    %v4912 = vsel %vm516, %v4910, %v4911
    %v4913 = vrot.slane %v4895, 1
    %v4914 = vrot.slane %v4897, 1
    %v4915 = vsel %vm516, %v4913, %v4914
    %v4916 = vrot.slane %v4896, 1
    %v4917 = vrot.slane %v4898, 1
    %v4918 = vsel %vm516, %v4916, %v4917
    %v4927 = vadd.f32 %v4784, %v4909
    %v4928 = vadd.f32 %v4785, %v4912
    %v4929 = vadd.f32 %v4786, %v4908
    %v4930 = vadd.f32 %v4787, %v4911
    %v4931 = vadd.f32 %v4788, %v4915
    %v4932 = vadd.f32 %v4789, %v4918
    %v4933 = vadd.f32 %v4790, %v4914
    %v4934 = vadd.f32 %v4791, %v4917
    %v4935 = vstv %s4470
    %v4936 = vmul.f32 %v4389, %v4935
    %v4937 = vmul.f32 %v4390, %v4935
    %v4938 = vmul.f32 %v4391, %v4935
    %v4939 = vmul.f32 %v4392, %v4935
    %v4940 = vmul.f32 %v4393, %v4935
    %v4941 = vmul.f32 %v4394, %v4935
    %v4942 = vmul.f32 %v4395, %v4935
    %v4943 = vmul.f32 %v4396, %v4935
    %v4952 = vrot.slane %v4936, 1
    %v4953 = vrot.slane %v4938, 1
    %v4954 = vsel %vm516, %v4952, %v4953
    %v4955 = vrot.slane %v4937, 1
    %v4956 = vrot.slane %v4939, 1
    %v4957 = vsel %vm516, %v4955, %v4956
    %v4958 = vrot.slane %v4940, 1
    %v4959 = vrot.slane %v4942, 1
    %v4960 = vsel %vm516, %v4958, %v4959
    %v4961 = vrot.slane %v4941, 1
    %v4962 = vrot.slane %v4943, 1
    %v4963 = vsel %vm516, %v4961, %v4962
    %v4972 = vadd.f32 %v4837, %v4954
    %v4973 = vadd.f32 %v4838, %v4957
    %v4974 = vadd.f32 %v4839, %v4953
    %v4975 = vadd.f32 %v4840, %v4956
    %v4976 = vadd.f32 %v4841, %v4960
    %v4977 = vadd.f32 %v4842, %v4963
    %v4978 = vadd.f32 %v4843, %v4959
    %v4979 = vadd.f32 %v4844, %v4962
    %v4980 = vstv %s4417
    %v4981 = vmul.f32 %v4389, %v4980
    %v4982 = vmul.f32 %v4390, %v4980
    %v4983 = vmul.f32 %v4391, %v4980
    %v4984 = vmul.f32 %v4392, %v4980
    %v4985 = vmul.f32 %v4393, %v4980
    %v4986 = vmul.f32 %v4394, %v4980
    %v4987 = vmul.f32 %v4395, %v4980
    %v4988 = vmul.f32 %v4396, %v4980
    %v4997 = vrot.slane %v4981, 1
    %v4998 = vrot.slane %v4983, 1
    %v4999 = vsel %vm516, %v4997, %v4998
    %v5000 = vrot.slane %v4982, 1
    %v5001 = vrot.slane %v4984, 1
    %v5002 = vsel %vm516, %v5000, %v5001
    %v5003 = vrot.slane %v4985, 1
    %v5004 = vrot.slane %v4987, 1
    %v5005 = vsel %vm516, %v5003, %v5004
    %v5006 = vrot.slane %v4986, 1
    %v5007 = vrot.slane %v4988, 1
    %v5008 = vsel %vm516, %v5006, %v5007
    %5009 = vrot.lane.b32.xlu0 %v4999, 127
    %v5010 = vpop.permute.xlu0 %5009
    %5011 = vrot.lane.b32.xlu0 %v5002, 127
    %v5012 = vpop.permute.xlu0 %5011
    %5013 = vrot.lane.b32.xlu0 %v4998, 127
    %v5014 = vpop.permute.xlu0 %5013
    %5015 = vrot.lane.b32.xlu0 %v5001, 127
    %v5016 = vpop.permute.xlu0 %5015
    %5017 = vrot.lane.b32.xlu0 %v5005, 127
    %v5018 = vpop.permute.xlu0 %5017
    %5019 = vrot.lane.b32.xlu0 %v5008, 127
    %v5020 = vpop.permute.xlu0 %5019
    %5021 = vrot.lane.b32.xlu0 %v5004, 127
    %v5022 = vpop.permute.xlu0 %5021
    %5023 = vrot.lane.b32.xlu0 %v5007, 127
    %v5024 = vpop.permute.xlu0 %5023
    %v5025 = vsel %vm212, %v5010, %v5012
    %v5026 = vsel %vm212, %v5014, %v5016
    %v5027 = vsel %vm212, %v5018, %v5020
    %v5028 = vsel %vm212, %v5022, %v5024
    %v5037 = vadd.f32 %v4882, %v5025
    %v5038 = vadd.f32 %v4883, %v5012
    %v5039 = vadd.f32 %v4884, %v5026
    %v5040 = vadd.f32 %v4885, %v5016
    %v5041 = vadd.f32 %v4886, %v5027
    %v5042 = vadd.f32 %v4887, %v5020
    %v5043 = vadd.f32 %v4888, %v5028
    %v5044 = vadd.f32 %v4889, %v5024
    %v5045 = vstv %s4444
    %v5046 = vmul.f32 %v4389, %v5045
    %v5047 = vmul.f32 %v4390, %v5045
    %v5048 = vmul.f32 %v4391, %v5045
    %v5049 = vmul.f32 %v4392, %v5045
    %v5050 = vmul.f32 %v4393, %v5045
    %v5051 = vmul.f32 %v4394, %v5045
    %v5052 = vmul.f32 %v4395, %v5045
    %v5053 = vmul.f32 %v4396, %v5045
    %v5062 = vrot.slane %v5046, 1
    %v5063 = vrot.slane %v5048, 1
    %v5064 = vsel %vm516, %v5062, %v5063
    %v5065 = vrot.slane %v5047, 1
    %v5066 = vrot.slane %v5049, 1
    %v5067 = vsel %vm516, %v5065, %v5066
    %v5068 = vrot.slane %v5050, 1
    %v5069 = vrot.slane %v5052, 1
    %v5070 = vsel %vm516, %v5068, %v5069
    %v5071 = vrot.slane %v5051, 1
    %v5072 = vrot.slane %v5053, 1
    %v5073 = vsel %vm516, %v5071, %v5072
    %5074 = vrot.lane.b32.xlu0 %v5064, 127
    %v5075 = vpop.permute.xlu0 %5074
    %5076 = vrot.lane.b32.xlu0 %v5067, 127
    %v5077 = vpop.permute.xlu0 %5076
    %5078 = vrot.lane.b32.xlu0 %v5063, 127
    %v5079 = vpop.permute.xlu0 %5078
    %5080 = vrot.lane.b32.xlu0 %v5066, 127
    %v5081 = vpop.permute.xlu0 %5080
    %5082 = vrot.lane.b32.xlu0 %v5070, 127
    %v5083 = vpop.permute.xlu0 %5082
    %5084 = vrot.lane.b32.xlu0 %v5073, 127
    %v5085 = vpop.permute.xlu0 %5084
    %5086 = vrot.lane.b32.xlu0 %v5069, 127
    %v5087 = vpop.permute.xlu0 %5086
    %5088 = vrot.lane.b32.xlu0 %v5072, 127
    %v5089 = vpop.permute.xlu0 %5088
    %v5090 = vsel %vm212, %v5075, %v5077
    %v5091 = vsel %vm212, %v5079, %v5081
    %v5092 = vsel %vm212, %v5083, %v5085
    %v5093 = vsel %vm212, %v5087, %v5089
    %v5102 = vadd.f32 %v4927, %v5090
    %v5103 = vadd.f32 %v4928, %v5077
    %v5104 = vadd.f32 %v4929, %v5091
    %v5105 = vadd.f32 %v4930, %v5081
    %v5106 = vadd.f32 %v4931, %v5092
    %v5107 = vadd.f32 %v4932, %v5085
    %v5108 = vadd.f32 %v4933, %v5093
    %v5109 = vadd.f32 %v4934, %v5089
    %v5110 = vstv %s4471
    %v5111 = vmul.f32 %v4389, %v5110
    %v5112 = vmul.f32 %v4390, %v5110
    %v5113 = vmul.f32 %v4391, %v5110
    %v5114 = vmul.f32 %v4392, %v5110
    %v5115 = vmul.f32 %v4393, %v5110
    %v5116 = vmul.f32 %v4394, %v5110
    %v5117 = vmul.f32 %v4395, %v5110
    %v5118 = vmul.f32 %v4396, %v5110
    %v5127 = vrot.slane %v5111, 1
    %v5128 = vrot.slane %v5113, 1
    %v5129 = vsel %vm516, %v5127, %v5128
    %v5130 = vrot.slane %v5112, 1
    %v5131 = vrot.slane %v5114, 1
    %v5132 = vsel %vm516, %v5130, %v5131
    %v5133 = vrot.slane %v5115, 1
    %v5134 = vrot.slane %v5117, 1
    %v5135 = vsel %vm516, %v5133, %v5134
    %v5136 = vrot.slane %v5116, 1
    %v5137 = vrot.slane %v5118, 1
    %v5138 = vsel %vm516, %v5136, %v5137
    %5139 = vrot.lane.b32.xlu0 %v5129, 127
    %v5140 = vpop.permute.xlu0 %5139
    %5141 = vrot.lane.b32.xlu0 %v5132, 127
    %v5142 = vpop.permute.xlu0 %5141
    %5143 = vrot.lane.b32.xlu0 %v5128, 127
    %v5144 = vpop.permute.xlu0 %5143
    %5145 = vrot.lane.b32.xlu0 %v5131, 127
    %v5146 = vpop.permute.xlu0 %5145
    %5147 = vrot.lane.b32.xlu0 %v5135, 127
    %v5148 = vpop.permute.xlu0 %5147
    %5149 = vrot.lane.b32.xlu0 %v5138, 127
    %v5150 = vpop.permute.xlu0 %5149
    %5151 = vrot.lane.b32.xlu0 %v5134, 127
    %v5152 = vpop.permute.xlu0 %5151
    %5153 = vrot.lane.b32.xlu0 %v5137, 127
    %v5154 = vpop.permute.xlu0 %5153
    %v5155 = vsel %vm212, %v5140, %v5142
    %v5156 = vsel %vm212, %v5144, %v5146
    %v5157 = vsel %vm212, %v5148, %v5150
    %v5158 = vsel %vm212, %v5152, %v5154
    %v5167 = vadd.f32 %v4972, %v5155
    %v5168 = vadd.f32 %v4973, %v5142
    %v5169 = vadd.f32 %v4974, %v5156
    %v5170 = vadd.f32 %v4975, %v5146
    %v5171 = vadd.f32 %v4976, %v5157
    %v5172 = vadd.f32 %v4977, %v5150
    %v5173 = vadd.f32 %v4978, %v5158
    %v5174 = vadd.f32 %v4979, %v5154
    %v5175 = vstv %s4418
    %v5176 = vmul.f32 %v4389, %v5175
    %v5177 = vmul.f32 %v4390, %v5175
    %v5178 = vmul.f32 %v4391, %v5175
    %v5179 = vmul.f32 %v4392, %v5175
    %v5180 = vmul.f32 %v4393, %v5175
    %v5181 = vmul.f32 %v4394, %v5175
    %v5182 = vmul.f32 %v4395, %v5175
    %v5183 = vmul.f32 %v4396, %v5175
    %v5192 = vrot.slane %v5176, 1
    %v5193 = vrot.slane %v5178, 1
    %v5194 = vsel %vm516, %v5192, %v5193
    %v5195 = vrot.slane %v5177, 1
    %v5196 = vrot.slane %v5179, 1
    %v5197 = vsel %vm516, %v5195, %v5196
    %v5198 = vrot.slane %v5180, 1
    %v5199 = vrot.slane %v5182, 1
    %v5200 = vsel %vm516, %v5198, %v5199
    %v5201 = vrot.slane %v5181, 1
    %v5202 = vrot.slane %v5183, 1
    %v5203 = vsel %vm516, %v5201, %v5202
    %5204 = vrot.lane.b32.xlu0 %v5194, 126
    %v5205 = vpop.permute.xlu0 %5204
    %5206 = vrot.lane.b32.xlu0 %v5197, 126
    %v5207 = vpop.permute.xlu0 %5206
    %5208 = vrot.lane.b32.xlu0 %v5193, 126
    %v5209 = vpop.permute.xlu0 %5208
    %5210 = vrot.lane.b32.xlu0 %v5196, 126
    %v5211 = vpop.permute.xlu0 %5210
    %5212 = vrot.lane.b32.xlu0 %v5200, 126
    %v5213 = vpop.permute.xlu0 %5212
    %5214 = vrot.lane.b32.xlu0 %v5203, 126
    %v5215 = vpop.permute.xlu0 %5214
    %5216 = vrot.lane.b32.xlu0 %v5199, 126
    %v5217 = vpop.permute.xlu0 %5216
    %5218 = vrot.lane.b32.xlu0 %v5202, 126
    %v5219 = vpop.permute.xlu0 %5218
    %v5220 = vsel %vm372, %v5205, %v5207
    %v5221 = vsel %vm372, %v5209, %v5211
    %v5222 = vsel %vm372, %v5213, %v5215
    %v5223 = vsel %vm372, %v5217, %v5219
    %v5232 = vadd.f32 %v5037, %v5220
    %v5233 = vadd.f32 %v5038, %v5207
    %v5234 = vadd.f32 %v5039, %v5221
    %v5235 = vadd.f32 %v5040, %v5211
    %v5236 = vadd.f32 %v5041, %v5222
    %v5237 = vadd.f32 %v5042, %v5215
    %v5238 = vadd.f32 %v5043, %v5223
    %v5239 = vadd.f32 %v5044, %v5219
    %v5240 = vstv %s4445
    %v5241 = vmul.f32 %v4389, %v5240
    %v5242 = vmul.f32 %v4390, %v5240
    %v5243 = vmul.f32 %v4391, %v5240
    %v5244 = vmul.f32 %v4392, %v5240
    %v5245 = vmul.f32 %v4393, %v5240
    %v5246 = vmul.f32 %v4394, %v5240
    %v5247 = vmul.f32 %v4395, %v5240
    %v5248 = vmul.f32 %v4396, %v5240
    %v5257 = vrot.slane %v5241, 1
    %v5258 = vrot.slane %v5243, 1
    %v5259 = vsel %vm516, %v5257, %v5258
    %v5260 = vrot.slane %v5242, 1
    %v5261 = vrot.slane %v5244, 1
    %v5262 = vsel %vm516, %v5260, %v5261
    %v5263 = vrot.slane %v5245, 1
    %v5264 = vrot.slane %v5247, 1
    %v5265 = vsel %vm516, %v5263, %v5264
    %v5266 = vrot.slane %v5246, 1
    %v5267 = vrot.slane %v5248, 1
    %v5268 = vsel %vm516, %v5266, %v5267
    %5269 = vrot.lane.b32.xlu0 %v5259, 126
    %v5270 = vpop.permute.xlu0 %5269
    %5271 = vrot.lane.b32.xlu0 %v5262, 126
    %v5272 = vpop.permute.xlu0 %5271
    %5273 = vrot.lane.b32.xlu0 %v5258, 126
    %v5274 = vpop.permute.xlu0 %5273
    %5275 = vrot.lane.b32.xlu0 %v5261, 126
    %v5276 = vpop.permute.xlu0 %5275
    %5277 = vrot.lane.b32.xlu0 %v5265, 126
    %v5278 = vpop.permute.xlu0 %5277
    %5279 = vrot.lane.b32.xlu0 %v5268, 126
    %v5280 = vpop.permute.xlu0 %5279
    %5281 = vrot.lane.b32.xlu0 %v5264, 126
    %v5282 = vpop.permute.xlu0 %5281
    %5283 = vrot.lane.b32.xlu0 %v5267, 126
    %v5284 = vpop.permute.xlu0 %5283
    %v5285 = vsel %vm372, %v5270, %v5272
    %v5286 = vsel %vm372, %v5274, %v5276
    %v5287 = vsel %vm372, %v5278, %v5280
    %v5288 = vsel %vm372, %v5282, %v5284
    %v5297 = vadd.f32 %v5102, %v5285
    %v5298 = vadd.f32 %v5103, %v5272
    %v5299 = vadd.f32 %v5104, %v5286
    %v5300 = vadd.f32 %v5105, %v5276
    %v5301 = vadd.f32 %v5106, %v5287
    %v5302 = vadd.f32 %v5107, %v5280
    %v5303 = vadd.f32 %v5108, %v5288
    %v5304 = vadd.f32 %v5109, %v5284
    %v5305 = vstv %s4472
    %v5306 = vmul.f32 %v4389, %v5305
    %v5307 = vmul.f32 %v4390, %v5305
    %v5308 = vmul.f32 %v4391, %v5305
    %v5309 = vmul.f32 %v4392, %v5305
    %v5310 = vmul.f32 %v4393, %v5305
    %v5311 = vmul.f32 %v4394, %v5305
    %v5312 = vmul.f32 %v4395, %v5305
    %v5313 = vmul.f32 %v4396, %v5305
    %v5322 = vrot.slane %v5306, 1
    %v5323 = vrot.slane %v5308, 1
    %v5324 = vsel %vm516, %v5322, %v5323
    %v5325 = vrot.slane %v5307, 1
    %v5326 = vrot.slane %v5309, 1
    %v5327 = vsel %vm516, %v5325, %v5326
    %v5328 = vrot.slane %v5310, 1
    %v5329 = vrot.slane %v5312, 1
    %v5330 = vsel %vm516, %v5328, %v5329
    %v5331 = vrot.slane %v5311, 1
    %v5332 = vrot.slane %v5313, 1
    %v5333 = vsel %vm516, %v5331, %v5332
    %5334 = vrot.lane.b32.xlu0 %v5324, 126
    %v5335 = vpop.permute.xlu0 %5334
    %5336 = vrot.lane.b32.xlu0 %v5327, 126
    %v5337 = vpop.permute.xlu0 %5336
    %5338 = vrot.lane.b32.xlu0 %v5323, 126
    %v5339 = vpop.permute.xlu0 %5338
    %5340 = vrot.lane.b32.xlu0 %v5326, 126
    %v5341 = vpop.permute.xlu0 %5340
    %5342 = vrot.lane.b32.xlu0 %v5330, 126
    %v5343 = vpop.permute.xlu0 %5342
    %5344 = vrot.lane.b32.xlu0 %v5333, 126
    %v5345 = vpop.permute.xlu0 %5344
    %5346 = vrot.lane.b32.xlu0 %v5329, 126
    %v5347 = vpop.permute.xlu0 %5346
    %5348 = vrot.lane.b32.xlu0 %v5332, 126
    %v5349 = vpop.permute.xlu0 %5348
    %v5350 = vsel %vm372, %v5335, %v5337
    %v5351 = vsel %vm372, %v5339, %v5341
    %v5352 = vsel %vm372, %v5343, %v5345
    %v5353 = vsel %vm372, %v5347, %v5349
    %v5362 = vadd.f32 %v5167, %v5350
    %v5363 = vadd.f32 %v5168, %v5337
    %v5364 = vadd.f32 %v5169, %v5351
    %v5365 = vadd.f32 %v5170, %v5341
    %v5366 = vadd.f32 %v5171, %v5352
    %v5367 = vadd.f32 %v5172, %v5345
    %v5368 = vadd.f32 %v5173, %v5353
    %v5369 = vadd.f32 %v5174, %v5349
    %v5370 = vstv %s4419
    %v5371 = vmul.f32 %v4389, %v5370
    %v5372 = vmul.f32 %v4390, %v5370
    %v5373 = vmul.f32 %v4391, %v5370
    %v5374 = vmul.f32 %v4392, %v5370
    %v5375 = vmul.f32 %v4393, %v5370
    %v5376 = vmul.f32 %v4394, %v5370
    %v5377 = vmul.f32 %v4395, %v5370
    %v5378 = vmul.f32 %v4396, %v5370
    %v5387 = vrot.slane %v5371, 2
    %v5388 = vrot.slane %v5373, 2
    %v5389 = vsel %vm1042, %v5387, %v5388
    %v5390 = vrot.slane %v5372, 2
    %v5391 = vrot.slane %v5374, 2
    %v5392 = vsel %vm1042, %v5390, %v5391
    %v5393 = vrot.slane %v5375, 2
    %v5394 = vrot.slane %v5377, 2
    %v5395 = vsel %vm1042, %v5393, %v5394
    %v5396 = vrot.slane %v5376, 2
    %v5397 = vrot.slane %v5378, 2
    %v5398 = vsel %vm1042, %v5396, %v5397
    %v5407 = vadd.f32 %v5232, %v5389
    %v5408 = vadd.f32 %v5233, %v5392
    %v5409 = vadd.f32 %v5234, %v5388
    %v5410 = vadd.f32 %v5235, %v5391
    %v5411 = vadd.f32 %v5236, %v5395
    %v5412 = vadd.f32 %v5237, %v5398
    %v5413 = vadd.f32 %v5238, %v5394
    %v5414 = vadd.f32 %v5239, %v5397
    %v5415 = vstv %s4446
    %v5416 = vmul.f32 %v4389, %v5415
    %v5417 = vmul.f32 %v4390, %v5415
    %v5418 = vmul.f32 %v4391, %v5415
    %v5419 = vmul.f32 %v4392, %v5415
    %v5420 = vmul.f32 %v4393, %v5415
    %v5421 = vmul.f32 %v4394, %v5415
    %v5422 = vmul.f32 %v4395, %v5415
    %v5423 = vmul.f32 %v4396, %v5415
    %v5432 = vrot.slane %v5416, 2
    %v5433 = vrot.slane %v5418, 2
    %v5434 = vsel %vm1042, %v5432, %v5433
    %v5435 = vrot.slane %v5417, 2
    %v5436 = vrot.slane %v5419, 2
    %v5437 = vsel %vm1042, %v5435, %v5436
    %v5438 = vrot.slane %v5420, 2
    %v5439 = vrot.slane %v5422, 2
    %v5440 = vsel %vm1042, %v5438, %v5439
    %v5441 = vrot.slane %v5421, 2
    %v5442 = vrot.slane %v5423, 2
    %v5443 = vsel %vm1042, %v5441, %v5442
    %v5452 = vadd.f32 %v5297, %v5434
    %v5453 = vadd.f32 %v5298, %v5437
    %v5454 = vadd.f32 %v5299, %v5433
    %v5455 = vadd.f32 %v5300, %v5436
    %v5456 = vadd.f32 %v5301, %v5440
    %v5457 = vadd.f32 %v5302, %v5443
    %v5458 = vadd.f32 %v5303, %v5439
    %v5459 = vadd.f32 %v5304, %v5442
    %v5460 = vstv %s4473
    %v5461 = vmul.f32 %v4389, %v5460
    %v5462 = vmul.f32 %v4390, %v5460
    %v5463 = vmul.f32 %v4391, %v5460
    %v5464 = vmul.f32 %v4392, %v5460
    %v5465 = vmul.f32 %v4393, %v5460
    %v5466 = vmul.f32 %v4394, %v5460
    %v5467 = vmul.f32 %v4395, %v5460
    %v5468 = vmul.f32 %v4396, %v5460
    %v5477 = vrot.slane %v5461, 2
    %v5478 = vrot.slane %v5463, 2
    %v5479 = vsel %vm1042, %v5477, %v5478
    %v5480 = vrot.slane %v5462, 2
    %v5481 = vrot.slane %v5464, 2
    %v5482 = vsel %vm1042, %v5480, %v5481
    %v5483 = vrot.slane %v5465, 2
    %v5484 = vrot.slane %v5467, 2
    %v5485 = vsel %vm1042, %v5483, %v5484
    %v5486 = vrot.slane %v5466, 2
    %v5487 = vrot.slane %v5468, 2
    %v5488 = vsel %vm1042, %v5486, %v5487
    %v5497 = vadd.f32 %v5362, %v5479
    %v5498 = vadd.f32 %v5363, %v5482
    %v5499 = vadd.f32 %v5364, %v5478
    %v5500 = vadd.f32 %v5365, %v5481
    %v5501 = vadd.f32 %v5366, %v5485
    %v5502 = vadd.f32 %v5367, %v5488
    %v5503 = vadd.f32 %v5368, %v5484
    %v5504 = vadd.f32 %v5369, %v5487
    %v5505 = vstv %s4420
    %v5506 = vmul.f32 %v4389, %v5505
    %v5507 = vmul.f32 %v4390, %v5505
    %v5508 = vmul.f32 %v4391, %v5505
    %v5509 = vmul.f32 %v4392, %v5505
    %v5510 = vmul.f32 %v4393, %v5505
    %v5511 = vmul.f32 %v4394, %v5505
    %v5512 = vmul.f32 %v4395, %v5505
    %v5513 = vmul.f32 %v4396, %v5505
    %v5522 = vrot.slane %v5506, 2
    %v5523 = vrot.slane %v5508, 2
    %v5524 = vsel %vm1042, %v5522, %v5523
    %v5525 = vrot.slane %v5507, 2
    %v5526 = vrot.slane %v5509, 2
    %v5527 = vsel %vm1042, %v5525, %v5526
    %v5528 = vrot.slane %v5510, 2
    %v5529 = vrot.slane %v5512, 2
    %v5530 = vsel %vm1042, %v5528, %v5529
    %v5531 = vrot.slane %v5511, 2
    %v5532 = vrot.slane %v5513, 2
    %v5533 = vsel %vm1042, %v5531, %v5532
    %5534 = vrot.lane.b32.xlu0 %v5524, 127
    %v5535 = vpop.permute.xlu0 %5534
    %5536 = vrot.lane.b32.xlu0 %v5527, 127
    %v5537 = vpop.permute.xlu0 %5536
    %5538 = vrot.lane.b32.xlu0 %v5523, 127
    %v5539 = vpop.permute.xlu0 %5538
    %5540 = vrot.lane.b32.xlu0 %v5526, 127
    %v5541 = vpop.permute.xlu0 %5540
    %5542 = vrot.lane.b32.xlu0 %v5530, 127
    %v5543 = vpop.permute.xlu0 %5542
    %5544 = vrot.lane.b32.xlu0 %v5533, 127
    %v5545 = vpop.permute.xlu0 %5544
    %5546 = vrot.lane.b32.xlu0 %v5529, 127
    %v5547 = vpop.permute.xlu0 %5546
    %5548 = vrot.lane.b32.xlu0 %v5532, 127
    %v5549 = vpop.permute.xlu0 %5548
    %v5550 = vsel %vm212, %v5535, %v5537
    %v5551 = vsel %vm212, %v5539, %v5541
    %v5552 = vsel %vm212, %v5543, %v5545
    %v5553 = vsel %vm212, %v5547, %v5549
    %v5562 = vadd.f32 %v5407, %v5550
    %v5563 = vadd.f32 %v5408, %v5537
    %v5564 = vadd.f32 %v5409, %v5551
    %v5565 = vadd.f32 %v5410, %v5541
    %v5566 = vadd.f32 %v5411, %v5552
    %v5567 = vadd.f32 %v5412, %v5545
    %v5568 = vadd.f32 %v5413, %v5553
    %v5569 = vadd.f32 %v5414, %v5549
    %v5570 = vstv %s4447
    %v5571 = vmul.f32 %v4389, %v5570
    %v5572 = vmul.f32 %v4390, %v5570
    %v5573 = vmul.f32 %v4391, %v5570
    %v5574 = vmul.f32 %v4392, %v5570
    %v5575 = vmul.f32 %v4393, %v5570
    %v5576 = vmul.f32 %v4394, %v5570
    %v5577 = vmul.f32 %v4395, %v5570
    %v5578 = vmul.f32 %v4396, %v5570
    %v5587 = vrot.slane %v5571, 2
    %v5588 = vrot.slane %v5573, 2
    %v5589 = vsel %vm1042, %v5587, %v5588
    %v5590 = vrot.slane %v5572, 2
    %v5591 = vrot.slane %v5574, 2
    %v5592 = vsel %vm1042, %v5590, %v5591
    %v5593 = vrot.slane %v5575, 2
    %v5594 = vrot.slane %v5577, 2
    %v5595 = vsel %vm1042, %v5593, %v5594
    %v5596 = vrot.slane %v5576, 2
    %v5597 = vrot.slane %v5578, 2
    %v5598 = vsel %vm1042, %v5596, %v5597
    %5599 = vrot.lane.b32.xlu0 %v5589, 127
    %v5600 = vpop.permute.xlu0 %5599
    %5601 = vrot.lane.b32.xlu0 %v5592, 127
    %v5602 = vpop.permute.xlu0 %5601
    %5603 = vrot.lane.b32.xlu0 %v5588, 127
    %v5604 = vpop.permute.xlu0 %5603
    %5605 = vrot.lane.b32.xlu0 %v5591, 127
    %v5606 = vpop.permute.xlu0 %5605
    %5607 = vrot.lane.b32.xlu0 %v5595, 127
    %v5608 = vpop.permute.xlu0 %5607
    %5609 = vrot.lane.b32.xlu0 %v5598, 127
    %v5610 = vpop.permute.xlu0 %5609
    %5611 = vrot.lane.b32.xlu0 %v5594, 127
    %v5612 = vpop.permute.xlu0 %5611
    %5613 = vrot.lane.b32.xlu0 %v5597, 127
    %v5614 = vpop.permute.xlu0 %5613
    %v5615 = vsel %vm212, %v5600, %v5602
    %v5616 = vsel %vm212, %v5604, %v5606
    %v5617 = vsel %vm212, %v5608, %v5610
    %v5618 = vsel %vm212, %v5612, %v5614
    %v5627 = vadd.f32 %v5452, %v5615
    %v5628 = vadd.f32 %v5453, %v5602
    %v5629 = vadd.f32 %v5454, %v5616
    %v5630 = vadd.f32 %v5455, %v5606
    %v5631 = vadd.f32 %v5456, %v5617
    %v5632 = vadd.f32 %v5457, %v5610
    %v5633 = vadd.f32 %v5458, %v5618
    %v5634 = vadd.f32 %v5459, %v5614
    %v5635 = vstv %s4474
    %v5636 = vmul.f32 %v4389, %v5635
    %v5637 = vmul.f32 %v4390, %v5635
    %v5638 = vmul.f32 %v4391, %v5635
    %v5639 = vmul.f32 %v4392, %v5635
    %v5640 = vmul.f32 %v4393, %v5635
    %v5641 = vmul.f32 %v4394, %v5635
    %v5642 = vmul.f32 %v4395, %v5635
    %v5643 = vmul.f32 %v4396, %v5635
    %v5652 = vrot.slane %v5636, 2
    %v5653 = vrot.slane %v5638, 2
    %v5654 = vsel %vm1042, %v5652, %v5653
    %v5655 = vrot.slane %v5637, 2
    %v5656 = vrot.slane %v5639, 2
    %v5657 = vsel %vm1042, %v5655, %v5656
    %v5658 = vrot.slane %v5640, 2
    %v5659 = vrot.slane %v5642, 2
    %v5660 = vsel %vm1042, %v5658, %v5659
    %v5661 = vrot.slane %v5641, 2
    %v5662 = vrot.slane %v5643, 2
    %v5663 = vsel %vm1042, %v5661, %v5662
    %5664 = vrot.lane.b32.xlu0 %v5654, 127
    %v5665 = vpop.permute.xlu0 %5664
    %5666 = vrot.lane.b32.xlu0 %v5657, 127
    %v5667 = vpop.permute.xlu0 %5666
    %5668 = vrot.lane.b32.xlu0 %v5653, 127
    %v5669 = vpop.permute.xlu0 %5668
    %5670 = vrot.lane.b32.xlu0 %v5656, 127
    %v5671 = vpop.permute.xlu0 %5670
    %5672 = vrot.lane.b32.xlu0 %v5660, 127
    %v5673 = vpop.permute.xlu0 %5672
    %5674 = vrot.lane.b32.xlu0 %v5663, 127
    %v5675 = vpop.permute.xlu0 %5674
    %5676 = vrot.lane.b32.xlu0 %v5659, 127
    %v5677 = vpop.permute.xlu0 %5676
    %5678 = vrot.lane.b32.xlu0 %v5662, 127
    %v5679 = vpop.permute.xlu0 %5678
    %v5680 = vsel %vm212, %v5665, %v5667
    %v5681 = vsel %vm212, %v5669, %v5671
    %v5682 = vsel %vm212, %v5673, %v5675
    %v5683 = vsel %vm212, %v5677, %v5679
    %v5692 = vadd.f32 %v5497, %v5680
    %v5693 = vadd.f32 %v5498, %v5667
    %v5694 = vadd.f32 %v5499, %v5681
    %v5695 = vadd.f32 %v5500, %v5671
    %v5696 = vadd.f32 %v5501, %v5682
    %v5697 = vadd.f32 %v5502, %v5675
    %v5698 = vadd.f32 %v5503, %v5683
    %v5699 = vadd.f32 %v5504, %v5679
    %v5700 = vstv %s4421
    %v5701 = vmul.f32 %v4389, %v5700
    %v5702 = vmul.f32 %v4390, %v5700
    %v5703 = vmul.f32 %v4391, %v5700
    %v5704 = vmul.f32 %v4392, %v5700
    %v5705 = vmul.f32 %v4393, %v5700
    %v5706 = vmul.f32 %v4394, %v5700
    %v5707 = vmul.f32 %v4395, %v5700
    %v5708 = vmul.f32 %v4396, %v5700
    %v5717 = vrot.slane %v5701, 2
    %v5718 = vrot.slane %v5703, 2
    %v5719 = vsel %vm1042, %v5717, %v5718
    %v5720 = vrot.slane %v5702, 2
    %v5721 = vrot.slane %v5704, 2
    %v5722 = vsel %vm1042, %v5720, %v5721
    %v5723 = vrot.slane %v5705, 2
    %v5724 = vrot.slane %v5707, 2
    %v5725 = vsel %vm1042, %v5723, %v5724
    %v5726 = vrot.slane %v5706, 2
    %v5727 = vrot.slane %v5708, 2
    %v5728 = vsel %vm1042, %v5726, %v5727
    %5729 = vrot.lane.b32.xlu0 %v5719, 126
    %v5730 = vpop.permute.xlu0 %5729
    %5731 = vrot.lane.b32.xlu0 %v5722, 126
    %v5732 = vpop.permute.xlu0 %5731
    %5733 = vrot.lane.b32.xlu0 %v5718, 126
    %v5734 = vpop.permute.xlu0 %5733
    %5735 = vrot.lane.b32.xlu0 %v5721, 126
    %v5736 = vpop.permute.xlu0 %5735
    %5737 = vrot.lane.b32.xlu0 %v5725, 126
    %v5738 = vpop.permute.xlu0 %5737
    %5739 = vrot.lane.b32.xlu0 %v5728, 126
    %v5740 = vpop.permute.xlu0 %5739
    %5741 = vrot.lane.b32.xlu0 %v5724, 126
    %v5742 = vpop.permute.xlu0 %5741
    %5743 = vrot.lane.b32.xlu0 %v5727, 126
    %v5744 = vpop.permute.xlu0 %5743
    %v5745 = vsel %vm372, %v5730, %v5732
    %v5746 = vsel %vm372, %v5734, %v5736
    %v5747 = vsel %vm372, %v5738, %v5740
    %v5748 = vsel %vm372, %v5742, %v5744
    %v5757 = vadd.f32 %v5562, %v5745
    %v5758 = vadd.f32 %v5563, %v5732
    %v5759 = vadd.f32 %v5564, %v5746
    %v5760 = vadd.f32 %v5565, %v5736
    %v5761 = vadd.f32 %v5566, %v5747
    %v5762 = vadd.f32 %v5567, %v5740
    %v5763 = vadd.f32 %v5568, %v5748
    %v5764 = vadd.f32 %v5569, %v5744
    %v5765 = vstv %s4448
    %v5766 = vmul.f32 %v4389, %v5765
    %v5767 = vmul.f32 %v4390, %v5765
    %v5768 = vmul.f32 %v4391, %v5765
    %v5769 = vmul.f32 %v4392, %v5765
    %v5770 = vmul.f32 %v4393, %v5765
    %v5771 = vmul.f32 %v4394, %v5765
    %v5772 = vmul.f32 %v4395, %v5765
    %v5773 = vmul.f32 %v4396, %v5765
    %v5782 = vrot.slane %v5766, 2
    %v5783 = vrot.slane %v5768, 2
    %v5784 = vsel %vm1042, %v5782, %v5783
    %v5785 = vrot.slane %v5767, 2
    %v5786 = vrot.slane %v5769, 2
    %v5787 = vsel %vm1042, %v5785, %v5786
    %v5788 = vrot.slane %v5770, 2
    %v5789 = vrot.slane %v5772, 2
    %v5790 = vsel %vm1042, %v5788, %v5789
    %v5791 = vrot.slane %v5771, 2
    %v5792 = vrot.slane %v5773, 2
    %v5793 = vsel %vm1042, %v5791, %v5792
    %5794 = vrot.lane.b32.xlu0 %v5784, 126
    %v5795 = vpop.permute.xlu0 %5794
    %5796 = vrot.lane.b32.xlu0 %v5787, 126
    %v5797 = vpop.permute.xlu0 %5796
    %5798 = vrot.lane.b32.xlu0 %v5783, 126
    %v5799 = vpop.permute.xlu0 %5798
    %5800 = vrot.lane.b32.xlu0 %v5786, 126
    %v5801 = vpop.permute.xlu0 %5800
    %5802 = vrot.lane.b32.xlu0 %v5790, 126
    %v5803 = vpop.permute.xlu0 %5802
    %5804 = vrot.lane.b32.xlu0 %v5793, 126
    %v5805 = vpop.permute.xlu0 %5804
    %5806 = vrot.lane.b32.xlu0 %v5789, 126
    %v5807 = vpop.permute.xlu0 %5806
    %5808 = vrot.lane.b32.xlu0 %v5792, 126
    %v5809 = vpop.permute.xlu0 %5808
    %v5810 = vsel %vm372, %v5795, %v5797
    %v5811 = vsel %vm372, %v5799, %v5801
    %v5812 = vsel %vm372, %v5803, %v5805
    %v5813 = vsel %vm372, %v5807, %v5809
    %v5822 = vadd.f32 %v5627, %v5810
    %v5823 = vadd.f32 %v5628, %v5797
    %v5824 = vadd.f32 %v5629, %v5811
    %v5825 = vadd.f32 %v5630, %v5801
    %v5826 = vadd.f32 %v5631, %v5812
    %v5827 = vadd.f32 %v5632, %v5805
    %v5828 = vadd.f32 %v5633, %v5813
    %v5829 = vadd.f32 %v5634, %v5809
    %v5830 = vstv %s4475
    %v5831 = vmul.f32 %v4389, %v5830
    %v5832 = vmul.f32 %v4390, %v5830
    %v5833 = vmul.f32 %v4391, %v5830
    %v5834 = vmul.f32 %v4392, %v5830
    %v5835 = vmul.f32 %v4393, %v5830
    %v5836 = vmul.f32 %v4394, %v5830
    %v5837 = vmul.f32 %v4395, %v5830
    %v5838 = vmul.f32 %v4396, %v5830
    %v5847 = vrot.slane %v5831, 2
    %v5848 = vrot.slane %v5833, 2
    %v5849 = vsel %vm1042, %v5847, %v5848
    %v5850 = vrot.slane %v5832, 2
    %v5851 = vrot.slane %v5834, 2
    %v5852 = vsel %vm1042, %v5850, %v5851
    %v5853 = vrot.slane %v5835, 2
    %v5854 = vrot.slane %v5837, 2
    %v5855 = vsel %vm1042, %v5853, %v5854
    %v5856 = vrot.slane %v5836, 2
    %v5857 = vrot.slane %v5838, 2
    %v5858 = vsel %vm1042, %v5856, %v5857
    %5859 = vrot.lane.b32.xlu0 %v5849, 126
    %v5860 = vpop.permute.xlu0 %5859
    %5861 = vrot.lane.b32.xlu0 %v5852, 126
    %v5862 = vpop.permute.xlu0 %5861
    %5863 = vrot.lane.b32.xlu0 %v5848, 126
    %v5864 = vpop.permute.xlu0 %5863
    %5865 = vrot.lane.b32.xlu0 %v5851, 126
    %v5866 = vpop.permute.xlu0 %5865
    %5867 = vrot.lane.b32.xlu0 %v5855, 126
    %v5868 = vpop.permute.xlu0 %5867
    %5869 = vrot.lane.b32.xlu0 %v5858, 126
    %v5870 = vpop.permute.xlu0 %5869
    %5871 = vrot.lane.b32.xlu0 %v5854, 126
    %v5872 = vpop.permute.xlu0 %5871
    %5873 = vrot.lane.b32.xlu0 %v5857, 126
    %v5874 = vpop.permute.xlu0 %5873
    %v5875 = vsel %vm372, %v5860, %v5862
    %v5876 = vsel %vm372, %v5864, %v5866
    %v5877 = vsel %vm372, %v5868, %v5870
    %v5878 = vsel %vm372, %v5872, %v5874
    %v5887 = vadd.f32 %v5692, %v5875
    %v5888 = vadd.f32 %v5693, %v5862
    %v5889 = vadd.f32 %v5694, %v5876
    %v5890 = vadd.f32 %v5695, %v5866
    %v5891 = vadd.f32 %v5696, %v5877
    %v5892 = vadd.f32 %v5697, %v5870
    %v5893 = vadd.f32 %v5698, %v5878
    %v5894 = vadd.f32 %v5699, %v5874
    %v5895 = vadd.f32 %v4495, %v5757
    %v5896 = vadd.f32 %v4495, %v5758
    %v5897 = vadd.f32 %v4495, %v5759
    %v5898 = vadd.f32 %v4495, %v5760
    %v5899 = vadd.f32 %v4495, %v5761
    %v5900 = vadd.f32 %v4495, %v5762
    %v5901 = vadd.f32 %v4495, %v5763
    %v5902 = vadd.f32 %v4495, %v5764
    %v5903 = vadd.f32 %v4497, %v5822
    %v5904 = vadd.f32 %v4497, %v5823
    %v5905 = vadd.f32 %v4497, %v5824
    %v5906 = vadd.f32 %v4497, %v5825
    %v5907 = vadd.f32 %v4497, %v5826
    %v5908 = vadd.f32 %v4497, %v5827
    %v5909 = vadd.f32 %v4497, %v5828
    %v5910 = vadd.f32 %v4497, %v5829
    %v5911 = vadd.f32 %v4499, %v5887
    %v5912 = vadd.f32 %v4499, %v5888
    %v5913 = vadd.f32 %v4499, %v5889
    %v5914 = vadd.f32 %v4499, %v5890
    %v5915 = vadd.f32 %v4499, %v5891
    %v5916 = vadd.f32 %v4499, %v5892
    %v5917 = vadd.f32 %v4499, %v5893
    %v5918 = vadd.f32 %v4499, %v5894
    %v5919 = vstv %s4422
    %v5920 = vmul.f32 %v4397, %v5919
    %v5921 = vmul.f32 %v4398, %v5919
    %v5922 = vmul.f32 %v4399, %v5919
    %v5923 = vmul.f32 %v4400, %v5919
    %v5924 = vmul.f32 %v4401, %v5919
    %v5925 = vmul.f32 %v4402, %v5919
    %v5926 = vmul.f32 %v4403, %v5919
    %v5927 = vmul.f32 %v4404, %v5919
    %v5928 = vstv %s4449
    %v5929 = vmul.f32 %v4397, %v5928
    %v5930 = vmul.f32 %v4398, %v5928
    %v5931 = vmul.f32 %v4399, %v5928
    %v5932 = vmul.f32 %v4400, %v5928
    %v5933 = vmul.f32 %v4401, %v5928
    %v5934 = vmul.f32 %v4402, %v5928
    %v5935 = vmul.f32 %v4403, %v5928
    %v5936 = vmul.f32 %v4404, %v5928
    %v5937 = vstv %s4476
    %v5938 = vmul.f32 %v4397, %v5937
    %v5939 = vmul.f32 %v4398, %v5937
    %v5940 = vmul.f32 %v4399, %v5937
    %v5941 = vmul.f32 %v4400, %v5937
    %v5942 = vmul.f32 %v4401, %v5937
    %v5943 = vmul.f32 %v4402, %v5937
    %v5944 = vmul.f32 %v4403, %v5937
    %v5945 = vmul.f32 %v4404, %v5937
    %v5946 = vstv %s4423
    %v5947 = vmul.f32 %v4397, %v5946
    %v5948 = vmul.f32 %v4398, %v5946
    %v5949 = vmul.f32 %v4399, %v5946
    %v5950 = vmul.f32 %v4400, %v5946
    %v5951 = vmul.f32 %v4401, %v5946
    %v5952 = vmul.f32 %v4402, %v5946
    %v5953 = vmul.f32 %v4403, %v5946
    %v5954 = vmul.f32 %v4404, %v5946
    %5963 = vrot.lane.b32.xlu0 %v5947, 127
    %v5964 = vpop.permute.xlu0 %5963
    %5965 = vrot.lane.b32.xlu0 %v5948, 127
    %v5966 = vpop.permute.xlu0 %5965
    %5967 = vrot.lane.b32.xlu0 %v5949, 127
    %v5968 = vpop.permute.xlu0 %5967
    %5969 = vrot.lane.b32.xlu0 %v5950, 127
    %v5970 = vpop.permute.xlu0 %5969
    %5971 = vrot.lane.b32.xlu0 %v5951, 127
    %v5972 = vpop.permute.xlu0 %5971
    %5973 = vrot.lane.b32.xlu0 %v5952, 127
    %v5974 = vpop.permute.xlu0 %5973
    %5975 = vrot.lane.b32.xlu0 %v5953, 127
    %v5976 = vpop.permute.xlu0 %5975
    %5977 = vrot.lane.b32.xlu0 %v5954, 127
    %v5978 = vpop.permute.xlu0 %5977
    %v5979 = vsel %vm212, %v5964, %v5966
    %v5980 = vsel %vm212, %v5968, %v5970
    %v5981 = vsel %vm212, %v5972, %v5974
    %v5982 = vsel %vm212, %v5976, %v5978
    %v5991 = vadd.f32 %v5920, %v5979
    %v5992 = vadd.f32 %v5921, %v5966
    %v5993 = vadd.f32 %v5922, %v5980
    %v5994 = vadd.f32 %v5923, %v5970
    %v5995 = vadd.f32 %v5924, %v5981
    %v5996 = vadd.f32 %v5925, %v5974
    %v5997 = vadd.f32 %v5926, %v5982
    %v5998 = vadd.f32 %v5927, %v5978
    %v5999 = vstv %s4450
    %v6000 = vmul.f32 %v4397, %v5999
    %v6001 = vmul.f32 %v4398, %v5999
    %v6002 = vmul.f32 %v4399, %v5999
    %v6003 = vmul.f32 %v4400, %v5999
    %v6004 = vmul.f32 %v4401, %v5999
    %v6005 = vmul.f32 %v4402, %v5999
    %v6006 = vmul.f32 %v4403, %v5999
    %v6007 = vmul.f32 %v4404, %v5999
    %6016 = vrot.lane.b32.xlu0 %v6000, 127
    %v6017 = vpop.permute.xlu0 %6016
    %6018 = vrot.lane.b32.xlu0 %v6001, 127
    %v6019 = vpop.permute.xlu0 %6018
    %6020 = vrot.lane.b32.xlu0 %v6002, 127
    %v6021 = vpop.permute.xlu0 %6020
    %6022 = vrot.lane.b32.xlu0 %v6003, 127
    %v6023 = vpop.permute.xlu0 %6022
    %6024 = vrot.lane.b32.xlu0 %v6004, 127
    %v6025 = vpop.permute.xlu0 %6024
    %6026 = vrot.lane.b32.xlu0 %v6005, 127
    %v6027 = vpop.permute.xlu0 %6026
    %6028 = vrot.lane.b32.xlu0 %v6006, 127
    %v6029 = vpop.permute.xlu0 %6028
    %6030 = vrot.lane.b32.xlu0 %v6007, 127
    %v6031 = vpop.permute.xlu0 %6030
    %v6032 = vsel %vm212, %v6017, %v6019
    %v6033 = vsel %vm212, %v6021, %v6023
    %v6034 = vsel %vm212, %v6025, %v6027
    %v6035 = vsel %vm212, %v6029, %v6031
    %v6044 = vadd.f32 %v5929, %v6032
    %v6045 = vadd.f32 %v5930, %v6019
    %v6046 = vadd.f32 %v5931, %v6033
    %v6047 = vadd.f32 %v5932, %v6023
    %v6048 = vadd.f32 %v5933, %v6034
    %v6049 = vadd.f32 %v5934, %v6027
    %v6050 = vadd.f32 %v5935, %v6035
    %v6051 = vadd.f32 %v5936, %v6031
    %v6052 = vstv %s4477
    %v6053 = vmul.f32 %v4397, %v6052
    %v6054 = vmul.f32 %v4398, %v6052
    %v6055 = vmul.f32 %v4399, %v6052
    %v6056 = vmul.f32 %v4400, %v6052
    %v6057 = vmul.f32 %v4401, %v6052
    %v6058 = vmul.f32 %v4402, %v6052
    %v6059 = vmul.f32 %v4403, %v6052
    %v6060 = vmul.f32 %v4404, %v6052
    %6069 = vrot.lane.b32.xlu0 %v6053, 127
    %v6070 = vpop.permute.xlu0 %6069
    %6071 = vrot.lane.b32.xlu0 %v6054, 127
    %v6072 = vpop.permute.xlu0 %6071
    %6073 = vrot.lane.b32.xlu0 %v6055, 127
    %v6074 = vpop.permute.xlu0 %6073
    %6075 = vrot.lane.b32.xlu0 %v6056, 127
    %v6076 = vpop.permute.xlu0 %6075
    %6077 = vrot.lane.b32.xlu0 %v6057, 127
    %v6078 = vpop.permute.xlu0 %6077
    %6079 = vrot.lane.b32.xlu0 %v6058, 127
    %v6080 = vpop.permute.xlu0 %6079
    %6081 = vrot.lane.b32.xlu0 %v6059, 127
    %v6082 = vpop.permute.xlu0 %6081
    %6083 = vrot.lane.b32.xlu0 %v6060, 127
    %v6084 = vpop.permute.xlu0 %6083
    %v6085 = vsel %vm212, %v6070, %v6072
    %v6086 = vsel %vm212, %v6074, %v6076
    %v6087 = vsel %vm212, %v6078, %v6080
    %v6088 = vsel %vm212, %v6082, %v6084
    %v6097 = vadd.f32 %v5938, %v6085
    %v6098 = vadd.f32 %v5939, %v6072
    %v6099 = vadd.f32 %v5940, %v6086
    %v6100 = vadd.f32 %v5941, %v6076
    %v6101 = vadd.f32 %v5942, %v6087
    %v6102 = vadd.f32 %v5943, %v6080
    %v6103 = vadd.f32 %v5944, %v6088
    %v6104 = vadd.f32 %v5945, %v6084
    %v6105 = vstv %s4424
    %v6106 = vmul.f32 %v4397, %v6105
    %v6107 = vmul.f32 %v4398, %v6105
    %v6108 = vmul.f32 %v4399, %v6105
    %v6109 = vmul.f32 %v4400, %v6105
    %v6110 = vmul.f32 %v4401, %v6105
    %v6111 = vmul.f32 %v4402, %v6105
    %v6112 = vmul.f32 %v4403, %v6105
    %v6113 = vmul.f32 %v4404, %v6105
    %6122 = vrot.lane.b32.xlu0 %v6106, 126
    %v6123 = vpop.permute.xlu0 %6122
    %6124 = vrot.lane.b32.xlu0 %v6107, 126
    %v6125 = vpop.permute.xlu0 %6124
    %6126 = vrot.lane.b32.xlu0 %v6108, 126
    %v6127 = vpop.permute.xlu0 %6126
    %6128 = vrot.lane.b32.xlu0 %v6109, 126
    %v6129 = vpop.permute.xlu0 %6128
    %6130 = vrot.lane.b32.xlu0 %v6110, 126
    %v6131 = vpop.permute.xlu0 %6130
    %6132 = vrot.lane.b32.xlu0 %v6111, 126
    %v6133 = vpop.permute.xlu0 %6132
    %6134 = vrot.lane.b32.xlu0 %v6112, 126
    %v6135 = vpop.permute.xlu0 %6134
    %6136 = vrot.lane.b32.xlu0 %v6113, 126
    %v6137 = vpop.permute.xlu0 %6136
    %v6138 = vsel %vm372, %v6123, %v6125
    %v6139 = vsel %vm372, %v6127, %v6129
    %v6140 = vsel %vm372, %v6131, %v6133
    %v6141 = vsel %vm372, %v6135, %v6137
    %v6150 = vadd.f32 %v5991, %v6138
    %v6151 = vadd.f32 %v5992, %v6125
    %v6152 = vadd.f32 %v5993, %v6139
    %v6153 = vadd.f32 %v5994, %v6129
    %v6154 = vadd.f32 %v5995, %v6140
    %v6155 = vadd.f32 %v5996, %v6133
    %v6156 = vadd.f32 %v5997, %v6141
    %v6157 = vadd.f32 %v5998, %v6137
    %v6158 = vstv %s4451
    %v6159 = vmul.f32 %v4397, %v6158
    %v6160 = vmul.f32 %v4398, %v6158
    %v6161 = vmul.f32 %v4399, %v6158
    %v6162 = vmul.f32 %v4400, %v6158
    %v6163 = vmul.f32 %v4401, %v6158
    %v6164 = vmul.f32 %v4402, %v6158
    %v6165 = vmul.f32 %v4403, %v6158
    %v6166 = vmul.f32 %v4404, %v6158
    %6175 = vrot.lane.b32.xlu0 %v6159, 126
    %v6176 = vpop.permute.xlu0 %6175
    %6177 = vrot.lane.b32.xlu0 %v6160, 126
    %v6178 = vpop.permute.xlu0 %6177
    %6179 = vrot.lane.b32.xlu0 %v6161, 126
    %v6180 = vpop.permute.xlu0 %6179
    %6181 = vrot.lane.b32.xlu0 %v6162, 126
    %v6182 = vpop.permute.xlu0 %6181
    %6183 = vrot.lane.b32.xlu0 %v6163, 126
    %v6184 = vpop.permute.xlu0 %6183
    %6185 = vrot.lane.b32.xlu0 %v6164, 126
    %v6186 = vpop.permute.xlu0 %6185
    %6187 = vrot.lane.b32.xlu0 %v6165, 126
    %v6188 = vpop.permute.xlu0 %6187
    %6189 = vrot.lane.b32.xlu0 %v6166, 126
    %v6190 = vpop.permute.xlu0 %6189
    %v6191 = vsel %vm372, %v6176, %v6178
    %v6192 = vsel %vm372, %v6180, %v6182
    %v6193 = vsel %vm372, %v6184, %v6186
    %v6194 = vsel %vm372, %v6188, %v6190
    %v6203 = vadd.f32 %v6044, %v6191
    %v6204 = vadd.f32 %v6045, %v6178
    %v6205 = vadd.f32 %v6046, %v6192
    %v6206 = vadd.f32 %v6047, %v6182
    %v6207 = vadd.f32 %v6048, %v6193
    %v6208 = vadd.f32 %v6049, %v6186
    %v6209 = vadd.f32 %v6050, %v6194
    %v6210 = vadd.f32 %v6051, %v6190
    %v6211 = vstv %s4478
    %v6212 = vmul.f32 %v4397, %v6211
    %v6213 = vmul.f32 %v4398, %v6211
    %v6214 = vmul.f32 %v4399, %v6211
    %v6215 = vmul.f32 %v4400, %v6211
    %v6216 = vmul.f32 %v4401, %v6211
    %v6217 = vmul.f32 %v4402, %v6211
    %v6218 = vmul.f32 %v4403, %v6211
    %v6219 = vmul.f32 %v4404, %v6211
    %6228 = vrot.lane.b32.xlu0 %v6212, 126
    %v6229 = vpop.permute.xlu0 %6228
    %6230 = vrot.lane.b32.xlu0 %v6213, 126
    %v6231 = vpop.permute.xlu0 %6230
    %6232 = vrot.lane.b32.xlu0 %v6214, 126
    %v6233 = vpop.permute.xlu0 %6232
    %6234 = vrot.lane.b32.xlu0 %v6215, 126
    %v6235 = vpop.permute.xlu0 %6234
    %6236 = vrot.lane.b32.xlu0 %v6216, 126
    %v6237 = vpop.permute.xlu0 %6236
    %6238 = vrot.lane.b32.xlu0 %v6217, 126
    %v6239 = vpop.permute.xlu0 %6238
    %6240 = vrot.lane.b32.xlu0 %v6218, 126
    %v6241 = vpop.permute.xlu0 %6240
    %6242 = vrot.lane.b32.xlu0 %v6219, 126
    %v6243 = vpop.permute.xlu0 %6242
    %v6244 = vsel %vm372, %v6229, %v6231
    %v6245 = vsel %vm372, %v6233, %v6235
    %v6246 = vsel %vm372, %v6237, %v6239
    %v6247 = vsel %vm372, %v6241, %v6243
    %v6256 = vadd.f32 %v6097, %v6244
    %v6257 = vadd.f32 %v6098, %v6231
    %v6258 = vadd.f32 %v6099, %v6245
    %v6259 = vadd.f32 %v6100, %v6235
    %v6260 = vadd.f32 %v6101, %v6246
    %v6261 = vadd.f32 %v6102, %v6239
    %v6262 = vadd.f32 %v6103, %v6247
    %v6263 = vadd.f32 %v6104, %v6243
    %v6264 = vstv %s4425
    %v6265 = vmul.f32 %v4397, %v6264
    %v6266 = vmul.f32 %v4398, %v6264
    %v6267 = vmul.f32 %v4399, %v6264
    %v6268 = vmul.f32 %v4400, %v6264
    %v6269 = vmul.f32 %v4401, %v6264
    %v6270 = vmul.f32 %v4402, %v6264
    %v6271 = vmul.f32 %v4403, %v6264
    %v6272 = vmul.f32 %v4404, %v6264
    %v6281 = vrot.slane %v6265, 1
    %v6282 = vrot.slane %v6267, 1
    %v6283 = vsel %vm516, %v6281, %v6282
    %v6284 = vrot.slane %v6266, 1
    %v6285 = vrot.slane %v6268, 1
    %v6286 = vsel %vm516, %v6284, %v6285
    %v6287 = vrot.slane %v6269, 1
    %v6288 = vrot.slane %v6271, 1
    %v6289 = vsel %vm516, %v6287, %v6288
    %v6290 = vrot.slane %v6270, 1
    %v6291 = vrot.slane %v6272, 1
    %v6292 = vsel %vm516, %v6290, %v6291
    %v6301 = vadd.f32 %v6150, %v6283
    %v6302 = vadd.f32 %v6151, %v6286
    %v6303 = vadd.f32 %v6152, %v6282
    %v6304 = vadd.f32 %v6153, %v6285
    %v6305 = vadd.f32 %v6154, %v6289
    %v6306 = vadd.f32 %v6155, %v6292
    %v6307 = vadd.f32 %v6156, %v6288
    %v6308 = vadd.f32 %v6157, %v6291
    %v6309 = vstv %s4452
    %v6310 = vmul.f32 %v4397, %v6309
    %v6311 = vmul.f32 %v4398, %v6309
    %v6312 = vmul.f32 %v4399, %v6309
    %v6313 = vmul.f32 %v4400, %v6309
    %v6314 = vmul.f32 %v4401, %v6309
    %v6315 = vmul.f32 %v4402, %v6309
    %v6316 = vmul.f32 %v4403, %v6309
    %v6317 = vmul.f32 %v4404, %v6309
    %v6326 = vrot.slane %v6310, 1
    %v6327 = vrot.slane %v6312, 1
    %v6328 = vsel %vm516, %v6326, %v6327
    %v6329 = vrot.slane %v6311, 1
    %v6330 = vrot.slane %v6313, 1
    %v6331 = vsel %vm516, %v6329, %v6330
    %v6332 = vrot.slane %v6314, 1
    %v6333 = vrot.slane %v6316, 1
    %v6334 = vsel %vm516, %v6332, %v6333
    %v6335 = vrot.slane %v6315, 1
    %v6336 = vrot.slane %v6317, 1
    %v6337 = vsel %vm516, %v6335, %v6336
    %v6346 = vadd.f32 %v6203, %v6328
    %v6347 = vadd.f32 %v6204, %v6331
    %v6348 = vadd.f32 %v6205, %v6327
    %v6349 = vadd.f32 %v6206, %v6330
    %v6350 = vadd.f32 %v6207, %v6334
    %v6351 = vadd.f32 %v6208, %v6337
    %v6352 = vadd.f32 %v6209, %v6333
    %v6353 = vadd.f32 %v6210, %v6336
    %v6354 = vstv %s4479
    %v6355 = vmul.f32 %v4397, %v6354
    %v6356 = vmul.f32 %v4398, %v6354
    %v6357 = vmul.f32 %v4399, %v6354
    %v6358 = vmul.f32 %v4400, %v6354
    %v6359 = vmul.f32 %v4401, %v6354
    %v6360 = vmul.f32 %v4402, %v6354
    %v6361 = vmul.f32 %v4403, %v6354
    %v6362 = vmul.f32 %v4404, %v6354
    %v6371 = vrot.slane %v6355, 1
    %v6372 = vrot.slane %v6357, 1
    %v6373 = vsel %vm516, %v6371, %v6372
    %v6374 = vrot.slane %v6356, 1
    %v6375 = vrot.slane %v6358, 1
    %v6376 = vsel %vm516, %v6374, %v6375
    %v6377 = vrot.slane %v6359, 1
    %v6378 = vrot.slane %v6361, 1
    %v6379 = vsel %vm516, %v6377, %v6378
    %v6380 = vrot.slane %v6360, 1
    %v6381 = vrot.slane %v6362, 1
    %v6382 = vsel %vm516, %v6380, %v6381
    %v6391 = vadd.f32 %v6256, %v6373
    %v6392 = vadd.f32 %v6257, %v6376
    %v6393 = vadd.f32 %v6258, %v6372
    %v6394 = vadd.f32 %v6259, %v6375
    %v6395 = vadd.f32 %v6260, %v6379
    %v6396 = vadd.f32 %v6261, %v6382
    %v6397 = vadd.f32 %v6262, %v6378
    %v6398 = vadd.f32 %v6263, %v6381
    %v6399 = vstv %s4426
    %v6400 = vmul.f32 %v4397, %v6399
    %v6401 = vmul.f32 %v4398, %v6399
    %v6402 = vmul.f32 %v4399, %v6399
    %v6403 = vmul.f32 %v4400, %v6399
    %v6404 = vmul.f32 %v4401, %v6399
    %v6405 = vmul.f32 %v4402, %v6399
    %v6406 = vmul.f32 %v4403, %v6399
    %v6407 = vmul.f32 %v4404, %v6399
    %v6416 = vrot.slane %v6400, 1
    %v6417 = vrot.slane %v6402, 1
    %v6418 = vsel %vm516, %v6416, %v6417
    %v6419 = vrot.slane %v6401, 1
    %v6420 = vrot.slane %v6403, 1
    %v6421 = vsel %vm516, %v6419, %v6420
    %v6422 = vrot.slane %v6404, 1
    %v6423 = vrot.slane %v6406, 1
    %v6424 = vsel %vm516, %v6422, %v6423
    %v6425 = vrot.slane %v6405, 1
    %v6426 = vrot.slane %v6407, 1
    %v6427 = vsel %vm516, %v6425, %v6426
    %6428 = vrot.lane.b32.xlu0 %v6418, 127
    %v6429 = vpop.permute.xlu0 %6428
    %6430 = vrot.lane.b32.xlu0 %v6421, 127
    %v6431 = vpop.permute.xlu0 %6430
    %6432 = vrot.lane.b32.xlu0 %v6417, 127
    %v6433 = vpop.permute.xlu0 %6432
    %6434 = vrot.lane.b32.xlu0 %v6420, 127
    %v6435 = vpop.permute.xlu0 %6434
    %6436 = vrot.lane.b32.xlu0 %v6424, 127
    %v6437 = vpop.permute.xlu0 %6436
    %6438 = vrot.lane.b32.xlu0 %v6427, 127
    %v6439 = vpop.permute.xlu0 %6438
    %6440 = vrot.lane.b32.xlu0 %v6423, 127
    %v6441 = vpop.permute.xlu0 %6440
    %6442 = vrot.lane.b32.xlu0 %v6426, 127
    %v6443 = vpop.permute.xlu0 %6442
    %v6444 = vsel %vm212, %v6429, %v6431
    %v6445 = vsel %vm212, %v6433, %v6435
    %v6446 = vsel %vm212, %v6437, %v6439
    %v6447 = vsel %vm212, %v6441, %v6443
    %v6456 = vadd.f32 %v6301, %v6444
    %v6457 = vadd.f32 %v6302, %v6431
    %v6458 = vadd.f32 %v6303, %v6445
    %v6459 = vadd.f32 %v6304, %v6435
    %v6460 = vadd.f32 %v6305, %v6446
    %v6461 = vadd.f32 %v6306, %v6439
    %v6462 = vadd.f32 %v6307, %v6447
    %v6463 = vadd.f32 %v6308, %v6443
    %v6464 = vstv %s4453
    %v6465 = vmul.f32 %v4397, %v6464
    %v6466 = vmul.f32 %v4398, %v6464
    %v6467 = vmul.f32 %v4399, %v6464
    %v6468 = vmul.f32 %v4400, %v6464
    %v6469 = vmul.f32 %v4401, %v6464
    %v6470 = vmul.f32 %v4402, %v6464
    %v6471 = vmul.f32 %v4403, %v6464
    %v6472 = vmul.f32 %v4404, %v6464
    %v6481 = vrot.slane %v6465, 1
    %v6482 = vrot.slane %v6467, 1
    %v6483 = vsel %vm516, %v6481, %v6482
    %v6484 = vrot.slane %v6466, 1
    %v6485 = vrot.slane %v6468, 1
    %v6486 = vsel %vm516, %v6484, %v6485
    %v6487 = vrot.slane %v6469, 1
    %v6488 = vrot.slane %v6471, 1
    %v6489 = vsel %vm516, %v6487, %v6488
    %v6490 = vrot.slane %v6470, 1
    %v6491 = vrot.slane %v6472, 1
    %v6492 = vsel %vm516, %v6490, %v6491
    %6493 = vrot.lane.b32.xlu0 %v6483, 127
    %v6494 = vpop.permute.xlu0 %6493
    %6495 = vrot.lane.b32.xlu0 %v6486, 127
    %v6496 = vpop.permute.xlu0 %6495
    %6497 = vrot.lane.b32.xlu0 %v6482, 127
    %v6498 = vpop.permute.xlu0 %6497
    %6499 = vrot.lane.b32.xlu0 %v6485, 127
    %v6500 = vpop.permute.xlu0 %6499
    %6501 = vrot.lane.b32.xlu0 %v6489, 127
    %v6502 = vpop.permute.xlu0 %6501
    %6503 = vrot.lane.b32.xlu0 %v6492, 127
    %v6504 = vpop.permute.xlu0 %6503
    %6505 = vrot.lane.b32.xlu0 %v6488, 127
    %v6506 = vpop.permute.xlu0 %6505
    %6507 = vrot.lane.b32.xlu0 %v6491, 127
    %v6508 = vpop.permute.xlu0 %6507
    %v6509 = vsel %vm212, %v6494, %v6496
    %v6510 = vsel %vm212, %v6498, %v6500
    %v6511 = vsel %vm212, %v6502, %v6504
    %v6512 = vsel %vm212, %v6506, %v6508
    %v6521 = vadd.f32 %v6346, %v6509
    %v6522 = vadd.f32 %v6347, %v6496
    %v6523 = vadd.f32 %v6348, %v6510
    %v6524 = vadd.f32 %v6349, %v6500
    %v6525 = vadd.f32 %v6350, %v6511
    %v6526 = vadd.f32 %v6351, %v6504
    %v6527 = vadd.f32 %v6352, %v6512
    %v6528 = vadd.f32 %v6353, %v6508
    %v6529 = vstv %s4480
    %v6530 = vmul.f32 %v4397, %v6529
    %v6531 = vmul.f32 %v4398, %v6529
    %v6532 = vmul.f32 %v4399, %v6529
    %v6533 = vmul.f32 %v4400, %v6529
    %v6534 = vmul.f32 %v4401, %v6529
    %v6535 = vmul.f32 %v4402, %v6529
    %v6536 = vmul.f32 %v4403, %v6529
    %v6537 = vmul.f32 %v4404, %v6529
    %v6546 = vrot.slane %v6530, 1
    %v6547 = vrot.slane %v6532, 1
    %v6548 = vsel %vm516, %v6546, %v6547
    %v6549 = vrot.slane %v6531, 1
    %v6550 = vrot.slane %v6533, 1
    %v6551 = vsel %vm516, %v6549, %v6550
    %v6552 = vrot.slane %v6534, 1
    %v6553 = vrot.slane %v6536, 1
    %v6554 = vsel %vm516, %v6552, %v6553
    %v6555 = vrot.slane %v6535, 1
    %v6556 = vrot.slane %v6537, 1
    %v6557 = vsel %vm516, %v6555, %v6556
    %6558 = vrot.lane.b32.xlu0 %v6548, 127
    %v6559 = vpop.permute.xlu0 %6558
    %6560 = vrot.lane.b32.xlu0 %v6551, 127
    %v6561 = vpop.permute.xlu0 %6560
    %6562 = vrot.lane.b32.xlu0 %v6547, 127
    %v6563 = vpop.permute.xlu0 %6562
    %6564 = vrot.lane.b32.xlu0 %v6550, 127
    %v6565 = vpop.permute.xlu0 %6564
    %6566 = vrot.lane.b32.xlu0 %v6554, 127
    %v6567 = vpop.permute.xlu0 %6566
    %6568 = vrot.lane.b32.xlu0 %v6557, 127
    %v6569 = vpop.permute.xlu0 %6568
    %6570 = vrot.lane.b32.xlu0 %v6553, 127
    %v6571 = vpop.permute.xlu0 %6570
    %6572 = vrot.lane.b32.xlu0 %v6556, 127
    %v6573 = vpop.permute.xlu0 %6572
    %v6574 = vsel %vm212, %v6559, %v6561
    %v6575 = vsel %vm212, %v6563, %v6565
    %v6576 = vsel %vm212, %v6567, %v6569
    %v6577 = vsel %vm212, %v6571, %v6573
    %v6586 = vadd.f32 %v6391, %v6574
    %v6587 = vadd.f32 %v6392, %v6561
    %v6588 = vadd.f32 %v6393, %v6575
    %v6589 = vadd.f32 %v6394, %v6565
    %v6590 = vadd.f32 %v6395, %v6576
    %v6591 = vadd.f32 %v6396, %v6569
    %v6592 = vadd.f32 %v6397, %v6577
    %v6593 = vadd.f32 %v6398, %v6573
    %v6594 = vstv %s4427
    %v6595 = vmul.f32 %v4397, %v6594
    %v6596 = vmul.f32 %v4398, %v6594
    %v6597 = vmul.f32 %v4399, %v6594
    %v6598 = vmul.f32 %v4400, %v6594
    %v6599 = vmul.f32 %v4401, %v6594
    %v6600 = vmul.f32 %v4402, %v6594
    %v6601 = vmul.f32 %v4403, %v6594
    %v6602 = vmul.f32 %v4404, %v6594
    %v6611 = vrot.slane %v6595, 1
    %v6612 = vrot.slane %v6597, 1
    %v6613 = vsel %vm516, %v6611, %v6612
    %v6614 = vrot.slane %v6596, 1
    %v6615 = vrot.slane %v6598, 1
    %v6616 = vsel %vm516, %v6614, %v6615
    %v6617 = vrot.slane %v6599, 1
    %v6618 = vrot.slane %v6601, 1
    %v6619 = vsel %vm516, %v6617, %v6618
    %v6620 = vrot.slane %v6600, 1
    %v6621 = vrot.slane %v6602, 1
    %v6622 = vsel %vm516, %v6620, %v6621
    %6623 = vrot.lane.b32.xlu0 %v6613, 126
    %v6624 = vpop.permute.xlu0 %6623
    %6625 = vrot.lane.b32.xlu0 %v6616, 126
    %v6626 = vpop.permute.xlu0 %6625
    %6627 = vrot.lane.b32.xlu0 %v6612, 126
    %v6628 = vpop.permute.xlu0 %6627
    %6629 = vrot.lane.b32.xlu0 %v6615, 126
    %v6630 = vpop.permute.xlu0 %6629
    %6631 = vrot.lane.b32.xlu0 %v6619, 126
    %v6632 = vpop.permute.xlu0 %6631
    %6633 = vrot.lane.b32.xlu0 %v6622, 126
    %v6634 = vpop.permute.xlu0 %6633
    %6635 = vrot.lane.b32.xlu0 %v6618, 126
    %v6636 = vpop.permute.xlu0 %6635
    %6637 = vrot.lane.b32.xlu0 %v6621, 126
    %v6638 = vpop.permute.xlu0 %6637
    %v6639 = vsel %vm372, %v6624, %v6626
    %v6640 = vsel %vm372, %v6628, %v6630
    %v6641 = vsel %vm372, %v6632, %v6634
    %v6642 = vsel %vm372, %v6636, %v6638
    %v6651 = vadd.f32 %v6456, %v6639
    %v6652 = vadd.f32 %v6457, %v6626
    %v6653 = vadd.f32 %v6458, %v6640
    %v6654 = vadd.f32 %v6459, %v6630
    %v6655 = vadd.f32 %v6460, %v6641
    %v6656 = vadd.f32 %v6461, %v6634
    %v6657 = vadd.f32 %v6462, %v6642
    %v6658 = vadd.f32 %v6463, %v6638
    %v6659 = vstv %s4454
    %v6660 = vmul.f32 %v4397, %v6659
    %v6661 = vmul.f32 %v4398, %v6659
    %v6662 = vmul.f32 %v4399, %v6659
    %v6663 = vmul.f32 %v4400, %v6659
    %v6664 = vmul.f32 %v4401, %v6659
    %v6665 = vmul.f32 %v4402, %v6659
    %v6666 = vmul.f32 %v4403, %v6659
    %v6667 = vmul.f32 %v4404, %v6659
    %v6676 = vrot.slane %v6660, 1
    %v6677 = vrot.slane %v6662, 1
    %v6678 = vsel %vm516, %v6676, %v6677
    %v6679 = vrot.slane %v6661, 1
    %v6680 = vrot.slane %v6663, 1
    %v6681 = vsel %vm516, %v6679, %v6680
    %v6682 = vrot.slane %v6664, 1
    %v6683 = vrot.slane %v6666, 1
    %v6684 = vsel %vm516, %v6682, %v6683
    %v6685 = vrot.slane %v6665, 1
    %v6686 = vrot.slane %v6667, 1
    %v6687 = vsel %vm516, %v6685, %v6686
    %6688 = vrot.lane.b32.xlu0 %v6678, 126
    %v6689 = vpop.permute.xlu0 %6688
    %6690 = vrot.lane.b32.xlu0 %v6681, 126
    %v6691 = vpop.permute.xlu0 %6690
    %6692 = vrot.lane.b32.xlu0 %v6677, 126
    %v6693 = vpop.permute.xlu0 %6692
    %6694 = vrot.lane.b32.xlu0 %v6680, 126
    %v6695 = vpop.permute.xlu0 %6694
    %6696 = vrot.lane.b32.xlu0 %v6684, 126
    %v6697 = vpop.permute.xlu0 %6696
    %6698 = vrot.lane.b32.xlu0 %v6687, 126
    %v6699 = vpop.permute.xlu0 %6698
    %6700 = vrot.lane.b32.xlu0 %v6683, 126
    %v6701 = vpop.permute.xlu0 %6700
    %6702 = vrot.lane.b32.xlu0 %v6686, 126
    %v6703 = vpop.permute.xlu0 %6702
    %v6704 = vsel %vm372, %v6689, %v6691
    %v6705 = vsel %vm372, %v6693, %v6695
    %v6706 = vsel %vm372, %v6697, %v6699
    %v6707 = vsel %vm372, %v6701, %v6703
    %v6716 = vadd.f32 %v6521, %v6704
    %v6717 = vadd.f32 %v6522, %v6691
    %v6718 = vadd.f32 %v6523, %v6705
    %v6719 = vadd.f32 %v6524, %v6695
    %v6720 = vadd.f32 %v6525, %v6706
    %v6721 = vadd.f32 %v6526, %v6699
    %v6722 = vadd.f32 %v6527, %v6707
    %v6723 = vadd.f32 %v6528, %v6703
    %v6724 = vstv %s4481
    %v6725 = vmul.f32 %v4397, %v6724
    %v6726 = vmul.f32 %v4398, %v6724
    %v6727 = vmul.f32 %v4399, %v6724
    %v6728 = vmul.f32 %v4400, %v6724
    %v6729 = vmul.f32 %v4401, %v6724
    %v6730 = vmul.f32 %v4402, %v6724
    %v6731 = vmul.f32 %v4403, %v6724
    %v6732 = vmul.f32 %v4404, %v6724
    %v6741 = vrot.slane %v6725, 1
    %v6742 = vrot.slane %v6727, 1
    %v6743 = vsel %vm516, %v6741, %v6742
    %v6744 = vrot.slane %v6726, 1
    %v6745 = vrot.slane %v6728, 1
    %v6746 = vsel %vm516, %v6744, %v6745
    %v6747 = vrot.slane %v6729, 1
    %v6748 = vrot.slane %v6731, 1
    %v6749 = vsel %vm516, %v6747, %v6748
    %v6750 = vrot.slane %v6730, 1
    %v6751 = vrot.slane %v6732, 1
    %v6752 = vsel %vm516, %v6750, %v6751
    %6753 = vrot.lane.b32.xlu0 %v6743, 126
    %v6754 = vpop.permute.xlu0 %6753
    %6755 = vrot.lane.b32.xlu0 %v6746, 126
    %v6756 = vpop.permute.xlu0 %6755
    %6757 = vrot.lane.b32.xlu0 %v6742, 126
    %v6758 = vpop.permute.xlu0 %6757
    %6759 = vrot.lane.b32.xlu0 %v6745, 126
    %v6760 = vpop.permute.xlu0 %6759
    %6761 = vrot.lane.b32.xlu0 %v6749, 126
    %v6762 = vpop.permute.xlu0 %6761
    %6763 = vrot.lane.b32.xlu0 %v6752, 126
    %v6764 = vpop.permute.xlu0 %6763
    %6765 = vrot.lane.b32.xlu0 %v6748, 126
    %v6766 = vpop.permute.xlu0 %6765
    %6767 = vrot.lane.b32.xlu0 %v6751, 126
    %v6768 = vpop.permute.xlu0 %6767
    %v6769 = vsel %vm372, %v6754, %v6756
    %v6770 = vsel %vm372, %v6758, %v6760
    %v6771 = vsel %vm372, %v6762, %v6764
    %v6772 = vsel %vm372, %v6766, %v6768
    %v6781 = vadd.f32 %v6586, %v6769
    %v6782 = vadd.f32 %v6587, %v6756
    %v6783 = vadd.f32 %v6588, %v6770
    %v6784 = vadd.f32 %v6589, %v6760
    %v6785 = vadd.f32 %v6590, %v6771
    %v6786 = vadd.f32 %v6591, %v6764
    %v6787 = vadd.f32 %v6592, %v6772
    %v6788 = vadd.f32 %v6593, %v6768
    %v6789 = vstv %s4428
    %v6790 = vmul.f32 %v4397, %v6789
    %v6791 = vmul.f32 %v4398, %v6789
    %v6792 = vmul.f32 %v4399, %v6789
    %v6793 = vmul.f32 %v4400, %v6789
    %v6794 = vmul.f32 %v4401, %v6789
    %v6795 = vmul.f32 %v4402, %v6789
    %v6796 = vmul.f32 %v4403, %v6789
    %v6797 = vmul.f32 %v4404, %v6789
    %v6806 = vrot.slane %v6790, 2
    %v6807 = vrot.slane %v6792, 2
    %v6808 = vsel %vm1042, %v6806, %v6807
    %v6809 = vrot.slane %v6791, 2
    %v6810 = vrot.slane %v6793, 2
    %v6811 = vsel %vm1042, %v6809, %v6810
    %v6812 = vrot.slane %v6794, 2
    %v6813 = vrot.slane %v6796, 2
    %v6814 = vsel %vm1042, %v6812, %v6813
    %v6815 = vrot.slane %v6795, 2
    %v6816 = vrot.slane %v6797, 2
    %v6817 = vsel %vm1042, %v6815, %v6816
    %v6826 = vadd.f32 %v6651, %v6808
    %v6827 = vadd.f32 %v6652, %v6811
    %v6828 = vadd.f32 %v6653, %v6807
    %v6829 = vadd.f32 %v6654, %v6810
    %v6830 = vadd.f32 %v6655, %v6814
    %v6831 = vadd.f32 %v6656, %v6817
    %v6832 = vadd.f32 %v6657, %v6813
    %v6833 = vadd.f32 %v6658, %v6816
    %v6834 = vstv %s4455
    %v6835 = vmul.f32 %v4397, %v6834
    %v6836 = vmul.f32 %v4398, %v6834
    %v6837 = vmul.f32 %v4399, %v6834
    %v6838 = vmul.f32 %v4400, %v6834
    %v6839 = vmul.f32 %v4401, %v6834
    %v6840 = vmul.f32 %v4402, %v6834
    %v6841 = vmul.f32 %v4403, %v6834
    %v6842 = vmul.f32 %v4404, %v6834
    %v6851 = vrot.slane %v6835, 2
    %v6852 = vrot.slane %v6837, 2
    %v6853 = vsel %vm1042, %v6851, %v6852
    %v6854 = vrot.slane %v6836, 2
    %v6855 = vrot.slane %v6838, 2
    %v6856 = vsel %vm1042, %v6854, %v6855
    %v6857 = vrot.slane %v6839, 2
    %v6858 = vrot.slane %v6841, 2
    %v6859 = vsel %vm1042, %v6857, %v6858
    %v6860 = vrot.slane %v6840, 2
    %v6861 = vrot.slane %v6842, 2
    %v6862 = vsel %vm1042, %v6860, %v6861
    %v6871 = vadd.f32 %v6716, %v6853
    %v6872 = vadd.f32 %v6717, %v6856
    %v6873 = vadd.f32 %v6718, %v6852
    %v6874 = vadd.f32 %v6719, %v6855
    %v6875 = vadd.f32 %v6720, %v6859
    %v6876 = vadd.f32 %v6721, %v6862
    %v6877 = vadd.f32 %v6722, %v6858
    %v6878 = vadd.f32 %v6723, %v6861
    %v6879 = vstv %s4482
    %v6880 = vmul.f32 %v4397, %v6879
    %v6881 = vmul.f32 %v4398, %v6879
    %v6882 = vmul.f32 %v4399, %v6879
    %v6883 = vmul.f32 %v4400, %v6879
    %v6884 = vmul.f32 %v4401, %v6879
    %v6885 = vmul.f32 %v4402, %v6879
    %v6886 = vmul.f32 %v4403, %v6879
    %v6887 = vmul.f32 %v4404, %v6879
    %v6896 = vrot.slane %v6880, 2
    %v6897 = vrot.slane %v6882, 2
    %v6898 = vsel %vm1042, %v6896, %v6897
    %v6899 = vrot.slane %v6881, 2
    %v6900 = vrot.slane %v6883, 2
    %v6901 = vsel %vm1042, %v6899, %v6900
    %v6902 = vrot.slane %v6884, 2
    %v6903 = vrot.slane %v6886, 2
    %v6904 = vsel %vm1042, %v6902, %v6903
    %v6905 = vrot.slane %v6885, 2
    %v6906 = vrot.slane %v6887, 2
    %v6907 = vsel %vm1042, %v6905, %v6906
    %v6916 = vadd.f32 %v6781, %v6898
    %v6917 = vadd.f32 %v6782, %v6901
    %v6918 = vadd.f32 %v6783, %v6897
    %v6919 = vadd.f32 %v6784, %v6900
    %v6920 = vadd.f32 %v6785, %v6904
    %v6921 = vadd.f32 %v6786, %v6907
    %v6922 = vadd.f32 %v6787, %v6903
    %v6923 = vadd.f32 %v6788, %v6906
    %v6924 = vstv %s4429
    %v6925 = vmul.f32 %v4397, %v6924
    %v6926 = vmul.f32 %v4398, %v6924
    %v6927 = vmul.f32 %v4399, %v6924
    %v6928 = vmul.f32 %v4400, %v6924
    %v6929 = vmul.f32 %v4401, %v6924
    %v6930 = vmul.f32 %v4402, %v6924
    %v6931 = vmul.f32 %v4403, %v6924
    %v6932 = vmul.f32 %v4404, %v6924
    %v6941 = vrot.slane %v6925, 2
    %v6942 = vrot.slane %v6927, 2
    %v6943 = vsel %vm1042, %v6941, %v6942
    %v6944 = vrot.slane %v6926, 2
    %v6945 = vrot.slane %v6928, 2
    %v6946 = vsel %vm1042, %v6944, %v6945
    %v6947 = vrot.slane %v6929, 2
    %v6948 = vrot.slane %v6931, 2
    %v6949 = vsel %vm1042, %v6947, %v6948
    %v6950 = vrot.slane %v6930, 2
    %v6951 = vrot.slane %v6932, 2
    %v6952 = vsel %vm1042, %v6950, %v6951
    %6953 = vrot.lane.b32.xlu0 %v6943, 127
    %v6954 = vpop.permute.xlu0 %6953
    %6955 = vrot.lane.b32.xlu0 %v6946, 127
    %v6956 = vpop.permute.xlu0 %6955
    %6957 = vrot.lane.b32.xlu0 %v6942, 127
    %v6958 = vpop.permute.xlu0 %6957
    %6959 = vrot.lane.b32.xlu0 %v6945, 127
    %v6960 = vpop.permute.xlu0 %6959
    %6961 = vrot.lane.b32.xlu0 %v6949, 127
    %v6962 = vpop.permute.xlu0 %6961
    %6963 = vrot.lane.b32.xlu0 %v6952, 127
    %v6964 = vpop.permute.xlu0 %6963
    %6965 = vrot.lane.b32.xlu0 %v6948, 127
    %v6966 = vpop.permute.xlu0 %6965
    %6967 = vrot.lane.b32.xlu0 %v6951, 127
    %v6968 = vpop.permute.xlu0 %6967
    %v6969 = vsel %vm212, %v6954, %v6956
    %v6970 = vsel %vm212, %v6958, %v6960
    %v6971 = vsel %vm212, %v6962, %v6964
    %v6972 = vsel %vm212, %v6966, %v6968
    %v6981 = vadd.f32 %v6826, %v6969
    %v6982 = vadd.f32 %v6827, %v6956
    %v6983 = vadd.f32 %v6828, %v6970
    %v6984 = vadd.f32 %v6829, %v6960
    %v6985 = vadd.f32 %v6830, %v6971
    %v6986 = vadd.f32 %v6831, %v6964
    %v6987 = vadd.f32 %v6832, %v6972
    %v6988 = vadd.f32 %v6833, %v6968
    %v6989 = vstv %s4456
    %v6990 = vmul.f32 %v4397, %v6989
    %v6991 = vmul.f32 %v4398, %v6989
    %v6992 = vmul.f32 %v4399, %v6989
    %v6993 = vmul.f32 %v4400, %v6989
    %v6994 = vmul.f32 %v4401, %v6989
    %v6995 = vmul.f32 %v4402, %v6989
    %v6996 = vmul.f32 %v4403, %v6989
    %v6997 = vmul.f32 %v4404, %v6989
    %v7006 = vrot.slane %v6990, 2
    %v7007 = vrot.slane %v6992, 2
    %v7008 = vsel %vm1042, %v7006, %v7007
    %v7009 = vrot.slane %v6991, 2
    %v7010 = vrot.slane %v6993, 2
    %v7011 = vsel %vm1042, %v7009, %v7010
    %v7012 = vrot.slane %v6994, 2
    %v7013 = vrot.slane %v6996, 2
    %v7014 = vsel %vm1042, %v7012, %v7013
    %v7015 = vrot.slane %v6995, 2
    %v7016 = vrot.slane %v6997, 2
    %v7017 = vsel %vm1042, %v7015, %v7016
    %7018 = vrot.lane.b32.xlu0 %v7008, 127
    %v7019 = vpop.permute.xlu0 %7018
    %7020 = vrot.lane.b32.xlu0 %v7011, 127
    %v7021 = vpop.permute.xlu0 %7020
    %7022 = vrot.lane.b32.xlu0 %v7007, 127
    %v7023 = vpop.permute.xlu0 %7022
    %7024 = vrot.lane.b32.xlu0 %v7010, 127
    %v7025 = vpop.permute.xlu0 %7024
    %7026 = vrot.lane.b32.xlu0 %v7014, 127
    %v7027 = vpop.permute.xlu0 %7026
    %7028 = vrot.lane.b32.xlu0 %v7017, 127
    %v7029 = vpop.permute.xlu0 %7028
    %7030 = vrot.lane.b32.xlu0 %v7013, 127
    %v7031 = vpop.permute.xlu0 %7030
    %7032 = vrot.lane.b32.xlu0 %v7016, 127
    %v7033 = vpop.permute.xlu0 %7032
    %v7034 = vsel %vm212, %v7019, %v7021
    %v7035 = vsel %vm212, %v7023, %v7025
    %v7036 = vsel %vm212, %v7027, %v7029
    %v7037 = vsel %vm212, %v7031, %v7033
    %v7046 = vadd.f32 %v6871, %v7034
    %v7047 = vadd.f32 %v6872, %v7021
    %v7048 = vadd.f32 %v6873, %v7035
    %v7049 = vadd.f32 %v6874, %v7025
    %v7050 = vadd.f32 %v6875, %v7036
    %v7051 = vadd.f32 %v6876, %v7029
    %v7052 = vadd.f32 %v6877, %v7037
    %v7053 = vadd.f32 %v6878, %v7033
    %v7054 = vstv %s4483
    %v7055 = vmul.f32 %v4397, %v7054
    %v7056 = vmul.f32 %v4398, %v7054
    %v7057 = vmul.f32 %v4399, %v7054
    %v7058 = vmul.f32 %v4400, %v7054
    %v7059 = vmul.f32 %v4401, %v7054
    %v7060 = vmul.f32 %v4402, %v7054
    %v7061 = vmul.f32 %v4403, %v7054
    %v7062 = vmul.f32 %v4404, %v7054
    %v7071 = vrot.slane %v7055, 2
    %v7072 = vrot.slane %v7057, 2
    %v7073 = vsel %vm1042, %v7071, %v7072
    %v7074 = vrot.slane %v7056, 2
    %v7075 = vrot.slane %v7058, 2
    %v7076 = vsel %vm1042, %v7074, %v7075
    %v7077 = vrot.slane %v7059, 2
    %v7078 = vrot.slane %v7061, 2
    %v7079 = vsel %vm1042, %v7077, %v7078
    %v7080 = vrot.slane %v7060, 2
    %v7081 = vrot.slane %v7062, 2
    %v7082 = vsel %vm1042, %v7080, %v7081
    %7083 = vrot.lane.b32.xlu0 %v7073, 127
    %v7084 = vpop.permute.xlu0 %7083
    %7085 = vrot.lane.b32.xlu0 %v7076, 127
    %v7086 = vpop.permute.xlu0 %7085
    %7087 = vrot.lane.b32.xlu0 %v7072, 127
    %v7088 = vpop.permute.xlu0 %7087
    %7089 = vrot.lane.b32.xlu0 %v7075, 127
    %v7090 = vpop.permute.xlu0 %7089
    %7091 = vrot.lane.b32.xlu0 %v7079, 127
    %v7092 = vpop.permute.xlu0 %7091
    %7093 = vrot.lane.b32.xlu0 %v7082, 127
    %v7094 = vpop.permute.xlu0 %7093
    %7095 = vrot.lane.b32.xlu0 %v7078, 127
    %v7096 = vpop.permute.xlu0 %7095
    %7097 = vrot.lane.b32.xlu0 %v7081, 127
    %v7098 = vpop.permute.xlu0 %7097
    %v7099 = vsel %vm212, %v7084, %v7086
    %v7100 = vsel %vm212, %v7088, %v7090
    %v7101 = vsel %vm212, %v7092, %v7094
    %v7102 = vsel %vm212, %v7096, %v7098
    %v7111 = vadd.f32 %v6916, %v7099
    %v7112 = vadd.f32 %v6917, %v7086
    %v7113 = vadd.f32 %v6918, %v7100
    %v7114 = vadd.f32 %v6919, %v7090
    %v7115 = vadd.f32 %v6920, %v7101
    %v7116 = vadd.f32 %v6921, %v7094
    %v7117 = vadd.f32 %v6922, %v7102
    %v7118 = vadd.f32 %v6923, %v7098
    %v7119 = vstv %s4430
    %v7120 = vmul.f32 %v4397, %v7119
    %v7121 = vmul.f32 %v4398, %v7119
    %v7122 = vmul.f32 %v4399, %v7119
    %v7123 = vmul.f32 %v4400, %v7119
    %v7124 = vmul.f32 %v4401, %v7119
    %v7125 = vmul.f32 %v4402, %v7119
    %v7126 = vmul.f32 %v4403, %v7119
    %v7127 = vmul.f32 %v4404, %v7119
    %v7136 = vrot.slane %v7120, 2
    %v7137 = vrot.slane %v7122, 2
    %v7138 = vsel %vm1042, %v7136, %v7137
    %v7139 = vrot.slane %v7121, 2
    %v7140 = vrot.slane %v7123, 2
    %v7141 = vsel %vm1042, %v7139, %v7140
    %v7142 = vrot.slane %v7124, 2
    %v7143 = vrot.slane %v7126, 2
    %v7144 = vsel %vm1042, %v7142, %v7143
    %v7145 = vrot.slane %v7125, 2
    %v7146 = vrot.slane %v7127, 2
    %v7147 = vsel %vm1042, %v7145, %v7146
    %7148 = vrot.lane.b32.xlu0 %v7138, 126
    %v7149 = vpop.permute.xlu0 %7148
    %7150 = vrot.lane.b32.xlu0 %v7141, 126
    %v7151 = vpop.permute.xlu0 %7150
    %7152 = vrot.lane.b32.xlu0 %v7137, 126
    %v7153 = vpop.permute.xlu0 %7152
    %7154 = vrot.lane.b32.xlu0 %v7140, 126
    %v7155 = vpop.permute.xlu0 %7154
    %7156 = vrot.lane.b32.xlu0 %v7144, 126
    %v7157 = vpop.permute.xlu0 %7156
    %7158 = vrot.lane.b32.xlu0 %v7147, 126
    %v7159 = vpop.permute.xlu0 %7158
    %7160 = vrot.lane.b32.xlu0 %v7143, 126
    %v7161 = vpop.permute.xlu0 %7160
    %7162 = vrot.lane.b32.xlu0 %v7146, 126
    %v7163 = vpop.permute.xlu0 %7162
    %v7164 = vsel %vm372, %v7149, %v7151
    %v7165 = vsel %vm372, %v7153, %v7155
    %v7166 = vsel %vm372, %v7157, %v7159
    %v7167 = vsel %vm372, %v7161, %v7163
    %v7176 = vadd.f32 %v6981, %v7164
    %v7177 = vadd.f32 %v6982, %v7151
    %v7178 = vadd.f32 %v6983, %v7165
    %v7179 = vadd.f32 %v6984, %v7155
    %v7180 = vadd.f32 %v6985, %v7166
    %v7181 = vadd.f32 %v6986, %v7159
    %v7182 = vadd.f32 %v6987, %v7167
    %v7183 = vadd.f32 %v6988, %v7163
    %v7184 = vstv %s4457
    %v7185 = vmul.f32 %v4397, %v7184
    %v7186 = vmul.f32 %v4398, %v7184
    %v7187 = vmul.f32 %v4399, %v7184
    %v7188 = vmul.f32 %v4400, %v7184
    %v7189 = vmul.f32 %v4401, %v7184
    %v7190 = vmul.f32 %v4402, %v7184
    %v7191 = vmul.f32 %v4403, %v7184
    %v7192 = vmul.f32 %v4404, %v7184
    %v7201 = vrot.slane %v7185, 2
    %v7202 = vrot.slane %v7187, 2
    %v7203 = vsel %vm1042, %v7201, %v7202
    %v7204 = vrot.slane %v7186, 2
    %v7205 = vrot.slane %v7188, 2
    %v7206 = vsel %vm1042, %v7204, %v7205
    %v7207 = vrot.slane %v7189, 2
    %v7208 = vrot.slane %v7191, 2
    %v7209 = vsel %vm1042, %v7207, %v7208
    %v7210 = vrot.slane %v7190, 2
    %v7211 = vrot.slane %v7192, 2
    %v7212 = vsel %vm1042, %v7210, %v7211
    %7213 = vrot.lane.b32.xlu0 %v7203, 126
    %v7214 = vpop.permute.xlu0 %7213
    %7215 = vrot.lane.b32.xlu0 %v7206, 126
    %v7216 = vpop.permute.xlu0 %7215
    %7217 = vrot.lane.b32.xlu0 %v7202, 126
    %v7218 = vpop.permute.xlu0 %7217
    %7219 = vrot.lane.b32.xlu0 %v7205, 126
    %v7220 = vpop.permute.xlu0 %7219
    %7221 = vrot.lane.b32.xlu0 %v7209, 126
    %v7222 = vpop.permute.xlu0 %7221
    %7223 = vrot.lane.b32.xlu0 %v7212, 126
    %v7224 = vpop.permute.xlu0 %7223
    %7225 = vrot.lane.b32.xlu0 %v7208, 126
    %v7226 = vpop.permute.xlu0 %7225
    %7227 = vrot.lane.b32.xlu0 %v7211, 126
    %v7228 = vpop.permute.xlu0 %7227
    %v7229 = vsel %vm372, %v7214, %v7216
    %v7230 = vsel %vm372, %v7218, %v7220
    %v7231 = vsel %vm372, %v7222, %v7224
    %v7232 = vsel %vm372, %v7226, %v7228
    %v7241 = vadd.f32 %v7046, %v7229
    %v7242 = vadd.f32 %v7047, %v7216
    %v7243 = vadd.f32 %v7048, %v7230
    %v7244 = vadd.f32 %v7049, %v7220
    %v7245 = vadd.f32 %v7050, %v7231
    %v7246 = vadd.f32 %v7051, %v7224
    %v7247 = vadd.f32 %v7052, %v7232
    %v7248 = vadd.f32 %v7053, %v7228
    %v7249 = vstv %s4484
    %v7250 = vmul.f32 %v4397, %v7249
    %v7251 = vmul.f32 %v4398, %v7249
    %v7252 = vmul.f32 %v4399, %v7249
    %v7253 = vmul.f32 %v4400, %v7249
    %v7254 = vmul.f32 %v4401, %v7249
    %v7255 = vmul.f32 %v4402, %v7249
    %v7256 = vmul.f32 %v4403, %v7249
    %v7257 = vmul.f32 %v4404, %v7249
    %v7266 = vrot.slane %v7250, 2
    %v7267 = vrot.slane %v7252, 2
    %v7268 = vsel %vm1042, %v7266, %v7267
    %v7269 = vrot.slane %v7251, 2
    %v7270 = vrot.slane %v7253, 2
    %v7271 = vsel %vm1042, %v7269, %v7270
    %v7272 = vrot.slane %v7254, 2
    %v7273 = vrot.slane %v7256, 2
    %v7274 = vsel %vm1042, %v7272, %v7273
    %v7275 = vrot.slane %v7255, 2
    %v7276 = vrot.slane %v7257, 2
    %v7277 = vsel %vm1042, %v7275, %v7276
    %7278 = vrot.lane.b32.xlu0 %v7268, 126
    %v7279 = vpop.permute.xlu0 %7278
    %7280 = vrot.lane.b32.xlu0 %v7271, 126
    %v7281 = vpop.permute.xlu0 %7280
    %7282 = vrot.lane.b32.xlu0 %v7267, 126
    %v7283 = vpop.permute.xlu0 %7282
    %7284 = vrot.lane.b32.xlu0 %v7270, 126
    %v7285 = vpop.permute.xlu0 %7284
    %7286 = vrot.lane.b32.xlu0 %v7274, 126
    %v7287 = vpop.permute.xlu0 %7286
    %7288 = vrot.lane.b32.xlu0 %v7277, 126
    %v7289 = vpop.permute.xlu0 %7288
    %7290 = vrot.lane.b32.xlu0 %v7273, 126
    %v7291 = vpop.permute.xlu0 %7290
    %7292 = vrot.lane.b32.xlu0 %v7276, 126
    %v7293 = vpop.permute.xlu0 %7292
    %v7294 = vsel %vm372, %v7279, %v7281
    %v7295 = vsel %vm372, %v7283, %v7285
    %v7296 = vsel %vm372, %v7287, %v7289
    %v7297 = vsel %vm372, %v7291, %v7293
    %v7306 = vadd.f32 %v7111, %v7294
    %v7307 = vadd.f32 %v7112, %v7281
    %v7308 = vadd.f32 %v7113, %v7295
    %v7309 = vadd.f32 %v7114, %v7285
    %v7310 = vadd.f32 %v7115, %v7296
    %v7311 = vadd.f32 %v7116, %v7289
    %v7312 = vadd.f32 %v7117, %v7297
    %v7313 = vadd.f32 %v7118, %v7293
    %v7314 = vadd.f32 %v5895, %v7176
    %v7315 = vadd.f32 %v5896, %v7177
    %v7316 = vadd.f32 %v5897, %v7178
    %v7317 = vadd.f32 %v5898, %v7179
    %v7318 = vadd.f32 %v5899, %v7180
    %v7319 = vadd.f32 %v5900, %v7181
    %v7320 = vadd.f32 %v5901, %v7182
    %v7321 = vadd.f32 %v5902, %v7183
    %v7322 = vadd.f32 %v5903, %v7241
    %v7323 = vadd.f32 %v5904, %v7242
    %v7324 = vadd.f32 %v5905, %v7243
    %v7325 = vadd.f32 %v5906, %v7244
    %v7326 = vadd.f32 %v5907, %v7245
    %v7327 = vadd.f32 %v5908, %v7246
    %v7328 = vadd.f32 %v5909, %v7247
    %v7329 = vadd.f32 %v5910, %v7248
    %v7330 = vadd.f32 %v5911, %v7306
    %v7331 = vadd.f32 %v5912, %v7307
    %v7332 = vadd.f32 %v5913, %v7308
    %v7333 = vadd.f32 %v5914, %v7309
    %v7334 = vadd.f32 %v5915, %v7310
    %v7335 = vadd.f32 %v5916, %v7311
    %v7336 = vadd.f32 %v5917, %v7312
    %v7337 = vadd.f32 %v5918, %v7313
    %v7338 = vstv %s4431
    %v7339 = vmul.f32 %v4405, %v7338
    %v7340 = vmul.f32 %v4406, %v7338
    %v7341 = vmul.f32 %v4407, %v7338
    %v7342 = vmul.f32 %v4408, %v7338
    %v7343 = vmul.f32 %v4409, %v7338
    %v7344 = vmul.f32 %v4410, %v7338
    %v7345 = vmul.f32 %v4411, %v7338
    %v7346 = vmul.f32 %v4412, %v7338
    %v7347 = vstv %s4458
    %v7348 = vmul.f32 %v4405, %v7347
    %v7349 = vmul.f32 %v4406, %v7347
    %v7350 = vmul.f32 %v4407, %v7347
    %v7351 = vmul.f32 %v4408, %v7347
    %v7352 = vmul.f32 %v4409, %v7347
    %v7353 = vmul.f32 %v4410, %v7347
    %v7354 = vmul.f32 %v4411, %v7347
    %v7355 = vmul.f32 %v4412, %v7347
    %v7356 = vstv %s4485
    %v7357 = vmul.f32 %v4405, %v7356
    %v7358 = vmul.f32 %v4406, %v7356
    %v7359 = vmul.f32 %v4407, %v7356
    %v7360 = vmul.f32 %v4408, %v7356
    %v7361 = vmul.f32 %v4409, %v7356
    %v7362 = vmul.f32 %v4410, %v7356
    %v7363 = vmul.f32 %v4411, %v7356
    %v7364 = vmul.f32 %v4412, %v7356
    %v7365 = vstv %s4432
    %v7366 = vmul.f32 %v4405, %v7365
    %v7367 = vmul.f32 %v4406, %v7365
    %v7368 = vmul.f32 %v4407, %v7365
    %v7369 = vmul.f32 %v4408, %v7365
    %v7370 = vmul.f32 %v4409, %v7365
    %v7371 = vmul.f32 %v4410, %v7365
    %v7372 = vmul.f32 %v4411, %v7365
    %v7373 = vmul.f32 %v4412, %v7365
    %7382 = vrot.lane.b32.xlu0 %v7366, 127
    %v7383 = vpop.permute.xlu0 %7382
    %7384 = vrot.lane.b32.xlu0 %v7367, 127
    %v7385 = vpop.permute.xlu0 %7384
    %7386 = vrot.lane.b32.xlu0 %v7368, 127
    %v7387 = vpop.permute.xlu0 %7386
    %7388 = vrot.lane.b32.xlu0 %v7369, 127
    %v7389 = vpop.permute.xlu0 %7388
    %7390 = vrot.lane.b32.xlu0 %v7370, 127
    %v7391 = vpop.permute.xlu0 %7390
    %7392 = vrot.lane.b32.xlu0 %v7371, 127
    %v7393 = vpop.permute.xlu0 %7392
    %7394 = vrot.lane.b32.xlu0 %v7372, 127
    %v7395 = vpop.permute.xlu0 %7394
    %7396 = vrot.lane.b32.xlu0 %v7373, 127
    %v7397 = vpop.permute.xlu0 %7396
    %v7398 = vsel %vm212, %v7383, %v7385
    %v7399 = vsel %vm212, %v7387, %v7389
    %v7400 = vsel %vm212, %v7391, %v7393
    %v7401 = vsel %vm212, %v7395, %v7397
    %v7410 = vadd.f32 %v7339, %v7398
    %v7411 = vadd.f32 %v7340, %v7385
    %v7412 = vadd.f32 %v7341, %v7399
    %v7413 = vadd.f32 %v7342, %v7389
    %v7414 = vadd.f32 %v7343, %v7400
    %v7415 = vadd.f32 %v7344, %v7393
    %v7416 = vadd.f32 %v7345, %v7401
    %v7417 = vadd.f32 %v7346, %v7397
    %v7418 = vstv %s4459
    %v7419 = vmul.f32 %v4405, %v7418
    %v7420 = vmul.f32 %v4406, %v7418
    %v7421 = vmul.f32 %v4407, %v7418
    %v7422 = vmul.f32 %v4408, %v7418
    %v7423 = vmul.f32 %v4409, %v7418
    %v7424 = vmul.f32 %v4410, %v7418
    %v7425 = vmul.f32 %v4411, %v7418
    %v7426 = vmul.f32 %v4412, %v7418
    %7435 = vrot.lane.b32.xlu0 %v7419, 127
    %v7436 = vpop.permute.xlu0 %7435
    %7437 = vrot.lane.b32.xlu0 %v7420, 127
    %v7438 = vpop.permute.xlu0 %7437
    %7439 = vrot.lane.b32.xlu0 %v7421, 127
    %v7440 = vpop.permute.xlu0 %7439
    %7441 = vrot.lane.b32.xlu0 %v7422, 127
    %v7442 = vpop.permute.xlu0 %7441
    %7443 = vrot.lane.b32.xlu0 %v7423, 127
    %v7444 = vpop.permute.xlu0 %7443
    %7445 = vrot.lane.b32.xlu0 %v7424, 127
    %v7446 = vpop.permute.xlu0 %7445
    %7447 = vrot.lane.b32.xlu0 %v7425, 127
    %v7448 = vpop.permute.xlu0 %7447
    %7449 = vrot.lane.b32.xlu0 %v7426, 127
    %v7450 = vpop.permute.xlu0 %7449
    %v7451 = vsel %vm212, %v7436, %v7438
    %v7452 = vsel %vm212, %v7440, %v7442
    %v7453 = vsel %vm212, %v7444, %v7446
    %v7454 = vsel %vm212, %v7448, %v7450
    %v7463 = vadd.f32 %v7348, %v7451
    %v7464 = vadd.f32 %v7349, %v7438
    %v7465 = vadd.f32 %v7350, %v7452
    %v7466 = vadd.f32 %v7351, %v7442
    %v7467 = vadd.f32 %v7352, %v7453
    %v7468 = vadd.f32 %v7353, %v7446
    %v7469 = vadd.f32 %v7354, %v7454
    %v7470 = vadd.f32 %v7355, %v7450
    %v7471 = vstv %s4486
    %v7472 = vmul.f32 %v4405, %v7471
    %v7473 = vmul.f32 %v4406, %v7471
    %v7474 = vmul.f32 %v4407, %v7471
    %v7475 = vmul.f32 %v4408, %v7471
    %v7476 = vmul.f32 %v4409, %v7471
    %v7477 = vmul.f32 %v4410, %v7471
    %v7478 = vmul.f32 %v4411, %v7471
    %v7479 = vmul.f32 %v4412, %v7471
    %7488 = vrot.lane.b32.xlu0 %v7472, 127
    %v7489 = vpop.permute.xlu0 %7488
    %7490 = vrot.lane.b32.xlu0 %v7473, 127
    %v7491 = vpop.permute.xlu0 %7490
    %7492 = vrot.lane.b32.xlu0 %v7474, 127
    %v7493 = vpop.permute.xlu0 %7492
    %7494 = vrot.lane.b32.xlu0 %v7475, 127
    %v7495 = vpop.permute.xlu0 %7494
    %7496 = vrot.lane.b32.xlu0 %v7476, 127
    %v7497 = vpop.permute.xlu0 %7496
    %7498 = vrot.lane.b32.xlu0 %v7477, 127
    %v7499 = vpop.permute.xlu0 %7498
    %7500 = vrot.lane.b32.xlu0 %v7478, 127
    %v7501 = vpop.permute.xlu0 %7500
    %7502 = vrot.lane.b32.xlu0 %v7479, 127
    %v7503 = vpop.permute.xlu0 %7502
    %v7504 = vsel %vm212, %v7489, %v7491
    %v7505 = vsel %vm212, %v7493, %v7495
    %v7506 = vsel %vm212, %v7497, %v7499
    %v7507 = vsel %vm212, %v7501, %v7503
    %v7516 = vadd.f32 %v7357, %v7504
    %v7517 = vadd.f32 %v7358, %v7491
    %v7518 = vadd.f32 %v7359, %v7505
    %v7519 = vadd.f32 %v7360, %v7495
    %v7520 = vadd.f32 %v7361, %v7506
    %v7521 = vadd.f32 %v7362, %v7499
    %v7522 = vadd.f32 %v7363, %v7507
    %v7523 = vadd.f32 %v7364, %v7503
    %v7524 = vstv %s4433
    %v7525 = vmul.f32 %v4405, %v7524
    %v7526 = vmul.f32 %v4406, %v7524
    %v7527 = vmul.f32 %v4407, %v7524
    %v7528 = vmul.f32 %v4408, %v7524
    %v7529 = vmul.f32 %v4409, %v7524
    %v7530 = vmul.f32 %v4410, %v7524
    %v7531 = vmul.f32 %v4411, %v7524
    %v7532 = vmul.f32 %v4412, %v7524
    %7541 = vrot.lane.b32.xlu0 %v7525, 126
    %v7542 = vpop.permute.xlu0 %7541
    %7543 = vrot.lane.b32.xlu0 %v7526, 126
    %v7544 = vpop.permute.xlu0 %7543
    %7545 = vrot.lane.b32.xlu0 %v7527, 126
    %v7546 = vpop.permute.xlu0 %7545
    %7547 = vrot.lane.b32.xlu0 %v7528, 126
    %v7548 = vpop.permute.xlu0 %7547
    %7549 = vrot.lane.b32.xlu0 %v7529, 126
    %v7550 = vpop.permute.xlu0 %7549
    %7551 = vrot.lane.b32.xlu0 %v7530, 126
    %v7552 = vpop.permute.xlu0 %7551
    %7553 = vrot.lane.b32.xlu0 %v7531, 126
    %v7554 = vpop.permute.xlu0 %7553
    %7555 = vrot.lane.b32.xlu0 %v7532, 126
    %v7556 = vpop.permute.xlu0 %7555
    %v7557 = vsel %vm372, %v7542, %v7544
    %v7558 = vsel %vm372, %v7546, %v7548
    %v7559 = vsel %vm372, %v7550, %v7552
    %v7560 = vsel %vm372, %v7554, %v7556
    %v7569 = vadd.f32 %v7410, %v7557
    %v7570 = vadd.f32 %v7411, %v7544
    %v7571 = vadd.f32 %v7412, %v7558
    %v7572 = vadd.f32 %v7413, %v7548
    %v7573 = vadd.f32 %v7414, %v7559
    %v7574 = vadd.f32 %v7415, %v7552
    %v7575 = vadd.f32 %v7416, %v7560
    %v7576 = vadd.f32 %v7417, %v7556
    %v7577 = vstv %s4460
    %v7578 = vmul.f32 %v4405, %v7577
    %v7579 = vmul.f32 %v4406, %v7577
    %v7580 = vmul.f32 %v4407, %v7577
    %v7581 = vmul.f32 %v4408, %v7577
    %v7582 = vmul.f32 %v4409, %v7577
    %v7583 = vmul.f32 %v4410, %v7577
    %v7584 = vmul.f32 %v4411, %v7577
    %v7585 = vmul.f32 %v4412, %v7577
    %7594 = vrot.lane.b32.xlu0 %v7578, 126
    %v7595 = vpop.permute.xlu0 %7594
    %7596 = vrot.lane.b32.xlu0 %v7579, 126
    %v7597 = vpop.permute.xlu0 %7596
    %7598 = vrot.lane.b32.xlu0 %v7580, 126
    %v7599 = vpop.permute.xlu0 %7598
    %7600 = vrot.lane.b32.xlu0 %v7581, 126
    %v7601 = vpop.permute.xlu0 %7600
    %7602 = vrot.lane.b32.xlu0 %v7582, 126
    %v7603 = vpop.permute.xlu0 %7602
    %7604 = vrot.lane.b32.xlu0 %v7583, 126
    %v7605 = vpop.permute.xlu0 %7604
    %7606 = vrot.lane.b32.xlu0 %v7584, 126
    %v7607 = vpop.permute.xlu0 %7606
    %7608 = vrot.lane.b32.xlu0 %v7585, 126
    %v7609 = vpop.permute.xlu0 %7608
    %v7610 = vsel %vm372, %v7595, %v7597
    %v7611 = vsel %vm372, %v7599, %v7601
    %v7612 = vsel %vm372, %v7603, %v7605
    %v7613 = vsel %vm372, %v7607, %v7609
    %v7622 = vadd.f32 %v7463, %v7610
    %v7623 = vadd.f32 %v7464, %v7597
    %v7624 = vadd.f32 %v7465, %v7611
    %v7625 = vadd.f32 %v7466, %v7601
    %v7626 = vadd.f32 %v7467, %v7612
    %v7627 = vadd.f32 %v7468, %v7605
    %v7628 = vadd.f32 %v7469, %v7613
    %v7629 = vadd.f32 %v7470, %v7609
    %v7630 = vstv %s4487
    %v7631 = vmul.f32 %v4405, %v7630
    %v7632 = vmul.f32 %v4406, %v7630
    %v7633 = vmul.f32 %v4407, %v7630
    %v7634 = vmul.f32 %v4408, %v7630
    %v7635 = vmul.f32 %v4409, %v7630
    %v7636 = vmul.f32 %v4410, %v7630
    %v7637 = vmul.f32 %v4411, %v7630
    %v7638 = vmul.f32 %v4412, %v7630
    %7647 = vrot.lane.b32.xlu0 %v7631, 126
    %v7648 = vpop.permute.xlu0 %7647
    %7649 = vrot.lane.b32.xlu0 %v7632, 126
    %v7650 = vpop.permute.xlu0 %7649
    %7651 = vrot.lane.b32.xlu0 %v7633, 126
    %v7652 = vpop.permute.xlu0 %7651
    %7653 = vrot.lane.b32.xlu0 %v7634, 126
    %v7654 = vpop.permute.xlu0 %7653
    %7655 = vrot.lane.b32.xlu0 %v7635, 126
    %v7656 = vpop.permute.xlu0 %7655
    %7657 = vrot.lane.b32.xlu0 %v7636, 126
    %v7658 = vpop.permute.xlu0 %7657
    %7659 = vrot.lane.b32.xlu0 %v7637, 126
    %v7660 = vpop.permute.xlu0 %7659
    %7661 = vrot.lane.b32.xlu0 %v7638, 126
    %v7662 = vpop.permute.xlu0 %7661
    %v7663 = vsel %vm372, %v7648, %v7650
    %v7664 = vsel %vm372, %v7652, %v7654
    %v7665 = vsel %vm372, %v7656, %v7658
    %v7666 = vsel %vm372, %v7660, %v7662
    %v7675 = vadd.f32 %v7516, %v7663
    %v7676 = vadd.f32 %v7517, %v7650
    %v7677 = vadd.f32 %v7518, %v7664
    %v7678 = vadd.f32 %v7519, %v7654
    %v7679 = vadd.f32 %v7520, %v7665
    %v7680 = vadd.f32 %v7521, %v7658
    %v7681 = vadd.f32 %v7522, %v7666
    %v7682 = vadd.f32 %v7523, %v7662
    %v7683 = vstv %s4434
    %v7684 = vmul.f32 %v4405, %v7683
    %v7685 = vmul.f32 %v4406, %v7683
    %v7686 = vmul.f32 %v4407, %v7683
    %v7687 = vmul.f32 %v4408, %v7683
    %v7688 = vmul.f32 %v4409, %v7683
    %v7689 = vmul.f32 %v4410, %v7683
    %v7690 = vmul.f32 %v4411, %v7683
    %v7691 = vmul.f32 %v4412, %v7683
    %v7700 = vrot.slane %v7684, 1
    %v7701 = vrot.slane %v7686, 1
    %v7702 = vsel %vm516, %v7700, %v7701
    %v7703 = vrot.slane %v7685, 1
    %v7704 = vrot.slane %v7687, 1
    %v7705 = vsel %vm516, %v7703, %v7704
    %v7706 = vrot.slane %v7688, 1
    %v7707 = vrot.slane %v7690, 1
    %v7708 = vsel %vm516, %v7706, %v7707
    %v7709 = vrot.slane %v7689, 1
    %v7710 = vrot.slane %v7691, 1
    %v7711 = vsel %vm516, %v7709, %v7710
    %v7720 = vadd.f32 %v7569, %v7702
    %v7721 = vadd.f32 %v7570, %v7705
    %v7722 = vadd.f32 %v7571, %v7701
    %v7723 = vadd.f32 %v7572, %v7704
    %v7724 = vadd.f32 %v7573, %v7708
    %v7725 = vadd.f32 %v7574, %v7711
    %v7726 = vadd.f32 %v7575, %v7707
    %v7727 = vadd.f32 %v7576, %v7710
    %v7728 = vstv %s4461
    %v7729 = vmul.f32 %v4405, %v7728
    %v7730 = vmul.f32 %v4406, %v7728
    %v7731 = vmul.f32 %v4407, %v7728
    %v7732 = vmul.f32 %v4408, %v7728
    %v7733 = vmul.f32 %v4409, %v7728
    %v7734 = vmul.f32 %v4410, %v7728
    %v7735 = vmul.f32 %v4411, %v7728
    %v7736 = vmul.f32 %v4412, %v7728
    %v7745 = vrot.slane %v7729, 1
    %v7746 = vrot.slane %v7731, 1
    %v7747 = vsel %vm516, %v7745, %v7746
    %v7748 = vrot.slane %v7730, 1
    %v7749 = vrot.slane %v7732, 1
    %v7750 = vsel %vm516, %v7748, %v7749
    %v7751 = vrot.slane %v7733, 1
    %v7752 = vrot.slane %v7735, 1
    %v7753 = vsel %vm516, %v7751, %v7752
    %v7754 = vrot.slane %v7734, 1
    %v7755 = vrot.slane %v7736, 1
    %v7756 = vsel %vm516, %v7754, %v7755
    %v7765 = vadd.f32 %v7622, %v7747
    %v7766 = vadd.f32 %v7623, %v7750
    %v7767 = vadd.f32 %v7624, %v7746
    %v7768 = vadd.f32 %v7625, %v7749
    %v7769 = vadd.f32 %v7626, %v7753
    %v7770 = vadd.f32 %v7627, %v7756
    %v7771 = vadd.f32 %v7628, %v7752
    %v7772 = vadd.f32 %v7629, %v7755
    %v7773 = vstv %s4488
    %v7774 = vmul.f32 %v4405, %v7773
    %v7775 = vmul.f32 %v4406, %v7773
    %v7776 = vmul.f32 %v4407, %v7773
    %v7777 = vmul.f32 %v4408, %v7773
    %v7778 = vmul.f32 %v4409, %v7773
    %v7779 = vmul.f32 %v4410, %v7773
    %v7780 = vmul.f32 %v4411, %v7773
    %v7781 = vmul.f32 %v4412, %v7773
    %v7790 = vrot.slane %v7774, 1
    %v7791 = vrot.slane %v7776, 1
    %v7792 = vsel %vm516, %v7790, %v7791
    %v7793 = vrot.slane %v7775, 1
    %v7794 = vrot.slane %v7777, 1
    %v7795 = vsel %vm516, %v7793, %v7794
    %v7796 = vrot.slane %v7778, 1
    %v7797 = vrot.slane %v7780, 1
    %v7798 = vsel %vm516, %v7796, %v7797
    %v7799 = vrot.slane %v7779, 1
    %v7800 = vrot.slane %v7781, 1
    %v7801 = vsel %vm516, %v7799, %v7800
    %v7810 = vadd.f32 %v7675, %v7792
    %v7811 = vadd.f32 %v7676, %v7795
    %v7812 = vadd.f32 %v7677, %v7791
    %v7813 = vadd.f32 %v7678, %v7794
    %v7814 = vadd.f32 %v7679, %v7798
    %v7815 = vadd.f32 %v7680, %v7801
    %v7816 = vadd.f32 %v7681, %v7797
    %v7817 = vadd.f32 %v7682, %v7800
    %v7818 = vstv %s4435
    %v7819 = vmul.f32 %v4405, %v7818
    %v7820 = vmul.f32 %v4406, %v7818
    %v7821 = vmul.f32 %v4407, %v7818
    %v7822 = vmul.f32 %v4408, %v7818
    %v7823 = vmul.f32 %v4409, %v7818
    %v7824 = vmul.f32 %v4410, %v7818
    %v7825 = vmul.f32 %v4411, %v7818
    %v7826 = vmul.f32 %v4412, %v7818
    %v7835 = vrot.slane %v7819, 1
    %v7836 = vrot.slane %v7821, 1
    %v7837 = vsel %vm516, %v7835, %v7836
    %v7838 = vrot.slane %v7820, 1
    %v7839 = vrot.slane %v7822, 1
    %v7840 = vsel %vm516, %v7838, %v7839
    %v7841 = vrot.slane %v7823, 1
    %v7842 = vrot.slane %v7825, 1
    %v7843 = vsel %vm516, %v7841, %v7842
    %v7844 = vrot.slane %v7824, 1
    %v7845 = vrot.slane %v7826, 1
    %v7846 = vsel %vm516, %v7844, %v7845
    %7847 = vrot.lane.b32.xlu0 %v7837, 127
    %v7848 = vpop.permute.xlu0 %7847
    %7849 = vrot.lane.b32.xlu0 %v7840, 127
    %v7850 = vpop.permute.xlu0 %7849
    %7851 = vrot.lane.b32.xlu0 %v7836, 127
    %v7852 = vpop.permute.xlu0 %7851
    %7853 = vrot.lane.b32.xlu0 %v7839, 127
    %v7854 = vpop.permute.xlu0 %7853
    %7855 = vrot.lane.b32.xlu0 %v7843, 127
    %v7856 = vpop.permute.xlu0 %7855
    %7857 = vrot.lane.b32.xlu0 %v7846, 127
    %v7858 = vpop.permute.xlu0 %7857
    %7859 = vrot.lane.b32.xlu0 %v7842, 127
    %v7860 = vpop.permute.xlu0 %7859
    %7861 = vrot.lane.b32.xlu0 %v7845, 127
    %v7862 = vpop.permute.xlu0 %7861
    %v7863 = vsel %vm212, %v7848, %v7850
    %v7864 = vsel %vm212, %v7852, %v7854
    %v7865 = vsel %vm212, %v7856, %v7858
    %v7866 = vsel %vm212, %v7860, %v7862
    %v7875 = vadd.f32 %v7720, %v7863
    %v7876 = vadd.f32 %v7721, %v7850
    %v7877 = vadd.f32 %v7722, %v7864
    %v7878 = vadd.f32 %v7723, %v7854
    %v7879 = vadd.f32 %v7724, %v7865
    %v7880 = vadd.f32 %v7725, %v7858
    %v7881 = vadd.f32 %v7726, %v7866
    %v7882 = vadd.f32 %v7727, %v7862
    %v7883 = vstv %s4462
    %v7884 = vmul.f32 %v4405, %v7883
    %v7885 = vmul.f32 %v4406, %v7883
    %v7886 = vmul.f32 %v4407, %v7883
    %v7887 = vmul.f32 %v4408, %v7883
    %v7888 = vmul.f32 %v4409, %v7883
    %v7889 = vmul.f32 %v4410, %v7883
    %v7890 = vmul.f32 %v4411, %v7883
    %v7891 = vmul.f32 %v4412, %v7883
    %v7900 = vrot.slane %v7884, 1
    %v7901 = vrot.slane %v7886, 1
    %v7902 = vsel %vm516, %v7900, %v7901
    %v7903 = vrot.slane %v7885, 1
    %v7904 = vrot.slane %v7887, 1
    %v7905 = vsel %vm516, %v7903, %v7904
    %v7906 = vrot.slane %v7888, 1
    %v7907 = vrot.slane %v7890, 1
    %v7908 = vsel %vm516, %v7906, %v7907
    %v7909 = vrot.slane %v7889, 1
    %v7910 = vrot.slane %v7891, 1
    %v7911 = vsel %vm516, %v7909, %v7910
    %7912 = vrot.lane.b32.xlu0 %v7902, 127
    %v7913 = vpop.permute.xlu0 %7912
    %7914 = vrot.lane.b32.xlu0 %v7905, 127
    %v7915 = vpop.permute.xlu0 %7914
    %7916 = vrot.lane.b32.xlu0 %v7901, 127
    %v7917 = vpop.permute.xlu0 %7916
    %7918 = vrot.lane.b32.xlu0 %v7904, 127
    %v7919 = vpop.permute.xlu0 %7918
    %7920 = vrot.lane.b32.xlu0 %v7908, 127
    %v7921 = vpop.permute.xlu0 %7920
    %7922 = vrot.lane.b32.xlu0 %v7911, 127
    %v7923 = vpop.permute.xlu0 %7922
    %7924 = vrot.lane.b32.xlu0 %v7907, 127
    %v7925 = vpop.permute.xlu0 %7924
    %7926 = vrot.lane.b32.xlu0 %v7910, 127
    %v7927 = vpop.permute.xlu0 %7926
    %v7928 = vsel %vm212, %v7913, %v7915
    %v7929 = vsel %vm212, %v7917, %v7919
    %v7930 = vsel %vm212, %v7921, %v7923
    %v7931 = vsel %vm212, %v7925, %v7927
    %v7940 = vadd.f32 %v7765, %v7928
    %v7941 = vadd.f32 %v7766, %v7915
    %v7942 = vadd.f32 %v7767, %v7929
    %v7943 = vadd.f32 %v7768, %v7919
    %v7944 = vadd.f32 %v7769, %v7930
    %v7945 = vadd.f32 %v7770, %v7923
    %v7946 = vadd.f32 %v7771, %v7931
    %v7947 = vadd.f32 %v7772, %v7927
    %v7948 = vstv %s4489
    %v7949 = vmul.f32 %v4405, %v7948
    %v7950 = vmul.f32 %v4406, %v7948
    %v7951 = vmul.f32 %v4407, %v7948
    %v7952 = vmul.f32 %v4408, %v7948
    %v7953 = vmul.f32 %v4409, %v7948
    %v7954 = vmul.f32 %v4410, %v7948
    %v7955 = vmul.f32 %v4411, %v7948
    %v7956 = vmul.f32 %v4412, %v7948
    %v7965 = vrot.slane %v7949, 1
    %v7966 = vrot.slane %v7951, 1
    %v7967 = vsel %vm516, %v7965, %v7966
    %v7968 = vrot.slane %v7950, 1
    %v7969 = vrot.slane %v7952, 1
    %v7970 = vsel %vm516, %v7968, %v7969
    %v7971 = vrot.slane %v7953, 1
    %v7972 = vrot.slane %v7955, 1
    %v7973 = vsel %vm516, %v7971, %v7972
    %v7974 = vrot.slane %v7954, 1
    %v7975 = vrot.slane %v7956, 1
    %v7976 = vsel %vm516, %v7974, %v7975
    %7977 = vrot.lane.b32.xlu0 %v7967, 127
    %v7978 = vpop.permute.xlu0 %7977
    %7979 = vrot.lane.b32.xlu0 %v7970, 127
    %v7980 = vpop.permute.xlu0 %7979
    %7981 = vrot.lane.b32.xlu0 %v7966, 127
    %v7982 = vpop.permute.xlu0 %7981
    %7983 = vrot.lane.b32.xlu0 %v7969, 127
    %v7984 = vpop.permute.xlu0 %7983
    %7985 = vrot.lane.b32.xlu0 %v7973, 127
    %v7986 = vpop.permute.xlu0 %7985
    %7987 = vrot.lane.b32.xlu0 %v7976, 127
    %v7988 = vpop.permute.xlu0 %7987
    %7989 = vrot.lane.b32.xlu0 %v7972, 127
    %v7990 = vpop.permute.xlu0 %7989
    %7991 = vrot.lane.b32.xlu0 %v7975, 127
    %v7992 = vpop.permute.xlu0 %7991
    %v7993 = vsel %vm212, %v7978, %v7980
    %v7994 = vsel %vm212, %v7982, %v7984
    %v7995 = vsel %vm212, %v7986, %v7988
    %v7996 = vsel %vm212, %v7990, %v7992
    %v8005 = vadd.f32 %v7810, %v7993
    %v8006 = vadd.f32 %v7811, %v7980
    %v8007 = vadd.f32 %v7812, %v7994
    %v8008 = vadd.f32 %v7813, %v7984
    %v8009 = vadd.f32 %v7814, %v7995
    %v8010 = vadd.f32 %v7815, %v7988
    %v8011 = vadd.f32 %v7816, %v7996
    %v8012 = vadd.f32 %v7817, %v7992
    %v8013 = vstv %s4436
    %v8014 = vmul.f32 %v4405, %v8013
    %v8015 = vmul.f32 %v4406, %v8013
    %v8016 = vmul.f32 %v4407, %v8013
    %v8017 = vmul.f32 %v4408, %v8013
    %v8018 = vmul.f32 %v4409, %v8013
    %v8019 = vmul.f32 %v4410, %v8013
    %v8020 = vmul.f32 %v4411, %v8013
    %v8021 = vmul.f32 %v4412, %v8013
    %v8030 = vrot.slane %v8014, 1
    %v8031 = vrot.slane %v8016, 1
    %v8032 = vsel %vm516, %v8030, %v8031
    %v8033 = vrot.slane %v8015, 1
    %v8034 = vrot.slane %v8017, 1
    %v8035 = vsel %vm516, %v8033, %v8034
    %v8036 = vrot.slane %v8018, 1
    %v8037 = vrot.slane %v8020, 1
    %v8038 = vsel %vm516, %v8036, %v8037
    %v8039 = vrot.slane %v8019, 1
    %v8040 = vrot.slane %v8021, 1
    %v8041 = vsel %vm516, %v8039, %v8040
    %8042 = vrot.lane.b32.xlu0 %v8032, 126
    %v8043 = vpop.permute.xlu0 %8042
    %8044 = vrot.lane.b32.xlu0 %v8035, 126
    %v8045 = vpop.permute.xlu0 %8044
    %8046 = vrot.lane.b32.xlu0 %v8031, 126
    %v8047 = vpop.permute.xlu0 %8046
    %8048 = vrot.lane.b32.xlu0 %v8034, 126
    %v8049 = vpop.permute.xlu0 %8048
    %8050 = vrot.lane.b32.xlu0 %v8038, 126
    %v8051 = vpop.permute.xlu0 %8050
    %8052 = vrot.lane.b32.xlu0 %v8041, 126
    %v8053 = vpop.permute.xlu0 %8052
    %8054 = vrot.lane.b32.xlu0 %v8037, 126
    %v8055 = vpop.permute.xlu0 %8054
    %8056 = vrot.lane.b32.xlu0 %v8040, 126
    %v8057 = vpop.permute.xlu0 %8056
    %v8058 = vsel %vm372, %v8043, %v8045
    %v8059 = vsel %vm372, %v8047, %v8049
    %v8060 = vsel %vm372, %v8051, %v8053
    %v8061 = vsel %vm372, %v8055, %v8057
    %v8070 = vadd.f32 %v7875, %v8058
    %v8071 = vadd.f32 %v7876, %v8045
    %v8072 = vadd.f32 %v7877, %v8059
    %v8073 = vadd.f32 %v7878, %v8049
    %v8074 = vadd.f32 %v7879, %v8060
    %v8075 = vadd.f32 %v7880, %v8053
    %v8076 = vadd.f32 %v7881, %v8061
    %v8077 = vadd.f32 %v7882, %v8057
    %v8078 = vstv %s4463
    %v8079 = vmul.f32 %v4405, %v8078
    %v8080 = vmul.f32 %v4406, %v8078
    %v8081 = vmul.f32 %v4407, %v8078
    %v8082 = vmul.f32 %v4408, %v8078
    %v8083 = vmul.f32 %v4409, %v8078
    %v8084 = vmul.f32 %v4410, %v8078
    %v8085 = vmul.f32 %v4411, %v8078
    %v8086 = vmul.f32 %v4412, %v8078
    %v8095 = vrot.slane %v8079, 1
    %v8096 = vrot.slane %v8081, 1
    %v8097 = vsel %vm516, %v8095, %v8096
    %v8098 = vrot.slane %v8080, 1
    %v8099 = vrot.slane %v8082, 1
    %v8100 = vsel %vm516, %v8098, %v8099
    %v8101 = vrot.slane %v8083, 1
    %v8102 = vrot.slane %v8085, 1
    %v8103 = vsel %vm516, %v8101, %v8102
    %v8104 = vrot.slane %v8084, 1
    %v8105 = vrot.slane %v8086, 1
    %v8106 = vsel %vm516, %v8104, %v8105
    %8107 = vrot.lane.b32.xlu0 %v8097, 126
    %v8108 = vpop.permute.xlu0 %8107
    %8109 = vrot.lane.b32.xlu0 %v8100, 126
    %v8110 = vpop.permute.xlu0 %8109
    %8111 = vrot.lane.b32.xlu0 %v8096, 126
    %v8112 = vpop.permute.xlu0 %8111
    %8113 = vrot.lane.b32.xlu0 %v8099, 126
    %v8114 = vpop.permute.xlu0 %8113
    %8115 = vrot.lane.b32.xlu0 %v8103, 126
    %v8116 = vpop.permute.xlu0 %8115
    %8117 = vrot.lane.b32.xlu0 %v8106, 126
    %v8118 = vpop.permute.xlu0 %8117
    %8119 = vrot.lane.b32.xlu0 %v8102, 126
    %v8120 = vpop.permute.xlu0 %8119
    %8121 = vrot.lane.b32.xlu0 %v8105, 126
    %v8122 = vpop.permute.xlu0 %8121
    %v8123 = vsel %vm372, %v8108, %v8110
    %v8124 = vsel %vm372, %v8112, %v8114
    %v8125 = vsel %vm372, %v8116, %v8118
    %v8126 = vsel %vm372, %v8120, %v8122
    %v8135 = vadd.f32 %v7940, %v8123
    %v8136 = vadd.f32 %v7941, %v8110
    %v8137 = vadd.f32 %v7942, %v8124
    %v8138 = vadd.f32 %v7943, %v8114
    %v8139 = vadd.f32 %v7944, %v8125
    %v8140 = vadd.f32 %v7945, %v8118
    %v8141 = vadd.f32 %v7946, %v8126
    %v8142 = vadd.f32 %v7947, %v8122
    %v8143 = vstv %s4490
    %v8144 = vmul.f32 %v4405, %v8143
    %v8145 = vmul.f32 %v4406, %v8143
    %v8146 = vmul.f32 %v4407, %v8143
    %v8147 = vmul.f32 %v4408, %v8143
    %v8148 = vmul.f32 %v4409, %v8143
    %v8149 = vmul.f32 %v4410, %v8143
    %v8150 = vmul.f32 %v4411, %v8143
    %v8151 = vmul.f32 %v4412, %v8143
    %v8160 = vrot.slane %v8144, 1
    %v8161 = vrot.slane %v8146, 1
    %v8162 = vsel %vm516, %v8160, %v8161
    %v8163 = vrot.slane %v8145, 1
    %v8164 = vrot.slane %v8147, 1
    %v8165 = vsel %vm516, %v8163, %v8164
    %v8166 = vrot.slane %v8148, 1
    %v8167 = vrot.slane %v8150, 1
    %v8168 = vsel %vm516, %v8166, %v8167
    %v8169 = vrot.slane %v8149, 1
    %v8170 = vrot.slane %v8151, 1
    %v8171 = vsel %vm516, %v8169, %v8170
    %8172 = vrot.lane.b32.xlu0 %v8162, 126
    %v8173 = vpop.permute.xlu0 %8172
    %8174 = vrot.lane.b32.xlu0 %v8165, 126
    %v8175 = vpop.permute.xlu0 %8174
    %8176 = vrot.lane.b32.xlu0 %v8161, 126
    %v8177 = vpop.permute.xlu0 %8176
    %8178 = vrot.lane.b32.xlu0 %v8164, 126
    %v8179 = vpop.permute.xlu0 %8178
    %8180 = vrot.lane.b32.xlu0 %v8168, 126
    %v8181 = vpop.permute.xlu0 %8180
    %8182 = vrot.lane.b32.xlu0 %v8171, 126
    %v8183 = vpop.permute.xlu0 %8182
    %8184 = vrot.lane.b32.xlu0 %v8167, 126
    %v8185 = vpop.permute.xlu0 %8184
    %8186 = vrot.lane.b32.xlu0 %v8170, 126
    %v8187 = vpop.permute.xlu0 %8186
    %v8188 = vsel %vm372, %v8173, %v8175
    %v8189 = vsel %vm372, %v8177, %v8179
    %v8190 = vsel %vm372, %v8181, %v8183
    %v8191 = vsel %vm372, %v8185, %v8187
    %v8200 = vadd.f32 %v8005, %v8188
    %v8201 = vadd.f32 %v8006, %v8175
    %v8202 = vadd.f32 %v8007, %v8189
    %v8203 = vadd.f32 %v8008, %v8179
    %v8204 = vadd.f32 %v8009, %v8190
    %v8205 = vadd.f32 %v8010, %v8183
    %v8206 = vadd.f32 %v8011, %v8191
    %v8207 = vadd.f32 %v8012, %v8187
    %v8208 = vstv %s4437
    %v8209 = vmul.f32 %v4405, %v8208
    %v8210 = vmul.f32 %v4406, %v8208
    %v8211 = vmul.f32 %v4407, %v8208
    %v8212 = vmul.f32 %v4408, %v8208
    %v8213 = vmul.f32 %v4409, %v8208
    %v8214 = vmul.f32 %v4410, %v8208
    %v8215 = vmul.f32 %v4411, %v8208
    %v8216 = vmul.f32 %v4412, %v8208
    %v8225 = vrot.slane %v8209, 2
    %v8226 = vrot.slane %v8211, 2
    %v8227 = vsel %vm1042, %v8225, %v8226
    %v8228 = vrot.slane %v8210, 2
    %v8229 = vrot.slane %v8212, 2
    %v8230 = vsel %vm1042, %v8228, %v8229
    %v8231 = vrot.slane %v8213, 2
    %v8232 = vrot.slane %v8215, 2
    %v8233 = vsel %vm1042, %v8231, %v8232
    %v8234 = vrot.slane %v8214, 2
    %v8235 = vrot.slane %v8216, 2
    %v8236 = vsel %vm1042, %v8234, %v8235
    %v8245 = vadd.f32 %v8070, %v8227
    %v8246 = vadd.f32 %v8071, %v8230
    %v8247 = vadd.f32 %v8072, %v8226
    %v8248 = vadd.f32 %v8073, %v8229
    %v8249 = vadd.f32 %v8074, %v8233
    %v8250 = vadd.f32 %v8075, %v8236
    %v8251 = vadd.f32 %v8076, %v8232
    %v8252 = vadd.f32 %v8077, %v8235
    %v8253 = vstv %s4464
    %v8254 = vmul.f32 %v4405, %v8253
    %v8255 = vmul.f32 %v4406, %v8253
    %v8256 = vmul.f32 %v4407, %v8253
    %v8257 = vmul.f32 %v4408, %v8253
    %v8258 = vmul.f32 %v4409, %v8253
    %v8259 = vmul.f32 %v4410, %v8253
    %v8260 = vmul.f32 %v4411, %v8253
    %v8261 = vmul.f32 %v4412, %v8253
    %v8270 = vrot.slane %v8254, 2
    %v8271 = vrot.slane %v8256, 2
    %v8272 = vsel %vm1042, %v8270, %v8271
    %v8273 = vrot.slane %v8255, 2
    %v8274 = vrot.slane %v8257, 2
    %v8275 = vsel %vm1042, %v8273, %v8274
    %v8276 = vrot.slane %v8258, 2
    %v8277 = vrot.slane %v8260, 2
    %v8278 = vsel %vm1042, %v8276, %v8277
    %v8279 = vrot.slane %v8259, 2
    %v8280 = vrot.slane %v8261, 2
    %v8281 = vsel %vm1042, %v8279, %v8280
    %v8290 = vadd.f32 %v8135, %v8272
    %v8291 = vadd.f32 %v8136, %v8275
    %v8292 = vadd.f32 %v8137, %v8271
    %v8293 = vadd.f32 %v8138, %v8274
    %v8294 = vadd.f32 %v8139, %v8278
    %v8295 = vadd.f32 %v8140, %v8281
    %v8296 = vadd.f32 %v8141, %v8277
    %v8297 = vadd.f32 %v8142, %v8280
    %v8298 = vstv %s4491
    %v8299 = vmul.f32 %v4405, %v8298
    %v8300 = vmul.f32 %v4406, %v8298
    %v8301 = vmul.f32 %v4407, %v8298
    %v8302 = vmul.f32 %v4408, %v8298
    %v8303 = vmul.f32 %v4409, %v8298
    %v8304 = vmul.f32 %v4410, %v8298
    %v8305 = vmul.f32 %v4411, %v8298
    %v8306 = vmul.f32 %v4412, %v8298
    %v8315 = vrot.slane %v8299, 2
    %v8316 = vrot.slane %v8301, 2
    %v8317 = vsel %vm1042, %v8315, %v8316
    %v8318 = vrot.slane %v8300, 2
    %v8319 = vrot.slane %v8302, 2
    %v8320 = vsel %vm1042, %v8318, %v8319
    %v8321 = vrot.slane %v8303, 2
    %v8322 = vrot.slane %v8305, 2
    %v8323 = vsel %vm1042, %v8321, %v8322
    %v8324 = vrot.slane %v8304, 2
    %v8325 = vrot.slane %v8306, 2
    %v8326 = vsel %vm1042, %v8324, %v8325
    %v8335 = vadd.f32 %v8200, %v8317
    %v8336 = vadd.f32 %v8201, %v8320
    %v8337 = vadd.f32 %v8202, %v8316
    %v8338 = vadd.f32 %v8203, %v8319
    %v8339 = vadd.f32 %v8204, %v8323
    %v8340 = vadd.f32 %v8205, %v8326
    %v8341 = vadd.f32 %v8206, %v8322
    %v8342 = vadd.f32 %v8207, %v8325
    %v8343 = vstv %s4438
    %v8344 = vmul.f32 %v4405, %v8343
    %v8345 = vmul.f32 %v4406, %v8343
    %v8346 = vmul.f32 %v4407, %v8343
    %v8347 = vmul.f32 %v4408, %v8343
    %v8348 = vmul.f32 %v4409, %v8343
    %v8349 = vmul.f32 %v4410, %v8343
    %v8350 = vmul.f32 %v4411, %v8343
    %v8351 = vmul.f32 %v4412, %v8343
    %v8360 = vrot.slane %v8344, 2
    %v8361 = vrot.slane %v8346, 2
    %v8362 = vsel %vm1042, %v8360, %v8361
    %v8363 = vrot.slane %v8345, 2
    %v8364 = vrot.slane %v8347, 2
    %v8365 = vsel %vm1042, %v8363, %v8364
    %v8366 = vrot.slane %v8348, 2
    %v8367 = vrot.slane %v8350, 2
    %v8368 = vsel %vm1042, %v8366, %v8367
    %v8369 = vrot.slane %v8349, 2
    %v8370 = vrot.slane %v8351, 2
    %v8371 = vsel %vm1042, %v8369, %v8370
    %8372 = vrot.lane.b32.xlu0 %v8362, 127
    %v8373 = vpop.permute.xlu0 %8372
    %8374 = vrot.lane.b32.xlu0 %v8365, 127
    %v8375 = vpop.permute.xlu0 %8374
    %8376 = vrot.lane.b32.xlu0 %v8361, 127
    %v8377 = vpop.permute.xlu0 %8376
    %8378 = vrot.lane.b32.xlu0 %v8364, 127
    %v8379 = vpop.permute.xlu0 %8378
    %8380 = vrot.lane.b32.xlu0 %v8368, 127
    %v8381 = vpop.permute.xlu0 %8380
    %8382 = vrot.lane.b32.xlu0 %v8371, 127
    %v8383 = vpop.permute.xlu0 %8382
    %8384 = vrot.lane.b32.xlu0 %v8367, 127
    %v8385 = vpop.permute.xlu0 %8384
    %8386 = vrot.lane.b32.xlu0 %v8370, 127
    %v8387 = vpop.permute.xlu0 %8386
    %v8388 = vsel %vm212, %v8373, %v8375
    %v8389 = vsel %vm212, %v8377, %v8379
    %v8390 = vsel %vm212, %v8381, %v8383
    %v8391 = vsel %vm212, %v8385, %v8387
    %v8400 = vadd.f32 %v8245, %v8388
    %v8401 = vadd.f32 %v8246, %v8375
    %v8402 = vadd.f32 %v8247, %v8389
    %v8403 = vadd.f32 %v8248, %v8379
    %v8404 = vadd.f32 %v8249, %v8390
    %v8405 = vadd.f32 %v8250, %v8383
    %v8406 = vadd.f32 %v8251, %v8391
    %v8407 = vadd.f32 %v8252, %v8387
    %v8408 = vstv %s4465
    %v8409 = vmul.f32 %v4405, %v8408
    %v8410 = vmul.f32 %v4406, %v8408
    %v8411 = vmul.f32 %v4407, %v8408
    %v8412 = vmul.f32 %v4408, %v8408
    %v8413 = vmul.f32 %v4409, %v8408
    %v8414 = vmul.f32 %v4410, %v8408
    %v8415 = vmul.f32 %v4411, %v8408
    %v8416 = vmul.f32 %v4412, %v8408
    %v8425 = vrot.slane %v8409, 2
    %v8426 = vrot.slane %v8411, 2
    %v8427 = vsel %vm1042, %v8425, %v8426
    %v8428 = vrot.slane %v8410, 2
    %v8429 = vrot.slane %v8412, 2
    %v8430 = vsel %vm1042, %v8428, %v8429
    %v8431 = vrot.slane %v8413, 2
    %v8432 = vrot.slane %v8415, 2
    %v8433 = vsel %vm1042, %v8431, %v8432
    %v8434 = vrot.slane %v8414, 2
    %v8435 = vrot.slane %v8416, 2
    %v8436 = vsel %vm1042, %v8434, %v8435
    %8437 = vrot.lane.b32.xlu0 %v8427, 127
    %v8438 = vpop.permute.xlu0 %8437
    %8439 = vrot.lane.b32.xlu0 %v8430, 127
    %v8440 = vpop.permute.xlu0 %8439
    %8441 = vrot.lane.b32.xlu0 %v8426, 127
    %v8442 = vpop.permute.xlu0 %8441
    %8443 = vrot.lane.b32.xlu0 %v8429, 127
    %v8444 = vpop.permute.xlu0 %8443
    %8445 = vrot.lane.b32.xlu0 %v8433, 127
    %v8446 = vpop.permute.xlu0 %8445
    %8447 = vrot.lane.b32.xlu0 %v8436, 127
    %v8448 = vpop.permute.xlu0 %8447
    %8449 = vrot.lane.b32.xlu0 %v8432, 127
    %v8450 = vpop.permute.xlu0 %8449
    %8451 = vrot.lane.b32.xlu0 %v8435, 127
    %v8452 = vpop.permute.xlu0 %8451
    %v8453 = vsel %vm212, %v8438, %v8440
    %v8454 = vsel %vm212, %v8442, %v8444
    %v8455 = vsel %vm212, %v8446, %v8448
    %v8456 = vsel %vm212, %v8450, %v8452
    %v8465 = vadd.f32 %v8290, %v8453
    %v8466 = vadd.f32 %v8291, %v8440
    %v8467 = vadd.f32 %v8292, %v8454
    %v8468 = vadd.f32 %v8293, %v8444
    %v8469 = vadd.f32 %v8294, %v8455
    %v8470 = vadd.f32 %v8295, %v8448
    %v8471 = vadd.f32 %v8296, %v8456
    %v8472 = vadd.f32 %v8297, %v8452
    %v8473 = vstv %s4492
    %v8474 = vmul.f32 %v4405, %v8473
    %v8475 = vmul.f32 %v4406, %v8473
    %v8476 = vmul.f32 %v4407, %v8473
    %v8477 = vmul.f32 %v4408, %v8473
    %v8478 = vmul.f32 %v4409, %v8473
    %v8479 = vmul.f32 %v4410, %v8473
    %v8480 = vmul.f32 %v4411, %v8473
    %v8481 = vmul.f32 %v4412, %v8473
    %v8490 = vrot.slane %v8474, 2
    %v8491 = vrot.slane %v8476, 2
    %v8492 = vsel %vm1042, %v8490, %v8491
    %v8493 = vrot.slane %v8475, 2
    %v8494 = vrot.slane %v8477, 2
    %v8495 = vsel %vm1042, %v8493, %v8494
    %v8496 = vrot.slane %v8478, 2
    %v8497 = vrot.slane %v8480, 2
    %v8498 = vsel %vm1042, %v8496, %v8497
    %v8499 = vrot.slane %v8479, 2
    %v8500 = vrot.slane %v8481, 2
    %v8501 = vsel %vm1042, %v8499, %v8500
    %8502 = vrot.lane.b32.xlu0 %v8492, 127
    %v8503 = vpop.permute.xlu0 %8502
    %8504 = vrot.lane.b32.xlu0 %v8495, 127
    %v8505 = vpop.permute.xlu0 %8504
    %8506 = vrot.lane.b32.xlu0 %v8491, 127
    %v8507 = vpop.permute.xlu0 %8506
    %8508 = vrot.lane.b32.xlu0 %v8494, 127
    %v8509 = vpop.permute.xlu0 %8508
    %8510 = vrot.lane.b32.xlu0 %v8498, 127
    %v8511 = vpop.permute.xlu0 %8510
    %8512 = vrot.lane.b32.xlu0 %v8501, 127
    %v8513 = vpop.permute.xlu0 %8512
    %8514 = vrot.lane.b32.xlu0 %v8497, 127
    %v8515 = vpop.permute.xlu0 %8514
    %8516 = vrot.lane.b32.xlu0 %v8500, 127
    %v8517 = vpop.permute.xlu0 %8516
    %v8518 = vsel %vm212, %v8503, %v8505
    %v8519 = vsel %vm212, %v8507, %v8509
    %v8520 = vsel %vm212, %v8511, %v8513
    %v8521 = vsel %vm212, %v8515, %v8517
    %v8530 = vadd.f32 %v8335, %v8518
    %v8531 = vadd.f32 %v8336, %v8505
    %v8532 = vadd.f32 %v8337, %v8519
    %v8533 = vadd.f32 %v8338, %v8509
    %v8534 = vadd.f32 %v8339, %v8520
    %v8535 = vadd.f32 %v8340, %v8513
    %v8536 = vadd.f32 %v8341, %v8521
    %v8537 = vadd.f32 %v8342, %v8517
    %v8538 = vstv %s4439
    %v8539 = vmul.f32 %v4405, %v8538
    %v8540 = vmul.f32 %v4406, %v8538
    %v8541 = vmul.f32 %v4407, %v8538
    %v8542 = vmul.f32 %v4408, %v8538
    %v8543 = vmul.f32 %v4409, %v8538
    %v8544 = vmul.f32 %v4410, %v8538
    %v8545 = vmul.f32 %v4411, %v8538
    %v8546 = vmul.f32 %v4412, %v8538
    %v8555 = vrot.slane %v8539, 2
    %v8556 = vrot.slane %v8541, 2
    %v8557 = vsel %vm1042, %v8555, %v8556
    %v8558 = vrot.slane %v8540, 2
    %v8559 = vrot.slane %v8542, 2
    %v8560 = vsel %vm1042, %v8558, %v8559
    %v8561 = vrot.slane %v8543, 2
    %v8562 = vrot.slane %v8545, 2
    %v8563 = vsel %vm1042, %v8561, %v8562
    %v8564 = vrot.slane %v8544, 2
    %v8565 = vrot.slane %v8546, 2
    %v8566 = vsel %vm1042, %v8564, %v8565
    %8567 = vrot.lane.b32.xlu0 %v8557, 126
    %v8568 = vpop.permute.xlu0 %8567
    %8569 = vrot.lane.b32.xlu0 %v8560, 126
    %v8570 = vpop.permute.xlu0 %8569
    %8571 = vrot.lane.b32.xlu0 %v8556, 126
    %v8572 = vpop.permute.xlu0 %8571
    %8573 = vrot.lane.b32.xlu0 %v8559, 126
    %v8574 = vpop.permute.xlu0 %8573
    %8575 = vrot.lane.b32.xlu0 %v8563, 126
    %v8576 = vpop.permute.xlu0 %8575
    %8577 = vrot.lane.b32.xlu0 %v8566, 126
    %v8578 = vpop.permute.xlu0 %8577
    %8579 = vrot.lane.b32.xlu0 %v8562, 126
    %v8580 = vpop.permute.xlu0 %8579
    %8581 = vrot.lane.b32.xlu0 %v8565, 126
    %v8582 = vpop.permute.xlu0 %8581
    %v8583 = vsel %vm372, %v8568, %v8570
    %v8584 = vsel %vm372, %v8572, %v8574
    %v8585 = vsel %vm372, %v8576, %v8578
    %v8586 = vsel %vm372, %v8580, %v8582
    %v8595 = vadd.f32 %v8400, %v8583
    %v8596 = vadd.f32 %v8401, %v8570
    %v8597 = vadd.f32 %v8402, %v8584
    %v8598 = vadd.f32 %v8403, %v8574
    %v8599 = vadd.f32 %v8404, %v8585
    %v8600 = vadd.f32 %v8405, %v8578
    %v8601 = vadd.f32 %v8406, %v8586
    %v8602 = vadd.f32 %v8407, %v8582
    %v8603 = vstv %s4466
    %v8604 = vmul.f32 %v4405, %v8603
    %v8605 = vmul.f32 %v4406, %v8603
    %v8606 = vmul.f32 %v4407, %v8603
    %v8607 = vmul.f32 %v4408, %v8603
    %v8608 = vmul.f32 %v4409, %v8603
    %v8609 = vmul.f32 %v4410, %v8603
    %v8610 = vmul.f32 %v4411, %v8603
    %v8611 = vmul.f32 %v4412, %v8603
    %v8620 = vrot.slane %v8604, 2
    %v8621 = vrot.slane %v8606, 2
    %v8622 = vsel %vm1042, %v8620, %v8621
    %v8623 = vrot.slane %v8605, 2
    %v8624 = vrot.slane %v8607, 2
    %v8625 = vsel %vm1042, %v8623, %v8624
    %v8626 = vrot.slane %v8608, 2
    %v8627 = vrot.slane %v8610, 2
    %v8628 = vsel %vm1042, %v8626, %v8627
    %v8629 = vrot.slane %v8609, 2
    %v8630 = vrot.slane %v8611, 2
    %v8631 = vsel %vm1042, %v8629, %v8630
    %8632 = vrot.lane.b32.xlu0 %v8622, 126
    %v8633 = vpop.permute.xlu0 %8632
    %8634 = vrot.lane.b32.xlu0 %v8625, 126
    %v8635 = vpop.permute.xlu0 %8634
    %8636 = vrot.lane.b32.xlu0 %v8621, 126
    %v8637 = vpop.permute.xlu0 %8636
    %8638 = vrot.lane.b32.xlu0 %v8624, 126
    %v8639 = vpop.permute.xlu0 %8638
    %8640 = vrot.lane.b32.xlu0 %v8628, 126
    %v8641 = vpop.permute.xlu0 %8640
    %8642 = vrot.lane.b32.xlu0 %v8631, 126
    %v8643 = vpop.permute.xlu0 %8642
    %8644 = vrot.lane.b32.xlu0 %v8627, 126
    %v8645 = vpop.permute.xlu0 %8644
    %8646 = vrot.lane.b32.xlu0 %v8630, 126
    %v8647 = vpop.permute.xlu0 %8646
    %v8648 = vsel %vm372, %v8633, %v8635
    %v8649 = vsel %vm372, %v8637, %v8639
    %v8650 = vsel %vm372, %v8641, %v8643
    %v8651 = vsel %vm372, %v8645, %v8647
    %v8660 = vadd.f32 %v8465, %v8648
    %v8661 = vadd.f32 %v8466, %v8635
    %v8662 = vadd.f32 %v8467, %v8649
    %v8663 = vadd.f32 %v8468, %v8639
    %v8664 = vadd.f32 %v8469, %v8650
    %v8665 = vadd.f32 %v8470, %v8643
    %v8666 = vadd.f32 %v8471, %v8651
    %v8667 = vadd.f32 %v8472, %v8647
    %v8668 = vstv %s4493
    %v8669 = vmul.f32 %v4405, %v8668
    %v8670 = vmul.f32 %v4406, %v8668
    %v8671 = vmul.f32 %v4407, %v8668
    %v8672 = vmul.f32 %v4408, %v8668
    %v8673 = vmul.f32 %v4409, %v8668
    %v8674 = vmul.f32 %v4410, %v8668
    %v8675 = vmul.f32 %v4411, %v8668
    %v8676 = vmul.f32 %v4412, %v8668
    %v8685 = vrot.slane %v8669, 2
    %v8686 = vrot.slane %v8671, 2
    %v8687 = vsel %vm1042, %v8685, %v8686
    %v8688 = vrot.slane %v8670, 2
    %v8689 = vrot.slane %v8672, 2
    %v8690 = vsel %vm1042, %v8688, %v8689
    %v8691 = vrot.slane %v8673, 2
    %v8692 = vrot.slane %v8675, 2
    %v8693 = vsel %vm1042, %v8691, %v8692
    %v8694 = vrot.slane %v8674, 2
    %v8695 = vrot.slane %v8676, 2
    %v8696 = vsel %vm1042, %v8694, %v8695
    %8697 = vrot.lane.b32.xlu0 %v8687, 126
    %v8698 = vpop.permute.xlu0 %8697
    %8699 = vrot.lane.b32.xlu0 %v8690, 126
    %v8700 = vpop.permute.xlu0 %8699
    %8701 = vrot.lane.b32.xlu0 %v8686, 126
    %v8702 = vpop.permute.xlu0 %8701
    %8703 = vrot.lane.b32.xlu0 %v8689, 126
    %v8704 = vpop.permute.xlu0 %8703
    %8705 = vrot.lane.b32.xlu0 %v8693, 126
    %v8706 = vpop.permute.xlu0 %8705
    %8707 = vrot.lane.b32.xlu0 %v8696, 126
    %v8708 = vpop.permute.xlu0 %8707
    %8709 = vrot.lane.b32.xlu0 %v8692, 126
    %v8710 = vpop.permute.xlu0 %8709
    %8711 = vrot.lane.b32.xlu0 %v8695, 126
    %v8712 = vpop.permute.xlu0 %8711
    %v8713 = vsel %vm372, %v8698, %v8700
    %v8714 = vsel %vm372, %v8702, %v8704
    %v8715 = vsel %vm372, %v8706, %v8708
    %v8716 = vsel %vm372, %v8710, %v8712
    %v8725 = vadd.f32 %v8530, %v8713
    %v8726 = vadd.f32 %v8531, %v8700
    %v8727 = vadd.f32 %v8532, %v8714
    %v8728 = vadd.f32 %v8533, %v8704
    %v8729 = vadd.f32 %v8534, %v8715
    %v8730 = vadd.f32 %v8535, %v8708
    %v8731 = vadd.f32 %v8536, %v8716
    %v8732 = vadd.f32 %v8537, %v8712
    %v8733 = vadd.f32 %v7314, %v8595
    %v8734 = vadd.f32 %v7315, %v8596
    %v8735 = vadd.f32 %v7316, %v8597
    %v8736 = vadd.f32 %v7317, %v8598
    %v8737 = vadd.f32 %v7318, %v8599
    %v8738 = vadd.f32 %v7319, %v8600
    %v8739 = vadd.f32 %v7320, %v8601
    %v8740 = vadd.f32 %v7321, %v8602
    %v8741 = vadd.f32 %v7322, %v8660
    %v8742 = vadd.f32 %v7323, %v8661
    %v8743 = vadd.f32 %v7324, %v8662
    %v8744 = vadd.f32 %v7325, %v8663
    %v8745 = vadd.f32 %v7326, %v8664
    %v8746 = vadd.f32 %v7327, %v8665
    %v8747 = vadd.f32 %v7328, %v8666
    %v8748 = vadd.f32 %v7329, %v8667
    %v8749 = vadd.f32 %v7330, %v8725
    %v8750 = vadd.f32 %v7331, %v8726
    %v8751 = vadd.f32 %v7332, %v8727
    %v8752 = vadd.f32 %v7333, %v8728
    %v8753 = vadd.f32 %v7334, %v8729
    %v8754 = vadd.f32 %v7335, %v8730
    %v8755 = vadd.f32 %v7336, %v8731
    %v8756 = vadd.f32 %v7337, %v8732
    %s8757 = sld [smem:[#allocation2 + $0xa2]]
    %s8758 = sld [smem:[#allocation2 + $0xa3]]
    %s8759 = sld [smem:[#allocation2 + $0xa4]]
    %s8760 = sld [smem:[#allocation2 + $0xa5]]
    %s8761 = sld [smem:[#allocation2 + $0xa6]]
    %s8762 = sld [smem:[#allocation2 + $0xa7]]
    %s8763 = sld [smem:[#allocation2 + $0xa8]]
    %s8764 = sld [smem:[#allocation2 + $0xa9]]
    %s8765 = sld [smem:[#allocation2 + $0xaa]]
    %s8766 = sld [smem:[#allocation2 + $0xab]]
    %s8767 = sld [smem:[#allocation2 + $0xac]]
    %s8768 = sld [smem:[#allocation2 + $0xad]]
    %s8769 = sld [smem:[#allocation2 + $0xae]]
    %s8770 = sld [smem:[#allocation2 + $0xaf]]
    %s8771 = sld [smem:[#allocation2 + $0xb0]]
    %s8772 = sld [smem:[#allocation2 + $0xb1]]
    %s8773 = sld [smem:[#allocation2 + $0xb2]]
    %s8774 = sld [smem:[#allocation2 + $0xb3]]
    %s8775 = sld [smem:[#allocation2 + $0xb4]]
    %s8776 = sld [smem:[#allocation2 + $0xb5]]
    %s8777 = sld [smem:[#allocation2 + $0xb6]]
    %s8778 = sld [smem:[#allocation2 + $0xb7]]
    %s8779 = sld [smem:[#allocation2 + $0xb8]]
    %s8780 = sld [smem:[#allocation2 + $0xb9]]
    %s8781 = sld [smem:[#allocation2 + $0xba]]
    %s8782 = sld [smem:[#allocation2 + $0xbb]]
    %s8783 = sld [smem:[#allocation2 + $0xbc]]
    %s8784 = sld [smem:[#allocation2 + $0xbd]]
    %s8785 = sld [smem:[#allocation2 + $0xbe]]
    %s8786 = sld [smem:[#allocation2 + $0xbf]]
    %s8787 = sld [smem:[#allocation2 + $0xc0]]
    %s8788 = sld [smem:[#allocation2 + $0xc1]]
    %s8789 = sld [smem:[#allocation2 + $0xc2]]
    %s8790 = sld [smem:[#allocation2 + $0xc3]]
    %s8791 = sld [smem:[#allocation2 + $0xc4]]
    %s8792 = sld [smem:[#allocation2 + $0xc5]]
    %s8793 = sld [smem:[#allocation2 + $0xc6]]
    %s8794 = sld [smem:[#allocation2 + $0xc7]]
    %s8795 = sld [smem:[#allocation2 + $0xc8]]
    %s8796 = sld [smem:[#allocation2 + $0xc9]]
    %s8797 = sld [smem:[#allocation2 + $0xca]]
    %s8798 = sld [smem:[#allocation2 + $0xcb]]
    %s8799 = sld [smem:[#allocation2 + $0xcc]]
    %s8800 = sld [smem:[#allocation2 + $0xcd]]
    %s8801 = sld [smem:[#allocation2 + $0xce]]
    %s8802 = sld [smem:[#allocation2 + $0xcf]]
    %s8803 = sld [smem:[#allocation2 + $0xd0]]
    %s8804 = sld [smem:[#allocation2 + $0xd1]]
    %s8805 = sld [smem:[#allocation2 + $0xd2]]
    %s8806 = sld [smem:[#allocation2 + $0xd3]]
    %s8807 = sld [smem:[#allocation2 + $0xd4]]
    %s8808 = sld [smem:[#allocation2 + $0xd5]]
    %s8809 = sld [smem:[#allocation2 + $0xd6]]
    %s8810 = sld [smem:[#allocation2 + $0xd7]]
    %s8811 = sld [smem:[#allocation2 + $0xd8]]
    %s8812 = sld [smem:[#allocation2 + $0xd9]]
    %s8813 = sld [smem:[#allocation2 + $0xda]]
    %s8814 = sld [smem:[#allocation2 + $0xdb]]
    %s8815 = sld [smem:[#allocation2 + $0xdc]]
    %s8816 = sld [smem:[#allocation2 + $0xdd]]
    %s8817 = sld [smem:[#allocation2 + $0xde]]
    %s8818 = sld [smem:[#allocation2 + $0xdf]]
    %s8819 = sld [smem:[#allocation2 + $0xe0]]
    %s8820 = sld [smem:[#allocation2 + $0xe1]]
    %s8821 = sld [smem:[#allocation2 + $0xe2]]
    %s8822 = sld [smem:[#allocation2 + $0xe3]]
    %s8823 = sld [smem:[#allocation2 + $0xe4]]
    %s8824 = sld [smem:[#allocation2 + $0xe5]]
    %s8825 = sld [smem:[#allocation2 + $0xe6]]
    %s8826 = sld [smem:[#allocation2 + $0xe7]]
    %s8827 = sld [smem:[#allocation2 + $0xe8]]
    %s8828 = sld [smem:[#allocation2 + $0xe9]]
    %s8829 = sld [smem:[#allocation2 + $0xea]]
    %s8830 = sld [smem:[#allocation2 + $0xeb]]
    %s8831 = sld [smem:[#allocation2 + $0xec]]
    %s8832 = sld [smem:[#allocation2 + $0xed]]
    %s8833 = sld [smem:[#allocation2 + $0xee]]
    %s8834 = sld [smem:[#allocation2 + $0xef]]
    %s8835 = sld [smem:[#allocation2 + $0xf0]]
    %s8836 = sld [smem:[#allocation2 + $0xf1]]
    %s8837 = sld [smem:[#allocation2 + $0xf2]]
    %s8838 = sld [smem:[#allocation4 + $0x6]]
    %v8839 = vstv %s8838
    %s8840 = sld [smem:[#allocation4 + $0x7]]
    %v8841 = vstv %s8840
    %s8842 = sld [smem:[#allocation4 + $0x8]]
    %v8843 = vstv %s8842
    %v8844 = vstv %s8757
    %v8845 = vmul.f32 %v8733, %v8844
    %v8846 = vmul.f32 %v8735, %v8844
    %v8847 = vmul.f32 %v8737, %v8844
    %v8848 = vmul.f32 %v8739, %v8844
    %v8849 = vstv %s8784
    %v8850 = vmul.f32 %v8733, %v8849
    %v8851 = vmul.f32 %v8735, %v8849
    %v8852 = vmul.f32 %v8737, %v8849
    %v8853 = vmul.f32 %v8739, %v8849
    %v8854 = vstv %s8811
    %v8855 = vmul.f32 %v8733, %v8854
    %v8856 = vmul.f32 %v8735, %v8854
    %v8857 = vmul.f32 %v8737, %v8854
    %v8858 = vmul.f32 %v8739, %v8854
    %v8859 = vstv %s8758
    %v8860 = vmul.f32 %v8733, %v8859
    %v8861 = vmul.f32 %v8734, %v8859
    %v8862 = vmul.f32 %v8735, %v8859
    %v8863 = vmul.f32 %v8736, %v8859
    %v8864 = vmul.f32 %v8737, %v8859
    %v8865 = vmul.f32 %v8738, %v8859
    %v8866 = vmul.f32 %v8739, %v8859
    %v8867 = vmul.f32 %v8740, %v8859
    %8876 = vrot.lane.b32.xlu0 %v8860, 127
    %v8877 = vpop.permute.xlu0 %8876
    %8878 = vrot.lane.b32.xlu0 %v8861, 127
    %v8879 = vpop.permute.xlu0 %8878
    %8880 = vrot.lane.b32.xlu0 %v8862, 127
    %v8881 = vpop.permute.xlu0 %8880
    %8882 = vrot.lane.b32.xlu0 %v8863, 127
    %v8883 = vpop.permute.xlu0 %8882
    %8884 = vrot.lane.b32.xlu0 %v8864, 127
    %v8885 = vpop.permute.xlu0 %8884
    %8886 = vrot.lane.b32.xlu0 %v8865, 127
    %v8887 = vpop.permute.xlu0 %8886
    %8888 = vrot.lane.b32.xlu0 %v8866, 127
    %v8889 = vpop.permute.xlu0 %8888
    %8890 = vrot.lane.b32.xlu0 %v8867, 127
    %v8891 = vpop.permute.xlu0 %8890
    %v8892 = vsel %vm212, %v8877, %v8879
    %v8893 = vsel %vm212, %v8881, %v8883
    %v8894 = vsel %vm212, %v8885, %v8887
    %v8895 = vsel %vm212, %v8889, %v8891
    %v8900 = vadd.f32 %v8845, %v8892
    %v8901 = vadd.f32 %v8846, %v8893
    %v8902 = vadd.f32 %v8847, %v8894
    %v8903 = vadd.f32 %v8848, %v8895
    %v8904 = vstv %s8785
    %v8905 = vmul.f32 %v8733, %v8904
    %v8906 = vmul.f32 %v8734, %v8904
    %v8907 = vmul.f32 %v8735, %v8904
    %v8908 = vmul.f32 %v8736, %v8904
    %v8909 = vmul.f32 %v8737, %v8904
    %v8910 = vmul.f32 %v8738, %v8904
    %v8911 = vmul.f32 %v8739, %v8904
    %v8912 = vmul.f32 %v8740, %v8904
    %8921 = vrot.lane.b32.xlu0 %v8905, 127
    %v8922 = vpop.permute.xlu0 %8921
    %8923 = vrot.lane.b32.xlu0 %v8906, 127
    %v8924 = vpop.permute.xlu0 %8923
    %8925 = vrot.lane.b32.xlu0 %v8907, 127
    %v8926 = vpop.permute.xlu0 %8925
    %8927 = vrot.lane.b32.xlu0 %v8908, 127
    %v8928 = vpop.permute.xlu0 %8927
    %8929 = vrot.lane.b32.xlu0 %v8909, 127
    %v8930 = vpop.permute.xlu0 %8929
    %8931 = vrot.lane.b32.xlu0 %v8910, 127
    %v8932 = vpop.permute.xlu0 %8931
    %8933 = vrot.lane.b32.xlu0 %v8911, 127
    %v8934 = vpop.permute.xlu0 %8933
    %8935 = vrot.lane.b32.xlu0 %v8912, 127
    %v8936 = vpop.permute.xlu0 %8935
    %v8937 = vsel %vm212, %v8922, %v8924
    %v8938 = vsel %vm212, %v8926, %v8928
    %v8939 = vsel %vm212, %v8930, %v8932
    %v8940 = vsel %vm212, %v8934, %v8936
    %v8945 = vadd.f32 %v8850, %v8937
    %v8946 = vadd.f32 %v8851, %v8938
    %v8947 = vadd.f32 %v8852, %v8939
    %v8948 = vadd.f32 %v8853, %v8940
    %v8949 = vstv %s8812
    %v8950 = vmul.f32 %v8733, %v8949
    %v8951 = vmul.f32 %v8734, %v8949
    %v8952 = vmul.f32 %v8735, %v8949
    %v8953 = vmul.f32 %v8736, %v8949
    %v8954 = vmul.f32 %v8737, %v8949
    %v8955 = vmul.f32 %v8738, %v8949
    %v8956 = vmul.f32 %v8739, %v8949
    %v8957 = vmul.f32 %v8740, %v8949
    %8966 = vrot.lane.b32.xlu0 %v8950, 127
    %v8967 = vpop.permute.xlu0 %8966
    %8968 = vrot.lane.b32.xlu0 %v8951, 127
    %v8969 = vpop.permute.xlu0 %8968
    %8970 = vrot.lane.b32.xlu0 %v8952, 127
    %v8971 = vpop.permute.xlu0 %8970
    %8972 = vrot.lane.b32.xlu0 %v8953, 127
    %v8973 = vpop.permute.xlu0 %8972
    %8974 = vrot.lane.b32.xlu0 %v8954, 127
    %v8975 = vpop.permute.xlu0 %8974
    %8976 = vrot.lane.b32.xlu0 %v8955, 127
    %v8977 = vpop.permute.xlu0 %8976
    %8978 = vrot.lane.b32.xlu0 %v8956, 127
    %v8979 = vpop.permute.xlu0 %8978
    %8980 = vrot.lane.b32.xlu0 %v8957, 127
    %v8981 = vpop.permute.xlu0 %8980
    %v8982 = vsel %vm212, %v8967, %v8969
    %v8983 = vsel %vm212, %v8971, %v8973
    %v8984 = vsel %vm212, %v8975, %v8977
    %v8985 = vsel %vm212, %v8979, %v8981
    %v8990 = vadd.f32 %v8855, %v8982
    %v8991 = vadd.f32 %v8856, %v8983
    %v8992 = vadd.f32 %v8857, %v8984
    %v8993 = vadd.f32 %v8858, %v8985
    %v8994 = vstv %s8759
    %v8995 = vmul.f32 %v8733, %v8994
    %v8996 = vmul.f32 %v8734, %v8994
    %v8997 = vmul.f32 %v8735, %v8994
    %v8998 = vmul.f32 %v8736, %v8994
    %v8999 = vmul.f32 %v8737, %v8994
    %v9000 = vmul.f32 %v8738, %v8994
    %v9001 = vmul.f32 %v8739, %v8994
    %v9002 = vmul.f32 %v8740, %v8994
    %9011 = vrot.lane.b32.xlu0 %v8995, 126
    %v9012 = vpop.permute.xlu0 %9011
    %9013 = vrot.lane.b32.xlu0 %v8996, 126
    %v9014 = vpop.permute.xlu0 %9013
    %9015 = vrot.lane.b32.xlu0 %v8997, 126
    %v9016 = vpop.permute.xlu0 %9015
    %9017 = vrot.lane.b32.xlu0 %v8998, 126
    %v9018 = vpop.permute.xlu0 %9017
    %9019 = vrot.lane.b32.xlu0 %v8999, 126
    %v9020 = vpop.permute.xlu0 %9019
    %9021 = vrot.lane.b32.xlu0 %v9000, 126
    %v9022 = vpop.permute.xlu0 %9021
    %9023 = vrot.lane.b32.xlu0 %v9001, 126
    %v9024 = vpop.permute.xlu0 %9023
    %9025 = vrot.lane.b32.xlu0 %v9002, 126
    %v9026 = vpop.permute.xlu0 %9025
    %v9027 = vsel %vm372, %v9012, %v9014
    %v9028 = vsel %vm372, %v9016, %v9018
    %v9029 = vsel %vm372, %v9020, %v9022
    %v9030 = vsel %vm372, %v9024, %v9026
    %v9035 = vadd.f32 %v8900, %v9027
    %v9036 = vadd.f32 %v8901, %v9028
    %v9037 = vadd.f32 %v8902, %v9029
    %v9038 = vadd.f32 %v8903, %v9030
    %v9039 = vstv %s8786
    %v9040 = vmul.f32 %v8733, %v9039
    %v9041 = vmul.f32 %v8734, %v9039
    %v9042 = vmul.f32 %v8735, %v9039
    %v9043 = vmul.f32 %v8736, %v9039
    %v9044 = vmul.f32 %v8737, %v9039
    %v9045 = vmul.f32 %v8738, %v9039
    %v9046 = vmul.f32 %v8739, %v9039
    %v9047 = vmul.f32 %v8740, %v9039
    %9056 = vrot.lane.b32.xlu0 %v9040, 126
    %v9057 = vpop.permute.xlu0 %9056
    %9058 = vrot.lane.b32.xlu0 %v9041, 126
    %v9059 = vpop.permute.xlu0 %9058
    %9060 = vrot.lane.b32.xlu0 %v9042, 126
    %v9061 = vpop.permute.xlu0 %9060
    %9062 = vrot.lane.b32.xlu0 %v9043, 126
    %v9063 = vpop.permute.xlu0 %9062
    %9064 = vrot.lane.b32.xlu0 %v9044, 126
    %v9065 = vpop.permute.xlu0 %9064
    %9066 = vrot.lane.b32.xlu0 %v9045, 126
    %v9067 = vpop.permute.xlu0 %9066
    %9068 = vrot.lane.b32.xlu0 %v9046, 126
    %v9069 = vpop.permute.xlu0 %9068
    %9070 = vrot.lane.b32.xlu0 %v9047, 126
    %v9071 = vpop.permute.xlu0 %9070
    %v9072 = vsel %vm372, %v9057, %v9059
    %v9073 = vsel %vm372, %v9061, %v9063
    %v9074 = vsel %vm372, %v9065, %v9067
    %v9075 = vsel %vm372, %v9069, %v9071
    %v9080 = vadd.f32 %v8945, %v9072
    %v9081 = vadd.f32 %v8946, %v9073
    %v9082 = vadd.f32 %v8947, %v9074
    %v9083 = vadd.f32 %v8948, %v9075
    %v9084 = vstv %s8813
    %v9085 = vmul.f32 %v8733, %v9084
    %v9086 = vmul.f32 %v8734, %v9084
    %v9087 = vmul.f32 %v8735, %v9084
    %v9088 = vmul.f32 %v8736, %v9084
    %v9089 = vmul.f32 %v8737, %v9084
    %v9090 = vmul.f32 %v8738, %v9084
    %v9091 = vmul.f32 %v8739, %v9084
    %v9092 = vmul.f32 %v8740, %v9084
    %9101 = vrot.lane.b32.xlu0 %v9085, 126
    %v9102 = vpop.permute.xlu0 %9101
    %9103 = vrot.lane.b32.xlu0 %v9086, 126
    %v9104 = vpop.permute.xlu0 %9103
    %9105 = vrot.lane.b32.xlu0 %v9087, 126
    %v9106 = vpop.permute.xlu0 %9105
    %9107 = vrot.lane.b32.xlu0 %v9088, 126
    %v9108 = vpop.permute.xlu0 %9107
    %9109 = vrot.lane.b32.xlu0 %v9089, 126
    %v9110 = vpop.permute.xlu0 %9109
    %9111 = vrot.lane.b32.xlu0 %v9090, 126
    %v9112 = vpop.permute.xlu0 %9111
    %9113 = vrot.lane.b32.xlu0 %v9091, 126
    %v9114 = vpop.permute.xlu0 %9113
    %9115 = vrot.lane.b32.xlu0 %v9092, 126
    %v9116 = vpop.permute.xlu0 %9115
    %v9117 = vsel %vm372, %v9102, %v9104
    %v9118 = vsel %vm372, %v9106, %v9108
    %v9119 = vsel %vm372, %v9110, %v9112
    %v9120 = vsel %vm372, %v9114, %v9116
    %v9125 = vadd.f32 %v8990, %v9117
    %v9126 = vadd.f32 %v8991, %v9118
    %v9127 = vadd.f32 %v8992, %v9119
    %v9128 = vadd.f32 %v8993, %v9120
    %v9129 = vstv %s8760
    %v9130 = vmul.f32 %v8733, %v9129
    %v9131 = vmul.f32 %v8735, %v9129
    %v9132 = vmul.f32 %v8737, %v9129
    %v9133 = vmul.f32 %v8739, %v9129
    %v9138 = vrot.slane %v9130, 1
    %v9139 = vrot.slane %v9131, 1
    %v9140 = vsel %vm516, %v9138, %v9139
    %v9141 = vrot.slane %v9132, 1
    %v9142 = vrot.slane %v9133, 1
    %v9143 = vsel %vm516, %v9141, %v9142
    %v9148 = vadd.f32 %v9035, %v9140
    %v9149 = vadd.f32 %v9036, %v9139
    %v9150 = vadd.f32 %v9037, %v9143
    %v9151 = vadd.f32 %v9038, %v9142
    %v9152 = vstv %s8787
    %v9153 = vmul.f32 %v8733, %v9152
    %v9154 = vmul.f32 %v8735, %v9152
    %v9155 = vmul.f32 %v8737, %v9152
    %v9156 = vmul.f32 %v8739, %v9152
    %v9161 = vrot.slane %v9153, 1
    %v9162 = vrot.slane %v9154, 1
    %v9163 = vsel %vm516, %v9161, %v9162
    %v9164 = vrot.slane %v9155, 1
    %v9165 = vrot.slane %v9156, 1
    %v9166 = vsel %vm516, %v9164, %v9165
    %v9171 = vadd.f32 %v9080, %v9163
    %v9172 = vadd.f32 %v9081, %v9162
    %v9173 = vadd.f32 %v9082, %v9166
    %v9174 = vadd.f32 %v9083, %v9165
    %v9175 = vstv %s8814
    %v9176 = vmul.f32 %v8733, %v9175
    %v9177 = vmul.f32 %v8735, %v9175
    %v9178 = vmul.f32 %v8737, %v9175
    %v9179 = vmul.f32 %v8739, %v9175
    %v9184 = vrot.slane %v9176, 1
    %v9185 = vrot.slane %v9177, 1
    %v9186 = vsel %vm516, %v9184, %v9185
    %v9187 = vrot.slane %v9178, 1
    %v9188 = vrot.slane %v9179, 1
    %v9189 = vsel %vm516, %v9187, %v9188
    %v9194 = vadd.f32 %v9125, %v9186
    %v9195 = vadd.f32 %v9126, %v9185
    %v9196 = vadd.f32 %v9127, %v9189
    %v9197 = vadd.f32 %v9128, %v9188
    %v9198 = vstv %s8761
    %v9199 = vmul.f32 %v8733, %v9198
    %v9200 = vmul.f32 %v8734, %v9198
    %v9201 = vmul.f32 %v8735, %v9198
    %v9202 = vmul.f32 %v8736, %v9198
    %v9203 = vmul.f32 %v8737, %v9198
    %v9204 = vmul.f32 %v8738, %v9198
    %v9205 = vmul.f32 %v8739, %v9198
    %v9206 = vmul.f32 %v8740, %v9198
    %v9215 = vrot.slane %v9199, 1
    %v9216 = vrot.slane %v9201, 1
    %v9217 = vsel %vm516, %v9215, %v9216
    %v9218 = vrot.slane %v9200, 1
    %v9219 = vrot.slane %v9202, 1
    %v9220 = vsel %vm516, %v9218, %v9219
    %v9221 = vrot.slane %v9203, 1
    %v9222 = vrot.slane %v9205, 1
    %v9223 = vsel %vm516, %v9221, %v9222
    %v9224 = vrot.slane %v9204, 1
    %v9225 = vrot.slane %v9206, 1
    %v9226 = vsel %vm516, %v9224, %v9225
    %9227 = vrot.lane.b32.xlu0 %v9217, 127
    %v9228 = vpop.permute.xlu0 %9227
    %9229 = vrot.lane.b32.xlu0 %v9220, 127
    %v9230 = vpop.permute.xlu0 %9229
    %9231 = vrot.lane.b32.xlu0 %v9216, 127
    %v9232 = vpop.permute.xlu0 %9231
    %9233 = vrot.lane.b32.xlu0 %v9219, 127
    %v9234 = vpop.permute.xlu0 %9233
    %9235 = vrot.lane.b32.xlu0 %v9223, 127
    %v9236 = vpop.permute.xlu0 %9235
    %9237 = vrot.lane.b32.xlu0 %v9226, 127
    %v9238 = vpop.permute.xlu0 %9237
    %9239 = vrot.lane.b32.xlu0 %v9222, 127
    %v9240 = vpop.permute.xlu0 %9239
    %9241 = vrot.lane.b32.xlu0 %v9225, 127
    %v9242 = vpop.permute.xlu0 %9241
    %v9243 = vsel %vm212, %v9228, %v9230
    %v9244 = vsel %vm212, %v9232, %v9234
    %v9245 = vsel %vm212, %v9236, %v9238
    %v9246 = vsel %vm212, %v9240, %v9242
    %v9251 = vadd.f32 %v9148, %v9243
    %v9252 = vadd.f32 %v9149, %v9244
    %v9253 = vadd.f32 %v9150, %v9245
    %v9254 = vadd.f32 %v9151, %v9246
    %v9255 = vstv %s8788
    %v9256 = vmul.f32 %v8733, %v9255
    %v9257 = vmul.f32 %v8734, %v9255
    %v9258 = vmul.f32 %v8735, %v9255
    %v9259 = vmul.f32 %v8736, %v9255
    %v9260 = vmul.f32 %v8737, %v9255
    %v9261 = vmul.f32 %v8738, %v9255
    %v9262 = vmul.f32 %v8739, %v9255
    %v9263 = vmul.f32 %v8740, %v9255
    %v9272 = vrot.slane %v9256, 1
    %v9273 = vrot.slane %v9258, 1
    %v9274 = vsel %vm516, %v9272, %v9273
    %v9275 = vrot.slane %v9257, 1
    %v9276 = vrot.slane %v9259, 1
    %v9277 = vsel %vm516, %v9275, %v9276
    %v9278 = vrot.slane %v9260, 1
    %v9279 = vrot.slane %v9262, 1
    %v9280 = vsel %vm516, %v9278, %v9279
    %v9281 = vrot.slane %v9261, 1
    %v9282 = vrot.slane %v9263, 1
    %v9283 = vsel %vm516, %v9281, %v9282
    %9284 = vrot.lane.b32.xlu0 %v9274, 127
    %v9285 = vpop.permute.xlu0 %9284
    %9286 = vrot.lane.b32.xlu0 %v9277, 127
    %v9287 = vpop.permute.xlu0 %9286
    %9288 = vrot.lane.b32.xlu0 %v9273, 127
    %v9289 = vpop.permute.xlu0 %9288
    %9290 = vrot.lane.b32.xlu0 %v9276, 127
    %v9291 = vpop.permute.xlu0 %9290
    %9292 = vrot.lane.b32.xlu0 %v9280, 127
    %v9293 = vpop.permute.xlu0 %9292
    %9294 = vrot.lane.b32.xlu0 %v9283, 127
    %v9295 = vpop.permute.xlu0 %9294
    %9296 = vrot.lane.b32.xlu0 %v9279, 127
    %v9297 = vpop.permute.xlu0 %9296
    %9298 = vrot.lane.b32.xlu0 %v9282, 127
    %v9299 = vpop.permute.xlu0 %9298
    %v9300 = vsel %vm212, %v9285, %v9287
    %v9301 = vsel %vm212, %v9289, %v9291
    %v9302 = vsel %vm212, %v9293, %v9295
    %v9303 = vsel %vm212, %v9297, %v9299
    %v9308 = vadd.f32 %v9171, %v9300
    %v9309 = vadd.f32 %v9172, %v9301
    %v9310 = vadd.f32 %v9173, %v9302
    %v9311 = vadd.f32 %v9174, %v9303
    %v9312 = vstv %s8815
    %v9313 = vmul.f32 %v8733, %v9312
    %v9314 = vmul.f32 %v8734, %v9312
    %v9315 = vmul.f32 %v8735, %v9312
    %v9316 = vmul.f32 %v8736, %v9312
    %v9317 = vmul.f32 %v8737, %v9312
    %v9318 = vmul.f32 %v8738, %v9312
    %v9319 = vmul.f32 %v8739, %v9312
    %v9320 = vmul.f32 %v8740, %v9312
    %v9329 = vrot.slane %v9313, 1
    %v9330 = vrot.slane %v9315, 1
    %v9331 = vsel %vm516, %v9329, %v9330
    %v9332 = vrot.slane %v9314, 1
    %v9333 = vrot.slane %v9316, 1
    %v9334 = vsel %vm516, %v9332, %v9333
    %v9335 = vrot.slane %v9317, 1
    %v9336 = vrot.slane %v9319, 1
    %v9337 = vsel %vm516, %v9335, %v9336
    %v9338 = vrot.slane %v9318, 1
    %v9339 = vrot.slane %v9320, 1
    %v9340 = vsel %vm516, %v9338, %v9339
    %9341 = vrot.lane.b32.xlu0 %v9331, 127
    %v9342 = vpop.permute.xlu0 %9341
    %9343 = vrot.lane.b32.xlu0 %v9334, 127
    %v9344 = vpop.permute.xlu0 %9343
    %9345 = vrot.lane.b32.xlu0 %v9330, 127
    %v9346 = vpop.permute.xlu0 %9345
    %9347 = vrot.lane.b32.xlu0 %v9333, 127
    %v9348 = vpop.permute.xlu0 %9347
    %9349 = vrot.lane.b32.xlu0 %v9337, 127
    %v9350 = vpop.permute.xlu0 %9349
    %9351 = vrot.lane.b32.xlu0 %v9340, 127
    %v9352 = vpop.permute.xlu0 %9351
    %9353 = vrot.lane.b32.xlu0 %v9336, 127
    %v9354 = vpop.permute.xlu0 %9353
    %9355 = vrot.lane.b32.xlu0 %v9339, 127
    %v9356 = vpop.permute.xlu0 %9355
    %v9357 = vsel %vm212, %v9342, %v9344
    %v9358 = vsel %vm212, %v9346, %v9348
    %v9359 = vsel %vm212, %v9350, %v9352
    %v9360 = vsel %vm212, %v9354, %v9356
    %v9365 = vadd.f32 %v9194, %v9357
    %v9366 = vadd.f32 %v9195, %v9358
    %v9367 = vadd.f32 %v9196, %v9359
    %v9368 = vadd.f32 %v9197, %v9360
    %v9369 = vstv %s8762
    %v9370 = vmul.f32 %v8733, %v9369
    %v9371 = vmul.f32 %v8734, %v9369
    %v9372 = vmul.f32 %v8735, %v9369
    %v9373 = vmul.f32 %v8736, %v9369
    %v9374 = vmul.f32 %v8737, %v9369
    %v9375 = vmul.f32 %v8738, %v9369
    %v9376 = vmul.f32 %v8739, %v9369
    %v9377 = vmul.f32 %v8740, %v9369
    %v9386 = vrot.slane %v9370, 1
    %v9387 = vrot.slane %v9372, 1
    %v9388 = vsel %vm516, %v9386, %v9387
    %v9389 = vrot.slane %v9371, 1
    %v9390 = vrot.slane %v9373, 1
    %v9391 = vsel %vm516, %v9389, %v9390
    %v9392 = vrot.slane %v9374, 1
    %v9393 = vrot.slane %v9376, 1
    %v9394 = vsel %vm516, %v9392, %v9393
    %v9395 = vrot.slane %v9375, 1
    %v9396 = vrot.slane %v9377, 1
    %v9397 = vsel %vm516, %v9395, %v9396
    %9398 = vrot.lane.b32.xlu0 %v9388, 126
    %v9399 = vpop.permute.xlu0 %9398
    %9400 = vrot.lane.b32.xlu0 %v9391, 126
    %v9401 = vpop.permute.xlu0 %9400
    %9402 = vrot.lane.b32.xlu0 %v9387, 126
    %v9403 = vpop.permute.xlu0 %9402
    %9404 = vrot.lane.b32.xlu0 %v9390, 126
    %v9405 = vpop.permute.xlu0 %9404
    %9406 = vrot.lane.b32.xlu0 %v9394, 126
    %v9407 = vpop.permute.xlu0 %9406
    %9408 = vrot.lane.b32.xlu0 %v9397, 126
    %v9409 = vpop.permute.xlu0 %9408
    %9410 = vrot.lane.b32.xlu0 %v9393, 126
    %v9411 = vpop.permute.xlu0 %9410
    %9412 = vrot.lane.b32.xlu0 %v9396, 126
    %v9413 = vpop.permute.xlu0 %9412
    %v9414 = vsel %vm372, %v9399, %v9401
    %v9415 = vsel %vm372, %v9403, %v9405
    %v9416 = vsel %vm372, %v9407, %v9409
    %v9417 = vsel %vm372, %v9411, %v9413
    %v9422 = vadd.f32 %v9251, %v9414
    %v9423 = vadd.f32 %v9252, %v9415
    %v9424 = vadd.f32 %v9253, %v9416
    %v9425 = vadd.f32 %v9254, %v9417
    %v9426 = vstv %s8789
    %v9427 = vmul.f32 %v8733, %v9426
    %v9428 = vmul.f32 %v8734, %v9426
    %v9429 = vmul.f32 %v8735, %v9426
    %v9430 = vmul.f32 %v8736, %v9426
    %v9431 = vmul.f32 %v8737, %v9426
    %v9432 = vmul.f32 %v8738, %v9426
    %v9433 = vmul.f32 %v8739, %v9426
    %v9434 = vmul.f32 %v8740, %v9426
    %v9443 = vrot.slane %v9427, 1
    %v9444 = vrot.slane %v9429, 1
    %v9445 = vsel %vm516, %v9443, %v9444
    %v9446 = vrot.slane %v9428, 1
    %v9447 = vrot.slane %v9430, 1
    %v9448 = vsel %vm516, %v9446, %v9447
    %v9449 = vrot.slane %v9431, 1
    %v9450 = vrot.slane %v9433, 1
    %v9451 = vsel %vm516, %v9449, %v9450
    %v9452 = vrot.slane %v9432, 1
    %v9453 = vrot.slane %v9434, 1
    %v9454 = vsel %vm516, %v9452, %v9453
    %9455 = vrot.lane.b32.xlu0 %v9445, 126
    %v9456 = vpop.permute.xlu0 %9455
    %9457 = vrot.lane.b32.xlu0 %v9448, 126
    %v9458 = vpop.permute.xlu0 %9457
    %9459 = vrot.lane.b32.xlu0 %v9444, 126
    %v9460 = vpop.permute.xlu0 %9459
    %9461 = vrot.lane.b32.xlu0 %v9447, 126
    %v9462 = vpop.permute.xlu0 %9461
    %9463 = vrot.lane.b32.xlu0 %v9451, 126
    %v9464 = vpop.permute.xlu0 %9463
    %9465 = vrot.lane.b32.xlu0 %v9454, 126
    %v9466 = vpop.permute.xlu0 %9465
    %9467 = vrot.lane.b32.xlu0 %v9450, 126
    %v9468 = vpop.permute.xlu0 %9467
    %9469 = vrot.lane.b32.xlu0 %v9453, 126
    %v9470 = vpop.permute.xlu0 %9469
    %v9471 = vsel %vm372, %v9456, %v9458
    %v9472 = vsel %vm372, %v9460, %v9462
    %v9473 = vsel %vm372, %v9464, %v9466
    %v9474 = vsel %vm372, %v9468, %v9470
    %v9479 = vadd.f32 %v9308, %v9471
    %v9480 = vadd.f32 %v9309, %v9472
    %v9481 = vadd.f32 %v9310, %v9473
    %v9482 = vadd.f32 %v9311, %v9474
    %v9483 = vstv %s8816
    %v9484 = vmul.f32 %v8733, %v9483
    %v9485 = vmul.f32 %v8734, %v9483
    %v9486 = vmul.f32 %v8735, %v9483
    %v9487 = vmul.f32 %v8736, %v9483
    %v9488 = vmul.f32 %v8737, %v9483
    %v9489 = vmul.f32 %v8738, %v9483
    %v9490 = vmul.f32 %v8739, %v9483
    %v9491 = vmul.f32 %v8740, %v9483
    %v9500 = vrot.slane %v9484, 1
    %v9501 = vrot.slane %v9486, 1
    %v9502 = vsel %vm516, %v9500, %v9501
    %v9503 = vrot.slane %v9485, 1
    %v9504 = vrot.slane %v9487, 1
    %v9505 = vsel %vm516, %v9503, %v9504
    %v9506 = vrot.slane %v9488, 1
    %v9507 = vrot.slane %v9490, 1
    %v9508 = vsel %vm516, %v9506, %v9507
    %v9509 = vrot.slane %v9489, 1
    %v9510 = vrot.slane %v9491, 1
    %v9511 = vsel %vm516, %v9509, %v9510
    %9512 = vrot.lane.b32.xlu0 %v9502, 126
    %v9513 = vpop.permute.xlu0 %9512
    %9514 = vrot.lane.b32.xlu0 %v9505, 126
    %v9515 = vpop.permute.xlu0 %9514
    %9516 = vrot.lane.b32.xlu0 %v9501, 126
    %v9517 = vpop.permute.xlu0 %9516
    %9518 = vrot.lane.b32.xlu0 %v9504, 126
    %v9519 = vpop.permute.xlu0 %9518
    %9520 = vrot.lane.b32.xlu0 %v9508, 126
    %v9521 = vpop.permute.xlu0 %9520
    %9522 = vrot.lane.b32.xlu0 %v9511, 126
    %v9523 = vpop.permute.xlu0 %9522
    %9524 = vrot.lane.b32.xlu0 %v9507, 126
    %v9525 = vpop.permute.xlu0 %9524
    %9526 = vrot.lane.b32.xlu0 %v9510, 126
    %v9527 = vpop.permute.xlu0 %9526
    %v9528 = vsel %vm372, %v9513, %v9515
    %v9529 = vsel %vm372, %v9517, %v9519
    %v9530 = vsel %vm372, %v9521, %v9523
    %v9531 = vsel %vm372, %v9525, %v9527
    %v9536 = vadd.f32 %v9365, %v9528
    %v9537 = vadd.f32 %v9366, %v9529
    %v9538 = vadd.f32 %v9367, %v9530
    %v9539 = vadd.f32 %v9368, %v9531
    %v9540 = vstv %s8763
    %v9541 = vmul.f32 %v8733, %v9540
    %v9542 = vmul.f32 %v8735, %v9540
    %v9543 = vmul.f32 %v8737, %v9540
    %v9544 = vmul.f32 %v8739, %v9540
    %v9549 = vrot.slane %v9541, 2
    %v9550 = vrot.slane %v9542, 2
    %v9551 = vsel %vm1042, %v9549, %v9550
    %v9552 = vrot.slane %v9543, 2
    %v9553 = vrot.slane %v9544, 2
    %v9554 = vsel %vm1042, %v9552, %v9553
    %v9559 = vadd.f32 %v9422, %v9551
    %v9560 = vadd.f32 %v9423, %v9550
    %v9561 = vadd.f32 %v9424, %v9554
    %v9562 = vadd.f32 %v9425, %v9553
    %v9563 = vstv %s8790
    %v9564 = vmul.f32 %v8733, %v9563
    %v9565 = vmul.f32 %v8735, %v9563
    %v9566 = vmul.f32 %v8737, %v9563
    %v9567 = vmul.f32 %v8739, %v9563
    %v9572 = vrot.slane %v9564, 2
    %v9573 = vrot.slane %v9565, 2
    %v9574 = vsel %vm1042, %v9572, %v9573
    %v9575 = vrot.slane %v9566, 2
    %v9576 = vrot.slane %v9567, 2
    %v9577 = vsel %vm1042, %v9575, %v9576
    %v9582 = vadd.f32 %v9479, %v9574
    %v9583 = vadd.f32 %v9480, %v9573
    %v9584 = vadd.f32 %v9481, %v9577
    %v9585 = vadd.f32 %v9482, %v9576
    %v9586 = vstv %s8817
    %v9587 = vmul.f32 %v8733, %v9586
    %v9588 = vmul.f32 %v8735, %v9586
    %v9589 = vmul.f32 %v8737, %v9586
    %v9590 = vmul.f32 %v8739, %v9586
    %v9595 = vrot.slane %v9587, 2
    %v9596 = vrot.slane %v9588, 2
    %v9597 = vsel %vm1042, %v9595, %v9596
    %v9598 = vrot.slane %v9589, 2
    %v9599 = vrot.slane %v9590, 2
    %v9600 = vsel %vm1042, %v9598, %v9599
    %v9605 = vadd.f32 %v9536, %v9597
    %v9606 = vadd.f32 %v9537, %v9596
    %v9607 = vadd.f32 %v9538, %v9600
    %v9608 = vadd.f32 %v9539, %v9599
    %v9609 = vstv %s8764
    %v9610 = vmul.f32 %v8733, %v9609
    %v9611 = vmul.f32 %v8734, %v9609
    %v9612 = vmul.f32 %v8735, %v9609
    %v9613 = vmul.f32 %v8736, %v9609
    %v9614 = vmul.f32 %v8737, %v9609
    %v9615 = vmul.f32 %v8738, %v9609
    %v9616 = vmul.f32 %v8739, %v9609
    %v9617 = vmul.f32 %v8740, %v9609
    %v9626 = vrot.slane %v9610, 2
    %v9627 = vrot.slane %v9612, 2
    %v9628 = vsel %vm1042, %v9626, %v9627
    %v9629 = vrot.slane %v9611, 2
    %v9630 = vrot.slane %v9613, 2
    %v9631 = vsel %vm1042, %v9629, %v9630
    %v9632 = vrot.slane %v9614, 2
    %v9633 = vrot.slane %v9616, 2
    %v9634 = vsel %vm1042, %v9632, %v9633
    %v9635 = vrot.slane %v9615, 2
    %v9636 = vrot.slane %v9617, 2
    %v9637 = vsel %vm1042, %v9635, %v9636
    %9638 = vrot.lane.b32.xlu0 %v9628, 127
    %v9639 = vpop.permute.xlu0 %9638
    %9640 = vrot.lane.b32.xlu0 %v9631, 127
    %v9641 = vpop.permute.xlu0 %9640
    %9642 = vrot.lane.b32.xlu0 %v9627, 127
    %v9643 = vpop.permute.xlu0 %9642
    %9644 = vrot.lane.b32.xlu0 %v9630, 127
    %v9645 = vpop.permute.xlu0 %9644
    %9646 = vrot.lane.b32.xlu0 %v9634, 127
    %v9647 = vpop.permute.xlu0 %9646
    %9648 = vrot.lane.b32.xlu0 %v9637, 127
    %v9649 = vpop.permute.xlu0 %9648
    %9650 = vrot.lane.b32.xlu0 %v9633, 127
    %v9651 = vpop.permute.xlu0 %9650
    %9652 = vrot.lane.b32.xlu0 %v9636, 127
    %v9653 = vpop.permute.xlu0 %9652
    %v9654 = vsel %vm212, %v9639, %v9641
    %v9655 = vsel %vm212, %v9643, %v9645
    %v9656 = vsel %vm212, %v9647, %v9649
    %v9657 = vsel %vm212, %v9651, %v9653
    %v9662 = vadd.f32 %v9559, %v9654
    %v9663 = vadd.f32 %v9560, %v9655
    %v9664 = vadd.f32 %v9561, %v9656
    %v9665 = vadd.f32 %v9562, %v9657
    %v9666 = vstv %s8791
    %v9667 = vmul.f32 %v8733, %v9666
    %v9668 = vmul.f32 %v8734, %v9666
    %v9669 = vmul.f32 %v8735, %v9666
    %v9670 = vmul.f32 %v8736, %v9666
    %v9671 = vmul.f32 %v8737, %v9666
    %v9672 = vmul.f32 %v8738, %v9666
    %v9673 = vmul.f32 %v8739, %v9666
    %v9674 = vmul.f32 %v8740, %v9666
    %v9683 = vrot.slane %v9667, 2
    %v9684 = vrot.slane %v9669, 2
    %v9685 = vsel %vm1042, %v9683, %v9684
    %v9686 = vrot.slane %v9668, 2
    %v9687 = vrot.slane %v9670, 2
    %v9688 = vsel %vm1042, %v9686, %v9687
    %v9689 = vrot.slane %v9671, 2
    %v9690 = vrot.slane %v9673, 2
    %v9691 = vsel %vm1042, %v9689, %v9690
    %v9692 = vrot.slane %v9672, 2
    %v9693 = vrot.slane %v9674, 2
    %v9694 = vsel %vm1042, %v9692, %v9693
    %9695 = vrot.lane.b32.xlu0 %v9685, 127
    %v9696 = vpop.permute.xlu0 %9695
    %9697 = vrot.lane.b32.xlu0 %v9688, 127
    %v9698 = vpop.permute.xlu0 %9697
    %9699 = vrot.lane.b32.xlu0 %v9684, 127
    %v9700 = vpop.permute.xlu0 %9699
    %9701 = vrot.lane.b32.xlu0 %v9687, 127
    %v9702 = vpop.permute.xlu0 %9701
    %9703 = vrot.lane.b32.xlu0 %v9691, 127
    %v9704 = vpop.permute.xlu0 %9703
    %9705 = vrot.lane.b32.xlu0 %v9694, 127
    %v9706 = vpop.permute.xlu0 %9705
    %9707 = vrot.lane.b32.xlu0 %v9690, 127
    %v9708 = vpop.permute.xlu0 %9707
    %9709 = vrot.lane.b32.xlu0 %v9693, 127
    %v9710 = vpop.permute.xlu0 %9709
    %v9711 = vsel %vm212, %v9696, %v9698
    %v9712 = vsel %vm212, %v9700, %v9702
    %v9713 = vsel %vm212, %v9704, %v9706
    %v9714 = vsel %vm212, %v9708, %v9710
    %v9719 = vadd.f32 %v9582, %v9711
    %v9720 = vadd.f32 %v9583, %v9712
    %v9721 = vadd.f32 %v9584, %v9713
    %v9722 = vadd.f32 %v9585, %v9714
    %v9723 = vstv %s8818
    %v9724 = vmul.f32 %v8733, %v9723
    %v9725 = vmul.f32 %v8734, %v9723
    %v9726 = vmul.f32 %v8735, %v9723
    %v9727 = vmul.f32 %v8736, %v9723
    %v9728 = vmul.f32 %v8737, %v9723
    %v9729 = vmul.f32 %v8738, %v9723
    %v9730 = vmul.f32 %v8739, %v9723
    %v9731 = vmul.f32 %v8740, %v9723
    %v9740 = vrot.slane %v9724, 2
    %v9741 = vrot.slane %v9726, 2
    %v9742 = vsel %vm1042, %v9740, %v9741
    %v9743 = vrot.slane %v9725, 2
    %v9744 = vrot.slane %v9727, 2
    %v9745 = vsel %vm1042, %v9743, %v9744
    %v9746 = vrot.slane %v9728, 2
    %v9747 = vrot.slane %v9730, 2
    %v9748 = vsel %vm1042, %v9746, %v9747
    %v9749 = vrot.slane %v9729, 2
    %v9750 = vrot.slane %v9731, 2
    %v9751 = vsel %vm1042, %v9749, %v9750
    %9752 = vrot.lane.b32.xlu0 %v9742, 127
    %v9753 = vpop.permute.xlu0 %9752
    %9754 = vrot.lane.b32.xlu0 %v9745, 127
    %v9755 = vpop.permute.xlu0 %9754
    %9756 = vrot.lane.b32.xlu0 %v9741, 127
    %v9757 = vpop.permute.xlu0 %9756
    %9758 = vrot.lane.b32.xlu0 %v9744, 127
    %v9759 = vpop.permute.xlu0 %9758
    %9760 = vrot.lane.b32.xlu0 %v9748, 127
    %v9761 = vpop.permute.xlu0 %9760
    %9762 = vrot.lane.b32.xlu0 %v9751, 127
    %v9763 = vpop.permute.xlu0 %9762
    %9764 = vrot.lane.b32.xlu0 %v9747, 127
    %v9765 = vpop.permute.xlu0 %9764
    %9766 = vrot.lane.b32.xlu0 %v9750, 127
    %v9767 = vpop.permute.xlu0 %9766
    %v9768 = vsel %vm212, %v9753, %v9755
    %v9769 = vsel %vm212, %v9757, %v9759
    %v9770 = vsel %vm212, %v9761, %v9763
    %v9771 = vsel %vm212, %v9765, %v9767
    %v9776 = vadd.f32 %v9605, %v9768
    %v9777 = vadd.f32 %v9606, %v9769
    %v9778 = vadd.f32 %v9607, %v9770
    %v9779 = vadd.f32 %v9608, %v9771
    %v9780 = vstv %s8765
    %v9781 = vmul.f32 %v8733, %v9780
    %v9782 = vmul.f32 %v8734, %v9780
    %v9783 = vmul.f32 %v8735, %v9780
    %v9784 = vmul.f32 %v8736, %v9780
    %v9785 = vmul.f32 %v8737, %v9780
    %v9786 = vmul.f32 %v8738, %v9780
    %v9787 = vmul.f32 %v8739, %v9780
    %v9788 = vmul.f32 %v8740, %v9780
    %v9797 = vrot.slane %v9781, 2
    %v9798 = vrot.slane %v9783, 2
    %v9799 = vsel %vm1042, %v9797, %v9798
    %v9800 = vrot.slane %v9782, 2
    %v9801 = vrot.slane %v9784, 2
    %v9802 = vsel %vm1042, %v9800, %v9801
    %v9803 = vrot.slane %v9785, 2
    %v9804 = vrot.slane %v9787, 2
    %v9805 = vsel %vm1042, %v9803, %v9804
    %v9806 = vrot.slane %v9786, 2
    %v9807 = vrot.slane %v9788, 2
    %v9808 = vsel %vm1042, %v9806, %v9807
    %9809 = vrot.lane.b32.xlu0 %v9799, 126
    %v9810 = vpop.permute.xlu0 %9809
    %9811 = vrot.lane.b32.xlu0 %v9802, 126
    %v9812 = vpop.permute.xlu0 %9811
    %9813 = vrot.lane.b32.xlu0 %v9798, 126
    %v9814 = vpop.permute.xlu0 %9813
    %9815 = vrot.lane.b32.xlu0 %v9801, 126
    %v9816 = vpop.permute.xlu0 %9815
    %9817 = vrot.lane.b32.xlu0 %v9805, 126
    %v9818 = vpop.permute.xlu0 %9817
    %9819 = vrot.lane.b32.xlu0 %v9808, 126
    %v9820 = vpop.permute.xlu0 %9819
    %9821 = vrot.lane.b32.xlu0 %v9804, 126
    %v9822 = vpop.permute.xlu0 %9821
    %9823 = vrot.lane.b32.xlu0 %v9807, 126
    %v9824 = vpop.permute.xlu0 %9823
    %v9825 = vsel %vm372, %v9810, %v9812
    %v9826 = vsel %vm372, %v9814, %v9816
    %v9827 = vsel %vm372, %v9818, %v9820
    %v9828 = vsel %vm372, %v9822, %v9824
    %v9833 = vadd.f32 %v9662, %v9825
    %v9834 = vadd.f32 %v9663, %v9826
    %v9835 = vadd.f32 %v9664, %v9827
    %v9836 = vadd.f32 %v9665, %v9828
    %v9837 = vstv %s8792
    %v9838 = vmul.f32 %v8733, %v9837
    %v9839 = vmul.f32 %v8734, %v9837
    %v9840 = vmul.f32 %v8735, %v9837
    %v9841 = vmul.f32 %v8736, %v9837
    %v9842 = vmul.f32 %v8737, %v9837
    %v9843 = vmul.f32 %v8738, %v9837
    %v9844 = vmul.f32 %v8739, %v9837
    %v9845 = vmul.f32 %v8740, %v9837
    %v9854 = vrot.slane %v9838, 2
    %v9855 = vrot.slane %v9840, 2
    %v9856 = vsel %vm1042, %v9854, %v9855
    %v9857 = vrot.slane %v9839, 2
    %v9858 = vrot.slane %v9841, 2
    %v9859 = vsel %vm1042, %v9857, %v9858
    %v9860 = vrot.slane %v9842, 2
    %v9861 = vrot.slane %v9844, 2
    %v9862 = vsel %vm1042, %v9860, %v9861
    %v9863 = vrot.slane %v9843, 2
    %v9864 = vrot.slane %v9845, 2
    %v9865 = vsel %vm1042, %v9863, %v9864
    %9866 = vrot.lane.b32.xlu0 %v9856, 126
    %v9867 = vpop.permute.xlu0 %9866
    %9868 = vrot.lane.b32.xlu0 %v9859, 126
    %v9869 = vpop.permute.xlu0 %9868
    %9870 = vrot.lane.b32.xlu0 %v9855, 126
    %v9871 = vpop.permute.xlu0 %9870
    %9872 = vrot.lane.b32.xlu0 %v9858, 126
    %v9873 = vpop.permute.xlu0 %9872
    %9874 = vrot.lane.b32.xlu0 %v9862, 126
    %v9875 = vpop.permute.xlu0 %9874
    %9876 = vrot.lane.b32.xlu0 %v9865, 126
    %v9877 = vpop.permute.xlu0 %9876
    %9878 = vrot.lane.b32.xlu0 %v9861, 126
    %v9879 = vpop.permute.xlu0 %9878
    %9880 = vrot.lane.b32.xlu0 %v9864, 126
    %v9881 = vpop.permute.xlu0 %9880
    %v9882 = vsel %vm372, %v9867, %v9869
    %v9883 = vsel %vm372, %v9871, %v9873
    %v9884 = vsel %vm372, %v9875, %v9877
    %v9885 = vsel %vm372, %v9879, %v9881
    %v9890 = vadd.f32 %v9719, %v9882
    %v9891 = vadd.f32 %v9720, %v9883
    %v9892 = vadd.f32 %v9721, %v9884
    %v9893 = vadd.f32 %v9722, %v9885
    %v9894 = vstv %s8819
    %v9895 = vmul.f32 %v8733, %v9894
    %v9896 = vmul.f32 %v8734, %v9894
    %v9897 = vmul.f32 %v8735, %v9894
    %v9898 = vmul.f32 %v8736, %v9894
    %v9899 = vmul.f32 %v8737, %v9894
    %v9900 = vmul.f32 %v8738, %v9894
    %v9901 = vmul.f32 %v8739, %v9894
    %v9902 = vmul.f32 %v8740, %v9894
    %v9911 = vrot.slane %v9895, 2
    %v9912 = vrot.slane %v9897, 2
    %v9913 = vsel %vm1042, %v9911, %v9912
    %v9914 = vrot.slane %v9896, 2
    %v9915 = vrot.slane %v9898, 2
    %v9916 = vsel %vm1042, %v9914, %v9915
    %v9917 = vrot.slane %v9899, 2
    %v9918 = vrot.slane %v9901, 2
    %v9919 = vsel %vm1042, %v9917, %v9918
    %v9920 = vrot.slane %v9900, 2
    %v9921 = vrot.slane %v9902, 2
    %v9922 = vsel %vm1042, %v9920, %v9921
    %9923 = vrot.lane.b32.xlu0 %v9913, 126
    %v9924 = vpop.permute.xlu0 %9923
    %9925 = vrot.lane.b32.xlu0 %v9916, 126
    %v9926 = vpop.permute.xlu0 %9925
    %9927 = vrot.lane.b32.xlu0 %v9912, 126
    %v9928 = vpop.permute.xlu0 %9927
    %9929 = vrot.lane.b32.xlu0 %v9915, 126
    %v9930 = vpop.permute.xlu0 %9929
    %9931 = vrot.lane.b32.xlu0 %v9919, 126
    %v9932 = vpop.permute.xlu0 %9931
    %9933 = vrot.lane.b32.xlu0 %v9922, 126
    %v9934 = vpop.permute.xlu0 %9933
    %9935 = vrot.lane.b32.xlu0 %v9918, 126
    %v9936 = vpop.permute.xlu0 %9935
    %9937 = vrot.lane.b32.xlu0 %v9921, 126
    %v9938 = vpop.permute.xlu0 %9937
    %v9939 = vsel %vm372, %v9924, %v9926
    %v9940 = vsel %vm372, %v9928, %v9930
    %v9941 = vsel %vm372, %v9932, %v9934
    %v9942 = vsel %vm372, %v9936, %v9938
    %v9947 = vadd.f32 %v9776, %v9939
    %v9948 = vadd.f32 %v9777, %v9940
    %v9949 = vadd.f32 %v9778, %v9941
    %v9950 = vadd.f32 %v9779, %v9942
    %v9951 = vadd.f32 %v8839, %v9833
    %v9952 = vadd.f32 %v8839, %v9834
    %v9953 = vadd.f32 %v8839, %v9835
    %v9954 = vadd.f32 %v8839, %v9836
    %v9955 = vadd.f32 %v8841, %v9890
    %v9956 = vadd.f32 %v8841, %v9891
    %v9957 = vadd.f32 %v8841, %v9892
    %v9958 = vadd.f32 %v8841, %v9893
    %v9959 = vadd.f32 %v8843, %v9947
    %v9960 = vadd.f32 %v8843, %v9948
    %v9961 = vadd.f32 %v8843, %v9949
    %v9962 = vadd.f32 %v8843, %v9950
    %v9963 = vstv %s8766
    %v9964 = vmul.f32 %v8741, %v9963
    %v9965 = vmul.f32 %v8743, %v9963
    %v9966 = vmul.f32 %v8745, %v9963
    %v9967 = vmul.f32 %v8747, %v9963
    %v9968 = vstv %s8793
    %v9969 = vmul.f32 %v8741, %v9968
    %v9970 = vmul.f32 %v8743, %v9968
    %v9971 = vmul.f32 %v8745, %v9968
    %v9972 = vmul.f32 %v8747, %v9968
    %v9973 = vstv %s8820
    %v9974 = vmul.f32 %v8741, %v9973
    %v9975 = vmul.f32 %v8743, %v9973
    %v9976 = vmul.f32 %v8745, %v9973
    %v9977 = vmul.f32 %v8747, %v9973
    %v9978 = vstv %s8767
    %v9979 = vmul.f32 %v8741, %v9978
    %v9980 = vmul.f32 %v8742, %v9978
    %v9981 = vmul.f32 %v8743, %v9978
    %v9982 = vmul.f32 %v8744, %v9978
    %v9983 = vmul.f32 %v8745, %v9978
    %v9984 = vmul.f32 %v8746, %v9978
    %v9985 = vmul.f32 %v8747, %v9978
    %v9986 = vmul.f32 %v8748, %v9978
    %9995 = vrot.lane.b32.xlu0 %v9979, 127
    %v9996 = vpop.permute.xlu0 %9995
    %9997 = vrot.lane.b32.xlu0 %v9980, 127
    %v9998 = vpop.permute.xlu0 %9997
    %9999 = vrot.lane.b32.xlu0 %v9981, 127
    %v10000 = vpop.permute.xlu0 %9999
    %10001 = vrot.lane.b32.xlu0 %v9982, 127
    %v10002 = vpop.permute.xlu0 %10001
    %10003 = vrot.lane.b32.xlu0 %v9983, 127
    %v10004 = vpop.permute.xlu0 %10003
    %10005 = vrot.lane.b32.xlu0 %v9984, 127
    %v10006 = vpop.permute.xlu0 %10005
    %10007 = vrot.lane.b32.xlu0 %v9985, 127
    %v10008 = vpop.permute.xlu0 %10007
    %10009 = vrot.lane.b32.xlu0 %v9986, 127
    %v10010 = vpop.permute.xlu0 %10009
    %v10011 = vsel %vm212, %v9996, %v9998
    %v10012 = vsel %vm212, %v10000, %v10002
    %v10013 = vsel %vm212, %v10004, %v10006
    %v10014 = vsel %vm212, %v10008, %v10010
    %v10019 = vadd.f32 %v9964, %v10011
    %v10020 = vadd.f32 %v9965, %v10012
    %v10021 = vadd.f32 %v9966, %v10013
    %v10022 = vadd.f32 %v9967, %v10014
    %v10023 = vstv %s8794
    %v10024 = vmul.f32 %v8741, %v10023
    %v10025 = vmul.f32 %v8742, %v10023
    %v10026 = vmul.f32 %v8743, %v10023
    %v10027 = vmul.f32 %v8744, %v10023
    %v10028 = vmul.f32 %v8745, %v10023
    %v10029 = vmul.f32 %v8746, %v10023
    %v10030 = vmul.f32 %v8747, %v10023
    %v10031 = vmul.f32 %v8748, %v10023
    %10040 = vrot.lane.b32.xlu0 %v10024, 127
    %v10041 = vpop.permute.xlu0 %10040
    %10042 = vrot.lane.b32.xlu0 %v10025, 127
    %v10043 = vpop.permute.xlu0 %10042
    %10044 = vrot.lane.b32.xlu0 %v10026, 127
    %v10045 = vpop.permute.xlu0 %10044
    %10046 = vrot.lane.b32.xlu0 %v10027, 127
    %v10047 = vpop.permute.xlu0 %10046
    %10048 = vrot.lane.b32.xlu0 %v10028, 127
    %v10049 = vpop.permute.xlu0 %10048
    %10050 = vrot.lane.b32.xlu0 %v10029, 127
    %v10051 = vpop.permute.xlu0 %10050
    %10052 = vrot.lane.b32.xlu0 %v10030, 127
    %v10053 = vpop.permute.xlu0 %10052
    %10054 = vrot.lane.b32.xlu0 %v10031, 127
    %v10055 = vpop.permute.xlu0 %10054
    %v10056 = vsel %vm212, %v10041, %v10043
    %v10057 = vsel %vm212, %v10045, %v10047
    %v10058 = vsel %vm212, %v10049, %v10051
    %v10059 = vsel %vm212, %v10053, %v10055
    %v10064 = vadd.f32 %v9969, %v10056
    %v10065 = vadd.f32 %v9970, %v10057
    %v10066 = vadd.f32 %v9971, %v10058
    %v10067 = vadd.f32 %v9972, %v10059
    %v10068 = vstv %s8821
    %v10069 = vmul.f32 %v8741, %v10068
    %v10070 = vmul.f32 %v8742, %v10068
    %v10071 = vmul.f32 %v8743, %v10068
    %v10072 = vmul.f32 %v8744, %v10068
    %v10073 = vmul.f32 %v8745, %v10068
    %v10074 = vmul.f32 %v8746, %v10068
    %v10075 = vmul.f32 %v8747, %v10068
    %v10076 = vmul.f32 %v8748, %v10068
    %10085 = vrot.lane.b32.xlu0 %v10069, 127
    %v10086 = vpop.permute.xlu0 %10085
    %10087 = vrot.lane.b32.xlu0 %v10070, 127
    %v10088 = vpop.permute.xlu0 %10087
    %10089 = vrot.lane.b32.xlu0 %v10071, 127
    %v10090 = vpop.permute.xlu0 %10089
    %10091 = vrot.lane.b32.xlu0 %v10072, 127
    %v10092 = vpop.permute.xlu0 %10091
    %10093 = vrot.lane.b32.xlu0 %v10073, 127
    %v10094 = vpop.permute.xlu0 %10093
    %10095 = vrot.lane.b32.xlu0 %v10074, 127
    %v10096 = vpop.permute.xlu0 %10095
    %10097 = vrot.lane.b32.xlu0 %v10075, 127
    %v10098 = vpop.permute.xlu0 %10097
    %10099 = vrot.lane.b32.xlu0 %v10076, 127
    %v10100 = vpop.permute.xlu0 %10099
    %v10101 = vsel %vm212, %v10086, %v10088
    %v10102 = vsel %vm212, %v10090, %v10092
    %v10103 = vsel %vm212, %v10094, %v10096
    %v10104 = vsel %vm212, %v10098, %v10100
    %v10109 = vadd.f32 %v9974, %v10101
    %v10110 = vadd.f32 %v9975, %v10102
    %v10111 = vadd.f32 %v9976, %v10103
    %v10112 = vadd.f32 %v9977, %v10104
    %v10113 = vstv %s8768
    %v10114 = vmul.f32 %v8741, %v10113
    %v10115 = vmul.f32 %v8742, %v10113
    %v10116 = vmul.f32 %v8743, %v10113
    %v10117 = vmul.f32 %v8744, %v10113
    %v10118 = vmul.f32 %v8745, %v10113
    %v10119 = vmul.f32 %v8746, %v10113
    %v10120 = vmul.f32 %v8747, %v10113
    %v10121 = vmul.f32 %v8748, %v10113
    %10130 = vrot.lane.b32.xlu0 %v10114, 126
    %v10131 = vpop.permute.xlu0 %10130
    %10132 = vrot.lane.b32.xlu0 %v10115, 126
    %v10133 = vpop.permute.xlu0 %10132
    %10134 = vrot.lane.b32.xlu0 %v10116, 126
    %v10135 = vpop.permute.xlu0 %10134
    %10136 = vrot.lane.b32.xlu0 %v10117, 126
    %v10137 = vpop.permute.xlu0 %10136
    %10138 = vrot.lane.b32.xlu0 %v10118, 126
    %v10139 = vpop.permute.xlu0 %10138
    %10140 = vrot.lane.b32.xlu0 %v10119, 126
    %v10141 = vpop.permute.xlu0 %10140
    %10142 = vrot.lane.b32.xlu0 %v10120, 126
    %v10143 = vpop.permute.xlu0 %10142
    %10144 = vrot.lane.b32.xlu0 %v10121, 126
    %v10145 = vpop.permute.xlu0 %10144
    %v10146 = vsel %vm372, %v10131, %v10133
    %v10147 = vsel %vm372, %v10135, %v10137
    %v10148 = vsel %vm372, %v10139, %v10141
    %v10149 = vsel %vm372, %v10143, %v10145
    %v10154 = vadd.f32 %v10019, %v10146
    %v10155 = vadd.f32 %v10020, %v10147
    %v10156 = vadd.f32 %v10021, %v10148
    %v10157 = vadd.f32 %v10022, %v10149
    %v10158 = vstv %s8795
    %v10159 = vmul.f32 %v8741, %v10158
    %v10160 = vmul.f32 %v8742, %v10158
    %v10161 = vmul.f32 %v8743, %v10158
    %v10162 = vmul.f32 %v8744, %v10158
    %v10163 = vmul.f32 %v8745, %v10158
    %v10164 = vmul.f32 %v8746, %v10158
    %v10165 = vmul.f32 %v8747, %v10158
    %v10166 = vmul.f32 %v8748, %v10158
    %10175 = vrot.lane.b32.xlu0 %v10159, 126
    %v10176 = vpop.permute.xlu0 %10175
    %10177 = vrot.lane.b32.xlu0 %v10160, 126
    %v10178 = vpop.permute.xlu0 %10177
    %10179 = vrot.lane.b32.xlu0 %v10161, 126
    %v10180 = vpop.permute.xlu0 %10179
    %10181 = vrot.lane.b32.xlu0 %v10162, 126
    %v10182 = vpop.permute.xlu0 %10181
    %10183 = vrot.lane.b32.xlu0 %v10163, 126
    %v10184 = vpop.permute.xlu0 %10183
    %10185 = vrot.lane.b32.xlu0 %v10164, 126
    %v10186 = vpop.permute.xlu0 %10185
    %10187 = vrot.lane.b32.xlu0 %v10165, 126
    %v10188 = vpop.permute.xlu0 %10187
    %10189 = vrot.lane.b32.xlu0 %v10166, 126
    %v10190 = vpop.permute.xlu0 %10189
    %v10191 = vsel %vm372, %v10176, %v10178
    %v10192 = vsel %vm372, %v10180, %v10182
    %v10193 = vsel %vm372, %v10184, %v10186
    %v10194 = vsel %vm372, %v10188, %v10190
    %v10199 = vadd.f32 %v10064, %v10191
    %v10200 = vadd.f32 %v10065, %v10192
    %v10201 = vadd.f32 %v10066, %v10193
    %v10202 = vadd.f32 %v10067, %v10194
    %v10203 = vstv %s8822
    %v10204 = vmul.f32 %v8741, %v10203
    %v10205 = vmul.f32 %v8742, %v10203
    %v10206 = vmul.f32 %v8743, %v10203
    %v10207 = vmul.f32 %v8744, %v10203
    %v10208 = vmul.f32 %v8745, %v10203
    %v10209 = vmul.f32 %v8746, %v10203
    %v10210 = vmul.f32 %v8747, %v10203
    %v10211 = vmul.f32 %v8748, %v10203
    %10220 = vrot.lane.b32.xlu0 %v10204, 126
    %v10221 = vpop.permute.xlu0 %10220
    %10222 = vrot.lane.b32.xlu0 %v10205, 126
    %v10223 = vpop.permute.xlu0 %10222
    %10224 = vrot.lane.b32.xlu0 %v10206, 126
    %v10225 = vpop.permute.xlu0 %10224
    %10226 = vrot.lane.b32.xlu0 %v10207, 126
    %v10227 = vpop.permute.xlu0 %10226
    %10228 = vrot.lane.b32.xlu0 %v10208, 126
    %v10229 = vpop.permute.xlu0 %10228
    %10230 = vrot.lane.b32.xlu0 %v10209, 126
    %v10231 = vpop.permute.xlu0 %10230
    %10232 = vrot.lane.b32.xlu0 %v10210, 126
    %v10233 = vpop.permute.xlu0 %10232
    %10234 = vrot.lane.b32.xlu0 %v10211, 126
    %v10235 = vpop.permute.xlu0 %10234
    %v10236 = vsel %vm372, %v10221, %v10223
    %v10237 = vsel %vm372, %v10225, %v10227
    %v10238 = vsel %vm372, %v10229, %v10231
    %v10239 = vsel %vm372, %v10233, %v10235
    %v10244 = vadd.f32 %v10109, %v10236
    %v10245 = vadd.f32 %v10110, %v10237
    %v10246 = vadd.f32 %v10111, %v10238
    %v10247 = vadd.f32 %v10112, %v10239
    %v10248 = vstv %s8769
    %v10249 = vmul.f32 %v8741, %v10248
    %v10250 = vmul.f32 %v8743, %v10248
    %v10251 = vmul.f32 %v8745, %v10248
    %v10252 = vmul.f32 %v8747, %v10248
    %v10257 = vrot.slane %v10249, 1
    %v10258 = vrot.slane %v10250, 1
    %v10259 = vsel %vm516, %v10257, %v10258
    %v10260 = vrot.slane %v10251, 1
    %v10261 = vrot.slane %v10252, 1
    %v10262 = vsel %vm516, %v10260, %v10261
    %v10267 = vadd.f32 %v10154, %v10259
    %v10268 = vadd.f32 %v10155, %v10258
    %v10269 = vadd.f32 %v10156, %v10262
    %v10270 = vadd.f32 %v10157, %v10261
    %v10271 = vstv %s8796
    %v10272 = vmul.f32 %v8741, %v10271
    %v10273 = vmul.f32 %v8743, %v10271
    %v10274 = vmul.f32 %v8745, %v10271
    %v10275 = vmul.f32 %v8747, %v10271
    %v10280 = vrot.slane %v10272, 1
    %v10281 = vrot.slane %v10273, 1
    %v10282 = vsel %vm516, %v10280, %v10281
    %v10283 = vrot.slane %v10274, 1
    %v10284 = vrot.slane %v10275, 1
    %v10285 = vsel %vm516, %v10283, %v10284
    %v10290 = vadd.f32 %v10199, %v10282
    %v10291 = vadd.f32 %v10200, %v10281
    %v10292 = vadd.f32 %v10201, %v10285
    %v10293 = vadd.f32 %v10202, %v10284
    %v10294 = vstv %s8823
    %v10295 = vmul.f32 %v8741, %v10294
    %v10296 = vmul.f32 %v8743, %v10294
    %v10297 = vmul.f32 %v8745, %v10294
    %v10298 = vmul.f32 %v8747, %v10294
    %v10303 = vrot.slane %v10295, 1
    %v10304 = vrot.slane %v10296, 1
    %v10305 = vsel %vm516, %v10303, %v10304
    %v10306 = vrot.slane %v10297, 1
    %v10307 = vrot.slane %v10298, 1
    %v10308 = vsel %vm516, %v10306, %v10307
    %v10313 = vadd.f32 %v10244, %v10305
    %v10314 = vadd.f32 %v10245, %v10304
    %v10315 = vadd.f32 %v10246, %v10308
    %v10316 = vadd.f32 %v10247, %v10307
    %v10317 = vstv %s8770
    %v10318 = vmul.f32 %v8741, %v10317
    %v10319 = vmul.f32 %v8742, %v10317
    %v10320 = vmul.f32 %v8743, %v10317
    %v10321 = vmul.f32 %v8744, %v10317
    %v10322 = vmul.f32 %v8745, %v10317
    %v10323 = vmul.f32 %v8746, %v10317
    %v10324 = vmul.f32 %v8747, %v10317
    %v10325 = vmul.f32 %v8748, %v10317
    %v10334 = vrot.slane %v10318, 1
    %v10335 = vrot.slane %v10320, 1
    %v10336 = vsel %vm516, %v10334, %v10335
    %v10337 = vrot.slane %v10319, 1
    %v10338 = vrot.slane %v10321, 1
    %v10339 = vsel %vm516, %v10337, %v10338
    %v10340 = vrot.slane %v10322, 1
    %v10341 = vrot.slane %v10324, 1
    %v10342 = vsel %vm516, %v10340, %v10341
    %v10343 = vrot.slane %v10323, 1
    %v10344 = vrot.slane %v10325, 1
    %v10345 = vsel %vm516, %v10343, %v10344
    %10346 = vrot.lane.b32.xlu0 %v10336, 127
    %v10347 = vpop.permute.xlu0 %10346
    %10348 = vrot.lane.b32.xlu0 %v10339, 127
    %v10349 = vpop.permute.xlu0 %10348
    %10350 = vrot.lane.b32.xlu0 %v10335, 127
    %v10351 = vpop.permute.xlu0 %10350
    %10352 = vrot.lane.b32.xlu0 %v10338, 127
    %v10353 = vpop.permute.xlu0 %10352
    %10354 = vrot.lane.b32.xlu0 %v10342, 127
    %v10355 = vpop.permute.xlu0 %10354
    %10356 = vrot.lane.b32.xlu0 %v10345, 127
    %v10357 = vpop.permute.xlu0 %10356
    %10358 = vrot.lane.b32.xlu0 %v10341, 127
    %v10359 = vpop.permute.xlu0 %10358
    %10360 = vrot.lane.b32.xlu0 %v10344, 127
    %v10361 = vpop.permute.xlu0 %10360
    %v10362 = vsel %vm212, %v10347, %v10349
    %v10363 = vsel %vm212, %v10351, %v10353
    %v10364 = vsel %vm212, %v10355, %v10357
    %v10365 = vsel %vm212, %v10359, %v10361
    %v10370 = vadd.f32 %v10267, %v10362
    %v10371 = vadd.f32 %v10268, %v10363
    %v10372 = vadd.f32 %v10269, %v10364
    %v10373 = vadd.f32 %v10270, %v10365
    %v10374 = vstv %s8797
    %v10375 = vmul.f32 %v8741, %v10374
    %v10376 = vmul.f32 %v8742, %v10374
    %v10377 = vmul.f32 %v8743, %v10374
    %v10378 = vmul.f32 %v8744, %v10374
    %v10379 = vmul.f32 %v8745, %v10374
    %v10380 = vmul.f32 %v8746, %v10374
    %v10381 = vmul.f32 %v8747, %v10374
    %v10382 = vmul.f32 %v8748, %v10374
    %v10391 = vrot.slane %v10375, 1
    %v10392 = vrot.slane %v10377, 1
    %v10393 = vsel %vm516, %v10391, %v10392
    %v10394 = vrot.slane %v10376, 1
    %v10395 = vrot.slane %v10378, 1
    %v10396 = vsel %vm516, %v10394, %v10395
    %v10397 = vrot.slane %v10379, 1
    %v10398 = vrot.slane %v10381, 1
    %v10399 = vsel %vm516, %v10397, %v10398
    %v10400 = vrot.slane %v10380, 1
    %v10401 = vrot.slane %v10382, 1
    %v10402 = vsel %vm516, %v10400, %v10401
    %10403 = vrot.lane.b32.xlu0 %v10393, 127
    %v10404 = vpop.permute.xlu0 %10403
    %10405 = vrot.lane.b32.xlu0 %v10396, 127
    %v10406 = vpop.permute.xlu0 %10405
    %10407 = vrot.lane.b32.xlu0 %v10392, 127
    %v10408 = vpop.permute.xlu0 %10407
    %10409 = vrot.lane.b32.xlu0 %v10395, 127
    %v10410 = vpop.permute.xlu0 %10409
    %10411 = vrot.lane.b32.xlu0 %v10399, 127
    %v10412 = vpop.permute.xlu0 %10411
    %10413 = vrot.lane.b32.xlu0 %v10402, 127
    %v10414 = vpop.permute.xlu0 %10413
    %10415 = vrot.lane.b32.xlu0 %v10398, 127
    %v10416 = vpop.permute.xlu0 %10415
    %10417 = vrot.lane.b32.xlu0 %v10401, 127
    %v10418 = vpop.permute.xlu0 %10417
    %v10419 = vsel %vm212, %v10404, %v10406
    %v10420 = vsel %vm212, %v10408, %v10410
    %v10421 = vsel %vm212, %v10412, %v10414
    %v10422 = vsel %vm212, %v10416, %v10418
    %v10427 = vadd.f32 %v10290, %v10419
    %v10428 = vadd.f32 %v10291, %v10420
    %v10429 = vadd.f32 %v10292, %v10421
    %v10430 = vadd.f32 %v10293, %v10422
    %v10431 = vstv %s8824
    %v10432 = vmul.f32 %v8741, %v10431
    %v10433 = vmul.f32 %v8742, %v10431
    %v10434 = vmul.f32 %v8743, %v10431
    %v10435 = vmul.f32 %v8744, %v10431
    %v10436 = vmul.f32 %v8745, %v10431
    %v10437 = vmul.f32 %v8746, %v10431
    %v10438 = vmul.f32 %v8747, %v10431
    %v10439 = vmul.f32 %v8748, %v10431
    %v10448 = vrot.slane %v10432, 1
    %v10449 = vrot.slane %v10434, 1
    %v10450 = vsel %vm516, %v10448, %v10449
    %v10451 = vrot.slane %v10433, 1
    %v10452 = vrot.slane %v10435, 1
    %v10453 = vsel %vm516, %v10451, %v10452
    %v10454 = vrot.slane %v10436, 1
    %v10455 = vrot.slane %v10438, 1
    %v10456 = vsel %vm516, %v10454, %v10455
    %v10457 = vrot.slane %v10437, 1
    %v10458 = vrot.slane %v10439, 1
    %v10459 = vsel %vm516, %v10457, %v10458
    %10460 = vrot.lane.b32.xlu0 %v10450, 127
    %v10461 = vpop.permute.xlu0 %10460
    %10462 = vrot.lane.b32.xlu0 %v10453, 127
    %v10463 = vpop.permute.xlu0 %10462
    %10464 = vrot.lane.b32.xlu0 %v10449, 127
    %v10465 = vpop.permute.xlu0 %10464
    %10466 = vrot.lane.b32.xlu0 %v10452, 127
    %v10467 = vpop.permute.xlu0 %10466
    %10468 = vrot.lane.b32.xlu0 %v10456, 127
    %v10469 = vpop.permute.xlu0 %10468
    %10470 = vrot.lane.b32.xlu0 %v10459, 127
    %v10471 = vpop.permute.xlu0 %10470
    %10472 = vrot.lane.b32.xlu0 %v10455, 127
    %v10473 = vpop.permute.xlu0 %10472
    %10474 = vrot.lane.b32.xlu0 %v10458, 127
    %v10475 = vpop.permute.xlu0 %10474
    %v10476 = vsel %vm212, %v10461, %v10463
    %v10477 = vsel %vm212, %v10465, %v10467
    %v10478 = vsel %vm212, %v10469, %v10471
    %v10479 = vsel %vm212, %v10473, %v10475
    %v10484 = vadd.f32 %v10313, %v10476
    %v10485 = vadd.f32 %v10314, %v10477
    %v10486 = vadd.f32 %v10315, %v10478
    %v10487 = vadd.f32 %v10316, %v10479
    %v10488 = vstv %s8771
    %v10489 = vmul.f32 %v8741, %v10488
    %v10490 = vmul.f32 %v8742, %v10488
    %v10491 = vmul.f32 %v8743, %v10488
    %v10492 = vmul.f32 %v8744, %v10488
    %v10493 = vmul.f32 %v8745, %v10488
    %v10494 = vmul.f32 %v8746, %v10488
    %v10495 = vmul.f32 %v8747, %v10488
    %v10496 = vmul.f32 %v8748, %v10488
    %v10505 = vrot.slane %v10489, 1
    %v10506 = vrot.slane %v10491, 1
    %v10507 = vsel %vm516, %v10505, %v10506
    %v10508 = vrot.slane %v10490, 1
    %v10509 = vrot.slane %v10492, 1
    %v10510 = vsel %vm516, %v10508, %v10509
    %v10511 = vrot.slane %v10493, 1
    %v10512 = vrot.slane %v10495, 1
    %v10513 = vsel %vm516, %v10511, %v10512
    %v10514 = vrot.slane %v10494, 1
    %v10515 = vrot.slane %v10496, 1
    %v10516 = vsel %vm516, %v10514, %v10515
    %10517 = vrot.lane.b32.xlu0 %v10507, 126
    %v10518 = vpop.permute.xlu0 %10517
    %10519 = vrot.lane.b32.xlu0 %v10510, 126
    %v10520 = vpop.permute.xlu0 %10519
    %10521 = vrot.lane.b32.xlu0 %v10506, 126
    %v10522 = vpop.permute.xlu0 %10521
    %10523 = vrot.lane.b32.xlu0 %v10509, 126
    %v10524 = vpop.permute.xlu0 %10523
    %10525 = vrot.lane.b32.xlu0 %v10513, 126
    %v10526 = vpop.permute.xlu0 %10525
    %10527 = vrot.lane.b32.xlu0 %v10516, 126
    %v10528 = vpop.permute.xlu0 %10527
    %10529 = vrot.lane.b32.xlu0 %v10512, 126
    %v10530 = vpop.permute.xlu0 %10529
    %10531 = vrot.lane.b32.xlu0 %v10515, 126
    %v10532 = vpop.permute.xlu0 %10531
    %v10533 = vsel %vm372, %v10518, %v10520
    %v10534 = vsel %vm372, %v10522, %v10524
    %v10535 = vsel %vm372, %v10526, %v10528
    %v10536 = vsel %vm372, %v10530, %v10532
    %v10541 = vadd.f32 %v10370, %v10533
    %v10542 = vadd.f32 %v10371, %v10534
    %v10543 = vadd.f32 %v10372, %v10535
    %v10544 = vadd.f32 %v10373, %v10536
    %v10545 = vstv %s8798
    %v10546 = vmul.f32 %v8741, %v10545
    %v10547 = vmul.f32 %v8742, %v10545
    %v10548 = vmul.f32 %v8743, %v10545
    %v10549 = vmul.f32 %v8744, %v10545
    %v10550 = vmul.f32 %v8745, %v10545
    %v10551 = vmul.f32 %v8746, %v10545
    %v10552 = vmul.f32 %v8747, %v10545
    %v10553 = vmul.f32 %v8748, %v10545
    %v10562 = vrot.slane %v10546, 1
    %v10563 = vrot.slane %v10548, 1
    %v10564 = vsel %vm516, %v10562, %v10563
    %v10565 = vrot.slane %v10547, 1
    %v10566 = vrot.slane %v10549, 1
    %v10567 = vsel %vm516, %v10565, %v10566
    %v10568 = vrot.slane %v10550, 1
    %v10569 = vrot.slane %v10552, 1
    %v10570 = vsel %vm516, %v10568, %v10569
    %v10571 = vrot.slane %v10551, 1
    %v10572 = vrot.slane %v10553, 1
    %v10573 = vsel %vm516, %v10571, %v10572
    %10574 = vrot.lane.b32.xlu0 %v10564, 126
    %v10575 = vpop.permute.xlu0 %10574
    %10576 = vrot.lane.b32.xlu0 %v10567, 126
    %v10577 = vpop.permute.xlu0 %10576
    %10578 = vrot.lane.b32.xlu0 %v10563, 126
    %v10579 = vpop.permute.xlu0 %10578
    %10580 = vrot.lane.b32.xlu0 %v10566, 126
    %v10581 = vpop.permute.xlu0 %10580
    %10582 = vrot.lane.b32.xlu0 %v10570, 126
    %v10583 = vpop.permute.xlu0 %10582
    %10584 = vrot.lane.b32.xlu0 %v10573, 126
    %v10585 = vpop.permute.xlu0 %10584
    %10586 = vrot.lane.b32.xlu0 %v10569, 126
    %v10587 = vpop.permute.xlu0 %10586
    %10588 = vrot.lane.b32.xlu0 %v10572, 126
    %v10589 = vpop.permute.xlu0 %10588
    %v10590 = vsel %vm372, %v10575, %v10577
    %v10591 = vsel %vm372, %v10579, %v10581
    %v10592 = vsel %vm372, %v10583, %v10585
    %v10593 = vsel %vm372, %v10587, %v10589
    %v10598 = vadd.f32 %v10427, %v10590
    %v10599 = vadd.f32 %v10428, %v10591
    %v10600 = vadd.f32 %v10429, %v10592
    %v10601 = vadd.f32 %v10430, %v10593
    %v10602 = vstv %s8825
    %v10603 = vmul.f32 %v8741, %v10602
    %v10604 = vmul.f32 %v8742, %v10602
    %v10605 = vmul.f32 %v8743, %v10602
    %v10606 = vmul.f32 %v8744, %v10602
    %v10607 = vmul.f32 %v8745, %v10602
    %v10608 = vmul.f32 %v8746, %v10602
    %v10609 = vmul.f32 %v8747, %v10602
    %v10610 = vmul.f32 %v8748, %v10602
    %v10619 = vrot.slane %v10603, 1
    %v10620 = vrot.slane %v10605, 1
    %v10621 = vsel %vm516, %v10619, %v10620
    %v10622 = vrot.slane %v10604, 1
    %v10623 = vrot.slane %v10606, 1
    %v10624 = vsel %vm516, %v10622, %v10623
    %v10625 = vrot.slane %v10607, 1
    %v10626 = vrot.slane %v10609, 1
    %v10627 = vsel %vm516, %v10625, %v10626
    %v10628 = vrot.slane %v10608, 1
    %v10629 = vrot.slane %v10610, 1
    %v10630 = vsel %vm516, %v10628, %v10629
    %10631 = vrot.lane.b32.xlu0 %v10621, 126
    %v10632 = vpop.permute.xlu0 %10631
    %10633 = vrot.lane.b32.xlu0 %v10624, 126
    %v10634 = vpop.permute.xlu0 %10633
    %10635 = vrot.lane.b32.xlu0 %v10620, 126
    %v10636 = vpop.permute.xlu0 %10635
    %10637 = vrot.lane.b32.xlu0 %v10623, 126
    %v10638 = vpop.permute.xlu0 %10637
    %10639 = vrot.lane.b32.xlu0 %v10627, 126
    %v10640 = vpop.permute.xlu0 %10639
    %10641 = vrot.lane.b32.xlu0 %v10630, 126
    %v10642 = vpop.permute.xlu0 %10641
    %10643 = vrot.lane.b32.xlu0 %v10626, 126
    %v10644 = vpop.permute.xlu0 %10643
    %10645 = vrot.lane.b32.xlu0 %v10629, 126
    %v10646 = vpop.permute.xlu0 %10645
    %v10647 = vsel %vm372, %v10632, %v10634
    %v10648 = vsel %vm372, %v10636, %v10638
    %v10649 = vsel %vm372, %v10640, %v10642
    %v10650 = vsel %vm372, %v10644, %v10646
    %v10655 = vadd.f32 %v10484, %v10647
    %v10656 = vadd.f32 %v10485, %v10648
    %v10657 = vadd.f32 %v10486, %v10649
    %v10658 = vadd.f32 %v10487, %v10650
    %v10659 = vstv %s8772
    %v10660 = vmul.f32 %v8741, %v10659
    %v10661 = vmul.f32 %v8743, %v10659
    %v10662 = vmul.f32 %v8745, %v10659
    %v10663 = vmul.f32 %v8747, %v10659
    %v10668 = vrot.slane %v10660, 2
    %v10669 = vrot.slane %v10661, 2
    %v10670 = vsel %vm1042, %v10668, %v10669
    %v10671 = vrot.slane %v10662, 2
    %v10672 = vrot.slane %v10663, 2
    %v10673 = vsel %vm1042, %v10671, %v10672
    %v10678 = vadd.f32 %v10541, %v10670
    %v10679 = vadd.f32 %v10542, %v10669
    %v10680 = vadd.f32 %v10543, %v10673
    %v10681 = vadd.f32 %v10544, %v10672
    %v10682 = vstv %s8799
    %v10683 = vmul.f32 %v8741, %v10682
    %v10684 = vmul.f32 %v8743, %v10682
    %v10685 = vmul.f32 %v8745, %v10682
    %v10686 = vmul.f32 %v8747, %v10682
    %v10691 = vrot.slane %v10683, 2
    %v10692 = vrot.slane %v10684, 2
    %v10693 = vsel %vm1042, %v10691, %v10692
    %v10694 = vrot.slane %v10685, 2
    %v10695 = vrot.slane %v10686, 2
    %v10696 = vsel %vm1042, %v10694, %v10695
    %v10701 = vadd.f32 %v10598, %v10693
    %v10702 = vadd.f32 %v10599, %v10692
    %v10703 = vadd.f32 %v10600, %v10696
    %v10704 = vadd.f32 %v10601, %v10695
    %v10705 = vstv %s8826
    %v10706 = vmul.f32 %v8741, %v10705
    %v10707 = vmul.f32 %v8743, %v10705
    %v10708 = vmul.f32 %v8745, %v10705
    %v10709 = vmul.f32 %v8747, %v10705
    %v10714 = vrot.slane %v10706, 2
    %v10715 = vrot.slane %v10707, 2
    %v10716 = vsel %vm1042, %v10714, %v10715
    %v10717 = vrot.slane %v10708, 2
    %v10718 = vrot.slane %v10709, 2
    %v10719 = vsel %vm1042, %v10717, %v10718
    %v10724 = vadd.f32 %v10655, %v10716
    %v10725 = vadd.f32 %v10656, %v10715
    %v10726 = vadd.f32 %v10657, %v10719
    %v10727 = vadd.f32 %v10658, %v10718
    %v10728 = vstv %s8773
    %v10729 = vmul.f32 %v8741, %v10728
    %v10730 = vmul.f32 %v8742, %v10728
    %v10731 = vmul.f32 %v8743, %v10728
    %v10732 = vmul.f32 %v8744, %v10728
    %v10733 = vmul.f32 %v8745, %v10728
    %v10734 = vmul.f32 %v8746, %v10728
    %v10735 = vmul.f32 %v8747, %v10728
    %v10736 = vmul.f32 %v8748, %v10728
    %v10745 = vrot.slane %v10729, 2
    %v10746 = vrot.slane %v10731, 2
    %v10747 = vsel %vm1042, %v10745, %v10746
    %v10748 = vrot.slane %v10730, 2
    %v10749 = vrot.slane %v10732, 2
    %v10750 = vsel %vm1042, %v10748, %v10749
    %v10751 = vrot.slane %v10733, 2
    %v10752 = vrot.slane %v10735, 2
    %v10753 = vsel %vm1042, %v10751, %v10752
    %v10754 = vrot.slane %v10734, 2
    %v10755 = vrot.slane %v10736, 2
    %v10756 = vsel %vm1042, %v10754, %v10755
    %10757 = vrot.lane.b32.xlu0 %v10747, 127
    %v10758 = vpop.permute.xlu0 %10757
    %10759 = vrot.lane.b32.xlu0 %v10750, 127
    %v10760 = vpop.permute.xlu0 %10759
    %10761 = vrot.lane.b32.xlu0 %v10746, 127
    %v10762 = vpop.permute.xlu0 %10761
    %10763 = vrot.lane.b32.xlu0 %v10749, 127
    %v10764 = vpop.permute.xlu0 %10763
    %10765 = vrot.lane.b32.xlu0 %v10753, 127
    %v10766 = vpop.permute.xlu0 %10765
    %10767 = vrot.lane.b32.xlu0 %v10756, 127
    %v10768 = vpop.permute.xlu0 %10767
    %10769 = vrot.lane.b32.xlu0 %v10752, 127
    %v10770 = vpop.permute.xlu0 %10769
    %10771 = vrot.lane.b32.xlu0 %v10755, 127
    %v10772 = vpop.permute.xlu0 %10771
    %v10773 = vsel %vm212, %v10758, %v10760
    %v10774 = vsel %vm212, %v10762, %v10764
    %v10775 = vsel %vm212, %v10766, %v10768
    %v10776 = vsel %vm212, %v10770, %v10772
    %v10781 = vadd.f32 %v10678, %v10773
    %v10782 = vadd.f32 %v10679, %v10774
    %v10783 = vadd.f32 %v10680, %v10775
    %v10784 = vadd.f32 %v10681, %v10776
    %v10785 = vstv %s8800
    %v10786 = vmul.f32 %v8741, %v10785
    %v10787 = vmul.f32 %v8742, %v10785
    %v10788 = vmul.f32 %v8743, %v10785
    %v10789 = vmul.f32 %v8744, %v10785
    %v10790 = vmul.f32 %v8745, %v10785
    %v10791 = vmul.f32 %v8746, %v10785
    %v10792 = vmul.f32 %v8747, %v10785
    %v10793 = vmul.f32 %v8748, %v10785
    %v10802 = vrot.slane %v10786, 2
    %v10803 = vrot.slane %v10788, 2
    %v10804 = vsel %vm1042, %v10802, %v10803
    %v10805 = vrot.slane %v10787, 2
    %v10806 = vrot.slane %v10789, 2
    %v10807 = vsel %vm1042, %v10805, %v10806
    %v10808 = vrot.slane %v10790, 2
    %v10809 = vrot.slane %v10792, 2
    %v10810 = vsel %vm1042, %v10808, %v10809
    %v10811 = vrot.slane %v10791, 2
    %v10812 = vrot.slane %v10793, 2
    %v10813 = vsel %vm1042, %v10811, %v10812
    %10814 = vrot.lane.b32.xlu0 %v10804, 127
    %v10815 = vpop.permute.xlu0 %10814
    %10816 = vrot.lane.b32.xlu0 %v10807, 127
    %v10817 = vpop.permute.xlu0 %10816
    %10818 = vrot.lane.b32.xlu0 %v10803, 127
    %v10819 = vpop.permute.xlu0 %10818
    %10820 = vrot.lane.b32.xlu0 %v10806, 127
    %v10821 = vpop.permute.xlu0 %10820
    %10822 = vrot.lane.b32.xlu0 %v10810, 127
    %v10823 = vpop.permute.xlu0 %10822
    %10824 = vrot.lane.b32.xlu0 %v10813, 127
    %v10825 = vpop.permute.xlu0 %10824
    %10826 = vrot.lane.b32.xlu0 %v10809, 127
    %v10827 = vpop.permute.xlu0 %10826
    %10828 = vrot.lane.b32.xlu0 %v10812, 127
    %v10829 = vpop.permute.xlu0 %10828
    %v10830 = vsel %vm212, %v10815, %v10817
    %v10831 = vsel %vm212, %v10819, %v10821
    %v10832 = vsel %vm212, %v10823, %v10825
    %v10833 = vsel %vm212, %v10827, %v10829
    %v10838 = vadd.f32 %v10701, %v10830
    %v10839 = vadd.f32 %v10702, %v10831
    %v10840 = vadd.f32 %v10703, %v10832
    %v10841 = vadd.f32 %v10704, %v10833
    %v10842 = vstv %s8827
    %v10843 = vmul.f32 %v8741, %v10842
    %v10844 = vmul.f32 %v8742, %v10842
    %v10845 = vmul.f32 %v8743, %v10842
    %v10846 = vmul.f32 %v8744, %v10842
    %v10847 = vmul.f32 %v8745, %v10842
    %v10848 = vmul.f32 %v8746, %v10842
    %v10849 = vmul.f32 %v8747, %v10842
    %v10850 = vmul.f32 %v8748, %v10842
    %v10859 = vrot.slane %v10843, 2
    %v10860 = vrot.slane %v10845, 2
    %v10861 = vsel %vm1042, %v10859, %v10860
    %v10862 = vrot.slane %v10844, 2
    %v10863 = vrot.slane %v10846, 2
    %v10864 = vsel %vm1042, %v10862, %v10863
    %v10865 = vrot.slane %v10847, 2
    %v10866 = vrot.slane %v10849, 2
    %v10867 = vsel %vm1042, %v10865, %v10866
    %v10868 = vrot.slane %v10848, 2
    %v10869 = vrot.slane %v10850, 2
    %v10870 = vsel %vm1042, %v10868, %v10869
    %10871 = vrot.lane.b32.xlu0 %v10861, 127
    %v10872 = vpop.permute.xlu0 %10871
    %10873 = vrot.lane.b32.xlu0 %v10864, 127
    %v10874 = vpop.permute.xlu0 %10873
    %10875 = vrot.lane.b32.xlu0 %v10860, 127
    %v10876 = vpop.permute.xlu0 %10875
    %10877 = vrot.lane.b32.xlu0 %v10863, 127
    %v10878 = vpop.permute.xlu0 %10877
    %10879 = vrot.lane.b32.xlu0 %v10867, 127
    %v10880 = vpop.permute.xlu0 %10879
    %10881 = vrot.lane.b32.xlu0 %v10870, 127
    %v10882 = vpop.permute.xlu0 %10881
    %10883 = vrot.lane.b32.xlu0 %v10866, 127
    %v10884 = vpop.permute.xlu0 %10883
    %10885 = vrot.lane.b32.xlu0 %v10869, 127
    %v10886 = vpop.permute.xlu0 %10885
    %v10887 = vsel %vm212, %v10872, %v10874
    %v10888 = vsel %vm212, %v10876, %v10878
    %v10889 = vsel %vm212, %v10880, %v10882
    %v10890 = vsel %vm212, %v10884, %v10886
    %v10895 = vadd.f32 %v10724, %v10887
    %v10896 = vadd.f32 %v10725, %v10888
    %v10897 = vadd.f32 %v10726, %v10889
    %v10898 = vadd.f32 %v10727, %v10890
    %v10899 = vstv %s8774
    %v10900 = vmul.f32 %v8741, %v10899
    %v10901 = vmul.f32 %v8742, %v10899
    %v10902 = vmul.f32 %v8743, %v10899
    %v10903 = vmul.f32 %v8744, %v10899
    %v10904 = vmul.f32 %v8745, %v10899
    %v10905 = vmul.f32 %v8746, %v10899
    %v10906 = vmul.f32 %v8747, %v10899
    %v10907 = vmul.f32 %v8748, %v10899
    %v10916 = vrot.slane %v10900, 2
    %v10917 = vrot.slane %v10902, 2
    %v10918 = vsel %vm1042, %v10916, %v10917
    %v10919 = vrot.slane %v10901, 2
    %v10920 = vrot.slane %v10903, 2
    %v10921 = vsel %vm1042, %v10919, %v10920
    %v10922 = vrot.slane %v10904, 2
    %v10923 = vrot.slane %v10906, 2
    %v10924 = vsel %vm1042, %v10922, %v10923
    %v10925 = vrot.slane %v10905, 2
    %v10926 = vrot.slane %v10907, 2
    %v10927 = vsel %vm1042, %v10925, %v10926
    %10928 = vrot.lane.b32.xlu0 %v10918, 126
    %v10929 = vpop.permute.xlu0 %10928
    %10930 = vrot.lane.b32.xlu0 %v10921, 126
    %v10931 = vpop.permute.xlu0 %10930
    %10932 = vrot.lane.b32.xlu0 %v10917, 126
    %v10933 = vpop.permute.xlu0 %10932
    %10934 = vrot.lane.b32.xlu0 %v10920, 126
    %v10935 = vpop.permute.xlu0 %10934
    %10936 = vrot.lane.b32.xlu0 %v10924, 126
    %v10937 = vpop.permute.xlu0 %10936
    %10938 = vrot.lane.b32.xlu0 %v10927, 126
    %v10939 = vpop.permute.xlu0 %10938
    %10940 = vrot.lane.b32.xlu0 %v10923, 126
    %v10941 = vpop.permute.xlu0 %10940
    %10942 = vrot.lane.b32.xlu0 %v10926, 126
    %v10943 = vpop.permute.xlu0 %10942
    %v10944 = vsel %vm372, %v10929, %v10931
    %v10945 = vsel %vm372, %v10933, %v10935
    %v10946 = vsel %vm372, %v10937, %v10939
    %v10947 = vsel %vm372, %v10941, %v10943
    %v10952 = vadd.f32 %v10781, %v10944
    %v10953 = vadd.f32 %v10782, %v10945
    %v10954 = vadd.f32 %v10783, %v10946
    %v10955 = vadd.f32 %v10784, %v10947
    %v10956 = vstv %s8801
    %v10957 = vmul.f32 %v8741, %v10956
    %v10958 = vmul.f32 %v8742, %v10956
    %v10959 = vmul.f32 %v8743, %v10956
    %v10960 = vmul.f32 %v8744, %v10956
    %v10961 = vmul.f32 %v8745, %v10956
    %v10962 = vmul.f32 %v8746, %v10956
    %v10963 = vmul.f32 %v8747, %v10956
    %v10964 = vmul.f32 %v8748, %v10956
    %v10973 = vrot.slane %v10957, 2
    %v10974 = vrot.slane %v10959, 2
    %v10975 = vsel %vm1042, %v10973, %v10974
    %v10976 = vrot.slane %v10958, 2
    %v10977 = vrot.slane %v10960, 2
    %v10978 = vsel %vm1042, %v10976, %v10977
    %v10979 = vrot.slane %v10961, 2
    %v10980 = vrot.slane %v10963, 2
    %v10981 = vsel %vm1042, %v10979, %v10980
    %v10982 = vrot.slane %v10962, 2
    %v10983 = vrot.slane %v10964, 2
    %v10984 = vsel %vm1042, %v10982, %v10983
    %10985 = vrot.lane.b32.xlu0 %v10975, 126
    %v10986 = vpop.permute.xlu0 %10985
    %10987 = vrot.lane.b32.xlu0 %v10978, 126
    %v10988 = vpop.permute.xlu0 %10987
    %10989 = vrot.lane.b32.xlu0 %v10974, 126
    %v10990 = vpop.permute.xlu0 %10989
    %10991 = vrot.lane.b32.xlu0 %v10977, 126
    %v10992 = vpop.permute.xlu0 %10991
    %10993 = vrot.lane.b32.xlu0 %v10981, 126
    %v10994 = vpop.permute.xlu0 %10993
    %10995 = vrot.lane.b32.xlu0 %v10984, 126
    %v10996 = vpop.permute.xlu0 %10995
    %10997 = vrot.lane.b32.xlu0 %v10980, 126
    %v10998 = vpop.permute.xlu0 %10997
    %10999 = vrot.lane.b32.xlu0 %v10983, 126
    %v11000 = vpop.permute.xlu0 %10999
    %v11001 = vsel %vm372, %v10986, %v10988
    %v11002 = vsel %vm372, %v10990, %v10992
    %v11003 = vsel %vm372, %v10994, %v10996
    %v11004 = vsel %vm372, %v10998, %v11000
    %v11009 = vadd.f32 %v10838, %v11001
    %v11010 = vadd.f32 %v10839, %v11002
    %v11011 = vadd.f32 %v10840, %v11003
    %v11012 = vadd.f32 %v10841, %v11004
    %v11013 = vstv %s8828
    %v11014 = vmul.f32 %v8741, %v11013
    %v11015 = vmul.f32 %v8742, %v11013
    %v11016 = vmul.f32 %v8743, %v11013
    %v11017 = vmul.f32 %v8744, %v11013
    %v11018 = vmul.f32 %v8745, %v11013
    %v11019 = vmul.f32 %v8746, %v11013
    %v11020 = vmul.f32 %v8747, %v11013
    %v11021 = vmul.f32 %v8748, %v11013
    %v11030 = vrot.slane %v11014, 2
    %v11031 = vrot.slane %v11016, 2
    %v11032 = vsel %vm1042, %v11030, %v11031
    %v11033 = vrot.slane %v11015, 2
    %v11034 = vrot.slane %v11017, 2
    %v11035 = vsel %vm1042, %v11033, %v11034
    %v11036 = vrot.slane %v11018, 2
    %v11037 = vrot.slane %v11020, 2
    %v11038 = vsel %vm1042, %v11036, %v11037
    %v11039 = vrot.slane %v11019, 2
    %v11040 = vrot.slane %v11021, 2
    %v11041 = vsel %vm1042, %v11039, %v11040
    %11042 = vrot.lane.b32.xlu0 %v11032, 126
    %v11043 = vpop.permute.xlu0 %11042
    %11044 = vrot.lane.b32.xlu0 %v11035, 126
    %v11045 = vpop.permute.xlu0 %11044
    %11046 = vrot.lane.b32.xlu0 %v11031, 126
    %v11047 = vpop.permute.xlu0 %11046
    %11048 = vrot.lane.b32.xlu0 %v11034, 126
    %v11049 = vpop.permute.xlu0 %11048
    %11050 = vrot.lane.b32.xlu0 %v11038, 126
    %v11051 = vpop.permute.xlu0 %11050
    %11052 = vrot.lane.b32.xlu0 %v11041, 126
    %v11053 = vpop.permute.xlu0 %11052
    %11054 = vrot.lane.b32.xlu0 %v11037, 126
    %v11055 = vpop.permute.xlu0 %11054
    %11056 = vrot.lane.b32.xlu0 %v11040, 126
    %v11057 = vpop.permute.xlu0 %11056
    %v11058 = vsel %vm372, %v11043, %v11045
    %v11059 = vsel %vm372, %v11047, %v11049
    %v11060 = vsel %vm372, %v11051, %v11053
    %v11061 = vsel %vm372, %v11055, %v11057
    %v11066 = vadd.f32 %v10895, %v11058
    %v11067 = vadd.f32 %v10896, %v11059
    %v11068 = vadd.f32 %v10897, %v11060
    %v11069 = vadd.f32 %v10898, %v11061
    %v11070 = vadd.f32 %v9951, %v10952
    %v11071 = vadd.f32 %v9952, %v10953
    %v11072 = vadd.f32 %v9953, %v10954
    %v11073 = vadd.f32 %v9954, %v10955
    %v11074 = vadd.f32 %v9955, %v11009
    %v11075 = vadd.f32 %v9956, %v11010
    %v11076 = vadd.f32 %v9957, %v11011
    %v11077 = vadd.f32 %v9958, %v11012
    %v11078 = vadd.f32 %v9959, %v11066
    %v11079 = vadd.f32 %v9960, %v11067
    %v11080 = vadd.f32 %v9961, %v11068
    %v11081 = vadd.f32 %v9962, %v11069
    %v11082 = vstv %s8775
    %v11083 = vmul.f32 %v8749, %v11082
    %v11084 = vmul.f32 %v8751, %v11082
    %v11085 = vmul.f32 %v8753, %v11082
    %v11086 = vmul.f32 %v8755, %v11082
    %v11087 = vstv %s8802
    %v11088 = vmul.f32 %v8749, %v11087
    %v11089 = vmul.f32 %v8751, %v11087
    %v11090 = vmul.f32 %v8753, %v11087
    %v11091 = vmul.f32 %v8755, %v11087
    %v11092 = vstv %s8829
    %v11093 = vmul.f32 %v8749, %v11092
    %v11094 = vmul.f32 %v8751, %v11092
    %v11095 = vmul.f32 %v8753, %v11092
    %v11096 = vmul.f32 %v8755, %v11092
    %v11097 = vstv %s8776
    %v11098 = vmul.f32 %v8749, %v11097
    %v11099 = vmul.f32 %v8750, %v11097
    %v11100 = vmul.f32 %v8751, %v11097
    %v11101 = vmul.f32 %v8752, %v11097
    %v11102 = vmul.f32 %v8753, %v11097
    %v11103 = vmul.f32 %v8754, %v11097
    %v11104 = vmul.f32 %v8755, %v11097
    %v11105 = vmul.f32 %v8756, %v11097
    %11114 = vrot.lane.b32.xlu0 %v11098, 127
    %v11115 = vpop.permute.xlu0 %11114
    %11116 = vrot.lane.b32.xlu0 %v11099, 127
    %v11117 = vpop.permute.xlu0 %11116
    %11118 = vrot.lane.b32.xlu0 %v11100, 127
    %v11119 = vpop.permute.xlu0 %11118
    %11120 = vrot.lane.b32.xlu0 %v11101, 127
    %v11121 = vpop.permute.xlu0 %11120
    %11122 = vrot.lane.b32.xlu0 %v11102, 127
    %v11123 = vpop.permute.xlu0 %11122
    %11124 = vrot.lane.b32.xlu0 %v11103, 127
    %v11125 = vpop.permute.xlu0 %11124
    %11126 = vrot.lane.b32.xlu0 %v11104, 127
    %v11127 = vpop.permute.xlu0 %11126
    %11128 = vrot.lane.b32.xlu0 %v11105, 127
    %v11129 = vpop.permute.xlu0 %11128
    %v11130 = vsel %vm212, %v11115, %v11117
    %v11131 = vsel %vm212, %v11119, %v11121
    %v11132 = vsel %vm212, %v11123, %v11125
    %v11133 = vsel %vm212, %v11127, %v11129
    %v11138 = vadd.f32 %v11083, %v11130
    %v11139 = vadd.f32 %v11084, %v11131
    %v11140 = vadd.f32 %v11085, %v11132
    %v11141 = vadd.f32 %v11086, %v11133
    %v11142 = vstv %s8803
    %v11143 = vmul.f32 %v8749, %v11142
    %v11144 = vmul.f32 %v8750, %v11142
    %v11145 = vmul.f32 %v8751, %v11142
    %v11146 = vmul.f32 %v8752, %v11142
    %v11147 = vmul.f32 %v8753, %v11142
    %v11148 = vmul.f32 %v8754, %v11142
    %v11149 = vmul.f32 %v8755, %v11142
    %v11150 = vmul.f32 %v8756, %v11142
    %11159 = vrot.lane.b32.xlu0 %v11143, 127
    %v11160 = vpop.permute.xlu0 %11159
    %11161 = vrot.lane.b32.xlu0 %v11144, 127
    %v11162 = vpop.permute.xlu0 %11161
    %11163 = vrot.lane.b32.xlu0 %v11145, 127
    %v11164 = vpop.permute.xlu0 %11163
    %11165 = vrot.lane.b32.xlu0 %v11146, 127
    %v11166 = vpop.permute.xlu0 %11165
    %11167 = vrot.lane.b32.xlu0 %v11147, 127
    %v11168 = vpop.permute.xlu0 %11167
    %11169 = vrot.lane.b32.xlu0 %v11148, 127
    %v11170 = vpop.permute.xlu0 %11169
    %11171 = vrot.lane.b32.xlu0 %v11149, 127
    %v11172 = vpop.permute.xlu0 %11171
    %11173 = vrot.lane.b32.xlu0 %v11150, 127
    %v11174 = vpop.permute.xlu0 %11173
    %v11175 = vsel %vm212, %v11160, %v11162
    %v11176 = vsel %vm212, %v11164, %v11166
    %v11177 = vsel %vm212, %v11168, %v11170
    %v11178 = vsel %vm212, %v11172, %v11174
    %v11183 = vadd.f32 %v11088, %v11175
    %v11184 = vadd.f32 %v11089, %v11176
    %v11185 = vadd.f32 %v11090, %v11177
    %v11186 = vadd.f32 %v11091, %v11178
    %v11187 = vstv %s8830
    %v11188 = vmul.f32 %v8749, %v11187
    %v11189 = vmul.f32 %v8750, %v11187
    %v11190 = vmul.f32 %v8751, %v11187
    %v11191 = vmul.f32 %v8752, %v11187
    %v11192 = vmul.f32 %v8753, %v11187
    %v11193 = vmul.f32 %v8754, %v11187
    %v11194 = vmul.f32 %v8755, %v11187
    %v11195 = vmul.f32 %v8756, %v11187
    %11204 = vrot.lane.b32.xlu0 %v11188, 127
    %v11205 = vpop.permute.xlu0 %11204
    %11206 = vrot.lane.b32.xlu0 %v11189, 127
    %v11207 = vpop.permute.xlu0 %11206
    %11208 = vrot.lane.b32.xlu0 %v11190, 127
    %v11209 = vpop.permute.xlu0 %11208
    %11210 = vrot.lane.b32.xlu0 %v11191, 127
    %v11211 = vpop.permute.xlu0 %11210
    %11212 = vrot.lane.b32.xlu0 %v11192, 127
    %v11213 = vpop.permute.xlu0 %11212
    %11214 = vrot.lane.b32.xlu0 %v11193, 127
    %v11215 = vpop.permute.xlu0 %11214
    %11216 = vrot.lane.b32.xlu0 %v11194, 127
    %v11217 = vpop.permute.xlu0 %11216
    %11218 = vrot.lane.b32.xlu0 %v11195, 127
    %v11219 = vpop.permute.xlu0 %11218
    %v11220 = vsel %vm212, %v11205, %v11207
    %v11221 = vsel %vm212, %v11209, %v11211
    %v11222 = vsel %vm212, %v11213, %v11215
    %v11223 = vsel %vm212, %v11217, %v11219
    %v11228 = vadd.f32 %v11093, %v11220
    %v11229 = vadd.f32 %v11094, %v11221
    %v11230 = vadd.f32 %v11095, %v11222
    %v11231 = vadd.f32 %v11096, %v11223
    %v11232 = vstv %s8777
    %v11233 = vmul.f32 %v8749, %v11232
    %v11234 = vmul.f32 %v8750, %v11232
    %v11235 = vmul.f32 %v8751, %v11232
    %v11236 = vmul.f32 %v8752, %v11232
    %v11237 = vmul.f32 %v8753, %v11232
    %v11238 = vmul.f32 %v8754, %v11232
    %v11239 = vmul.f32 %v8755, %v11232
    %v11240 = vmul.f32 %v8756, %v11232
    %11249 = vrot.lane.b32.xlu0 %v11233, 126
    %v11250 = vpop.permute.xlu0 %11249
    %11251 = vrot.lane.b32.xlu0 %v11234, 126
    %v11252 = vpop.permute.xlu0 %11251
    %11253 = vrot.lane.b32.xlu0 %v11235, 126
    %v11254 = vpop.permute.xlu0 %11253
    %11255 = vrot.lane.b32.xlu0 %v11236, 126
    %v11256 = vpop.permute.xlu0 %11255
    %11257 = vrot.lane.b32.xlu0 %v11237, 126
    %v11258 = vpop.permute.xlu0 %11257
    %11259 = vrot.lane.b32.xlu0 %v11238, 126
    %v11260 = vpop.permute.xlu0 %11259
    %11261 = vrot.lane.b32.xlu0 %v11239, 126
    %v11262 = vpop.permute.xlu0 %11261
    %11263 = vrot.lane.b32.xlu0 %v11240, 126
    %v11264 = vpop.permute.xlu0 %11263
    %v11265 = vsel %vm372, %v11250, %v11252
    %v11266 = vsel %vm372, %v11254, %v11256
    %v11267 = vsel %vm372, %v11258, %v11260
    %v11268 = vsel %vm372, %v11262, %v11264
    %v11273 = vadd.f32 %v11138, %v11265
    %v11274 = vadd.f32 %v11139, %v11266
    %v11275 = vadd.f32 %v11140, %v11267
    %v11276 = vadd.f32 %v11141, %v11268
    %v11277 = vstv %s8804
    %v11278 = vmul.f32 %v8749, %v11277
    %v11279 = vmul.f32 %v8750, %v11277
    %v11280 = vmul.f32 %v8751, %v11277
    %v11281 = vmul.f32 %v8752, %v11277
    %v11282 = vmul.f32 %v8753, %v11277
    %v11283 = vmul.f32 %v8754, %v11277
    %v11284 = vmul.f32 %v8755, %v11277
    %v11285 = vmul.f32 %v8756, %v11277
    %11294 = vrot.lane.b32.xlu0 %v11278, 126
    %v11295 = vpop.permute.xlu0 %11294
    %11296 = vrot.lane.b32.xlu0 %v11279, 126
    %v11297 = vpop.permute.xlu0 %11296
    %11298 = vrot.lane.b32.xlu0 %v11280, 126
    %v11299 = vpop.permute.xlu0 %11298
    %11300 = vrot.lane.b32.xlu0 %v11281, 126
    %v11301 = vpop.permute.xlu0 %11300
    %11302 = vrot.lane.b32.xlu0 %v11282, 126
    %v11303 = vpop.permute.xlu0 %11302
    %11304 = vrot.lane.b32.xlu0 %v11283, 126
    %v11305 = vpop.permute.xlu0 %11304
    %11306 = vrot.lane.b32.xlu0 %v11284, 126
    %v11307 = vpop.permute.xlu0 %11306
    %11308 = vrot.lane.b32.xlu0 %v11285, 126
    %v11309 = vpop.permute.xlu0 %11308
    %v11310 = vsel %vm372, %v11295, %v11297
    %v11311 = vsel %vm372, %v11299, %v11301
    %v11312 = vsel %vm372, %v11303, %v11305
    %v11313 = vsel %vm372, %v11307, %v11309
    %v11318 = vadd.f32 %v11183, %v11310
    %v11319 = vadd.f32 %v11184, %v11311
    %v11320 = vadd.f32 %v11185, %v11312
    %v11321 = vadd.f32 %v11186, %v11313
    %v11322 = vstv %s8831
    %v11323 = vmul.f32 %v8749, %v11322
    %v11324 = vmul.f32 %v8750, %v11322
    %v11325 = vmul.f32 %v8751, %v11322
    %v11326 = vmul.f32 %v8752, %v11322
    %v11327 = vmul.f32 %v8753, %v11322
    %v11328 = vmul.f32 %v8754, %v11322
    %v11329 = vmul.f32 %v8755, %v11322
    %v11330 = vmul.f32 %v8756, %v11322
    %11339 = vrot.lane.b32.xlu0 %v11323, 126
    %v11340 = vpop.permute.xlu0 %11339
    %11341 = vrot.lane.b32.xlu0 %v11324, 126
    %v11342 = vpop.permute.xlu0 %11341
    %11343 = vrot.lane.b32.xlu0 %v11325, 126
    %v11344 = vpop.permute.xlu0 %11343
    %11345 = vrot.lane.b32.xlu0 %v11326, 126
    %v11346 = vpop.permute.xlu0 %11345
    %11347 = vrot.lane.b32.xlu0 %v11327, 126
    %v11348 = vpop.permute.xlu0 %11347
    %11349 = vrot.lane.b32.xlu0 %v11328, 126
    %v11350 = vpop.permute.xlu0 %11349
    %11351 = vrot.lane.b32.xlu0 %v11329, 126
    %v11352 = vpop.permute.xlu0 %11351
    %11353 = vrot.lane.b32.xlu0 %v11330, 126
    %v11354 = vpop.permute.xlu0 %11353
    %v11355 = vsel %vm372, %v11340, %v11342
    %v11356 = vsel %vm372, %v11344, %v11346
    %v11357 = vsel %vm372, %v11348, %v11350
    %v11358 = vsel %vm372, %v11352, %v11354
    %v11363 = vadd.f32 %v11228, %v11355
    %v11364 = vadd.f32 %v11229, %v11356
    %v11365 = vadd.f32 %v11230, %v11357
    %v11366 = vadd.f32 %v11231, %v11358
    %v11367 = vstv %s8778
    %v11368 = vmul.f32 %v8749, %v11367
    %v11369 = vmul.f32 %v8751, %v11367
    %v11370 = vmul.f32 %v8753, %v11367
    %v11371 = vmul.f32 %v8755, %v11367
    %v11376 = vrot.slane %v11368, 1
    %v11377 = vrot.slane %v11369, 1
    %v11378 = vsel %vm516, %v11376, %v11377
    %v11379 = vrot.slane %v11370, 1
    %v11380 = vrot.slane %v11371, 1
    %v11381 = vsel %vm516, %v11379, %v11380
    %v11386 = vadd.f32 %v11273, %v11378
    %v11387 = vadd.f32 %v11274, %v11377
    %v11388 = vadd.f32 %v11275, %v11381
    %v11389 = vadd.f32 %v11276, %v11380
    %v11390 = vstv %s8805
    %v11391 = vmul.f32 %v8749, %v11390
    %v11392 = vmul.f32 %v8751, %v11390
    %v11393 = vmul.f32 %v8753, %v11390
    %v11394 = vmul.f32 %v8755, %v11390
    %v11399 = vrot.slane %v11391, 1
    %v11400 = vrot.slane %v11392, 1
    %v11401 = vsel %vm516, %v11399, %v11400
    %v11402 = vrot.slane %v11393, 1
    %v11403 = vrot.slane %v11394, 1
    %v11404 = vsel %vm516, %v11402, %v11403
    %v11409 = vadd.f32 %v11318, %v11401
    %v11410 = vadd.f32 %v11319, %v11400
    %v11411 = vadd.f32 %v11320, %v11404
    %v11412 = vadd.f32 %v11321, %v11403
    %v11413 = vstv %s8832
    %v11414 = vmul.f32 %v8749, %v11413
    %v11415 = vmul.f32 %v8751, %v11413
    %v11416 = vmul.f32 %v8753, %v11413
    %v11417 = vmul.f32 %v8755, %v11413
    %v11422 = vrot.slane %v11414, 1
    %v11423 = vrot.slane %v11415, 1
    %v11424 = vsel %vm516, %v11422, %v11423
    %v11425 = vrot.slane %v11416, 1
    %v11426 = vrot.slane %v11417, 1
    %v11427 = vsel %vm516, %v11425, %v11426
    %v11432 = vadd.f32 %v11363, %v11424
    %v11433 = vadd.f32 %v11364, %v11423
    %v11434 = vadd.f32 %v11365, %v11427
    %v11435 = vadd.f32 %v11366, %v11426
    %v11436 = vstv %s8779
    %v11437 = vmul.f32 %v8749, %v11436
    %v11438 = vmul.f32 %v8750, %v11436
    %v11439 = vmul.f32 %v8751, %v11436
    %v11440 = vmul.f32 %v8752, %v11436
    %v11441 = vmul.f32 %v8753, %v11436
    %v11442 = vmul.f32 %v8754, %v11436
    %v11443 = vmul.f32 %v8755, %v11436
    %v11444 = vmul.f32 %v8756, %v11436
    %v11453 = vrot.slane %v11437, 1
    %v11454 = vrot.slane %v11439, 1
    %v11455 = vsel %vm516, %v11453, %v11454
    %v11456 = vrot.slane %v11438, 1
    %v11457 = vrot.slane %v11440, 1
    %v11458 = vsel %vm516, %v11456, %v11457
    %v11459 = vrot.slane %v11441, 1
    %v11460 = vrot.slane %v11443, 1
    %v11461 = vsel %vm516, %v11459, %v11460
    %v11462 = vrot.slane %v11442, 1
    %v11463 = vrot.slane %v11444, 1
    %v11464 = vsel %vm516, %v11462, %v11463
    %11465 = vrot.lane.b32.xlu0 %v11455, 127
    %v11466 = vpop.permute.xlu0 %11465
    %11467 = vrot.lane.b32.xlu0 %v11458, 127
    %v11468 = vpop.permute.xlu0 %11467
    %11469 = vrot.lane.b32.xlu0 %v11454, 127
    %v11470 = vpop.permute.xlu0 %11469
    %11471 = vrot.lane.b32.xlu0 %v11457, 127
    %v11472 = vpop.permute.xlu0 %11471
    %11473 = vrot.lane.b32.xlu0 %v11461, 127
    %v11474 = vpop.permute.xlu0 %11473
    %11475 = vrot.lane.b32.xlu0 %v11464, 127
    %v11476 = vpop.permute.xlu0 %11475
    %11477 = vrot.lane.b32.xlu0 %v11460, 127
    %v11478 = vpop.permute.xlu0 %11477
    %11479 = vrot.lane.b32.xlu0 %v11463, 127
    %v11480 = vpop.permute.xlu0 %11479
    %v11481 = vsel %vm212, %v11466, %v11468
    %v11482 = vsel %vm212, %v11470, %v11472
    %v11483 = vsel %vm212, %v11474, %v11476
    %v11484 = vsel %vm212, %v11478, %v11480
    %v11489 = vadd.f32 %v11386, %v11481
    %v11490 = vadd.f32 %v11387, %v11482
    %v11491 = vadd.f32 %v11388, %v11483
    %v11492 = vadd.f32 %v11389, %v11484
    %v11493 = vstv %s8806
    %v11494 = vmul.f32 %v8749, %v11493
    %v11495 = vmul.f32 %v8750, %v11493
    %v11496 = vmul.f32 %v8751, %v11493
    %v11497 = vmul.f32 %v8752, %v11493
    %v11498 = vmul.f32 %v8753, %v11493
    %v11499 = vmul.f32 %v8754, %v11493
    %v11500 = vmul.f32 %v8755, %v11493
    %v11501 = vmul.f32 %v8756, %v11493
    %v11510 = vrot.slane %v11494, 1
    %v11511 = vrot.slane %v11496, 1
    %v11512 = vsel %vm516, %v11510, %v11511
    %v11513 = vrot.slane %v11495, 1
    %v11514 = vrot.slane %v11497, 1
    %v11515 = vsel %vm516, %v11513, %v11514
    %v11516 = vrot.slane %v11498, 1
    %v11517 = vrot.slane %v11500, 1
    %v11518 = vsel %vm516, %v11516, %v11517
    %v11519 = vrot.slane %v11499, 1
    %v11520 = vrot.slane %v11501, 1
    %v11521 = vsel %vm516, %v11519, %v11520
    %11522 = vrot.lane.b32.xlu0 %v11512, 127
    %v11523 = vpop.permute.xlu0 %11522
    %11524 = vrot.lane.b32.xlu0 %v11515, 127
    %v11525 = vpop.permute.xlu0 %11524
    %11526 = vrot.lane.b32.xlu0 %v11511, 127
    %v11527 = vpop.permute.xlu0 %11526
    %11528 = vrot.lane.b32.xlu0 %v11514, 127
    %v11529 = vpop.permute.xlu0 %11528
    %11530 = vrot.lane.b32.xlu0 %v11518, 127
    %v11531 = vpop.permute.xlu0 %11530
    %11532 = vrot.lane.b32.xlu0 %v11521, 127
    %v11533 = vpop.permute.xlu0 %11532
    %11534 = vrot.lane.b32.xlu0 %v11517, 127
    %v11535 = vpop.permute.xlu0 %11534
    %11536 = vrot.lane.b32.xlu0 %v11520, 127
    %v11537 = vpop.permute.xlu0 %11536
    %v11538 = vsel %vm212, %v11523, %v11525
    %v11539 = vsel %vm212, %v11527, %v11529
    %v11540 = vsel %vm212, %v11531, %v11533
    %v11541 = vsel %vm212, %v11535, %v11537
    %v11546 = vadd.f32 %v11409, %v11538
    %v11547 = vadd.f32 %v11410, %v11539
    %v11548 = vadd.f32 %v11411, %v11540
    %v11549 = vadd.f32 %v11412, %v11541
    %v11550 = vstv %s8833
    %v11551 = vmul.f32 %v8749, %v11550
    %v11552 = vmul.f32 %v8750, %v11550
    %v11553 = vmul.f32 %v8751, %v11550
    %v11554 = vmul.f32 %v8752, %v11550
    %v11555 = vmul.f32 %v8753, %v11550
    %v11556 = vmul.f32 %v8754, %v11550
    %v11557 = vmul.f32 %v8755, %v11550
    %v11558 = vmul.f32 %v8756, %v11550
    %v11567 = vrot.slane %v11551, 1
    %v11568 = vrot.slane %v11553, 1
    %v11569 = vsel %vm516, %v11567, %v11568
    %v11570 = vrot.slane %v11552, 1
    %v11571 = vrot.slane %v11554, 1
    %v11572 = vsel %vm516, %v11570, %v11571
    %v11573 = vrot.slane %v11555, 1
    %v11574 = vrot.slane %v11557, 1
    %v11575 = vsel %vm516, %v11573, %v11574
    %v11576 = vrot.slane %v11556, 1
    %v11577 = vrot.slane %v11558, 1
    %v11578 = vsel %vm516, %v11576, %v11577
    %11579 = vrot.lane.b32.xlu0 %v11569, 127
    %v11580 = vpop.permute.xlu0 %11579
    %11581 = vrot.lane.b32.xlu0 %v11572, 127
    %v11582 = vpop.permute.xlu0 %11581
    %11583 = vrot.lane.b32.xlu0 %v11568, 127
    %v11584 = vpop.permute.xlu0 %11583
    %11585 = vrot.lane.b32.xlu0 %v11571, 127
    %v11586 = vpop.permute.xlu0 %11585
    %11587 = vrot.lane.b32.xlu0 %v11575, 127
    %v11588 = vpop.permute.xlu0 %11587
    %11589 = vrot.lane.b32.xlu0 %v11578, 127
    %v11590 = vpop.permute.xlu0 %11589
    %11591 = vrot.lane.b32.xlu0 %v11574, 127
    %v11592 = vpop.permute.xlu0 %11591
    %11593 = vrot.lane.b32.xlu0 %v11577, 127
    %v11594 = vpop.permute.xlu0 %11593
    %v11595 = vsel %vm212, %v11580, %v11582
    %v11596 = vsel %vm212, %v11584, %v11586
    %v11597 = vsel %vm212, %v11588, %v11590
    %v11598 = vsel %vm212, %v11592, %v11594
    %v11603 = vadd.f32 %v11432, %v11595
    %v11604 = vadd.f32 %v11433, %v11596
    %v11605 = vadd.f32 %v11434, %v11597
    %v11606 = vadd.f32 %v11435, %v11598
    %v11607 = vstv %s8780
    %v11608 = vmul.f32 %v8749, %v11607
    %v11609 = vmul.f32 %v8750, %v11607
    %v11610 = vmul.f32 %v8751, %v11607
    %v11611 = vmul.f32 %v8752, %v11607
    %v11612 = vmul.f32 %v8753, %v11607
    %v11613 = vmul.f32 %v8754, %v11607
    %v11614 = vmul.f32 %v8755, %v11607
    %v11615 = vmul.f32 %v8756, %v11607
    %v11624 = vrot.slane %v11608, 1
    %v11625 = vrot.slane %v11610, 1
    %v11626 = vsel %vm516, %v11624, %v11625
    %v11627 = vrot.slane %v11609, 1
    %v11628 = vrot.slane %v11611, 1
    %v11629 = vsel %vm516, %v11627, %v11628
    %v11630 = vrot.slane %v11612, 1
    %v11631 = vrot.slane %v11614, 1
    %v11632 = vsel %vm516, %v11630, %v11631
    %v11633 = vrot.slane %v11613, 1
    %v11634 = vrot.slane %v11615, 1
    %v11635 = vsel %vm516, %v11633, %v11634
    %11636 = vrot.lane.b32.xlu0 %v11626, 126
    %v11637 = vpop.permute.xlu0 %11636
    %11638 = vrot.lane.b32.xlu0 %v11629, 126
    %v11639 = vpop.permute.xlu0 %11638
    %11640 = vrot.lane.b32.xlu0 %v11625, 126
    %v11641 = vpop.permute.xlu0 %11640
    %11642 = vrot.lane.b32.xlu0 %v11628, 126
    %v11643 = vpop.permute.xlu0 %11642
    %11644 = vrot.lane.b32.xlu0 %v11632, 126
    %v11645 = vpop.permute.xlu0 %11644
    %11646 = vrot.lane.b32.xlu0 %v11635, 126
    %v11647 = vpop.permute.xlu0 %11646
    %11648 = vrot.lane.b32.xlu0 %v11631, 126
    %v11649 = vpop.permute.xlu0 %11648
    %11650 = vrot.lane.b32.xlu0 %v11634, 126
    %v11651 = vpop.permute.xlu0 %11650
    %v11652 = vsel %vm372, %v11637, %v11639
    %v11653 = vsel %vm372, %v11641, %v11643
    %v11654 = vsel %vm372, %v11645, %v11647
    %v11655 = vsel %vm372, %v11649, %v11651
    %v11660 = vadd.f32 %v11489, %v11652
    %v11661 = vadd.f32 %v11490, %v11653
    %v11662 = vadd.f32 %v11491, %v11654
    %v11663 = vadd.f32 %v11492, %v11655
    %v11664 = vstv %s8807
    %v11665 = vmul.f32 %v8749, %v11664
    %v11666 = vmul.f32 %v8750, %v11664
    %v11667 = vmul.f32 %v8751, %v11664
    %v11668 = vmul.f32 %v8752, %v11664
    %v11669 = vmul.f32 %v8753, %v11664
    %v11670 = vmul.f32 %v8754, %v11664
    %v11671 = vmul.f32 %v8755, %v11664
    %v11672 = vmul.f32 %v8756, %v11664
    %v11681 = vrot.slane %v11665, 1
    %v11682 = vrot.slane %v11667, 1
    %v11683 = vsel %vm516, %v11681, %v11682
    %v11684 = vrot.slane %v11666, 1
    %v11685 = vrot.slane %v11668, 1
    %v11686 = vsel %vm516, %v11684, %v11685
    %v11687 = vrot.slane %v11669, 1
    %v11688 = vrot.slane %v11671, 1
    %v11689 = vsel %vm516, %v11687, %v11688
    %v11690 = vrot.slane %v11670, 1
    %v11691 = vrot.slane %v11672, 1
    %v11692 = vsel %vm516, %v11690, %v11691
    %11693 = vrot.lane.b32.xlu0 %v11683, 126
    %v11694 = vpop.permute.xlu0 %11693
    %11695 = vrot.lane.b32.xlu0 %v11686, 126
    %v11696 = vpop.permute.xlu0 %11695
    %11697 = vrot.lane.b32.xlu0 %v11682, 126
    %v11698 = vpop.permute.xlu0 %11697
    %11699 = vrot.lane.b32.xlu0 %v11685, 126
    %v11700 = vpop.permute.xlu0 %11699
    %11701 = vrot.lane.b32.xlu0 %v11689, 126
    %v11702 = vpop.permute.xlu0 %11701
    %11703 = vrot.lane.b32.xlu0 %v11692, 126
    %v11704 = vpop.permute.xlu0 %11703
    %11705 = vrot.lane.b32.xlu0 %v11688, 126
    %v11706 = vpop.permute.xlu0 %11705
    %11707 = vrot.lane.b32.xlu0 %v11691, 126
    %v11708 = vpop.permute.xlu0 %11707
    %v11709 = vsel %vm372, %v11694, %v11696
    %v11710 = vsel %vm372, %v11698, %v11700
    %v11711 = vsel %vm372, %v11702, %v11704
    %v11712 = vsel %vm372, %v11706, %v11708
    %v11717 = vadd.f32 %v11546, %v11709
    %v11718 = vadd.f32 %v11547, %v11710
    %v11719 = vadd.f32 %v11548, %v11711
    %v11720 = vadd.f32 %v11549, %v11712
    %v11721 = vstv %s8834
    %v11722 = vmul.f32 %v8749, %v11721
    %v11723 = vmul.f32 %v8750, %v11721
    %v11724 = vmul.f32 %v8751, %v11721
    %v11725 = vmul.f32 %v8752, %v11721
    %v11726 = vmul.f32 %v8753, %v11721
    %v11727 = vmul.f32 %v8754, %v11721
    %v11728 = vmul.f32 %v8755, %v11721
    %v11729 = vmul.f32 %v8756, %v11721
    %v11738 = vrot.slane %v11722, 1
    %v11739 = vrot.slane %v11724, 1
    %v11740 = vsel %vm516, %v11738, %v11739
    %v11741 = vrot.slane %v11723, 1
    %v11742 = vrot.slane %v11725, 1
    %v11743 = vsel %vm516, %v11741, %v11742
    %v11744 = vrot.slane %v11726, 1
    %v11745 = vrot.slane %v11728, 1
    %v11746 = vsel %vm516, %v11744, %v11745
    %v11747 = vrot.slane %v11727, 1
    %v11748 = vrot.slane %v11729, 1
    %v11749 = vsel %vm516, %v11747, %v11748
    %11750 = vrot.lane.b32.xlu0 %v11740, 126
    %v11751 = vpop.permute.xlu0 %11750
    %11752 = vrot.lane.b32.xlu0 %v11743, 126
    %v11753 = vpop.permute.xlu0 %11752
    %11754 = vrot.lane.b32.xlu0 %v11739, 126
    %v11755 = vpop.permute.xlu0 %11754
    %11756 = vrot.lane.b32.xlu0 %v11742, 126
    %v11757 = vpop.permute.xlu0 %11756
    %11758 = vrot.lane.b32.xlu0 %v11746, 126
    %v11759 = vpop.permute.xlu0 %11758
    %11760 = vrot.lane.b32.xlu0 %v11749, 126
    %v11761 = vpop.permute.xlu0 %11760
    %11762 = vrot.lane.b32.xlu0 %v11745, 126
    %v11763 = vpop.permute.xlu0 %11762
    %11764 = vrot.lane.b32.xlu0 %v11748, 126
    %v11765 = vpop.permute.xlu0 %11764
    %v11766 = vsel %vm372, %v11751, %v11753
    %v11767 = vsel %vm372, %v11755, %v11757
    %v11768 = vsel %vm372, %v11759, %v11761
    %v11769 = vsel %vm372, %v11763, %v11765
    %v11774 = vadd.f32 %v11603, %v11766
    %v11775 = vadd.f32 %v11604, %v11767
    %v11776 = vadd.f32 %v11605, %v11768
    %v11777 = vadd.f32 %v11606, %v11769
    %v11778 = vstv %s8781
    %v11779 = vmul.f32 %v8749, %v11778
    %v11780 = vmul.f32 %v8751, %v11778
    %v11781 = vmul.f32 %v8753, %v11778
    %v11782 = vmul.f32 %v8755, %v11778
    %v11787 = vrot.slane %v11779, 2
    %v11788 = vrot.slane %v11780, 2
    %v11789 = vsel %vm1042, %v11787, %v11788
    %v11790 = vrot.slane %v11781, 2
    %v11791 = vrot.slane %v11782, 2
    %v11792 = vsel %vm1042, %v11790, %v11791
    %v11797 = vadd.f32 %v11660, %v11789
    %v11798 = vadd.f32 %v11661, %v11788
    %v11799 = vadd.f32 %v11662, %v11792
    %v11800 = vadd.f32 %v11663, %v11791
    %v11801 = vstv %s8808
    %v11802 = vmul.f32 %v8749, %v11801
    %v11803 = vmul.f32 %v8751, %v11801
    %v11804 = vmul.f32 %v8753, %v11801
    %v11805 = vmul.f32 %v8755, %v11801
    %v11810 = vrot.slane %v11802, 2
    %v11811 = vrot.slane %v11803, 2
    %v11812 = vsel %vm1042, %v11810, %v11811
    %v11813 = vrot.slane %v11804, 2
    %v11814 = vrot.slane %v11805, 2
    %v11815 = vsel %vm1042, %v11813, %v11814
    %v11820 = vadd.f32 %v11717, %v11812
    %v11821 = vadd.f32 %v11718, %v11811
    %v11822 = vadd.f32 %v11719, %v11815
    %v11823 = vadd.f32 %v11720, %v11814
    %v11824 = vstv %s8835
    %v11825 = vmul.f32 %v8749, %v11824
    %v11826 = vmul.f32 %v8751, %v11824
    %v11827 = vmul.f32 %v8753, %v11824
    %v11828 = vmul.f32 %v8755, %v11824
    %v11833 = vrot.slane %v11825, 2
    %v11834 = vrot.slane %v11826, 2
    %v11835 = vsel %vm1042, %v11833, %v11834
    %v11836 = vrot.slane %v11827, 2
    %v11837 = vrot.slane %v11828, 2
    %v11838 = vsel %vm1042, %v11836, %v11837
    %v11843 = vadd.f32 %v11774, %v11835
    %v11844 = vadd.f32 %v11775, %v11834
    %v11845 = vadd.f32 %v11776, %v11838
    %v11846 = vadd.f32 %v11777, %v11837
    %v11847 = vstv %s8782
    %v11848 = vmul.f32 %v8749, %v11847
    %v11849 = vmul.f32 %v8750, %v11847
    %v11850 = vmul.f32 %v8751, %v11847
    %v11851 = vmul.f32 %v8752, %v11847
    %v11852 = vmul.f32 %v8753, %v11847
    %v11853 = vmul.f32 %v8754, %v11847
    %v11854 = vmul.f32 %v8755, %v11847
    %v11855 = vmul.f32 %v8756, %v11847
    %v11864 = vrot.slane %v11848, 2
    %v11865 = vrot.slane %v11850, 2
    %v11866 = vsel %vm1042, %v11864, %v11865
    %v11867 = vrot.slane %v11849, 2
    %v11868 = vrot.slane %v11851, 2
    %v11869 = vsel %vm1042, %v11867, %v11868
    %v11870 = vrot.slane %v11852, 2
    %v11871 = vrot.slane %v11854, 2
    %v11872 = vsel %vm1042, %v11870, %v11871
    %v11873 = vrot.slane %v11853, 2
    %v11874 = vrot.slane %v11855, 2
    %v11875 = vsel %vm1042, %v11873, %v11874
    %11876 = vrot.lane.b32.xlu0 %v11866, 127
    %v11877 = vpop.permute.xlu0 %11876
    %11878 = vrot.lane.b32.xlu0 %v11869, 127
    %v11879 = vpop.permute.xlu0 %11878
    %11880 = vrot.lane.b32.xlu0 %v11865, 127
    %v11881 = vpop.permute.xlu0 %11880
    %11882 = vrot.lane.b32.xlu0 %v11868, 127
    %v11883 = vpop.permute.xlu0 %11882
    %11884 = vrot.lane.b32.xlu0 %v11872, 127
    %v11885 = vpop.permute.xlu0 %11884
    %11886 = vrot.lane.b32.xlu0 %v11875, 127
    %v11887 = vpop.permute.xlu0 %11886
    %11888 = vrot.lane.b32.xlu0 %v11871, 127
    %v11889 = vpop.permute.xlu0 %11888
    %11890 = vrot.lane.b32.xlu0 %v11874, 127
    %v11891 = vpop.permute.xlu0 %11890
    %v11892 = vsel %vm212, %v11877, %v11879
    %v11893 = vsel %vm212, %v11881, %v11883
    %v11894 = vsel %vm212, %v11885, %v11887
    %v11895 = vsel %vm212, %v11889, %v11891
    %v11900 = vadd.f32 %v11797, %v11892
    %v11901 = vadd.f32 %v11798, %v11893
    %v11902 = vadd.f32 %v11799, %v11894
    %v11903 = vadd.f32 %v11800, %v11895
    %v11904 = vstv %s8809
    %v11905 = vmul.f32 %v8749, %v11904
    %v11906 = vmul.f32 %v8750, %v11904
    %v11907 = vmul.f32 %v8751, %v11904
    %v11908 = vmul.f32 %v8752, %v11904
    %v11909 = vmul.f32 %v8753, %v11904
    %v11910 = vmul.f32 %v8754, %v11904
    %v11911 = vmul.f32 %v8755, %v11904
    %v11912 = vmul.f32 %v8756, %v11904
    %v11921 = vrot.slane %v11905, 2
    %v11922 = vrot.slane %v11907, 2
    %v11923 = vsel %vm1042, %v11921, %v11922
    %v11924 = vrot.slane %v11906, 2
    %v11925 = vrot.slane %v11908, 2
    %v11926 = vsel %vm1042, %v11924, %v11925
    %v11927 = vrot.slane %v11909, 2
    %v11928 = vrot.slane %v11911, 2
    %v11929 = vsel %vm1042, %v11927, %v11928
    %v11930 = vrot.slane %v11910, 2
    %v11931 = vrot.slane %v11912, 2
    %v11932 = vsel %vm1042, %v11930, %v11931
    %11933 = vrot.lane.b32.xlu0 %v11923, 127
    %v11934 = vpop.permute.xlu0 %11933
    %11935 = vrot.lane.b32.xlu0 %v11926, 127
    %v11936 = vpop.permute.xlu0 %11935
    %11937 = vrot.lane.b32.xlu0 %v11922, 127
    %v11938 = vpop.permute.xlu0 %11937
    %11939 = vrot.lane.b32.xlu0 %v11925, 127
    %v11940 = vpop.permute.xlu0 %11939
    %11941 = vrot.lane.b32.xlu0 %v11929, 127
    %v11942 = vpop.permute.xlu0 %11941
    %11943 = vrot.lane.b32.xlu0 %v11932, 127
    %v11944 = vpop.permute.xlu0 %11943
    %11945 = vrot.lane.b32.xlu0 %v11928, 127
    %v11946 = vpop.permute.xlu0 %11945
    %11947 = vrot.lane.b32.xlu0 %v11931, 127
    %v11948 = vpop.permute.xlu0 %11947
    %v11949 = vsel %vm212, %v11934, %v11936
    %v11950 = vsel %vm212, %v11938, %v11940
    %v11951 = vsel %vm212, %v11942, %v11944
    %v11952 = vsel %vm212, %v11946, %v11948
    %v11957 = vadd.f32 %v11820, %v11949
    %v11958 = vadd.f32 %v11821, %v11950
    %v11959 = vadd.f32 %v11822, %v11951
    %v11960 = vadd.f32 %v11823, %v11952
    %v11961 = vstv %s8836
    %v11962 = vmul.f32 %v8749, %v11961
    %v11963 = vmul.f32 %v8750, %v11961
    %v11964 = vmul.f32 %v8751, %v11961
    %v11965 = vmul.f32 %v8752, %v11961
    %v11966 = vmul.f32 %v8753, %v11961
    %v11967 = vmul.f32 %v8754, %v11961
    %v11968 = vmul.f32 %v8755, %v11961
    %v11969 = vmul.f32 %v8756, %v11961
    %v11978 = vrot.slane %v11962, 2
    %v11979 = vrot.slane %v11964, 2
    %v11980 = vsel %vm1042, %v11978, %v11979
    %v11981 = vrot.slane %v11963, 2
    %v11982 = vrot.slane %v11965, 2
    %v11983 = vsel %vm1042, %v11981, %v11982
    %v11984 = vrot.slane %v11966, 2
    %v11985 = vrot.slane %v11968, 2
    %v11986 = vsel %vm1042, %v11984, %v11985
    %v11987 = vrot.slane %v11967, 2
    %v11988 = vrot.slane %v11969, 2
    %v11989 = vsel %vm1042, %v11987, %v11988
    %11990 = vrot.lane.b32.xlu0 %v11980, 127
    %v11991 = vpop.permute.xlu0 %11990
    %11992 = vrot.lane.b32.xlu0 %v11983, 127
    %v11993 = vpop.permute.xlu0 %11992
    %11994 = vrot.lane.b32.xlu0 %v11979, 127
    %v11995 = vpop.permute.xlu0 %11994
    %11996 = vrot.lane.b32.xlu0 %v11982, 127
    %v11997 = vpop.permute.xlu0 %11996
    %11998 = vrot.lane.b32.xlu0 %v11986, 127
    %v11999 = vpop.permute.xlu0 %11998
    %12000 = vrot.lane.b32.xlu0 %v11989, 127
    %v12001 = vpop.permute.xlu0 %12000
    %12002 = vrot.lane.b32.xlu0 %v11985, 127
    %v12003 = vpop.permute.xlu0 %12002
    %12004 = vrot.lane.b32.xlu0 %v11988, 127
    %v12005 = vpop.permute.xlu0 %12004
    %v12006 = vsel %vm212, %v11991, %v11993
    %v12007 = vsel %vm212, %v11995, %v11997
    %v12008 = vsel %vm212, %v11999, %v12001
    %v12009 = vsel %vm212, %v12003, %v12005
    %v12014 = vadd.f32 %v11843, %v12006
    %v12015 = vadd.f32 %v11844, %v12007
    %v12016 = vadd.f32 %v11845, %v12008
    %v12017 = vadd.f32 %v11846, %v12009
    %v12018 = vstv %s8783
    %v12019 = vmul.f32 %v8749, %v12018
    %v12020 = vmul.f32 %v8750, %v12018
    %v12021 = vmul.f32 %v8751, %v12018
    %v12022 = vmul.f32 %v8752, %v12018
    %v12023 = vmul.f32 %v8753, %v12018
    %v12024 = vmul.f32 %v8754, %v12018
    %v12025 = vmul.f32 %v8755, %v12018
    %v12026 = vmul.f32 %v8756, %v12018
    %v12035 = vrot.slane %v12019, 2
    %v12036 = vrot.slane %v12021, 2
    %v12037 = vsel %vm1042, %v12035, %v12036
    %v12038 = vrot.slane %v12020, 2
    %v12039 = vrot.slane %v12022, 2
    %v12040 = vsel %vm1042, %v12038, %v12039
    %v12041 = vrot.slane %v12023, 2
    %v12042 = vrot.slane %v12025, 2
    %v12043 = vsel %vm1042, %v12041, %v12042
    %v12044 = vrot.slane %v12024, 2
    %v12045 = vrot.slane %v12026, 2
    %v12046 = vsel %vm1042, %v12044, %v12045
    %12047 = vrot.lane.b32.xlu0 %v12037, 126
    %v12048 = vpop.permute.xlu0 %12047
    %12049 = vrot.lane.b32.xlu0 %v12040, 126
    %v12050 = vpop.permute.xlu0 %12049
    %12051 = vrot.lane.b32.xlu0 %v12036, 126
    %v12052 = vpop.permute.xlu0 %12051
    %12053 = vrot.lane.b32.xlu0 %v12039, 126
    %v12054 = vpop.permute.xlu0 %12053
    %12055 = vrot.lane.b32.xlu0 %v12043, 126
    %v12056 = vpop.permute.xlu0 %12055
    %12057 = vrot.lane.b32.xlu0 %v12046, 126
    %v12058 = vpop.permute.xlu0 %12057
    %12059 = vrot.lane.b32.xlu0 %v12042, 126
    %v12060 = vpop.permute.xlu0 %12059
    %12061 = vrot.lane.b32.xlu0 %v12045, 126
    %v12062 = vpop.permute.xlu0 %12061
    %v12063 = vsel %vm372, %v12048, %v12050
    %v12064 = vsel %vm372, %v12052, %v12054
    %v12065 = vsel %vm372, %v12056, %v12058
    %v12066 = vsel %vm372, %v12060, %v12062
    %v12071 = vadd.f32 %v11900, %v12063
    %v12072 = vadd.f32 %v11901, %v12064
    %v12073 = vadd.f32 %v11902, %v12065
    %v12074 = vadd.f32 %v11903, %v12066
    %v12075 = vstv %s8810
    %v12076 = vmul.f32 %v8749, %v12075
    %v12077 = vmul.f32 %v8750, %v12075
    %v12078 = vmul.f32 %v8751, %v12075
    %v12079 = vmul.f32 %v8752, %v12075
    %v12080 = vmul.f32 %v8753, %v12075
    %v12081 = vmul.f32 %v8754, %v12075
    %v12082 = vmul.f32 %v8755, %v12075
    %v12083 = vmul.f32 %v8756, %v12075
    %v12092 = vrot.slane %v12076, 2
    %v12093 = vrot.slane %v12078, 2
    %v12094 = vsel %vm1042, %v12092, %v12093
    %v12095 = vrot.slane %v12077, 2
    %v12096 = vrot.slane %v12079, 2
    %v12097 = vsel %vm1042, %v12095, %v12096
    %v12098 = vrot.slane %v12080, 2
    %v12099 = vrot.slane %v12082, 2
    %v12100 = vsel %vm1042, %v12098, %v12099
    %v12101 = vrot.slane %v12081, 2
    %v12102 = vrot.slane %v12083, 2
    %v12103 = vsel %vm1042, %v12101, %v12102
    %12104 = vrot.lane.b32.xlu0 %v12094, 126
    %v12105 = vpop.permute.xlu0 %12104
    %12106 = vrot.lane.b32.xlu0 %v12097, 126
    %v12107 = vpop.permute.xlu0 %12106
    %12108 = vrot.lane.b32.xlu0 %v12093, 126
    %v12109 = vpop.permute.xlu0 %12108
    %12110 = vrot.lane.b32.xlu0 %v12096, 126
    %v12111 = vpop.permute.xlu0 %12110
    %12112 = vrot.lane.b32.xlu0 %v12100, 126
    %v12113 = vpop.permute.xlu0 %12112
    %12114 = vrot.lane.b32.xlu0 %v12103, 126
    %v12115 = vpop.permute.xlu0 %12114
    %12116 = vrot.lane.b32.xlu0 %v12099, 126
    %v12117 = vpop.permute.xlu0 %12116
    %12118 = vrot.lane.b32.xlu0 %v12102, 126
    %v12119 = vpop.permute.xlu0 %12118
    %v12120 = vsel %vm372, %v12105, %v12107
    %v12121 = vsel %vm372, %v12109, %v12111
    %v12122 = vsel %vm372, %v12113, %v12115
    %v12123 = vsel %vm372, %v12117, %v12119
    %v12128 = vadd.f32 %v11957, %v12120
    %v12129 = vadd.f32 %v11958, %v12121
    %v12130 = vadd.f32 %v11959, %v12122
    %v12131 = vadd.f32 %v11960, %v12123
    %v12132 = vstv %s8837
    %v12133 = vmul.f32 %v8749, %v12132
    %v12134 = vmul.f32 %v8750, %v12132
    %v12135 = vmul.f32 %v8751, %v12132
    %v12136 = vmul.f32 %v8752, %v12132
    %v12137 = vmul.f32 %v8753, %v12132
    %v12138 = vmul.f32 %v8754, %v12132
    %v12139 = vmul.f32 %v8755, %v12132
    %v12140 = vmul.f32 %v8756, %v12132
    %v12149 = vrot.slane %v12133, 2
    %v12150 = vrot.slane %v12135, 2
    %v12151 = vsel %vm1042, %v12149, %v12150
    %v12152 = vrot.slane %v12134, 2
    %v12153 = vrot.slane %v12136, 2
    %v12154 = vsel %vm1042, %v12152, %v12153
    %v12155 = vrot.slane %v12137, 2
    %v12156 = vrot.slane %v12139, 2
    %v12157 = vsel %vm1042, %v12155, %v12156
    %v12158 = vrot.slane %v12138, 2
    %v12159 = vrot.slane %v12140, 2
    %v12160 = vsel %vm1042, %v12158, %v12159
    %12161 = vrot.lane.b32.xlu0 %v12151, 126
    %v12162 = vpop.permute.xlu0 %12161
    %12163 = vrot.lane.b32.xlu0 %v12154, 126
    %v12164 = vpop.permute.xlu0 %12163
    %12165 = vrot.lane.b32.xlu0 %v12150, 126
    %v12166 = vpop.permute.xlu0 %12165
    %12167 = vrot.lane.b32.xlu0 %v12153, 126
    %v12168 = vpop.permute.xlu0 %12167
    %12169 = vrot.lane.b32.xlu0 %v12157, 126
    %v12170 = vpop.permute.xlu0 %12169
    %12171 = vrot.lane.b32.xlu0 %v12160, 126
    %v12172 = vpop.permute.xlu0 %12171
    %12173 = vrot.lane.b32.xlu0 %v12156, 126
    %v12174 = vpop.permute.xlu0 %12173
    %12175 = vrot.lane.b32.xlu0 %v12159, 126
    %v12176 = vpop.permute.xlu0 %12175
    %v12177 = vsel %vm372, %v12162, %v12164
    %v12178 = vsel %vm372, %v12166, %v12168
    %v12179 = vsel %vm372, %v12170, %v12172
    %v12180 = vsel %vm372, %v12174, %v12176
    %v12185 = vadd.f32 %v12014, %v12177
    %v12186 = vadd.f32 %v12015, %v12178
    %v12187 = vadd.f32 %v12016, %v12179
    %v12188 = vadd.f32 %v12017, %v12180
    %v12189 = vadd.f32 %v11070, %v12071
    %v12190 = vadd.f32 %v11071, %v12072
    %v12191 = vadd.f32 %v11072, %v12073
    %v12192 = vadd.f32 %v11073, %v12074
    %v12193 = vadd.f32 %v11074, %v12128
    %v12194 = vadd.f32 %v11075, %v12129
    %v12195 = vadd.f32 %v11076, %v12130
    %v12196 = vadd.f32 %v11077, %v12131
    %v12197 = vadd.f32 %v11078, %v12185
    %v12198 = vadd.f32 %v11079, %v12186
    %v12199 = vadd.f32 %v11080, %v12187
    %v12200 = vadd.f32 %v11081, %v12188
    %12201 = vst [vmem:[%s3] sm:$0xff] %v12189
    %12202 = vst [vmem:[%s3 + $0x8] sm:$0x3] %v12190
    %12203 = vst [vmem:[%s3 + $0x30] sm:$0xff] %v12191
    %12204 = vst [vmem:[%s3 + $0x38] sm:$0x3] %v12192
    %s12205 = scalar_lea.vmem %s3, 16
    %12206 = vst [vmem:[%s12205] sm:$0xff] %v12193
    %12207 = vst [vmem:[%s12205 + $0x8] sm:$0x3] %v12194
    %12208 = vst [vmem:[%s12205 + $0x30] sm:$0xff] %v12195
    %12209 = vst [vmem:[%s12205 + $0x38] sm:$0x3] %v12196
    %s12210 = scalar_lea.vmem %s3, 32
    %12211 = vst [vmem:[%s12210] sm:$0xff] %v12197
    %12212 = vst [vmem:[%s12210 + $0x8] sm:$0x3] %v12198
    %12213 = vst [vmem:[%s12210 + $0x30] sm:$0xff] %v12199
    %12214 = vst [vmem:[%s12210 + $0x38] sm:$0x3] %v12200
    // Predicated region
    $region22: #{net_forward.1} parent=1 // pred_check
      _
    $region23: #{net_forward.1} parent=1 // pred_check_branch
      %12216 = sbr.rel (0) target = $region25
    $region24: #{net_forward.1} parent=1 // pred_region
      _
    $region25: #{net_forward.1} parent=1 // pred_fallthru
      _
    // Predicated region
    $region26: #{net_forward.1} parent=1 // pred_check
      _
    $region27: #{net_forward.1} parent=1 // pred_check_branch
      %12218 = sbr.rel (0) target = $region29
    $region28: #{net_forward.1} parent=1 // pred_region
      _
    $region29: #{net_forward.1} parent=1 // pred_fallthru
      _
    %12219 = vsyncpa [#allocation3], 1
    %12220 = vsyncpa [#allocation5], 1

</llo_original>
